<compile_context>
chip_gen: v5e
topology: v5e:2x2
jax: 0.10.0
libtpu: 0.0.40
codegen_flags: <defaults>
</compile_context>

<pallas_src>
import math
import jax
import jax.numpy as jnp
from jax import lax
from jax.experimental import pallas as pl
from jax.experimental.pallas import tpu as pltpu

_INV_SQRT2 = 1.0 / math.sqrt(2.0)


def _mlp_kernel(x_ref, w1_ref, b1_ref, w2_ref, b2_ref, o_ref, acc_ref):
    # x_ref : (tm, C)    w1_ref: (C, th)   b1_ref: (1, th)
    # w2_ref: (th, O)    b2_ref: (1, O)    o_ref : (tm, O)
    # acc_ref: (tm, O) f32 scratch, persistent across the H (reduction) axis.
    h_idx = pl.program_id(1)

    @pl.when(h_idx == 0)
    def _init():
        acc_ref[...] = jnp.zeros_like(acc_ref)

    # fc1 partial: x @ W1[:, th-chunk] + b1[th-chunk]   (MXU, f32 accumulate)
    h = jnp.dot(x_ref[...], w1_ref[...], preferred_element_type=jnp.float32)
    h = h + b1_ref[...]

    # exact GELU (torch.nn.GELU default): 0.5*x*(1+erf(x/sqrt(2)))
    # (elementwise -> per-H-chunk fusion is exact; kept in f32 for v5e VPU)
    h = 0.5 * h * (1.0 + lax.erf(h * _INV_SQRT2))

    # Cast back to the input dtype so fc2 hits the native (bf16) MXU path
    # when x / weights are bf16; a no-op for f32 inputs.
    h = h.astype(x_ref.dtype)

    # fc2 partial: accumulate h @ W2[th-chunk, :] in f32.
    acc_ref[...] += jnp.dot(h, w2_ref[...], preferred_element_type=jnp.float32)

    # dropout(p=0.0) is the identity -> nothing to do

    @pl.when(h_idx == pl.num_programs(1) - 1)
    def _finalize():
        o_ref[...] = (acc_ref[...] + b2_ref[...]).astype(o_ref.dtype)


def _pick_tile(dim, prefs):
    for p in prefs:
        if dim % p == 0:
            return p
    return dim  # fall back to the full (untiled) extent


def mlp_pallas(x, w1, b1, w2, b2, *, tm=None, th=None, vmem_limit_bytes=None):
    """x: (B, N, C); w1: (C, H); b1: (H,); w2: (H, O); b2: (O,)."""
    B, N, C = x.shape
    H = w1.shape[1]
    O = w2.shape[1]
    M = B * N

    # Token tile: 256 targets the v6e/v7x 2x256^2 MXU; 128 is the natural v5e
    # choice.  Both are tunable via the tm kwarg.
    if tm is None:
        tm = _pick_tile(M, (256, 128, 64, 32, 16, 8))
    # Hidden-dim tile: bounds weight-block residency (important on v7x VMEM).
    if th is None:
        th = _pick_tile(H, (512, 256, 128))
    assert M % tm == 0 and H % th == 0

    x2d = x.reshape(M, C)
    b1_2d = b1.reshape(1, H)
    b2_2d = b2.reshape(1, O)

    if vmem_limit_bytes is None:
        x_sz = jnp.dtype(x.dtype).itemsize
        w_sz = jnp.dtype(w1.dtype).itemsize
        need = (
            2 * tm * C * x_sz        # x tile (double-buffered)
            + 2 * C * th * w_sz      # W1 H-chunk (double-buffered)
            + 2 * th * O * w_sz      # W2 H-chunk (double-buffered)
            + 2 * 8 * th * w_sz      # b1 chunk (sublane-padded)
            + 2 * 8 * O * w_sz       # b2
            + 2 * tm * O * x_sz      # output tile (double-buffered)
            + tm * O * 4             # f32 accumulator scratch
            + 2 * tm * th * 4        # fc1/GELU intermediate + headroom
        )
        vmem_limit_bytes = min(max(int(need * 1.5), 32 * 1024 * 1024),
                               100 * 1024 * 1024)

    grid = (M // tm, H // th)

    out2d = pl.pallas_call(
        _mlp_kernel,
        out_shape=jax.ShapeDtypeStruct((M, O), x.dtype),
        grid_spec=pltpu.PrefetchScalarGridSpec(
            num_scalar_prefetch=0,
            grid=grid,
            in_specs=[
                pl.BlockSpec((tm, C), lambda i, j: (i, 0)),   # x tile
                pl.BlockSpec((C, th), lambda i, j: (0, j)),   # W1 H-chunk
                pl.BlockSpec((1, th), lambda i, j: (0, j)),   # b1 H-chunk
                pl.BlockSpec((th, O), lambda i, j: (j, 0)),   # W2 H-chunk
                pl.BlockSpec((1, O), lambda i, j: (0, 0)),    # b2
            ],
            out_specs=pl.BlockSpec((tm, O), lambda i, j: (i, 0)),
            scratch_shapes=[pltpu.VMEM((tm, O), jnp.float32)],
        ),
        compiler_params=pltpu.CompilerParams(
            dimension_semantics=("parallel", "arbitrary"),
            vmem_limit_bytes=vmem_limit_bytes,
        ),
    )(x2d, w1, b1_2d, w2, b2_2d)

    return out2d.reshape(B, N, O)


def _init_linear(key, fan_in, fan_out, dtype=jnp.float32):
    """Deterministic init mimicking torch.nn.Linear (kaiming-uniform-ish)."""
    kw, kb = jax.random.split(key)
    bound = 1.0 / math.sqrt(fan_in)
    # stored as (in_features, out_features) so the kernel does x @ W
    w = jax.random.uniform(kw, (fan_in, fan_out), dtype, -bound, bound)
    b = jax.random.uniform(kb, (fan_out,), dtype, -bound, bound)
    return w, b


if __name__ == "__main__":
    key = jax.random.PRNGKey(0)
    k_x, k_fc1, k_fc2 = jax.random.split(key, 3)

    # small but lane-dense transformer-token shapes:
    # batch=2, seq=256, in=128, hidden=4*128=512, out=128
    B, N, C = 2, 256, 128
    H = 4 * C
    O = C

    x = jax.random.normal(k_x, (B, N, C), dtype=jnp.float32)
    w1, b1 = _init_linear(k_fc1, C, H)
    w2, b2 = _init_linear(k_fc2, H, O)

    y = mlp_pallas(x, w1, b1, w2, b2)
    jax.block_until_ready(y)

    # reference check in plain JAX (full-precision dots)
    hp = lax.Precision.HIGHEST
    h_ref = jnp.dot(x.reshape(-1, C), w1, precision=hp) + b1
    h_ref = 0.5 * h_ref * (1.0 + lax.erf(h_ref / math.sqrt(2.0)))
    y_ref = (jnp.dot(h_ref, w2, precision=hp) + b2).reshape(B, N, O)
    assert jnp.allclose(y, y_ref, atol=2e-4, rtol=2e-4), "mismatch vs reference"

    print("KERNEL_OK")
</pallas_src>

<mosaic_0001>
module attributes {stable_mosaic.version = 11 : i64} {
  func.func @_mlp_kernel(%arg0: i32, %arg1: i32, %arg2: memref<256x128xf32, #tpu.memory_space<vmem>>, %arg3: memref<128x512xf32, #tpu.memory_space<vmem>>, %arg4: memref<1x512xf32, #tpu.memory_space<vmem>>, %arg5: memref<512x128xf32, #tpu.memory_space<vmem>>, %arg6: memref<1x128xf32, #tpu.memory_space<vmem>>, %arg7: memref<256x128xf32, #tpu.memory_space<vmem>>, %arg8: memref<256x128xf32, #tpu.memory_space<vmem>>) attributes {dimension_semantics = [#tpu.dimension_semantics<parallel>, #tpu.dimension_semantics<arbitrary>], iteration_bounds = array<i64: 2, 1>, scalar_prefetch = 0 : i64, scratch_operands = 1 : i64, tpu.core_type = #tpu.core_type<tc>, window_params = [{transform_indices = @transform_0, window_bounds = array<i64: 256, 128>}, {transform_indices = @transform_1, window_bounds = array<i64: 128, 512>}, {transform_indices = @transform_2, window_bounds = array<i64: 1, 512>}, {transform_indices = @transform_3, window_bounds = array<i64: 512, 128>}, {pipeline_mode = #tpu.pipeline_mode<synchronous>, transform_indices = @transform_4, window_bounds = array<i64: 1, 128>}, {transform_indices = @transform_5, window_bounds = array<i64: 256, 128>}]} {
    %c0_i32 = arith.constant 0 : i32
    %0 = arith.cmpi eq, %arg1, %c0_i32 : i32
    %1 = arith.extui %0 : i1 to i32
    %c0_i32_0 = arith.constant 0 : i32
    %2 = arith.cmpi ne, %1, %c0_i32_0 : i32
    scf.if %2 {
      %cst_18 = arith.constant 0.000000e+00 : f32
      %25 = vector.broadcast %cst_18 : f32 to vector<256x128xf32>
      %c0_19 = arith.constant 0 : index
      %c0_20 = arith.constant 0 : index
      %26 = vector.load %arg8[%c0_19, %c0_20] : memref<256x128xf32, #tpu.memory_space<vmem>>, vector<256x128xf32>
      tpu.vector_store %arg8[%c0_19, %c0_20], %25 {strides = array<i32>} : memref<256x128xf32, #tpu.memory_space<vmem>>, vector<256x128xf32>,
    } else {
    }
    %c0 = arith.constant 0 : index
    %c0_1 = arith.constant 0 : index
    %3 = vector.load %arg2[%c0, %c0_1] : memref<256x128xf32, #tpu.memory_space<vmem>>, vector<256x128xf32>
    %c0_2 = arith.constant 0 : index
    %c0_3 = arith.constant 0 : index
    %4 = vector.load %arg3[%c0_2, %c0_3] : memref<128x512xf32, #tpu.memory_space<vmem>>, vector<128x512xf32>
    %cst = arith.constant dense<0.000000e+00> : vector<256x512xf32>
    %5 = tpu.matmul %3, %4, %cst {dimension_numbers = #tpu.dot_dimension_numbers<[1], [0], [0], [1], [0, 0, 1, 1], [], []>} : vector<256x128xf32>, vector<128x512xf32>, vector<256x512xf32> -> vector<256x512xf32>
    %c0_4 = arith.constant 0 : index
    %c0_5 = arith.constant 0 : index
    %6 = vector.load %arg4[%c0_4, %c0_5] : memref<1x512xf32, #tpu.memory_space<vmem>>, vector<1x512xf32>
    %7 = vector.broadcast %6 : vector<1x512xf32> to vector<256x512xf32>
    %8 = arith.addf %5, %7 : vector<256x512xf32>
    %cst_6 = arith.constant 5.000000e-01 : f32
    %9 = vector.broadcast %cst_6 : f32 to vector<256x512xf32>
    %10 = arith.mulf %9, %8 : vector<256x512xf32>
    %cst_7 = arith.constant 0.707106769 : f32
    %11 = vector.broadcast %cst_7 : f32 to vector<256x512xf32>
    %12 = arith.mulf %8, %11 : vector<256x512xf32>
    %13 = math.erf %12 : vector<256x512xf32>
    %cst_8 = arith.constant 1.000000e+00 : f32
    %14 = vector.broadcast %cst_8 : f32 to vector<256x512xf32>
    %15 = arith.addf %14, %13 : vector<256x512xf32>
    %16 = arith.mulf %10, %15 : vector<256x512xf32>
    %c0_9 = arith.constant 0 : index
    %c0_10 = arith.constant 0 : index
    %17 = vector.load %arg8[%c0_9, %c0_10] : memref<256x128xf32, #tpu.memory_space<vmem>>, vector<256x128xf32>
    %c0_11 = arith.constant 0 : index
    %c0_12 = arith.constant 0 : index
    %18 = vector.load %arg5[%c0_11, %c0_12] : memref<512x128xf32, #tpu.memory_space<vmem>>, vector<512x128xf32>
    %cst_13 = arith.constant dense<0.000000e+00> : vector<256x128xf32>
    %19 = tpu.matmul %16, %18, %cst_13 {dimension_numbers = #tpu.dot_dimension_numbers<[1], [0], [0], [1], [0, 0, 1, 1], [], []>} : vector<256x512xf32>, vector<512x128xf32>, vector<256x128xf32> -> vector<256x128xf32>
    %20 = arith.addf %17, %19 : vector<256x128xf32>
    %c0_14 = arith.constant 0 : index
    %c0_15 = arith.constant 0 : index
    %21 = vector.load %arg8[%c0_14, %c0_15] : memref<256x128xf32, #tpu.memory_space<vmem>>, vector<256x128xf32>
    tpu.vector_store %arg8[%c0_14, %c0_15], %20 {strides = array<i32>} : memref<256x128xf32, #tpu.memory_space<vmem>>, vector<256x128xf32>,
    %c0_i32_16 = arith.constant 0 : i32
    %22 = arith.cmpi eq, %arg1, %c0_i32_16 : i32
    %23 = arith.extui %22 : i1 to i32
    %c0_i32_17 = arith.constant 0 : i32
    %24 = arith.cmpi ne, %23, %c0_i32_17 : i32
    scf.if %24 {
      %c0_18 = arith.constant 0 : index
      %c0_19 = arith.constant 0 : index
      %25 = vector.load %arg8[%c0_18, %c0_19] : memref<256x128xf32, #tpu.memory_space<vmem>>, vector<256x128xf32>
      %c0_20 = arith.constant 0 : index
      %c0_21 = arith.constant 0 : index
      %26 = vector.load %arg6[%c0_20, %c0_21] : memref<1x128xf32, #tpu.memory_space<vmem>>, vector<1x128xf32>
      %27 = vector.broadcast %26 : vector<1x128xf32> to vector<256x128xf32>
      %28 = arith.addf %25, %27 : vector<256x128xf32>
      %c0_22 = arith.constant 0 : index
      %c0_23 = arith.constant 0 : index
      %29 = vector.load %arg7[%c0_22, %c0_23] : memref<256x128xf32, #tpu.memory_space<vmem>>, vector<256x128xf32>
      tpu.vector_store %arg7[%c0_22, %c0_23], %28 {strides = array<i32>} : memref<256x128xf32, #tpu.memory_space<vmem>>, vector<256x128xf32>,
    } else {
    }
    return
  }
  func.func @transform_0(%arg0: i32, %arg1: i32) -> (i32, i32) {
    %c0_i32 = arith.constant 0 : i32
    %c0_i32_0 = arith.constant 0 : i32
    return %arg0, %c0_i32 : i32, i32
  }
  func.func @transform_1(%arg0: i32, %arg1: i32) -> (i32, i32) {
    %c0_i32 = arith.constant 0 : i32
    %c0_i32_0 = arith.constant 0 : i32
    return %c0_i32, %arg1 : i32, i32
  }
  func.func @transform_2(%arg0: i32, %arg1: i32) -> (i32, i32) {
    %c0_i32 = arith.constant 0 : i32
    %c0_i32_0 = arith.constant 0 : i32
    return %c0_i32, %arg1 : i32, i32
  }
  func.func @transform_3(%arg0: i32, %arg1: i32) -> (i32, i32) {
    %c0_i32 = arith.constant 0 : i32
    %c0_i32_0 = arith.constant 0 : i32
    return %arg1, %c0_i32 : i32, i32
  }
  func.func @transform_4(%arg0: i32, %arg1: i32) -> (i32, i32) {
    %c0_i32 = arith.constant 0 : i32
    %c0_i32_0 = arith.constant 0 : i32
    %c0_i32_1 = arith.constant 0 : i32
    return %c0_i32, %c0_i32_0 : i32, i32
  }
  func.func @transform_5(%arg0: i32, %arg1: i32) -> (i32, i32) {
    %c0_i32 = arith.constant 0 : i32
    %c0_i32_0 = arith.constant 0 : i32
    return %arg0, %c0_i32 : i32, i32
  }
}

</mosaic_0001>

<llo_original>
// kernel: tpu_custom_call.1
$region0: #{tpu_custom_call.1}
  #allocation0 [shape = 'u32[]', space=smem, size = 0x4, offset = 0x4, fixed_abs, tag = 'smem constant byte address 0x4 - core index']
  #allocation1 [shape = 'u32[72,128]{1,0:T(1,128)}', space=vmem, size = 0x9000, scoped, tag = 'internal scratch']
  #allocation2 [shape = 'f32[256,128]{1,0:T(8,128)}', space=vmem, size = 0x20000, scoped, tag = 'scratch operand']
  %s0 = inlined_call_operand.hbm [shape: f32[512,128], index: 0, kind: input, shape index: {}]
  %s1 = inlined_call_operand.hbm [shape: f32[128,512], index: 1, kind: input, shape index: {}]
  %s2 = inlined_call_operand.hbm [shape: f32[1,512], index: 2, kind: input, shape index: {}]
  %s3 = inlined_call_operand.hbm [shape: f32[512,128], index: 3, kind: input, shape index: {}]
  %s4 = inlined_call_operand.vmem [shape: f32[1,128], index: 4, kind: input, shape index: {}]
  %s5 = inlined_call_operand.hbm [shape: f32[512,128], index: 5, kind: output, shape index: {}]
  %s6 = sld [smem:[#allocation0]]
  $region77: #{tpu_custom_call.1} parent=0
    _
  %s8 = ssub.s32 1, %s6
  %s9 = scalar_select 0, %s8, %s6
  $region1: #{tpu_custom_call.1} parent=0
    #allocation3 [shape = 'u8[262144]{0}', space=vmem, size = 0x40000, scoped, tag = 'input window, operand 0']
    #allocation4 [shape = 's32[2]{0}', space=sflag, size = 0x8, scoped, tag = 'scoped memory for tpu_custom_call.1']
    #allocation5 [shape = 's32[2]{0}', space=sflag, size = 0x8, scoped, tag = 'scoped memory for tpu_custom_call.1']
    #allocation6 [shape = 'u8[262144]{0}', space=vmem, size = 0x40000, scoped, tag = 'input window, operand 1, single buffered']
    #allocation7 [shape = 's32[1]{0}', space=sflag, size = 0x4, scoped, tag = 'scoped memory for tpu_custom_call.1']
    #allocation8 [shape = 'u8[2048]{0}', space=vmem, size = 0x800, scoped, tag = 'input window, operand 2, single buffered']
    #allocation9 [shape = 'u8[262144]{0}', space=vmem, size = 0x40000, scoped, tag = 'input window, operand 3, single buffered']
    #allocation10 [shape = 's32[1]{0}', space=sflag, size = 0x4, scoped, tag = 'scoped memory for tpu_custom_call.1']
    #allocation11 [shape = 'u8[262144]{0}', space=vmem, size = 0x40000, scoped, tag = 'output window, operand 0']
    %10 = vsyncpa [#allocation4], 0
    %s11 = scalar_lea.sflag [#allocation4], 1
    %12 = vsyncpa %s11, 0
    %13 = vsyncpa [#allocation7], 0
    %14 = vsyncpa [#allocation10], 0
    %15 = vsyncpa [#allocation5], 0
    %s16 = scalar_lea.sflag [#allocation5], 1
    %17 = vsyncpa %s16, 0
    loop: start=0, step=1, limit=4
    $region2: #{tpu_custom_call.1} parent=1 // loop_pre_header
      _
    $region3: #{tpu_custom_call.1} parent=1 // loop_header
      %s19 = sphi 0, %s23
      %p20 = scmp.ge.s32.totalorder %s19, 4
      %s26 = sphi 0, %s38
      %s27 = sphi 0, %s34
      %s28 = sphi 0, %s26
      %s29 = sphi 0, %s27
      %s30 = sphi 0, %s28
      %s31 = sphi 0, %s29
      %s41 = sphi 0, %s43
      %s44 = sphi 0, %s41
      %s45 = sphi 0, %s44
      %s61 = sphi 0, %s45
      %s67 = sphi 0, %s69
      %s70 = sphi 0, %s67
      %s71 = sphi 0, %s70
      %s87 = sphi 0, %s71
      %s93 = sphi 0, %s95
      %s96 = sphi 0, %s93
      %s97 = sphi 0, %s96
      %s113 = sphi 0, %s97
      %s119 = sphi 0, %s121
      %s122 = sphi 0, %s119
      %s123 = sphi 0, %s122
      %s139 = sphi 0, %s123
      %s143 = sphi 0, %s143
      %s145 = sphi 0, %s143
      %s146 = sphi 0, %s145
      %s160 = sphi 0, %s146
      %s166 = sphi 0, %s168
      %s169 = sphi 0, %s166
      %s170 = sphi 0, %s169
      %s186 = sphi 0, %s170
    $region4: #{tpu_custom_call.1} parent=1 // loop_header_branch
      %22 = sbr.rel (%p20) target = $region8
    $region5: #{tpu_custom_call.1} parent=1 // loop_body
      %s24 = ssub.s32 %s19, 1
      %s25 = ssub.s32 %s19, 2
      %s32 = sadd.s32 1, %s27
      %p33 = scmp.ge.s32.totalorder %s32, 1
      %s34 = scalar_select %p33, 0, %s32
      %s35 = sadd.s32 1, %s26
      %s36 = scalar_select %p33, %s35, %s26
      %p37 = scmp.ge.s32.totalorder %s36, 2
      %s38 = scalar_select %p37, 0, %s36
      %s39 = ssub.s32 %s26, %s38
      %p40 = scmp.eq.s32.totalorder %s39, 0
      %s42 = sadd.s32 %s41, 1
      %s43 = scalar_select %p40, %s41, %s42
      %p46 = pneg %p40
      %p47 = scmp.eq.s32.totalorder %s19, 1
      %p48 = por %p46, %p47
      %p49 = scmp.ne.s32.totalorder %s41, %s44
      %p50 = scmp.eq.s32.totalorder %s19, 0
      %p51 = por %p49, %p50
      %p52 = scmp.ne.s32.totalorder %s41, %s44
      %p53 = scmp.eq.s32.totalorder %s24, 1
      %p54 = por %p52, %p53
      %p55 = scmp.ne.s32.totalorder %s44, %s45
      %p56 = scmp.eq.s32.totalorder %s24, 0
      %p57 = por %p55, %p56
      %p58 = scmp.ne.s32.totalorder %s44, %s45
      %p59 = scmp.eq.s32.totalorder %s25, 1
      %p60 = por %p58, %p59
      %p62 = scmp.ne.s32.totalorder %s45, %s61
      %p63 = scmp.eq.s32.totalorder %s25, 0
      %p64 = por %p62, %p63
      %s65 = ssub.s32 %s27, %s34
      %p66 = scmp.eq.s32.totalorder %s65, 0
      %s68 = sadd.s32 %s67, 1
      %s69 = scalar_select %p66, %s67, %s68
      %p72 = pneg %p66
      %p73 = scmp.eq.s32.totalorder %s19, 1
      %p74 = por %p72, %p73
      %p75 = scmp.ne.s32.totalorder %s67, %s70
      %p76 = scmp.eq.s32.totalorder %s19, 0
      %p77 = por %p75, %p76
      %p78 = scmp.ne.s32.totalorder %s67, %s70
      %p79 = scmp.eq.s32.totalorder %s24, 1
      %p80 = por %p78, %p79
      %p81 = scmp.ne.s32.totalorder %s70, %s71
      %p82 = scmp.eq.s32.totalorder %s24, 0
      %p83 = por %p81, %p82
      %p84 = scmp.ne.s32.totalorder %s70, %s71
      %p85 = scmp.eq.s32.totalorder %s25, 1
      %p86 = por %p84, %p85
      %p88 = scmp.ne.s32.totalorder %s71, %s87
      %p89 = scmp.eq.s32.totalorder %s25, 0
      %p90 = por %p88, %p89
      %s91 = ssub.s32 %s27, %s34
      %p92 = scmp.eq.s32.totalorder %s91, 0
      %s94 = sadd.s32 %s93, 1
      %s95 = scalar_select %p92, %s93, %s94
      %p98 = pneg %p92
      %p99 = scmp.eq.s32.totalorder %s19, 1
      %p100 = por %p98, %p99
      %p101 = scmp.ne.s32.totalorder %s93, %s96
      %p102 = scmp.eq.s32.totalorder %s19, 0
      %p103 = por %p101, %p102
      %p104 = scmp.ne.s32.totalorder %s93, %s96
      %p105 = scmp.eq.s32.totalorder %s24, 1
      %p106 = por %p104, %p105
      %p107 = scmp.ne.s32.totalorder %s96, %s97
      %p108 = scmp.eq.s32.totalorder %s24, 0
      %p109 = por %p107, %p108
      %p110 = scmp.ne.s32.totalorder %s96, %s97
      %p111 = scmp.eq.s32.totalorder %s25, 1
      %p112 = por %p110, %p111
      %p114 = scmp.ne.s32.totalorder %s97, %s113
      %p115 = scmp.eq.s32.totalorder %s25, 0
      %p116 = por %p114, %p115
      %s117 = ssub.s32 %s27, %s34
      %p118 = scmp.eq.s32.totalorder %s117, 0
      %s120 = sadd.s32 %s119, 1
      %s121 = scalar_select %p118, %s119, %s120
      %p124 = pneg %p118
      %p125 = scmp.eq.s32.totalorder %s19, 1
      %p126 = por %p124, %p125
      %p127 = scmp.ne.s32.totalorder %s119, %s122
      %p128 = scmp.eq.s32.totalorder %s19, 0
      %p129 = por %p127, %p128
      %p130 = scmp.ne.s32.totalorder %s119, %s122
      %p131 = scmp.eq.s32.totalorder %s24, 1
      %p132 = por %p130, %p131
      %p133 = scmp.ne.s32.totalorder %s122, %s123
      %p134 = scmp.eq.s32.totalorder %s24, 0
      %p135 = por %p133, %p134
      %p136 = scmp.ne.s32.totalorder %s122, %s123
      %p137 = scmp.eq.s32.totalorder %s25, 1
      %p138 = por %p136, %p137
      %p140 = scmp.ne.s32.totalorder %s123, %s139
      %p141 = scmp.eq.s32.totalorder %s25, 0
      %p142 = por %p140, %p141
      %s144 = sadd.s32 %s143, 1
      %p147 = scmp.eq.s32.totalorder %s19, 1
      %p148 = scmp.ne.s32.totalorder %s143, %s145
      %p149 = scmp.eq.s32.totalorder %s19, 0
      %p150 = por %p148, %p149
      %p151 = scmp.ne.s32.totalorder %s143, %s145
      %p152 = scmp.eq.s32.totalorder %s24, 1
      %p153 = por %p151, %p152
      %p154 = scmp.ne.s32.totalorder %s145, %s146
      %p155 = scmp.eq.s32.totalorder %s24, 0
      %p156 = por %p154, %p155
      %p157 = scmp.ne.s32.totalorder %s145, %s146
      %p158 = scmp.eq.s32.totalorder %s25, 1
      %p159 = por %p157, %p158
      %p161 = scmp.ne.s32.totalorder %s146, %s160
      %p162 = scmp.eq.s32.totalorder %s25, 0
      %p163 = por %p161, %p162
      %s164 = ssub.s32 %s26, %s38
      %p165 = scmp.eq.s32.totalorder %s164, 0
      %s167 = sadd.s32 %s166, 1
      %s168 = scalar_select %p165, %s166, %s167
      %p171 = pneg %p165
      %p172 = scmp.eq.s32.totalorder %s19, 1
      %p173 = por %p171, %p172
      %p174 = scmp.ne.s32.totalorder %s166, %s169
      %p175 = scmp.eq.s32.totalorder %s19, 0
      %p176 = por %p174, %p175
      %p177 = scmp.ne.s32.totalorder %s166, %s169
      %p178 = scmp.eq.s32.totalorder %s24, 1
      %p179 = por %p177, %p178
      %p180 = scmp.ne.s32.totalorder %s169, %s170
      %p181 = scmp.eq.s32.totalorder %s24, 0
      %p182 = por %p180, %p181
      %p183 = scmp.ne.s32.totalorder %s169, %s170
      %p184 = scmp.eq.s32.totalorder %s25, 1
      %p185 = por %p183, %p184
      %p187 = scmp.ne.s32.totalorder %s170, %s186
      %p188 = scmp.eq.s32.totalorder %s25, 0
      %p189 = por %p187, %p188
      %p190 = scmp.le.s32.totalorder 1, %s19
      %p191 = scmp.lt.s32.totalorder %s19, 3
      %p192 = pnand %p190, %p191
      %p193 = pneg %p192
      // Predicated region
      $region9: #{tpu_custom_call.1} parent=5 // pred_check
        _
      $region10: #{tpu_custom_call.1} parent=5 // pred_check_branch
        %195 = sbr.rel (%p192) target = $region12
      $region11: #{tpu_custom_call.1} parent=5 // pred_region
        %s196 = ssub.s32 %s19, 1
        // Predicated region
        $region13: #{tpu_custom_call.1} parent=11 // pred_check
          %p197 = pneg %p83
        $region14: #{tpu_custom_call.1} parent=11 // pred_check_branch
          %199 = sbr.rel (%p197) target = $region16
        $region15: #{tpu_custom_call.1} parent=11 // pred_region
          %s200 = smul.u32 4, %s29
          %202 = vsyncadd [#allocation7], 0
          %s203 = smul.addr %s200, 8
          %s204 = scalar_lea.hbm %s1, %s203
          %s205 = sshll.u32 %s204, 4
          %s206 = int_to_ptr.hbm [resolvable:$true] %s205
          %s207 = sshll.u32 [#allocation6], 4
          %s208 = int_to_ptr.vmem [resolvable:$true] %s207
          %213 = dma.hbm_to_vmem [thread:$0]  %s206, 8192, %s208, [#allocation7], 512, 512, 32
        $region16: #{tpu_custom_call.1} parent=11 // pred_fallthru
          _
        // Predicated region
        $region17: #{tpu_custom_call.1} parent=11 // pred_check
          %p214 = pneg %p109
        $region18: #{tpu_custom_call.1} parent=11 // pred_check_branch
          %216 = sbr.rel (%p214) target = $region20
        $region19: #{tpu_custom_call.1} parent=11 // pred_region
          %s217 = smul.u32 4, %s29
          %219 = vsyncadd [#allocation7], 0
          %s220 = scalar_lea.hbm %s2, %s217
          %s222 = sshll.u32 %s220, 4
          %s223 = int_to_ptr.hbm [resolvable:$true] %s222
          %s224 = sshll.u32 [#allocation8], 4
          %s225 = int_to_ptr.vmem [resolvable:$true] %s224
          %227 = dma.hbm_to_vmem [thread:$0]  %s223, 64, %s225, [#allocation7]
        $region20: #{tpu_custom_call.1} parent=11 // pred_fallthru
          _
        // Predicated region
        $region21: #{tpu_custom_call.1} parent=11 // pred_check
          %p228 = pneg %p135
        $region22: #{tpu_custom_call.1} parent=11 // pred_check_branch
          %230 = sbr.rel (%p228) target = $region24
        $region23: #{tpu_custom_call.1} parent=11 // pred_region
          %s231 = smul.u32 64, %s29
          %233 = vsyncadd [#allocation10], 0
          %s234 = smul.addr %s231, 8
          %s235 = scalar_lea.hbm %s3, %s234
          %s236 = sshll.u32 %s235, 4
          %s237 = int_to_ptr.hbm [resolvable:$true] %s236
          %s238 = sshll.u32 [#allocation9], 4
          %s239 = int_to_ptr.vmem [resolvable:$true] %s238
          %244 = dma.hbm_to_vmem [thread:$0]  %s237, 8192, %s239, [#allocation10], 128, 128, 8
        $region24: #{tpu_custom_call.1} parent=11 // pred_fallthru
          _
        // Predicated region
        $region25: #{tpu_custom_call.1} parent=11 // pred_check
          %p245 = pneg %p156
        $region26: #{tpu_custom_call.1} parent=11 // pred_check_branch
          %247 = sbr.rel (%p245) target = $region28
        $region27: #{tpu_custom_call.1} parent=11 // pred_region
          _
        $region28: #{tpu_custom_call.1} parent=11 // pred_fallthru
          _
      $region12: #{tpu_custom_call.1} parent=5 // pred_fallthru
        _
      %p248 = scmp.lt.s32.totalorder %s19, 2
      // Predicated region
      $region29: #{tpu_custom_call.1} parent=5 // pred_check
        %p249 = pneg %p248
      $region30: #{tpu_custom_call.1} parent=5 // pred_check_branch
        %251 = sbr.rel (%p249) target = $region32
      $region31: #{tpu_custom_call.1} parent=5 // pred_region
        // Predicated region
        $region33: #{tpu_custom_call.1} parent=31 // pred_check
          %p252 = pneg %p51
        $region34: #{tpu_custom_call.1} parent=31 // pred_check_branch
          %254 = sbr.rel (%p252) target = $region36
        $region35: #{tpu_custom_call.1} parent=31 // pred_region
          %s255 = sand.u32 %s41, 1
          %s256 = scalar_lea.sflag [#allocation4], %s255
          %s257 = sand.u32 %s41, 1
          %s258 = smul.addr %s257, 256
          %s259 = scalar_lea.vmem [#allocation3], %s258
          %s260 = smul.u32 32, %s26
          %262 = vsyncadd %s256, 0
          %s263 = smul.addr %s260, 8
          %s264 = scalar_lea.hbm %s0, %s263
          %s265 = sshll.u32 %s264, 4
          %s266 = int_to_ptr.hbm [resolvable:$true] %s265
          %s267 = sshll.u32 %s259, 4
          %s268 = int_to_ptr.vmem [resolvable:$true] %s267
          %273 = dma.hbm_to_vmem [thread:$0]  %s266, 4096, %s268, %s256, 128, 128, 8
        $region36: #{tpu_custom_call.1} parent=31 // pred_fallthru
          _
      $region32: #{tpu_custom_call.1} parent=5 // pred_fallthru
        _
      %p274 = scmp.le.s32.totalorder 1, %s19
      %p275 = scmp.lt.s32.totalorder %s19, 3
      %p276 = pnand %p274, %p275
      %p277 = pneg %p276
      // Predicated region
      $region37: #{tpu_custom_call.1} parent=5 // pred_check
        _
      $region38: #{tpu_custom_call.1} parent=5 // pred_check_branch
        %279 = sbr.rel (%p276) target = $region40
      $region39: #{tpu_custom_call.1} parent=5 // pred_region
        %s280 = ssub.s32 %s19, 1
        %s281 = sand.u32 %s44, 1
        %s282 = scalar_lea.sflag [#allocation4], %s281
        %s283 = sand.u32 %s44, 1
        %s284 = smul.addr %s283, 256
        %s285 = scalar_lea.vmem [#allocation3], %s284
        // Predicated region
        $region41: #{tpu_custom_call.1} parent=39 // pred_check
          %p286 = pneg %p57
        $region42: #{tpu_custom_call.1} parent=39 // pred_check_branch
          %288 = sbr.rel (%p286) target = $region44
        $region43: #{tpu_custom_call.1} parent=39 // pred_region
          %290 = dma.done %s282, 4096
        $region44: #{tpu_custom_call.1} parent=39 // pred_fallthru
          _
        // Predicated region
        $region45: #{tpu_custom_call.1} parent=39 // pred_check
          %p291 = pneg %p83
        $region46: #{tpu_custom_call.1} parent=39 // pred_check_branch
          %293 = sbr.rel (%p291) target = $region48
        $region47: #{tpu_custom_call.1} parent=39 // pred_region
          %295 = dma.done [#allocation7], 8192
        $region48: #{tpu_custom_call.1} parent=39 // pred_fallthru
          _
        // Predicated region
        $region49: #{tpu_custom_call.1} parent=39 // pred_check
          %p296 = pneg %p109
        $region50: #{tpu_custom_call.1} parent=39 // pred_check_branch
          %298 = sbr.rel (%p296) target = $region52
        $region51: #{tpu_custom_call.1} parent=39 // pred_region
          %300 = dma.done [#allocation7], 64
        $region52: #{tpu_custom_call.1} parent=39 // pred_fallthru
          _
        // Predicated region
        $region53: #{tpu_custom_call.1} parent=39 // pred_check
          %p301 = pneg %p135
        $region54: #{tpu_custom_call.1} parent=39 // pred_check_branch
          %303 = sbr.rel (%p301) target = $region56
        $region55: #{tpu_custom_call.1} parent=39 // pred_region
          %305 = dma.done [#allocation10], 8192
        $region56: #{tpu_custom_call.1} parent=39 // pred_fallthru
          _
        %s306 = sand.u32 %s44, 1
        %s307 = scalar_lea.sflag [#allocation4], %s306
        %s308 = sand.u32 %s44, 1
        %s309 = smul.addr %s308, 256
        %s310 = scalar_lea.vmem [#allocation3], %s309
        %p311 = pneg %p57
        %p312 = pneg %p54
        %p313 = pneg %p83
        %p314 = pneg %p80
        %p315 = pneg %p109
        %p316 = pneg %p106
        %p317 = pneg %p135
        %p318 = pneg %p132
        %p319 = pneg %p156
        %p320 = pneg %p153
        %p321 = pneg %p182
        %p322 = pneg %p179
        %s323 = sand.u32 %s169, 1
        %s324 = scalar_lea.sflag [#allocation5], %s323
        %s325 = sand.u32 %s169, 1
        %s326 = smul.addr %s325, 256
        %s327 = scalar_lea.vmem [#allocation11], %s326
        %s328 = smul.u32 32, %s28
        %s329 = smul.u32 4, %s29
        %s330 = smul.u32 4, %s29
        %s331 = smul.u32 64, %s29
        %s332 = smul.u32 32, %s28
        %p333 = scmp.eq.s32.totalorder %s29, 0
        // Predicated region
        $region57: #{tpu_custom_call.1} parent=39 // pred_check
          %p334 = pneg %p333
        $region58: #{tpu_custom_call.1} parent=39 // pred_check_branch
          %336 = sbr.rel (%p334) target = $region60
        $region59: #{tpu_custom_call.1} parent=39 // pred_region
          %337 = vst [vmem:[#allocation2] sm:$0xff] 0.0
          %338 = vst [vmem:[#allocation2 + $0x8] sm:$0xff] 0.0
          %339 = vst [vmem:[#allocation2 + $0x10] sm:$0xff] 0.0
          %340 = vst [vmem:[#allocation2 + $0x18] sm:$0xff] 0.0
          %341 = vst [vmem:[#allocation2 + $0x20] sm:$0xff] 0.0
          %342 = vst [vmem:[#allocation2 + $0x28] sm:$0xff] 0.0
          %343 = vst [vmem:[#allocation2 + $0x30] sm:$0xff] 0.0
          %344 = vst [vmem:[#allocation2 + $0x38] sm:$0xff] 0.0
          %345 = vst [vmem:[#allocation2 + $0x40] sm:$0xff] 0.0
          %346 = vst [vmem:[#allocation2 + $0x48] sm:$0xff] 0.0
          %347 = vst [vmem:[#allocation2 + $0x50] sm:$0xff] 0.0
          %348 = vst [vmem:[#allocation2 + $0x58] sm:$0xff] 0.0
          %349 = vst [vmem:[#allocation2 + $0x60] sm:$0xff] 0.0
          %350 = vst [vmem:[#allocation2 + $0x68] sm:$0xff] 0.0
          %351 = vst [vmem:[#allocation2 + $0x70] sm:$0xff] 0.0
          %352 = vst [vmem:[#allocation2 + $0x78] sm:$0xff] 0.0
          %353 = vst [vmem:[#allocation2 + $0x80] sm:$0xff] 0.0
          %354 = vst [vmem:[#allocation2 + $0x88] sm:$0xff] 0.0
          %355 = vst [vmem:[#allocation2 + $0x90] sm:$0xff] 0.0
          %356 = vst [vmem:[#allocation2 + $0x98] sm:$0xff] 0.0
          %357 = vst [vmem:[#allocation2 + $0xa0] sm:$0xff] 0.0
          %358 = vst [vmem:[#allocation2 + $0xa8] sm:$0xff] 0.0
          %359 = vst [vmem:[#allocation2 + $0xb0] sm:$0xff] 0.0
          %360 = vst [vmem:[#allocation2 + $0xb8] sm:$0xff] 0.0
          %361 = vst [vmem:[#allocation2 + $0xc0] sm:$0xff] 0.0
          %362 = vst [vmem:[#allocation2 + $0xc8] sm:$0xff] 0.0
          %363 = vst [vmem:[#allocation2 + $0xd0] sm:$0xff] 0.0
          %364 = vst [vmem:[#allocation2 + $0xd8] sm:$0xff] 0.0
          %365 = vst [vmem:[#allocation2 + $0xe0] sm:$0xff] 0.0
          %366 = vst [vmem:[#allocation2 + $0xe8] sm:$0xff] 0.0
          %367 = vst [vmem:[#allocation2 + $0xf0] sm:$0xff] 0.0
          %368 = vst [vmem:[#allocation2 + $0xf8] sm:$0xff] 0.0
        $region60: #{tpu_custom_call.1} parent=39 // pred_fallthru
          _
        %v369 = vld [vmem:[%s285] sm:$0xff]
        %v370 = vld [vmem:[%s285 + $0x8] sm:$0xff]
        %v371 = vld [vmem:[%s285 + $0x10] sm:$0xff]
        %v372 = vld [vmem:[%s285 + $0x18] sm:$0xff]
        %v373 = vld [vmem:[%s285 + $0x20] sm:$0xff]
        %v374 = vld [vmem:[%s285 + $0x28] sm:$0xff]
        %v375 = vld [vmem:[%s285 + $0x30] sm:$0xff]
        %v376 = vld [vmem:[%s285 + $0x38] sm:$0xff]
        %v377 = vld [vmem:[%s285 + $0x40] sm:$0xff]
        %v378 = vld [vmem:[%s285 + $0x48] sm:$0xff]
        %v379 = vld [vmem:[%s285 + $0x50] sm:$0xff]
        %v380 = vld [vmem:[%s285 + $0x58] sm:$0xff]
        %v381 = vld [vmem:[%s285 + $0x60] sm:$0xff]
        %v382 = vld [vmem:[%s285 + $0x68] sm:$0xff]
        %v383 = vld [vmem:[%s285 + $0x70] sm:$0xff]
        %v384 = vld [vmem:[%s285 + $0x78] sm:$0xff]
        %v385 = vld [vmem:[%s285 + $0x80] sm:$0xff]
        %v386 = vld [vmem:[%s285 + $0x88] sm:$0xff]
        %v387 = vld [vmem:[%s285 + $0x90] sm:$0xff]
        %v388 = vld [vmem:[%s285 + $0x98] sm:$0xff]
        %v389 = vld [vmem:[%s285 + $0xa0] sm:$0xff]
        %v390 = vld [vmem:[%s285 + $0xa8] sm:$0xff]
        %v391 = vld [vmem:[%s285 + $0xb0] sm:$0xff]
        %v392 = vld [vmem:[%s285 + $0xb8] sm:$0xff]
        %v393 = vld [vmem:[%s285 + $0xc0] sm:$0xff]
        %v394 = vld [vmem:[%s285 + $0xc8] sm:$0xff]
        %v395 = vld [vmem:[%s285 + $0xd0] sm:$0xff]
        %v396 = vld [vmem:[%s285 + $0xd8] sm:$0xff]
        %v397 = vld [vmem:[%s285 + $0xe0] sm:$0xff]
        %v398 = vld [vmem:[%s285 + $0xe8] sm:$0xff]
        %v399 = vld [vmem:[%s285 + $0xf0] sm:$0xff]
        %v400 = vld [vmem:[%s285 + $0xf8] sm:$0xff]
        %v401 = vld [vmem:[#allocation6] sm:$0xff]
        %v402 = vld [vmem:[#allocation6 + $0x8] sm:$0xff]
        %v403 = vld [vmem:[#allocation6 + $0x10] sm:$0xff]
        %v404 = vld [vmem:[#allocation6 + $0x18] sm:$0xff]
        %v405 = vld [vmem:[#allocation6 + $0x20] sm:$0xff]
        %v406 = vld [vmem:[#allocation6 + $0x28] sm:$0xff]
        %v407 = vld [vmem:[#allocation6 + $0x30] sm:$0xff]
        %v408 = vld [vmem:[#allocation6 + $0x38] sm:$0xff]
        %v409 = vld [vmem:[#allocation6 + $0x40] sm:$0xff]
        %v410 = vld [vmem:[#allocation6 + $0x48] sm:$0xff]
        %v411 = vld [vmem:[#allocation6 + $0x50] sm:$0xff]
        %v412 = vld [vmem:[#allocation6 + $0x58] sm:$0xff]
        %v413 = vld [vmem:[#allocation6 + $0x60] sm:$0xff]
        %v414 = vld [vmem:[#allocation6 + $0x68] sm:$0xff]
        %v415 = vld [vmem:[#allocation6 + $0x70] sm:$0xff]
        %v416 = vld [vmem:[#allocation6 + $0x78] sm:$0xff]
        %v417 = vld [vmem:[#allocation6 + $0x80] sm:$0xff]
        %v418 = vld [vmem:[#allocation6 + $0x88] sm:$0xff]
        %v419 = vld [vmem:[#allocation6 + $0x90] sm:$0xff]
        %v420 = vld [vmem:[#allocation6 + $0x98] sm:$0xff]
        %v421 = vld [vmem:[#allocation6 + $0xa0] sm:$0xff]
        %v422 = vld [vmem:[#allocation6 + $0xa8] sm:$0xff]
        %v423 = vld [vmem:[#allocation6 + $0xb0] sm:$0xff]
        %v424 = vld [vmem:[#allocation6 + $0xb8] sm:$0xff]
        %v425 = vld [vmem:[#allocation6 + $0xc0] sm:$0xff]
        %v426 = vld [vmem:[#allocation6 + $0xc8] sm:$0xff]
        %v427 = vld [vmem:[#allocation6 + $0xd0] sm:$0xff]
        %v428 = vld [vmem:[#allocation6 + $0xd8] sm:$0xff]
        %v429 = vld [vmem:[#allocation6 + $0xe0] sm:$0xff]
        %v430 = vld [vmem:[#allocation6 + $0xe8] sm:$0xff]
        %v431 = vld [vmem:[#allocation6 + $0xf0] sm:$0xff]
        %v432 = vld [vmem:[#allocation6 + $0xf8] sm:$0xff]
        %v433 = vld [vmem:[#allocation6 + $0x100] sm:$0xff]
        %v434 = vld [vmem:[#allocation6 + $0x108] sm:$0xff]
        %v435 = vld [vmem:[#allocation6 + $0x110] sm:$0xff]
        %v436 = vld [vmem:[#allocation6 + $0x118] sm:$0xff]
        %v437 = vld [vmem:[#allocation6 + $0x120] sm:$0xff]
        %v438 = vld [vmem:[#allocation6 + $0x128] sm:$0xff]
        %v439 = vld [vmem:[#allocation6 + $0x130] sm:$0xff]
        %v440 = vld [vmem:[#allocation6 + $0x138] sm:$0xff]
        %v441 = vld [vmem:[#allocation6 + $0x140] sm:$0xff]
        %v442 = vld [vmem:[#allocation6 + $0x148] sm:$0xff]
        %v443 = vld [vmem:[#allocation6 + $0x150] sm:$0xff]
        %v444 = vld [vmem:[#allocation6 + $0x158] sm:$0xff]
        %v445 = vld [vmem:[#allocation6 + $0x160] sm:$0xff]
        %v446 = vld [vmem:[#allocation6 + $0x168] sm:$0xff]
        %v447 = vld [vmem:[#allocation6 + $0x170] sm:$0xff]
        %v448 = vld [vmem:[#allocation6 + $0x178] sm:$0xff]
        %v449 = vld [vmem:[#allocation6 + $0x180] sm:$0xff]
        %v450 = vld [vmem:[#allocation6 + $0x188] sm:$0xff]
        %v451 = vld [vmem:[#allocation6 + $0x190] sm:$0xff]
        %v452 = vld [vmem:[#allocation6 + $0x198] sm:$0xff]
        %v453 = vld [vmem:[#allocation6 + $0x1a0] sm:$0xff]
        %v454 = vld [vmem:[#allocation6 + $0x1a8] sm:$0xff]
        %v455 = vld [vmem:[#allocation6 + $0x1b0] sm:$0xff]
        %v456 = vld [vmem:[#allocation6 + $0x1b8] sm:$0xff]
        %v457 = vld [vmem:[#allocation6 + $0x1c0] sm:$0xff]
        %v458 = vld [vmem:[#allocation6 + $0x1c8] sm:$0xff]
        %v459 = vld [vmem:[#allocation6 + $0x1d0] sm:$0xff]
        %v460 = vld [vmem:[#allocation6 + $0x1d8] sm:$0xff]
        %v461 = vld [vmem:[#allocation6 + $0x1e0] sm:$0xff]
        %v462 = vld [vmem:[#allocation6 + $0x1e8] sm:$0xff]
        %v463 = vld [vmem:[#allocation6 + $0x1f0] sm:$0xff]
        %v464 = vld [vmem:[#allocation6 + $0x1f8] sm:$0xff]
        %v465 = vld [vmem:[#allocation8] sm:$0xf]
        %v467 = vperm.slane %v465, 0
        %v468 = vperm.slane %v465, 1
        %v469 = vperm.slane %v465, 2
        %v470 = vperm.slane %v465, 3
        %475 = vmatpush.msra.mxu0 %v461
        %476 = vmatpush.msra.mxu0 %v457
        %477 = vmatpush.msra.mxu0 %v453
        %478 = vmatpush.msra.mxu0 %v449
        %479 = vmatpush.msra.mxu0 %v445
        %480 = vmatpush.msra.mxu0 %v441
        %481 = vmatpush.msra.mxu0 %v437
        %482 = vmatpush.msra.mxu0 %v433
        %483 = vmatpush.msra.mxu0 %v429
        %484 = vmatpush.msra.mxu0 %v425
        %485 = vmatpush.msra.mxu0 %v421
        %486 = vmatpush.msra.mxu0 %v417
        %487 = vmatpush.msra.mxu0 %v413
        %488 = vmatpush.msra.mxu0 %v409
        %489 = vmatpush.msra.mxu0 %v405
        %490 = vmatpush.msra.mxu0 %v401
        %491 = vmatmul.f32.gmra.mxu0 %v369
        %v492 = vpop.f32.mrf.mxu0
        %v493 = vadd.f32 %v467, %v492
        %494 = vmatmul.f32.gmra.mxu0 %v370
        %v495 = vpop.f32.mrf.mxu0
        %v496 = vadd.f32 %v467, %v495
        %497 = vmatmul.f32.gmra.mxu0 %v371
        %v498 = vpop.f32.mrf.mxu0
        %v499 = vadd.f32 %v467, %v498
        %500 = vmatmul.f32.gmra.mxu0 %v372
        %v501 = vpop.f32.mrf.mxu0
        %v502 = vadd.f32 %v467, %v501
        %503 = vmatmul.f32.gmra.mxu0 %v373
        %v504 = vpop.f32.mrf.mxu0
        %v505 = vadd.f32 %v467, %v504
        %506 = vmatmul.f32.gmra.mxu0 %v374
        %v507 = vpop.f32.mrf.mxu0
        %v508 = vadd.f32 %v467, %v507
        %509 = vmatmul.f32.gmra.mxu0 %v375
        %v510 = vpop.f32.mrf.mxu0
        %v511 = vadd.f32 %v467, %v510
        %512 = vmatmul.f32.gmra.mxu0 %v376
        %v513 = vpop.f32.mrf.mxu0
        %v514 = vadd.f32 %v467, %v513
        %515 = vmatmul.f32.gmra.mxu0 %v377
        %v516 = vpop.f32.mrf.mxu0
        %v517 = vadd.f32 %v467, %v516
        %518 = vmatmul.f32.gmra.mxu0 %v378
        %v519 = vpop.f32.mrf.mxu0
        %v520 = vadd.f32 %v467, %v519
        %521 = vmatmul.f32.gmra.mxu0 %v379
        %v522 = vpop.f32.mrf.mxu0
        %v523 = vadd.f32 %v467, %v522
        %524 = vmatmul.f32.gmra.mxu0 %v380
        %v525 = vpop.f32.mrf.mxu0
        %v526 = vadd.f32 %v467, %v525
        %527 = vmatmul.f32.gmra.mxu0 %v381
        %v528 = vpop.f32.mrf.mxu0
        %v529 = vadd.f32 %v467, %v528
        %530 = vmatmul.f32.gmra.mxu0 %v382
        %v531 = vpop.f32.mrf.mxu0
        %v532 = vadd.f32 %v467, %v531
        %533 = vmatmul.f32.gmra.mxu0 %v383
        %v534 = vpop.f32.mrf.mxu0
        %v535 = vadd.f32 %v467, %v534
        %536 = vmatmul.f32.gmra.mxu0 %v384
        %v537 = vpop.f32.mrf.mxu0
        %v538 = vadd.f32 %v467, %v537
        %539 = vmatmul.f32.gmra.mxu0 %v385
        %v540 = vpop.f32.mrf.mxu0
        %v541 = vadd.f32 %v467, %v540
        %542 = vmatmul.f32.gmra.mxu0 %v386
        %v543 = vpop.f32.mrf.mxu0
        %v544 = vadd.f32 %v467, %v543
        %545 = vmatmul.f32.gmra.mxu0 %v387
        %v546 = vpop.f32.mrf.mxu0
        %v547 = vadd.f32 %v467, %v546
        %548 = vmatmul.f32.gmra.mxu0 %v388
        %v549 = vpop.f32.mrf.mxu0
        %v550 = vadd.f32 %v467, %v549
        %551 = vmatmul.f32.gmra.mxu0 %v389
        %v552 = vpop.f32.mrf.mxu0
        %v553 = vadd.f32 %v467, %v552
        %554 = vmatmul.f32.gmra.mxu0 %v390
        %v555 = vpop.f32.mrf.mxu0
        %v556 = vadd.f32 %v467, %v555
        %557 = vmatmul.f32.gmra.mxu0 %v391
        %v558 = vpop.f32.mrf.mxu0
        %v559 = vadd.f32 %v467, %v558
        %560 = vmatmul.f32.gmra.mxu0 %v392
        %v561 = vpop.f32.mrf.mxu0
        %v562 = vadd.f32 %v467, %v561
        %563 = vmatmul.f32.gmra.mxu0 %v393
        %v564 = vpop.f32.mrf.mxu0
        %v565 = vadd.f32 %v467, %v564
        %566 = vmatmul.f32.gmra.mxu0 %v394
        %v567 = vpop.f32.mrf.mxu0
        %v568 = vadd.f32 %v467, %v567
        %569 = vmatmul.f32.gmra.mxu0 %v395
        %v570 = vpop.f32.mrf.mxu0
        %v571 = vadd.f32 %v467, %v570
        %572 = vmatmul.f32.gmra.mxu0 %v396
        %v573 = vpop.f32.mrf.mxu0
        %v574 = vadd.f32 %v467, %v573
        %575 = vmatmul.f32.gmra.mxu0 %v397
        %v576 = vpop.f32.mrf.mxu0
        %v577 = vadd.f32 %v467, %v576
        %578 = vmatmul.f32.gmra.mxu0 %v398
        %v579 = vpop.f32.mrf.mxu0
        %v580 = vadd.f32 %v467, %v579
        %581 = vmatmul.f32.gmra.mxu0 %v399
        %v582 = vpop.f32.mrf.mxu0
        %v583 = vadd.f32 %v467, %v582
        %584 = vmatmul.f32.gmra.mxu0 %v400
        %v585 = vpop.f32.mrf.mxu0
        %v586 = vadd.f32 %v467, %v585
        %587 = vdwg.mxu0
        %588 = vmatpush.msra.mxu0 %v462
        %589 = vmatpush.msra.mxu0 %v458
        %590 = vmatpush.msra.mxu0 %v454
        %591 = vmatpush.msra.mxu0 %v450
        %592 = vmatpush.msra.mxu0 %v446
        %593 = vmatpush.msra.mxu0 %v442
        %594 = vmatpush.msra.mxu0 %v438
        %595 = vmatpush.msra.mxu0 %v434
        %596 = vmatpush.msra.mxu0 %v430
        %597 = vmatpush.msra.mxu0 %v426
        %598 = vmatpush.msra.mxu0 %v422
        %599 = vmatpush.msra.mxu0 %v418
        %600 = vmatpush.msra.mxu0 %v414
        %601 = vmatpush.msra.mxu0 %v410
        %602 = vmatpush.msra.mxu0 %v406
        %603 = vmatpush.msra.mxu0 %v402
        %604 = vmatmul.f32.gmra.mxu0 %v369
        %v605 = vpop.f32.mrf.mxu0
        %v606 = vadd.f32 %v468, %v605
        %607 = vmatmul.f32.gmra.mxu0 %v370
        %v608 = vpop.f32.mrf.mxu0
        %v609 = vadd.f32 %v468, %v608
        %610 = vmatmul.f32.gmra.mxu0 %v371
        %v611 = vpop.f32.mrf.mxu0
        %v612 = vadd.f32 %v468, %v611
        %613 = vmatmul.f32.gmra.mxu0 %v372
        %v614 = vpop.f32.mrf.mxu0
        %v615 = vadd.f32 %v468, %v614
        %616 = vmatmul.f32.gmra.mxu0 %v373
        %v617 = vpop.f32.mrf.mxu0
        %v618 = vadd.f32 %v468, %v617
        %619 = vmatmul.f32.gmra.mxu0 %v374
        %v620 = vpop.f32.mrf.mxu0
        %v621 = vadd.f32 %v468, %v620
        %622 = vmatmul.f32.gmra.mxu0 %v375
        %v623 = vpop.f32.mrf.mxu0
        %v624 = vadd.f32 %v468, %v623
        %625 = vmatmul.f32.gmra.mxu0 %v376
        %v626 = vpop.f32.mrf.mxu0
        %v627 = vadd.f32 %v468, %v626
        %628 = vmatmul.f32.gmra.mxu0 %v377
        %v629 = vpop.f32.mrf.mxu0
        %v630 = vadd.f32 %v468, %v629
        %631 = vmatmul.f32.gmra.mxu0 %v378
        %v632 = vpop.f32.mrf.mxu0
        %v633 = vadd.f32 %v468, %v632
        %634 = vmatmul.f32.gmra.mxu0 %v379
        %v635 = vpop.f32.mrf.mxu0
        %v636 = vadd.f32 %v468, %v635
        %637 = vmatmul.f32.gmra.mxu0 %v380
        %v638 = vpop.f32.mrf.mxu0
        %v639 = vadd.f32 %v468, %v638
        %640 = vmatmul.f32.gmra.mxu0 %v381
        %v641 = vpop.f32.mrf.mxu0
        %v642 = vadd.f32 %v468, %v641
        %643 = vmatmul.f32.gmra.mxu0 %v382
        %v644 = vpop.f32.mrf.mxu0
        %v645 = vadd.f32 %v468, %v644
        %646 = vmatmul.f32.gmra.mxu0 %v383
        %v647 = vpop.f32.mrf.mxu0
        %v648 = vadd.f32 %v468, %v647
        %649 = vmatmul.f32.gmra.mxu0 %v384
        %v650 = vpop.f32.mrf.mxu0
        %v651 = vadd.f32 %v468, %v650
        %652 = vmatmul.f32.gmra.mxu0 %v385
        %v653 = vpop.f32.mrf.mxu0
        %v654 = vadd.f32 %v468, %v653
        %655 = vmatmul.f32.gmra.mxu0 %v386
        %v656 = vpop.f32.mrf.mxu0
        %v657 = vadd.f32 %v468, %v656
        %658 = vmatmul.f32.gmra.mxu0 %v387
        %v659 = vpop.f32.mrf.mxu0
        %v660 = vadd.f32 %v468, %v659
        %661 = vmatmul.f32.gmra.mxu0 %v388
        %v662 = vpop.f32.mrf.mxu0
        %v663 = vadd.f32 %v468, %v662
        %664 = vmatmul.f32.gmra.mxu0 %v389
        %v665 = vpop.f32.mrf.mxu0
        %v666 = vadd.f32 %v468, %v665
        %667 = vmatmul.f32.gmra.mxu0 %v390
        %v668 = vpop.f32.mrf.mxu0
        %v669 = vadd.f32 %v468, %v668
        %670 = vmatmul.f32.gmra.mxu0 %v391
        %v671 = vpop.f32.mrf.mxu0
        %v672 = vadd.f32 %v468, %v671
        %673 = vmatmul.f32.gmra.mxu0 %v392
        %v674 = vpop.f32.mrf.mxu0
        %v675 = vadd.f32 %v468, %v674
        %676 = vmatmul.f32.gmra.mxu0 %v393
        %v677 = vpop.f32.mrf.mxu0
        %v678 = vadd.f32 %v468, %v677
        %679 = vmatmul.f32.gmra.mxu0 %v394
        %v680 = vpop.f32.mrf.mxu0
        %v681 = vadd.f32 %v468, %v680
        %682 = vmatmul.f32.gmra.mxu0 %v395
        %v683 = vpop.f32.mrf.mxu0
        %v684 = vadd.f32 %v468, %v683
        %685 = vmatmul.f32.gmra.mxu0 %v396
        %v686 = vpop.f32.mrf.mxu0
        %v687 = vadd.f32 %v468, %v686
        %688 = vmatmul.f32.gmra.mxu0 %v397
        %v689 = vpop.f32.mrf.mxu0
        %v690 = vadd.f32 %v468, %v689
        %691 = vmatmul.f32.gmra.mxu0 %v398
        %v692 = vpop.f32.mrf.mxu0
        %v693 = vadd.f32 %v468, %v692
        %694 = vmatmul.f32.gmra.mxu0 %v399
        %v695 = vpop.f32.mrf.mxu0
        %v696 = vadd.f32 %v468, %v695
        %697 = vmatmul.f32.gmra.mxu0 %v400
        %v698 = vpop.f32.mrf.mxu0
        %v699 = vadd.f32 %v468, %v698
        %700 = vdwg.mxu0
        %701 = vmatpush.msra.mxu0 %v463
        %702 = vmatpush.msra.mxu0 %v459
        %703 = vmatpush.msra.mxu0 %v455
        %704 = vmatpush.msra.mxu0 %v451
        %705 = vmatpush.msra.mxu0 %v447
        %706 = vmatpush.msra.mxu0 %v443
        %707 = vmatpush.msra.mxu0 %v439
        %708 = vmatpush.msra.mxu0 %v435
        %709 = vmatpush.msra.mxu0 %v431
        %710 = vmatpush.msra.mxu0 %v427
        %711 = vmatpush.msra.mxu0 %v423
        %712 = vmatpush.msra.mxu0 %v419
        %713 = vmatpush.msra.mxu0 %v415
        %714 = vmatpush.msra.mxu0 %v411
        %715 = vmatpush.msra.mxu0 %v407
        %716 = vmatpush.msra.mxu0 %v403
        %717 = vmatmul.f32.gmra.mxu0 %v369
        %v718 = vpop.f32.mrf.mxu0
        %v719 = vadd.f32 %v469, %v718
        %720 = vmatmul.f32.gmra.mxu0 %v370
        %v721 = vpop.f32.mrf.mxu0
        %v722 = vadd.f32 %v469, %v721
        %723 = vmatmul.f32.gmra.mxu0 %v371
        %v724 = vpop.f32.mrf.mxu0
        %v725 = vadd.f32 %v469, %v724
        %726 = vmatmul.f32.gmra.mxu0 %v372
        %v727 = vpop.f32.mrf.mxu0
        %v728 = vadd.f32 %v469, %v727
        %729 = vmatmul.f32.gmra.mxu0 %v373
        %v730 = vpop.f32.mrf.mxu0
        %v731 = vadd.f32 %v469, %v730
        %732 = vmatmul.f32.gmra.mxu0 %v374
        %v733 = vpop.f32.mrf.mxu0
        %v734 = vadd.f32 %v469, %v733
        %735 = vmatmul.f32.gmra.mxu0 %v375
        %v736 = vpop.f32.mrf.mxu0
        %v737 = vadd.f32 %v469, %v736
        %738 = vmatmul.f32.gmra.mxu0 %v376
        %v739 = vpop.f32.mrf.mxu0
        %v740 = vadd.f32 %v469, %v739
        %741 = vmatmul.f32.gmra.mxu0 %v377
        %v742 = vpop.f32.mrf.mxu0
        %v743 = vadd.f32 %v469, %v742
        %744 = vmatmul.f32.gmra.mxu0 %v378
        %v745 = vpop.f32.mrf.mxu0
        %v746 = vadd.f32 %v469, %v745
        %747 = vmatmul.f32.gmra.mxu0 %v379
        %v748 = vpop.f32.mrf.mxu0
        %v749 = vadd.f32 %v469, %v748
        %750 = vmatmul.f32.gmra.mxu0 %v380
        %v751 = vpop.f32.mrf.mxu0
        %v752 = vadd.f32 %v469, %v751
        %753 = vmatmul.f32.gmra.mxu0 %v381
        %v754 = vpop.f32.mrf.mxu0
        %v755 = vadd.f32 %v469, %v754
        %756 = vmatmul.f32.gmra.mxu0 %v382
        %v757 = vpop.f32.mrf.mxu0
        %v758 = vadd.f32 %v469, %v757
        %759 = vmatmul.f32.gmra.mxu0 %v383
        %v760 = vpop.f32.mrf.mxu0
        %v761 = vadd.f32 %v469, %v760
        %762 = vmatmul.f32.gmra.mxu0 %v384
        %v763 = vpop.f32.mrf.mxu0
        %v764 = vadd.f32 %v469, %v763
        %765 = vmatmul.f32.gmra.mxu0 %v385
        %v766 = vpop.f32.mrf.mxu0
        %v767 = vadd.f32 %v469, %v766
        %768 = vmatmul.f32.gmra.mxu0 %v386
        %v769 = vpop.f32.mrf.mxu0
        %v770 = vadd.f32 %v469, %v769
        %771 = vmatmul.f32.gmra.mxu0 %v387
        %v772 = vpop.f32.mrf.mxu0
        %v773 = vadd.f32 %v469, %v772
        %774 = vmatmul.f32.gmra.mxu0 %v388
        %v775 = vpop.f32.mrf.mxu0
        %v776 = vadd.f32 %v469, %v775
        %777 = vmatmul.f32.gmra.mxu0 %v389
        %v778 = vpop.f32.mrf.mxu0
        %v779 = vadd.f32 %v469, %v778
        %780 = vmatmul.f32.gmra.mxu0 %v390
        %v781 = vpop.f32.mrf.mxu0
        %v782 = vadd.f32 %v469, %v781
        %783 = vmatmul.f32.gmra.mxu0 %v391
        %v784 = vpop.f32.mrf.mxu0
        %v785 = vadd.f32 %v469, %v784
        %786 = vmatmul.f32.gmra.mxu0 %v392
        %v787 = vpop.f32.mrf.mxu0
        %v788 = vadd.f32 %v469, %v787
        %789 = vmatmul.f32.gmra.mxu0 %v393
        %v790 = vpop.f32.mrf.mxu0
        %v791 = vadd.f32 %v469, %v790
        %792 = vmatmul.f32.gmra.mxu0 %v394
        %v793 = vpop.f32.mrf.mxu0
        %v794 = vadd.f32 %v469, %v793
        %795 = vmatmul.f32.gmra.mxu0 %v395
        %v796 = vpop.f32.mrf.mxu0
        %v797 = vadd.f32 %v469, %v796
        %798 = vmatmul.f32.gmra.mxu0 %v396
        %v799 = vpop.f32.mrf.mxu0
        %v800 = vadd.f32 %v469, %v799
        %801 = vmatmul.f32.gmra.mxu0 %v397
        %v802 = vpop.f32.mrf.mxu0
        %v803 = vadd.f32 %v469, %v802
        %804 = vmatmul.f32.gmra.mxu0 %v398
        %v805 = vpop.f32.mrf.mxu0
        %v806 = vadd.f32 %v469, %v805
        %807 = vmatmul.f32.gmra.mxu0 %v399
        %v808 = vpop.f32.mrf.mxu0
        %v809 = vadd.f32 %v469, %v808
        %810 = vmatmul.f32.gmra.mxu0 %v400
        %v811 = vpop.f32.mrf.mxu0
        %v812 = vadd.f32 %v469, %v811
        %813 = vdwg.mxu0
        %814 = vmatpush.msra.mxu0 %v464
        %815 = vmatpush.msra.mxu0 %v460
        %816 = vmatpush.msra.mxu0 %v456
        %817 = vmatpush.msra.mxu0 %v452
        %818 = vmatpush.msra.mxu0 %v448
        %819 = vmatpush.msra.mxu0 %v444
        %820 = vmatpush.msra.mxu0 %v440
        %821 = vmatpush.msra.mxu0 %v436
        %822 = vmatpush.msra.mxu0 %v432
        %823 = vmatpush.msra.mxu0 %v428
        %824 = vmatpush.msra.mxu0 %v424
        %825 = vmatpush.msra.mxu0 %v420
        %826 = vmatpush.msra.mxu0 %v416
        %827 = vmatpush.msra.mxu0 %v412
        %828 = vmatpush.msra.mxu0 %v408
        %829 = vmatpush.msra.mxu0 %v404
        %830 = vmatmul.f32.gmra.mxu0 %v369
        %v831 = vpop.f32.mrf.mxu0
        %v832 = vadd.f32 %v470, %v831
        %833 = vmatmul.f32.gmra.mxu0 %v370
        %v834 = vpop.f32.mrf.mxu0
        %v835 = vadd.f32 %v470, %v834
        %836 = vmatmul.f32.gmra.mxu0 %v371
        %v837 = vpop.f32.mrf.mxu0
        %v838 = vadd.f32 %v470, %v837
        %839 = vmatmul.f32.gmra.mxu0 %v372
        %v840 = vpop.f32.mrf.mxu0
        %v841 = vadd.f32 %v470, %v840
        %842 = vmatmul.f32.gmra.mxu0 %v373
        %v843 = vpop.f32.mrf.mxu0
        %v844 = vadd.f32 %v470, %v843
        %845 = vmatmul.f32.gmra.mxu0 %v374
        %v846 = vpop.f32.mrf.mxu0
        %v847 = vadd.f32 %v470, %v846
        %848 = vmatmul.f32.gmra.mxu0 %v375
        %v849 = vpop.f32.mrf.mxu0
        %v850 = vadd.f32 %v470, %v849
        %851 = vmatmul.f32.gmra.mxu0 %v376
        %v852 = vpop.f32.mrf.mxu0
        %v853 = vadd.f32 %v470, %v852
        %854 = vmatmul.f32.gmra.mxu0 %v377
        %v855 = vpop.f32.mrf.mxu0
        %v856 = vadd.f32 %v470, %v855
        %857 = vmatmul.f32.gmra.mxu0 %v378
        %v858 = vpop.f32.mrf.mxu0
        %v859 = vadd.f32 %v470, %v858
        %860 = vmatmul.f32.gmra.mxu0 %v379
        %v861 = vpop.f32.mrf.mxu0
        %v862 = vadd.f32 %v470, %v861
        %863 = vmatmul.f32.gmra.mxu0 %v380
        %v864 = vpop.f32.mrf.mxu0
        %v865 = vadd.f32 %v470, %v864
        %866 = vmatmul.f32.gmra.mxu0 %v381
        %v867 = vpop.f32.mrf.mxu0
        %v868 = vadd.f32 %v470, %v867
        %869 = vmatmul.f32.gmra.mxu0 %v382
        %v870 = vpop.f32.mrf.mxu0
        %v871 = vadd.f32 %v470, %v870
        %872 = vmatmul.f32.gmra.mxu0 %v383
        %v873 = vpop.f32.mrf.mxu0
        %v874 = vadd.f32 %v470, %v873
        %875 = vmatmul.f32.gmra.mxu0 %v384
        %v876 = vpop.f32.mrf.mxu0
        %v877 = vadd.f32 %v470, %v876
        %878 = vmatmul.f32.gmra.mxu0 %v385
        %v879 = vpop.f32.mrf.mxu0
        %v880 = vadd.f32 %v470, %v879
        %881 = vmatmul.f32.gmra.mxu0 %v386
        %v882 = vpop.f32.mrf.mxu0
        %v883 = vadd.f32 %v470, %v882
        %884 = vmatmul.f32.gmra.mxu0 %v387
        %v885 = vpop.f32.mrf.mxu0
        %v886 = vadd.f32 %v470, %v885
        %887 = vmatmul.f32.gmra.mxu0 %v388
        %v888 = vpop.f32.mrf.mxu0
        %v889 = vadd.f32 %v470, %v888
        %890 = vmatmul.f32.gmra.mxu0 %v389
        %v891 = vpop.f32.mrf.mxu0
        %v892 = vadd.f32 %v470, %v891
        %893 = vmatmul.f32.gmra.mxu0 %v390
        %v894 = vpop.f32.mrf.mxu0
        %v895 = vadd.f32 %v470, %v894
        %896 = vmatmul.f32.gmra.mxu0 %v391
        %v897 = vpop.f32.mrf.mxu0
        %v898 = vadd.f32 %v470, %v897
        %899 = vmatmul.f32.gmra.mxu0 %v392
        %v900 = vpop.f32.mrf.mxu0
        %v901 = vadd.f32 %v470, %v900
        %902 = vmatmul.f32.gmra.mxu0 %v393
        %v903 = vpop.f32.mrf.mxu0
        %v904 = vadd.f32 %v470, %v903
        %905 = vmatmul.f32.gmra.mxu0 %v394
        %v906 = vpop.f32.mrf.mxu0
        %v907 = vadd.f32 %v470, %v906
        %908 = vmatmul.f32.gmra.mxu0 %v395
        %v909 = vpop.f32.mrf.mxu0
        %v910 = vadd.f32 %v470, %v909
        %911 = vmatmul.f32.gmra.mxu0 %v396
        %v912 = vpop.f32.mrf.mxu0
        %v913 = vadd.f32 %v470, %v912
        %914 = vmatmul.f32.gmra.mxu0 %v397
        %v915 = vpop.f32.mrf.mxu0
        %v916 = vadd.f32 %v470, %v915
        %917 = vmatmul.f32.gmra.mxu0 %v398
        %v918 = vpop.f32.mrf.mxu0
        %v919 = vadd.f32 %v470, %v918
        %920 = vmatmul.f32.gmra.mxu0 %v399
        %v921 = vpop.f32.mrf.mxu0
        %v922 = vadd.f32 %v470, %v921
        %923 = vmatmul.f32.gmra.mxu0 %v400
        %v924 = vpop.f32.mrf.mxu0
        %v925 = vadd.f32 %v470, %v924
        %926 = vdwg.mxu0
        %v927 = vmul.f32 %v493, 0.5
        %v928 = vmul.f32 %v606, 0.5
        %v929 = vmul.f32 %v719, 0.5
        %v930 = vmul.f32 %v832, 0.5
        %v931 = vmul.f32 %v496, 0.5
        %v932 = vmul.f32 %v609, 0.5
        %v933 = vmul.f32 %v722, 0.5
        %v934 = vmul.f32 %v835, 0.5
        %v935 = vmul.f32 %v499, 0.5
        %v936 = vmul.f32 %v612, 0.5
        %v937 = vmul.f32 %v725, 0.5
        %v938 = vmul.f32 %v838, 0.5
        %v939 = vmul.f32 %v502, 0.5
        %v940 = vmul.f32 %v615, 0.5
        %v941 = vmul.f32 %v728, 0.5
        %v942 = vmul.f32 %v841, 0.5
        %v943 = vmul.f32 %v505, 0.5
        %v944 = vmul.f32 %v618, 0.5
        %v945 = vmul.f32 %v731, 0.5
        %v946 = vmul.f32 %v844, 0.5
        %v947 = vmul.f32 %v508, 0.5
        %v948 = vmul.f32 %v621, 0.5
        %v949 = vmul.f32 %v734, 0.5
        %v950 = vmul.f32 %v847, 0.5
        %v951 = vmul.f32 %v511, 0.5
        %v952 = vmul.f32 %v624, 0.5
        %v953 = vmul.f32 %v737, 0.5
        %v954 = vmul.f32 %v850, 0.5
        %v955 = vmul.f32 %v514, 0.5
        %v956 = vmul.f32 %v627, 0.5
        %v957 = vmul.f32 %v740, 0.5
        %v958 = vmul.f32 %v853, 0.5
        %v959 = vmul.f32 %v517, 0.5
        %v960 = vmul.f32 %v630, 0.5
        %v961 = vmul.f32 %v743, 0.5
        %v962 = vmul.f32 %v856, 0.5
        %v963 = vmul.f32 %v520, 0.5
        %v964 = vmul.f32 %v633, 0.5
        %v965 = vmul.f32 %v746, 0.5
        %v966 = vmul.f32 %v859, 0.5
        %v967 = vmul.f32 %v523, 0.5
        %v968 = vmul.f32 %v636, 0.5
        %v969 = vmul.f32 %v749, 0.5
        %v970 = vmul.f32 %v862, 0.5
        %v971 = vmul.f32 %v526, 0.5
        %v972 = vmul.f32 %v639, 0.5
        %v973 = vmul.f32 %v752, 0.5
        %v974 = vmul.f32 %v865, 0.5
        %v975 = vmul.f32 %v529, 0.5
        %v976 = vmul.f32 %v642, 0.5
        %v977 = vmul.f32 %v755, 0.5
        %v978 = vmul.f32 %v868, 0.5
        %v979 = vmul.f32 %v532, 0.5
        %v980 = vmul.f32 %v645, 0.5
        %v981 = vmul.f32 %v758, 0.5
        %v982 = vmul.f32 %v871, 0.5
        %v983 = vmul.f32 %v535, 0.5
        %v984 = vmul.f32 %v648, 0.5
        %v985 = vmul.f32 %v761, 0.5
        %v986 = vmul.f32 %v874, 0.5
        %v987 = vmul.f32 %v538, 0.5
        %v988 = vmul.f32 %v651, 0.5
        %v989 = vmul.f32 %v764, 0.5
        %v990 = vmul.f32 %v877, 0.5
        %v991 = vmul.f32 %v541, 0.5
        %v992 = vmul.f32 %v654, 0.5
        %v993 = vmul.f32 %v767, 0.5
        %v994 = vmul.f32 %v880, 0.5
        %v995 = vmul.f32 %v544, 0.5
        %v996 = vmul.f32 %v657, 0.5
        %v997 = vmul.f32 %v770, 0.5
        %v998 = vmul.f32 %v883, 0.5
        %v999 = vmul.f32 %v547, 0.5
        %v1000 = vmul.f32 %v660, 0.5
        %v1001 = vmul.f32 %v773, 0.5
        %v1002 = vmul.f32 %v886, 0.5
        %v1003 = vmul.f32 %v550, 0.5
        %v1004 = vmul.f32 %v663, 0.5
        %v1005 = vmul.f32 %v776, 0.5
        %v1006 = vmul.f32 %v889, 0.5
        %v1007 = vmul.f32 %v553, 0.5
        %v1008 = vmul.f32 %v666, 0.5
        %v1009 = vmul.f32 %v779, 0.5
        %v1010 = vmul.f32 %v892, 0.5
        %v1011 = vmul.f32 %v556, 0.5
        %v1012 = vmul.f32 %v669, 0.5
        %v1013 = vmul.f32 %v782, 0.5
        %v1014 = vmul.f32 %v895, 0.5
        %v1015 = vmul.f32 %v559, 0.5
        %v1016 = vmul.f32 %v672, 0.5
        %v1017 = vmul.f32 %v785, 0.5
        %v1018 = vmul.f32 %v898, 0.5
        %v1019 = vmul.f32 %v562, 0.5
        %v1020 = vmul.f32 %v675, 0.5
        %v1021 = vmul.f32 %v788, 0.5
        %v1022 = vmul.f32 %v901, 0.5
        %v1023 = vmul.f32 %v565, 0.5
        %v1024 = vmul.f32 %v678, 0.5
        %v1025 = vmul.f32 %v791, 0.5
        %v1026 = vmul.f32 %v904, 0.5
        %v1027 = vmul.f32 %v568, 0.5
        %v1028 = vmul.f32 %v681, 0.5
        %v1029 = vmul.f32 %v794, 0.5
        %v1030 = vmul.f32 %v907, 0.5
        %v1031 = vmul.f32 %v571, 0.5
        %v1032 = vmul.f32 %v684, 0.5
        %v1033 = vmul.f32 %v797, 0.5
        %v1034 = vmul.f32 %v910, 0.5
        %v1035 = vmul.f32 %v574, 0.5
        %v1036 = vmul.f32 %v687, 0.5
        %v1037 = vmul.f32 %v800, 0.5
        %v1038 = vmul.f32 %v913, 0.5
        %v1039 = vmul.f32 %v577, 0.5
        %v1040 = vmul.f32 %v690, 0.5
        %v1041 = vmul.f32 %v803, 0.5
        %v1042 = vmul.f32 %v916, 0.5
        %v1043 = vmul.f32 %v580, 0.5
        %v1044 = vmul.f32 %v693, 0.5
        %v1045 = vmul.f32 %v806, 0.5
        %v1046 = vmul.f32 %v919, 0.5
        %v1047 = vmul.f32 %v583, 0.5
        %v1048 = vmul.f32 %v696, 0.5
        %v1049 = vmul.f32 %v809, 0.5
        %v1050 = vmul.f32 %v922, 0.5
        %v1051 = vmul.f32 %v586, 0.5
        %v1052 = vmul.f32 %v699, 0.5
        %v1053 = vmul.f32 %v812, 0.5
        %v1054 = vmul.f32 %v925, 0.5
        %v1055 = vmul.f32 %v493, 0.70710677
        %v1056 = vmul.f32 %v606, 0.70710677
        %v1057 = vmul.f32 %v719, 0.70710677
        %v1058 = vmul.f32 %v832, 0.70710677
        %v1059 = vmul.f32 %v496, 0.70710677
        %v1060 = vmul.f32 %v609, 0.70710677
        %v1061 = vmul.f32 %v722, 0.70710677
        %v1062 = vmul.f32 %v835, 0.70710677
        %v1063 = vmul.f32 %v499, 0.70710677
        %v1064 = vmul.f32 %v612, 0.70710677
        %v1065 = vmul.f32 %v725, 0.70710677
        %v1066 = vmul.f32 %v838, 0.70710677
        %v1067 = vmul.f32 %v502, 0.70710677
        %v1068 = vmul.f32 %v615, 0.70710677
        %v1069 = vmul.f32 %v728, 0.70710677
        %v1070 = vmul.f32 %v841, 0.70710677
        %v1071 = vmul.f32 %v505, 0.70710677
        %v1072 = vmul.f32 %v618, 0.70710677
        %v1073 = vmul.f32 %v731, 0.70710677
        %v1074 = vmul.f32 %v844, 0.70710677
        %v1075 = vmul.f32 %v508, 0.70710677
        %v1076 = vmul.f32 %v621, 0.70710677
        %v1077 = vmul.f32 %v734, 0.70710677
        %v1078 = vmul.f32 %v847, 0.70710677
        %v1079 = vmul.f32 %v511, 0.70710677
        %v1080 = vmul.f32 %v624, 0.70710677
        %v1081 = vmul.f32 %v737, 0.70710677
        %v1082 = vmul.f32 %v850, 0.70710677
        %v1083 = vmul.f32 %v514, 0.70710677
        %v1084 = vmul.f32 %v627, 0.70710677
        %v1085 = vmul.f32 %v740, 0.70710677
        %v1086 = vmul.f32 %v853, 0.70710677
        %v1087 = vmul.f32 %v517, 0.70710677
        %v1088 = vmul.f32 %v630, 0.70710677
        %v1089 = vmul.f32 %v743, 0.70710677
        %v1090 = vmul.f32 %v856, 0.70710677
        %v1091 = vmul.f32 %v520, 0.70710677
        %v1092 = vmul.f32 %v633, 0.70710677
        %v1093 = vmul.f32 %v746, 0.70710677
        %v1094 = vmul.f32 %v859, 0.70710677
        %v1095 = vmul.f32 %v523, 0.70710677
        %v1096 = vmul.f32 %v636, 0.70710677
        %v1097 = vmul.f32 %v749, 0.70710677
        %v1098 = vmul.f32 %v862, 0.70710677
        %v1099 = vmul.f32 %v526, 0.70710677
        %v1100 = vmul.f32 %v639, 0.70710677
        %v1101 = vmul.f32 %v752, 0.70710677
        %v1102 = vmul.f32 %v865, 0.70710677
        %v1103 = vmul.f32 %v529, 0.70710677
        %v1104 = vmul.f32 %v642, 0.70710677
        %v1105 = vmul.f32 %v755, 0.70710677
        %v1106 = vmul.f32 %v868, 0.70710677
        %v1107 = vmul.f32 %v532, 0.70710677
        %v1108 = vmul.f32 %v645, 0.70710677
        %v1109 = vmul.f32 %v758, 0.70710677
        %v1110 = vmul.f32 %v871, 0.70710677
        %v1111 = vmul.f32 %v535, 0.70710677
        %v1112 = vmul.f32 %v648, 0.70710677
        %v1113 = vmul.f32 %v761, 0.70710677
        %v1114 = vmul.f32 %v874, 0.70710677
        %v1115 = vmul.f32 %v538, 0.70710677
        %v1116 = vmul.f32 %v651, 0.70710677
        %v1117 = vmul.f32 %v764, 0.70710677
        %v1118 = vmul.f32 %v877, 0.70710677
        %v1119 = vmul.f32 %v541, 0.70710677
        %v1120 = vmul.f32 %v654, 0.70710677
        %v1121 = vmul.f32 %v767, 0.70710677
        %v1122 = vmul.f32 %v880, 0.70710677
        %v1123 = vmul.f32 %v544, 0.70710677
        %v1124 = vmul.f32 %v657, 0.70710677
        %v1125 = vmul.f32 %v770, 0.70710677
        %v1126 = vmul.f32 %v883, 0.70710677
        %v1127 = vmul.f32 %v547, 0.70710677
        %v1128 = vmul.f32 %v660, 0.70710677
        %v1129 = vmul.f32 %v773, 0.70710677
        %v1130 = vmul.f32 %v886, 0.70710677
        %v1131 = vmul.f32 %v550, 0.70710677
        %v1132 = vmul.f32 %v663, 0.70710677
        %v1133 = vmul.f32 %v776, 0.70710677
        %v1134 = vmul.f32 %v889, 0.70710677
        %v1135 = vmul.f32 %v553, 0.70710677
        %v1136 = vmul.f32 %v666, 0.70710677
        %v1137 = vmul.f32 %v779, 0.70710677
        %v1138 = vmul.f32 %v892, 0.70710677
        %v1139 = vmul.f32 %v556, 0.70710677
        %v1140 = vmul.f32 %v669, 0.70710677
        %v1141 = vmul.f32 %v782, 0.70710677
        %v1142 = vmul.f32 %v895, 0.70710677
        %v1143 = vmul.f32 %v559, 0.70710677
        %v1144 = vmul.f32 %v672, 0.70710677
        %v1145 = vmul.f32 %v785, 0.70710677
        %v1146 = vmul.f32 %v898, 0.70710677
        %v1147 = vmul.f32 %v562, 0.70710677
        %v1148 = vmul.f32 %v675, 0.70710677
        %v1149 = vmul.f32 %v788, 0.70710677
        %v1150 = vmul.f32 %v901, 0.70710677
        %v1151 = vmul.f32 %v565, 0.70710677
        %v1152 = vmul.f32 %v678, 0.70710677
        %v1153 = vmul.f32 %v791, 0.70710677
        %v1154 = vmul.f32 %v904, 0.70710677
        %v1155 = vmul.f32 %v568, 0.70710677
        %v1156 = vmul.f32 %v681, 0.70710677
        %v1157 = vmul.f32 %v794, 0.70710677
        %v1158 = vmul.f32 %v907, 0.70710677
        %v1159 = vmul.f32 %v571, 0.70710677
        %v1160 = vmul.f32 %v684, 0.70710677
        %v1161 = vmul.f32 %v797, 0.70710677
        %v1162 = vmul.f32 %v910, 0.70710677
        %v1163 = vmul.f32 %v574, 0.70710677
        %v1164 = vmul.f32 %v687, 0.70710677
        %v1165 = vmul.f32 %v800, 0.70710677
        %v1166 = vmul.f32 %v913, 0.70710677
        %v1167 = vmul.f32 %v577, 0.70710677
        %v1168 = vmul.f32 %v690, 0.70710677
        %v1169 = vmul.f32 %v803, 0.70710677
        %v1170 = vmul.f32 %v916, 0.70710677
        %v1171 = vmul.f32 %v580, 0.70710677
        %v1172 = vmul.f32 %v693, 0.70710677
        %v1173 = vmul.f32 %v806, 0.70710677
        %v1174 = vmul.f32 %v919, 0.70710677
        %v1175 = vmul.f32 %v583, 0.70710677
        %v1176 = vmul.f32 %v696, 0.70710677
        %v1177 = vmul.f32 %v809, 0.70710677
        %v1178 = vmul.f32 %v922, 0.70710677
        %v1179 = vmul.f32 %v586, 0.70710677
        %v1180 = vmul.f32 %v699, 0.70710677
        %v1181 = vmul.f32 %v812, 0.70710677
        %v1182 = vmul.f32 %v925, 0.70710677
        %v1183 = vmul.f32 %v1055, %v1055
        %v1184 = vmin.f32 16.0, %v1183
        %v1185 = vmul.f32 %v1184, 2.1237322e-06
        %v1186 = vadd.f32 %v1185, 0.00028619796
        %v1187 = vmul.f32 %v1184, %v1186
        %v1188 = vadd.f32 %v1187, 0.0036580483
        %v1189 = vmul.f32 %v1184, %v1188
        %v1190 = vadd.f32 %v1189, 0.05243302
        %v1191 = vmul.f32 %v1184, %v1190
        %v1192 = vadd.f32 %v1191, 0.18741608
        %v1193 = vmul.f32 %v1184, %v1192
        %v1194 = vadd.f32 %v1193, 1.1283791
        %v1195 = vmul.f32 %v1055, %v1194
        %v1196 = vmul.f32 %v1184, 3.8918573e-05
        %v1197 = vadd.f32 %v1196, 0.001143296
        %v1198 = vmul.f32 %v1184, %v1197
        %v1199 = vadd.f32 %v1198, 0.014752088
        %v1200 = vmul.f32 %v1184, %v1199
        %v1201 = vadd.f32 %v1200, 0.112945676
        %v1202 = vmul.f32 %v1184, %v1201
        %v1203 = vadd.f32 %v1202, 0.4994258
        %v1204 = vmul.f32 %v1184, %v1203
        %v1205 = vadd.f32 %v1204, 1.0
        %v1206 = vrcp.pop %v1205
        %v1207 = vmul.f32 %v1205, %v1206
        %v1208 = vsub.f32 1.0, %v1207
        %v1209 = vmul.f32 %v1206, %v1208
        %v1210 = vadd.f32 %v1206, %v1209
        %vm1211 = vweird.f32 %v1205
        %vm1212 = vweird.f32 %v1206
        %vm1213 = vmor %vm1211, %vm1212
        %v1214 = vsel %vm1213, %v1206, %v1210
        %v1215 = vand.u32 2147483647, %v1205
        %vm1216 = vcmp.eq.f32.partialorder %v1215, 8.507059e+37
        %v1217 = vand.u32 %v1205, 2147483648
        %v1218 = vor.u32 1.1754944e-38, %v1217
        %v1219 = vsel %vm1216, %v1218, %v1214
        %v1220 = vmul.f32 %v1195, %v1219
        %v1221 = vmin.f32 %v1220, 1.0
        %v1222 = vmax.f32 %v1221, -1.0
        %v1223 = vmul.f32 %v1056, %v1056
        %v1224 = vmin.f32 16.0, %v1223
        %v1225 = vmul.f32 %v1224, 2.1237322e-06
        %v1226 = vadd.f32 %v1225, 0.00028619796
        %v1227 = vmul.f32 %v1224, %v1226
        %v1228 = vadd.f32 %v1227, 0.0036580483
        %v1229 = vmul.f32 %v1224, %v1228
        %v1230 = vadd.f32 %v1229, 0.05243302
        %v1231 = vmul.f32 %v1224, %v1230
        %v1232 = vadd.f32 %v1231, 0.18741608
        %v1233 = vmul.f32 %v1224, %v1232
        %v1234 = vadd.f32 %v1233, 1.1283791
        %v1235 = vmul.f32 %v1056, %v1234
        %v1236 = vmul.f32 %v1224, 3.8918573e-05
        %v1237 = vadd.f32 %v1236, 0.001143296
        %v1238 = vmul.f32 %v1224, %v1237
        %v1239 = vadd.f32 %v1238, 0.014752088
        %v1240 = vmul.f32 %v1224, %v1239
        %v1241 = vadd.f32 %v1240, 0.112945676
        %v1242 = vmul.f32 %v1224, %v1241
        %v1243 = vadd.f32 %v1242, 0.4994258
        %v1244 = vmul.f32 %v1224, %v1243
        %v1245 = vadd.f32 %v1244, 1.0
        %v1246 = vrcp.pop %v1245
        %v1247 = vmul.f32 %v1245, %v1246
        %v1248 = vsub.f32 1.0, %v1247
        %v1249 = vmul.f32 %v1246, %v1248
        %v1250 = vadd.f32 %v1246, %v1249
        %vm1251 = vweird.f32 %v1245
        %vm1252 = vweird.f32 %v1246
        %vm1253 = vmor %vm1251, %vm1252
        %v1254 = vsel %vm1253, %v1246, %v1250
        %v1255 = vand.u32 2147483647, %v1245
        %vm1256 = vcmp.eq.f32.partialorder %v1255, 8.507059e+37
        %v1257 = vand.u32 %v1245, 2147483648
        %v1258 = vor.u32 1.1754944e-38, %v1257
        %v1259 = vsel %vm1256, %v1258, %v1254
        %v1260 = vmul.f32 %v1235, %v1259
        %v1261 = vmin.f32 %v1260, 1.0
        %v1262 = vmax.f32 %v1261, -1.0
        %v1263 = vmul.f32 %v1057, %v1057
        %v1264 = vmin.f32 16.0, %v1263
        %v1265 = vmul.f32 %v1264, 2.1237322e-06
        %v1266 = vadd.f32 %v1265, 0.00028619796
        %v1267 = vmul.f32 %v1264, %v1266
        %v1268 = vadd.f32 %v1267, 0.0036580483
        %v1269 = vmul.f32 %v1264, %v1268
        %v1270 = vadd.f32 %v1269, 0.05243302
        %v1271 = vmul.f32 %v1264, %v1270
        %v1272 = vadd.f32 %v1271, 0.18741608
        %v1273 = vmul.f32 %v1264, %v1272
        %v1274 = vadd.f32 %v1273, 1.1283791
        %v1275 = vmul.f32 %v1057, %v1274
        %v1276 = vmul.f32 %v1264, 3.8918573e-05
        %v1277 = vadd.f32 %v1276, 0.001143296
        %v1278 = vmul.f32 %v1264, %v1277
        %v1279 = vadd.f32 %v1278, 0.014752088
        %v1280 = vmul.f32 %v1264, %v1279
        %v1281 = vadd.f32 %v1280, 0.112945676
        %v1282 = vmul.f32 %v1264, %v1281
        %v1283 = vadd.f32 %v1282, 0.4994258
        %v1284 = vmul.f32 %v1264, %v1283
        %v1285 = vadd.f32 %v1284, 1.0
        %v1286 = vrcp.pop %v1285
        %v1287 = vmul.f32 %v1285, %v1286
        %v1288 = vsub.f32 1.0, %v1287
        %v1289 = vmul.f32 %v1286, %v1288
        %v1290 = vadd.f32 %v1286, %v1289
        %vm1291 = vweird.f32 %v1285
        %vm1292 = vweird.f32 %v1286
        %vm1293 = vmor %vm1291, %vm1292
        %v1294 = vsel %vm1293, %v1286, %v1290
        %v1295 = vand.u32 2147483647, %v1285
        %vm1296 = vcmp.eq.f32.partialorder %v1295, 8.507059e+37
        %v1297 = vand.u32 %v1285, 2147483648
        %v1298 = vor.u32 1.1754944e-38, %v1297
        %v1299 = vsel %vm1296, %v1298, %v1294
        %v1300 = vmul.f32 %v1275, %v1299
        %v1301 = vmin.f32 %v1300, 1.0
        %v1302 = vmax.f32 %v1301, -1.0
        %v1303 = vmul.f32 %v1058, %v1058
        %v1304 = vmin.f32 16.0, %v1303
        %v1305 = vmul.f32 %v1304, 2.1237322e-06
        %v1306 = vadd.f32 %v1305, 0.00028619796
        %v1307 = vmul.f32 %v1304, %v1306
        %v1308 = vadd.f32 %v1307, 0.0036580483
        %v1309 = vmul.f32 %v1304, %v1308
        %v1310 = vadd.f32 %v1309, 0.05243302
        %v1311 = vmul.f32 %v1304, %v1310
        %v1312 = vadd.f32 %v1311, 0.18741608
        %v1313 = vmul.f32 %v1304, %v1312
        %v1314 = vadd.f32 %v1313, 1.1283791
        %v1315 = vmul.f32 %v1058, %v1314
        %v1316 = vmul.f32 %v1304, 3.8918573e-05
        %v1317 = vadd.f32 %v1316, 0.001143296
        %v1318 = vmul.f32 %v1304, %v1317
        %v1319 = vadd.f32 %v1318, 0.014752088
        %v1320 = vmul.f32 %v1304, %v1319
        %v1321 = vadd.f32 %v1320, 0.112945676
        %v1322 = vmul.f32 %v1304, %v1321
        %v1323 = vadd.f32 %v1322, 0.4994258
        %v1324 = vmul.f32 %v1304, %v1323
        %v1325 = vadd.f32 %v1324, 1.0
        %v1326 = vrcp.pop %v1325
        %v1327 = vmul.f32 %v1325, %v1326
        %v1328 = vsub.f32 1.0, %v1327
        %v1329 = vmul.f32 %v1326, %v1328
        %v1330 = vadd.f32 %v1326, %v1329
        %vm1331 = vweird.f32 %v1325
        %vm1332 = vweird.f32 %v1326
        %vm1333 = vmor %vm1331, %vm1332
        %v1334 = vsel %vm1333, %v1326, %v1330
        %v1335 = vand.u32 2147483647, %v1325
        %vm1336 = vcmp.eq.f32.partialorder %v1335, 8.507059e+37
        %v1337 = vand.u32 %v1325, 2147483648
        %v1338 = vor.u32 1.1754944e-38, %v1337
        %v1339 = vsel %vm1336, %v1338, %v1334
        %v1340 = vmul.f32 %v1315, %v1339
        %v1341 = vmin.f32 %v1340, 1.0
        %v1342 = vmax.f32 %v1341, -1.0
        %v1343 = vmul.f32 %v1059, %v1059
        %v1344 = vmin.f32 16.0, %v1343
        %v1345 = vmul.f32 %v1344, 2.1237322e-06
        %v1346 = vadd.f32 %v1345, 0.00028619796
        %v1347 = vmul.f32 %v1344, %v1346
        %v1348 = vadd.f32 %v1347, 0.0036580483
        %v1349 = vmul.f32 %v1344, %v1348
        %v1350 = vadd.f32 %v1349, 0.05243302
        %v1351 = vmul.f32 %v1344, %v1350
        %v1352 = vadd.f32 %v1351, 0.18741608
        %v1353 = vmul.f32 %v1344, %v1352
        %v1354 = vadd.f32 %v1353, 1.1283791
        %v1355 = vmul.f32 %v1059, %v1354
        %v1356 = vmul.f32 %v1344, 3.8918573e-05
        %v1357 = vadd.f32 %v1356, 0.001143296
        %v1358 = vmul.f32 %v1344, %v1357
        %v1359 = vadd.f32 %v1358, 0.014752088
        %v1360 = vmul.f32 %v1344, %v1359
        %v1361 = vadd.f32 %v1360, 0.112945676
        %v1362 = vmul.f32 %v1344, %v1361
        %v1363 = vadd.f32 %v1362, 0.4994258
        %v1364 = vmul.f32 %v1344, %v1363
        %v1365 = vadd.f32 %v1364, 1.0
        %v1366 = vrcp.pop %v1365
        %v1367 = vmul.f32 %v1365, %v1366
        %v1368 = vsub.f32 1.0, %v1367
        %v1369 = vmul.f32 %v1366, %v1368
        %v1370 = vadd.f32 %v1366, %v1369
        %vm1371 = vweird.f32 %v1365
        %vm1372 = vweird.f32 %v1366
        %vm1373 = vmor %vm1371, %vm1372
        %v1374 = vsel %vm1373, %v1366, %v1370
        %v1375 = vand.u32 2147483647, %v1365
        %vm1376 = vcmp.eq.f32.partialorder %v1375, 8.507059e+37
        %v1377 = vand.u32 %v1365, 2147483648
        %v1378 = vor.u32 1.1754944e-38, %v1377
        %v1379 = vsel %vm1376, %v1378, %v1374
        %v1380 = vmul.f32 %v1355, %v1379
        %v1381 = vmin.f32 %v1380, 1.0
        %v1382 = vmax.f32 %v1381, -1.0
        %v1383 = vmul.f32 %v1060, %v1060
        %v1384 = vmin.f32 16.0, %v1383
        %v1385 = vmul.f32 %v1384, 2.1237322e-06
        %v1386 = vadd.f32 %v1385, 0.00028619796
        %v1387 = vmul.f32 %v1384, %v1386
        %v1388 = vadd.f32 %v1387, 0.0036580483
        %v1389 = vmul.f32 %v1384, %v1388
        %v1390 = vadd.f32 %v1389, 0.05243302
        %v1391 = vmul.f32 %v1384, %v1390
        %v1392 = vadd.f32 %v1391, 0.18741608
        %v1393 = vmul.f32 %v1384, %v1392
        %v1394 = vadd.f32 %v1393, 1.1283791
        %v1395 = vmul.f32 %v1060, %v1394
        %v1396 = vmul.f32 %v1384, 3.8918573e-05
        %v1397 = vadd.f32 %v1396, 0.001143296
        %v1398 = vmul.f32 %v1384, %v1397
        %v1399 = vadd.f32 %v1398, 0.014752088
        %v1400 = vmul.f32 %v1384, %v1399
        %v1401 = vadd.f32 %v1400, 0.112945676
        %v1402 = vmul.f32 %v1384, %v1401
        %v1403 = vadd.f32 %v1402, 0.4994258
        %v1404 = vmul.f32 %v1384, %v1403
        %v1405 = vadd.f32 %v1404, 1.0
        %v1406 = vrcp.pop %v1405
        %v1407 = vmul.f32 %v1405, %v1406
        %v1408 = vsub.f32 1.0, %v1407
        %v1409 = vmul.f32 %v1406, %v1408
        %v1410 = vadd.f32 %v1406, %v1409
        %vm1411 = vweird.f32 %v1405
        %vm1412 = vweird.f32 %v1406
        %vm1413 = vmor %vm1411, %vm1412
        %v1414 = vsel %vm1413, %v1406, %v1410
        %v1415 = vand.u32 2147483647, %v1405
        %vm1416 = vcmp.eq.f32.partialorder %v1415, 8.507059e+37
        %v1417 = vand.u32 %v1405, 2147483648
        %v1418 = vor.u32 1.1754944e-38, %v1417
        %v1419 = vsel %vm1416, %v1418, %v1414
        %v1420 = vmul.f32 %v1395, %v1419
        %v1421 = vmin.f32 %v1420, 1.0
        %v1422 = vmax.f32 %v1421, -1.0
        %v1423 = vmul.f32 %v1061, %v1061
        %v1424 = vmin.f32 16.0, %v1423
        %v1425 = vmul.f32 %v1424, 2.1237322e-06
        %v1426 = vadd.f32 %v1425, 0.00028619796
        %v1427 = vmul.f32 %v1424, %v1426
        %v1428 = vadd.f32 %v1427, 0.0036580483
        %v1429 = vmul.f32 %v1424, %v1428
        %v1430 = vadd.f32 %v1429, 0.05243302
        %v1431 = vmul.f32 %v1424, %v1430
        %v1432 = vadd.f32 %v1431, 0.18741608
        %v1433 = vmul.f32 %v1424, %v1432
        %v1434 = vadd.f32 %v1433, 1.1283791
        %v1435 = vmul.f32 %v1061, %v1434
        %v1436 = vmul.f32 %v1424, 3.8918573e-05
        %v1437 = vadd.f32 %v1436, 0.001143296
        %v1438 = vmul.f32 %v1424, %v1437
        %v1439 = vadd.f32 %v1438, 0.014752088
        %v1440 = vmul.f32 %v1424, %v1439
        %v1441 = vadd.f32 %v1440, 0.112945676
        %v1442 = vmul.f32 %v1424, %v1441
        %v1443 = vadd.f32 %v1442, 0.4994258
        %v1444 = vmul.f32 %v1424, %v1443
        %v1445 = vadd.f32 %v1444, 1.0
        %v1446 = vrcp.pop %v1445
        %v1447 = vmul.f32 %v1445, %v1446
        %v1448 = vsub.f32 1.0, %v1447
        %v1449 = vmul.f32 %v1446, %v1448
        %v1450 = vadd.f32 %v1446, %v1449
        %vm1451 = vweird.f32 %v1445
        %vm1452 = vweird.f32 %v1446
        %vm1453 = vmor %vm1451, %vm1452
        %v1454 = vsel %vm1453, %v1446, %v1450
        %v1455 = vand.u32 2147483647, %v1445
        %vm1456 = vcmp.eq.f32.partialorder %v1455, 8.507059e+37
        %v1457 = vand.u32 %v1445, 2147483648
        %v1458 = vor.u32 1.1754944e-38, %v1457
        %v1459 = vsel %vm1456, %v1458, %v1454
        %v1460 = vmul.f32 %v1435, %v1459
        %v1461 = vmin.f32 %v1460, 1.0
        %v1462 = vmax.f32 %v1461, -1.0
        %v1463 = vmul.f32 %v1062, %v1062
        %v1464 = vmin.f32 16.0, %v1463
        %v1465 = vmul.f32 %v1464, 2.1237322e-06
        %v1466 = vadd.f32 %v1465, 0.00028619796
        %v1467 = vmul.f32 %v1464, %v1466
        %v1468 = vadd.f32 %v1467, 0.0036580483
        %v1469 = vmul.f32 %v1464, %v1468
        %v1470 = vadd.f32 %v1469, 0.05243302
        %v1471 = vmul.f32 %v1464, %v1470
        %v1472 = vadd.f32 %v1471, 0.18741608
        %v1473 = vmul.f32 %v1464, %v1472
        %v1474 = vadd.f32 %v1473, 1.1283791
        %v1475 = vmul.f32 %v1062, %v1474
        %v1476 = vmul.f32 %v1464, 3.8918573e-05
        %v1477 = vadd.f32 %v1476, 0.001143296
        %v1478 = vmul.f32 %v1464, %v1477
        %v1479 = vadd.f32 %v1478, 0.014752088
        %v1480 = vmul.f32 %v1464, %v1479
        %v1481 = vadd.f32 %v1480, 0.112945676
        %v1482 = vmul.f32 %v1464, %v1481
        %v1483 = vadd.f32 %v1482, 0.4994258
        %v1484 = vmul.f32 %v1464, %v1483
        %v1485 = vadd.f32 %v1484, 1.0
        %v1486 = vrcp.pop %v1485
        %v1487 = vmul.f32 %v1485, %v1486
        %v1488 = vsub.f32 1.0, %v1487
        %v1489 = vmul.f32 %v1486, %v1488
        %v1490 = vadd.f32 %v1486, %v1489
        %vm1491 = vweird.f32 %v1485
        %vm1492 = vweird.f32 %v1486
        %vm1493 = vmor %vm1491, %vm1492
        %v1494 = vsel %vm1493, %v1486, %v1490
        %v1495 = vand.u32 2147483647, %v1485
        %vm1496 = vcmp.eq.f32.partialorder %v1495, 8.507059e+37
        %v1497 = vand.u32 %v1485, 2147483648
        %v1498 = vor.u32 1.1754944e-38, %v1497
        %v1499 = vsel %vm1496, %v1498, %v1494
        %v1500 = vmul.f32 %v1475, %v1499
        %v1501 = vmin.f32 %v1500, 1.0
        %v1502 = vmax.f32 %v1501, -1.0
        %v1503 = vmul.f32 %v1063, %v1063
        %v1504 = vmin.f32 16.0, %v1503
        %v1505 = vmul.f32 %v1504, 2.1237322e-06
        %v1506 = vadd.f32 %v1505, 0.00028619796
        %v1507 = vmul.f32 %v1504, %v1506
        %v1508 = vadd.f32 %v1507, 0.0036580483
        %v1509 = vmul.f32 %v1504, %v1508
        %v1510 = vadd.f32 %v1509, 0.05243302
        %v1511 = vmul.f32 %v1504, %v1510
        %v1512 = vadd.f32 %v1511, 0.18741608
        %v1513 = vmul.f32 %v1504, %v1512
        %v1514 = vadd.f32 %v1513, 1.1283791
        %v1515 = vmul.f32 %v1063, %v1514
        %v1516 = vmul.f32 %v1504, 3.8918573e-05
        %v1517 = vadd.f32 %v1516, 0.001143296
        %v1518 = vmul.f32 %v1504, %v1517
        %v1519 = vadd.f32 %v1518, 0.014752088
        %v1520 = vmul.f32 %v1504, %v1519
        %v1521 = vadd.f32 %v1520, 0.112945676
        %v1522 = vmul.f32 %v1504, %v1521
        %v1523 = vadd.f32 %v1522, 0.4994258
        %v1524 = vmul.f32 %v1504, %v1523
        %v1525 = vadd.f32 %v1524, 1.0
        %v1526 = vrcp.pop %v1525
        %v1527 = vmul.f32 %v1525, %v1526
        %v1528 = vsub.f32 1.0, %v1527
        %v1529 = vmul.f32 %v1526, %v1528
        %v1530 = vadd.f32 %v1526, %v1529
        %vm1531 = vweird.f32 %v1525
        %vm1532 = vweird.f32 %v1526
        %vm1533 = vmor %vm1531, %vm1532
        %v1534 = vsel %vm1533, %v1526, %v1530
        %v1535 = vand.u32 2147483647, %v1525
        %vm1536 = vcmp.eq.f32.partialorder %v1535, 8.507059e+37
        %v1537 = vand.u32 %v1525, 2147483648
        %v1538 = vor.u32 1.1754944e-38, %v1537
        %v1539 = vsel %vm1536, %v1538, %v1534
        %v1540 = vmul.f32 %v1515, %v1539
        %v1541 = vmin.f32 %v1540, 1.0
        %v1542 = vmax.f32 %v1541, -1.0
        %v1543 = vmul.f32 %v1064, %v1064
        %v1544 = vmin.f32 16.0, %v1543
        %v1545 = vmul.f32 %v1544, 2.1237322e-06
        %v1546 = vadd.f32 %v1545, 0.00028619796
        %v1547 = vmul.f32 %v1544, %v1546
        %v1548 = vadd.f32 %v1547, 0.0036580483
        %v1549 = vmul.f32 %v1544, %v1548
        %v1550 = vadd.f32 %v1549, 0.05243302
        %v1551 = vmul.f32 %v1544, %v1550
        %v1552 = vadd.f32 %v1551, 0.18741608
        %v1553 = vmul.f32 %v1544, %v1552
        %v1554 = vadd.f32 %v1553, 1.1283791
        %v1555 = vmul.f32 %v1064, %v1554
        %v1556 = vmul.f32 %v1544, 3.8918573e-05
        %v1557 = vadd.f32 %v1556, 0.001143296
        %v1558 = vmul.f32 %v1544, %v1557
        %v1559 = vadd.f32 %v1558, 0.014752088
        %v1560 = vmul.f32 %v1544, %v1559
        %v1561 = vadd.f32 %v1560, 0.112945676
        %v1562 = vmul.f32 %v1544, %v1561
        %v1563 = vadd.f32 %v1562, 0.4994258
        %v1564 = vmul.f32 %v1544, %v1563
        %v1565 = vadd.f32 %v1564, 1.0
        %v1566 = vrcp.pop %v1565
        %v1567 = vmul.f32 %v1565, %v1566
        %v1568 = vsub.f32 1.0, %v1567
        %v1569 = vmul.f32 %v1566, %v1568
        %v1570 = vadd.f32 %v1566, %v1569
        %vm1571 = vweird.f32 %v1565
        %vm1572 = vweird.f32 %v1566
        %vm1573 = vmor %vm1571, %vm1572
        %v1574 = vsel %vm1573, %v1566, %v1570
        %v1575 = vand.u32 2147483647, %v1565
        %vm1576 = vcmp.eq.f32.partialorder %v1575, 8.507059e+37
        %v1577 = vand.u32 %v1565, 2147483648
        %v1578 = vor.u32 1.1754944e-38, %v1577
        %v1579 = vsel %vm1576, %v1578, %v1574
        %v1580 = vmul.f32 %v1555, %v1579
        %v1581 = vmin.f32 %v1580, 1.0
        %v1582 = vmax.f32 %v1581, -1.0
        %v1583 = vmul.f32 %v1065, %v1065
        %v1584 = vmin.f32 16.0, %v1583
        %v1585 = vmul.f32 %v1584, 2.1237322e-06
        %v1586 = vadd.f32 %v1585, 0.00028619796
        %v1587 = vmul.f32 %v1584, %v1586
        %v1588 = vadd.f32 %v1587, 0.0036580483
        %v1589 = vmul.f32 %v1584, %v1588
        %v1590 = vadd.f32 %v1589, 0.05243302
        %v1591 = vmul.f32 %v1584, %v1590
        %v1592 = vadd.f32 %v1591, 0.18741608
        %v1593 = vmul.f32 %v1584, %v1592
        %v1594 = vadd.f32 %v1593, 1.1283791
        %v1595 = vmul.f32 %v1065, %v1594
        %v1596 = vmul.f32 %v1584, 3.8918573e-05
        %v1597 = vadd.f32 %v1596, 0.001143296
        %v1598 = vmul.f32 %v1584, %v1597
        %v1599 = vadd.f32 %v1598, 0.014752088
        %v1600 = vmul.f32 %v1584, %v1599
        %v1601 = vadd.f32 %v1600, 0.112945676
        %v1602 = vmul.f32 %v1584, %v1601
        %v1603 = vadd.f32 %v1602, 0.4994258
        %v1604 = vmul.f32 %v1584, %v1603
        %v1605 = vadd.f32 %v1604, 1.0
        %v1606 = vrcp.pop %v1605
        %v1607 = vmul.f32 %v1605, %v1606
        %v1608 = vsub.f32 1.0, %v1607
        %v1609 = vmul.f32 %v1606, %v1608
        %v1610 = vadd.f32 %v1606, %v1609
        %vm1611 = vweird.f32 %v1605
        %vm1612 = vweird.f32 %v1606
        %vm1613 = vmor %vm1611, %vm1612
        %v1614 = vsel %vm1613, %v1606, %v1610
        %v1615 = vand.u32 2147483647, %v1605
        %vm1616 = vcmp.eq.f32.partialorder %v1615, 8.507059e+37
        %v1617 = vand.u32 %v1605, 2147483648
        %v1618 = vor.u32 1.1754944e-38, %v1617
        %v1619 = vsel %vm1616, %v1618, %v1614
        %v1620 = vmul.f32 %v1595, %v1619
        %v1621 = vmin.f32 %v1620, 1.0
        %v1622 = vmax.f32 %v1621, -1.0
        %v1623 = vmul.f32 %v1066, %v1066
        %v1624 = vmin.f32 16.0, %v1623
        %v1625 = vmul.f32 %v1624, 2.1237322e-06
        %v1626 = vadd.f32 %v1625, 0.00028619796
        %v1627 = vmul.f32 %v1624, %v1626
        %v1628 = vadd.f32 %v1627, 0.0036580483
        %v1629 = vmul.f32 %v1624, %v1628
        %v1630 = vadd.f32 %v1629, 0.05243302
        %v1631 = vmul.f32 %v1624, %v1630
        %v1632 = vadd.f32 %v1631, 0.18741608
        %v1633 = vmul.f32 %v1624, %v1632
        %v1634 = vadd.f32 %v1633, 1.1283791
        %v1635 = vmul.f32 %v1066, %v1634
        %v1636 = vmul.f32 %v1624, 3.8918573e-05
        %v1637 = vadd.f32 %v1636, 0.001143296
        %v1638 = vmul.f32 %v1624, %v1637
        %v1639 = vadd.f32 %v1638, 0.014752088
        %v1640 = vmul.f32 %v1624, %v1639
        %v1641 = vadd.f32 %v1640, 0.112945676
        %v1642 = vmul.f32 %v1624, %v1641
        %v1643 = vadd.f32 %v1642, 0.4994258
        %v1644 = vmul.f32 %v1624, %v1643
        %v1645 = vadd.f32 %v1644, 1.0
        %v1646 = vrcp.pop %v1645
        %v1647 = vmul.f32 %v1645, %v1646
        %v1648 = vsub.f32 1.0, %v1647
        %v1649 = vmul.f32 %v1646, %v1648
        %v1650 = vadd.f32 %v1646, %v1649
        %vm1651 = vweird.f32 %v1645
        %vm1652 = vweird.f32 %v1646
        %vm1653 = vmor %vm1651, %vm1652
        %v1654 = vsel %vm1653, %v1646, %v1650
        %v1655 = vand.u32 2147483647, %v1645
        %vm1656 = vcmp.eq.f32.partialorder %v1655, 8.507059e+37
        %v1657 = vand.u32 %v1645, 2147483648
        %v1658 = vor.u32 1.1754944e-38, %v1657
        %v1659 = vsel %vm1656, %v1658, %v1654
        %v1660 = vmul.f32 %v1635, %v1659
        %v1661 = vmin.f32 %v1660, 1.0
        %v1662 = vmax.f32 %v1661, -1.0
        %v1663 = vmul.f32 %v1067, %v1067
        %v1664 = vmin.f32 16.0, %v1663
        %v1665 = vmul.f32 %v1664, 2.1237322e-06
        %v1666 = vadd.f32 %v1665, 0.00028619796
        %v1667 = vmul.f32 %v1664, %v1666
        %v1668 = vadd.f32 %v1667, 0.0036580483
        %v1669 = vmul.f32 %v1664, %v1668
        %v1670 = vadd.f32 %v1669, 0.05243302
        %v1671 = vmul.f32 %v1664, %v1670
        %v1672 = vadd.f32 %v1671, 0.18741608
        %v1673 = vmul.f32 %v1664, %v1672
        %v1674 = vadd.f32 %v1673, 1.1283791
        %v1675 = vmul.f32 %v1067, %v1674
        %v1676 = vmul.f32 %v1664, 3.8918573e-05
        %v1677 = vadd.f32 %v1676, 0.001143296
        %v1678 = vmul.f32 %v1664, %v1677
        %v1679 = vadd.f32 %v1678, 0.014752088
        %v1680 = vmul.f32 %v1664, %v1679
        %v1681 = vadd.f32 %v1680, 0.112945676
        %v1682 = vmul.f32 %v1664, %v1681
        %v1683 = vadd.f32 %v1682, 0.4994258
        %v1684 = vmul.f32 %v1664, %v1683
        %v1685 = vadd.f32 %v1684, 1.0
        %v1686 = vrcp.pop %v1685
        %v1687 = vmul.f32 %v1685, %v1686
        %v1688 = vsub.f32 1.0, %v1687
        %v1689 = vmul.f32 %v1686, %v1688
        %v1690 = vadd.f32 %v1686, %v1689
        %vm1691 = vweird.f32 %v1685
        %vm1692 = vweird.f32 %v1686
        %vm1693 = vmor %vm1691, %vm1692
        %v1694 = vsel %vm1693, %v1686, %v1690
        %v1695 = vand.u32 2147483647, %v1685
        %vm1696 = vcmp.eq.f32.partialorder %v1695, 8.507059e+37
        %v1697 = vand.u32 %v1685, 2147483648
        %v1698 = vor.u32 1.1754944e-38, %v1697
        %v1699 = vsel %vm1696, %v1698, %v1694
        %v1700 = vmul.f32 %v1675, %v1699
        %v1701 = vmin.f32 %v1700, 1.0
        %v1702 = vmax.f32 %v1701, -1.0
        %v1703 = vmul.f32 %v1068, %v1068
        %v1704 = vmin.f32 16.0, %v1703
        %v1705 = vmul.f32 %v1704, 2.1237322e-06
        %v1706 = vadd.f32 %v1705, 0.00028619796
        %v1707 = vmul.f32 %v1704, %v1706
        %v1708 = vadd.f32 %v1707, 0.0036580483
        %v1709 = vmul.f32 %v1704, %v1708
        %v1710 = vadd.f32 %v1709, 0.05243302
        %v1711 = vmul.f32 %v1704, %v1710
        %v1712 = vadd.f32 %v1711, 0.18741608
        %v1713 = vmul.f32 %v1704, %v1712
        %v1714 = vadd.f32 %v1713, 1.1283791
        %v1715 = vmul.f32 %v1068, %v1714
        %v1716 = vmul.f32 %v1704, 3.8918573e-05
        %v1717 = vadd.f32 %v1716, 0.001143296
        %v1718 = vmul.f32 %v1704, %v1717
        %v1719 = vadd.f32 %v1718, 0.014752088
        %v1720 = vmul.f32 %v1704, %v1719
        %v1721 = vadd.f32 %v1720, 0.112945676
        %v1722 = vmul.f32 %v1704, %v1721
        %v1723 = vadd.f32 %v1722, 0.4994258
        %v1724 = vmul.f32 %v1704, %v1723
        %v1725 = vadd.f32 %v1724, 1.0
        %v1726 = vrcp.pop %v1725
        %v1727 = vmul.f32 %v1725, %v1726
        %v1728 = vsub.f32 1.0, %v1727
        %v1729 = vmul.f32 %v1726, %v1728
        %v1730 = vadd.f32 %v1726, %v1729
        %vm1731 = vweird.f32 %v1725
        %vm1732 = vweird.f32 %v1726
        %vm1733 = vmor %vm1731, %vm1732
        %v1734 = vsel %vm1733, %v1726, %v1730
        %v1735 = vand.u32 2147483647, %v1725
        %vm1736 = vcmp.eq.f32.partialorder %v1735, 8.507059e+37
        %v1737 = vand.u32 %v1725, 2147483648
        %v1738 = vor.u32 1.1754944e-38, %v1737
        %v1739 = vsel %vm1736, %v1738, %v1734
        %v1740 = vmul.f32 %v1715, %v1739
        %v1741 = vmin.f32 %v1740, 1.0
        %v1742 = vmax.f32 %v1741, -1.0
        %v1743 = vmul.f32 %v1069, %v1069
        %v1744 = vmin.f32 16.0, %v1743
        %v1745 = vmul.f32 %v1744, 2.1237322e-06
        %v1746 = vadd.f32 %v1745, 0.00028619796
        %v1747 = vmul.f32 %v1744, %v1746
        %v1748 = vadd.f32 %v1747, 0.0036580483
        %v1749 = vmul.f32 %v1744, %v1748
        %v1750 = vadd.f32 %v1749, 0.05243302
        %v1751 = vmul.f32 %v1744, %v1750
        %v1752 = vadd.f32 %v1751, 0.18741608
        %v1753 = vmul.f32 %v1744, %v1752
        %v1754 = vadd.f32 %v1753, 1.1283791
        %v1755 = vmul.f32 %v1069, %v1754
        %v1756 = vmul.f32 %v1744, 3.8918573e-05
        %v1757 = vadd.f32 %v1756, 0.001143296
        %v1758 = vmul.f32 %v1744, %v1757
        %v1759 = vadd.f32 %v1758, 0.014752088
        %v1760 = vmul.f32 %v1744, %v1759
        %v1761 = vadd.f32 %v1760, 0.112945676
        %v1762 = vmul.f32 %v1744, %v1761
        %v1763 = vadd.f32 %v1762, 0.4994258
        %v1764 = vmul.f32 %v1744, %v1763
        %v1765 = vadd.f32 %v1764, 1.0
        %v1766 = vrcp.pop %v1765
        %v1767 = vmul.f32 %v1765, %v1766
        %v1768 = vsub.f32 1.0, %v1767
        %v1769 = vmul.f32 %v1766, %v1768
        %v1770 = vadd.f32 %v1766, %v1769
        %vm1771 = vweird.f32 %v1765
        %vm1772 = vweird.f32 %v1766
        %vm1773 = vmor %vm1771, %vm1772
        %v1774 = vsel %vm1773, %v1766, %v1770
        %v1775 = vand.u32 2147483647, %v1765
        %vm1776 = vcmp.eq.f32.partialorder %v1775, 8.507059e+37
        %v1777 = vand.u32 %v1765, 2147483648
        %v1778 = vor.u32 1.1754944e-38, %v1777
        %v1779 = vsel %vm1776, %v1778, %v1774
        %v1780 = vmul.f32 %v1755, %v1779
        %v1781 = vmin.f32 %v1780, 1.0
        %v1782 = vmax.f32 %v1781, -1.0
        %v1783 = vmul.f32 %v1070, %v1070
        %v1784 = vmin.f32 16.0, %v1783
        %v1785 = vmul.f32 %v1784, 2.1237322e-06
        %v1786 = vadd.f32 %v1785, 0.00028619796
        %v1787 = vmul.f32 %v1784, %v1786
        %v1788 = vadd.f32 %v1787, 0.0036580483
        %v1789 = vmul.f32 %v1784, %v1788
        %v1790 = vadd.f32 %v1789, 0.05243302
        %v1791 = vmul.f32 %v1784, %v1790
        %v1792 = vadd.f32 %v1791, 0.18741608
        %v1793 = vmul.f32 %v1784, %v1792
        %v1794 = vadd.f32 %v1793, 1.1283791
        %v1795 = vmul.f32 %v1070, %v1794
        %v1796 = vmul.f32 %v1784, 3.8918573e-05
        %v1797 = vadd.f32 %v1796, 0.001143296
        %v1798 = vmul.f32 %v1784, %v1797
        %v1799 = vadd.f32 %v1798, 0.014752088
        %v1800 = vmul.f32 %v1784, %v1799
        %v1801 = vadd.f32 %v1800, 0.112945676
        %v1802 = vmul.f32 %v1784, %v1801
        %v1803 = vadd.f32 %v1802, 0.4994258
        %v1804 = vmul.f32 %v1784, %v1803
        %v1805 = vadd.f32 %v1804, 1.0
        %v1806 = vrcp.pop %v1805
        %v1807 = vmul.f32 %v1805, %v1806
        %v1808 = vsub.f32 1.0, %v1807
        %v1809 = vmul.f32 %v1806, %v1808
        %v1810 = vadd.f32 %v1806, %v1809
        %vm1811 = vweird.f32 %v1805
        %vm1812 = vweird.f32 %v1806
        %vm1813 = vmor %vm1811, %vm1812
        %v1814 = vsel %vm1813, %v1806, %v1810
        %v1815 = vand.u32 2147483647, %v1805
        %vm1816 = vcmp.eq.f32.partialorder %v1815, 8.507059e+37
        %v1817 = vand.u32 %v1805, 2147483648
        %v1818 = vor.u32 1.1754944e-38, %v1817
        %v1819 = vsel %vm1816, %v1818, %v1814
        %v1820 = vmul.f32 %v1795, %v1819
        %v1821 = vmin.f32 %v1820, 1.0
        %v1822 = vmax.f32 %v1821, -1.0
        %v1823 = vmul.f32 %v1071, %v1071
        %v1824 = vmin.f32 16.0, %v1823
        %v1825 = vmul.f32 %v1824, 2.1237322e-06
        %v1826 = vadd.f32 %v1825, 0.00028619796
        %v1827 = vmul.f32 %v1824, %v1826
        %v1828 = vadd.f32 %v1827, 0.0036580483
        %v1829 = vmul.f32 %v1824, %v1828
        %v1830 = vadd.f32 %v1829, 0.05243302
        %v1831 = vmul.f32 %v1824, %v1830
        %v1832 = vadd.f32 %v1831, 0.18741608
        %v1833 = vmul.f32 %v1824, %v1832
        %v1834 = vadd.f32 %v1833, 1.1283791
        %v1835 = vmul.f32 %v1071, %v1834
        %v1836 = vmul.f32 %v1824, 3.8918573e-05
        %v1837 = vadd.f32 %v1836, 0.001143296
        %v1838 = vmul.f32 %v1824, %v1837
        %v1839 = vadd.f32 %v1838, 0.014752088
        %v1840 = vmul.f32 %v1824, %v1839
        %v1841 = vadd.f32 %v1840, 0.112945676
        %v1842 = vmul.f32 %v1824, %v1841
        %v1843 = vadd.f32 %v1842, 0.4994258
        %v1844 = vmul.f32 %v1824, %v1843
        %v1845 = vadd.f32 %v1844, 1.0
        %v1846 = vrcp.pop %v1845
        %v1847 = vmul.f32 %v1845, %v1846
        %v1848 = vsub.f32 1.0, %v1847
        %v1849 = vmul.f32 %v1846, %v1848
        %v1850 = vadd.f32 %v1846, %v1849
        %vm1851 = vweird.f32 %v1845
        %vm1852 = vweird.f32 %v1846
        %vm1853 = vmor %vm1851, %vm1852
        %v1854 = vsel %vm1853, %v1846, %v1850
        %v1855 = vand.u32 2147483647, %v1845
        %vm1856 = vcmp.eq.f32.partialorder %v1855, 8.507059e+37
        %v1857 = vand.u32 %v1845, 2147483648
        %v1858 = vor.u32 1.1754944e-38, %v1857
        %v1859 = vsel %vm1856, %v1858, %v1854
        %v1860 = vmul.f32 %v1835, %v1859
        %v1861 = vmin.f32 %v1860, 1.0
        %v1862 = vmax.f32 %v1861, -1.0
        %v1863 = vmul.f32 %v1072, %v1072
        %v1864 = vmin.f32 16.0, %v1863
        %v1865 = vmul.f32 %v1864, 2.1237322e-06
        %v1866 = vadd.f32 %v1865, 0.00028619796
        %v1867 = vmul.f32 %v1864, %v1866
        %v1868 = vadd.f32 %v1867, 0.0036580483
        %v1869 = vmul.f32 %v1864, %v1868
        %v1870 = vadd.f32 %v1869, 0.05243302
        %v1871 = vmul.f32 %v1864, %v1870
        %v1872 = vadd.f32 %v1871, 0.18741608
        %v1873 = vmul.f32 %v1864, %v1872
        %v1874 = vadd.f32 %v1873, 1.1283791
        %v1875 = vmul.f32 %v1072, %v1874
        %v1876 = vmul.f32 %v1864, 3.8918573e-05
        %v1877 = vadd.f32 %v1876, 0.001143296
        %v1878 = vmul.f32 %v1864, %v1877
        %v1879 = vadd.f32 %v1878, 0.014752088
        %v1880 = vmul.f32 %v1864, %v1879
        %v1881 = vadd.f32 %v1880, 0.112945676
        %v1882 = vmul.f32 %v1864, %v1881
        %v1883 = vadd.f32 %v1882, 0.4994258
        %v1884 = vmul.f32 %v1864, %v1883
        %v1885 = vadd.f32 %v1884, 1.0
        %v1886 = vrcp.pop %v1885
        %v1887 = vmul.f32 %v1885, %v1886
        %v1888 = vsub.f32 1.0, %v1887
        %v1889 = vmul.f32 %v1886, %v1888
        %v1890 = vadd.f32 %v1886, %v1889
        %vm1891 = vweird.f32 %v1885
        %vm1892 = vweird.f32 %v1886
        %vm1893 = vmor %vm1891, %vm1892
        %v1894 = vsel %vm1893, %v1886, %v1890
        %v1895 = vand.u32 2147483647, %v1885
        %vm1896 = vcmp.eq.f32.partialorder %v1895, 8.507059e+37
        %v1897 = vand.u32 %v1885, 2147483648
        %v1898 = vor.u32 1.1754944e-38, %v1897
        %v1899 = vsel %vm1896, %v1898, %v1894
        %v1900 = vmul.f32 %v1875, %v1899
        %v1901 = vmin.f32 %v1900, 1.0
        %v1902 = vmax.f32 %v1901, -1.0
        %v1903 = vmul.f32 %v1073, %v1073
        %v1904 = vmin.f32 16.0, %v1903
        %v1905 = vmul.f32 %v1904, 2.1237322e-06
        %v1906 = vadd.f32 %v1905, 0.00028619796
        %v1907 = vmul.f32 %v1904, %v1906
        %v1908 = vadd.f32 %v1907, 0.0036580483
        %v1909 = vmul.f32 %v1904, %v1908
        %v1910 = vadd.f32 %v1909, 0.05243302
        %v1911 = vmul.f32 %v1904, %v1910
        %v1912 = vadd.f32 %v1911, 0.18741608
        %v1913 = vmul.f32 %v1904, %v1912
        %v1914 = vadd.f32 %v1913, 1.1283791
        %v1915 = vmul.f32 %v1073, %v1914
        %v1916 = vmul.f32 %v1904, 3.8918573e-05
        %v1917 = vadd.f32 %v1916, 0.001143296
        %v1918 = vmul.f32 %v1904, %v1917
        %v1919 = vadd.f32 %v1918, 0.014752088
        %v1920 = vmul.f32 %v1904, %v1919
        %v1921 = vadd.f32 %v1920, 0.112945676
        %v1922 = vmul.f32 %v1904, %v1921
        %v1923 = vadd.f32 %v1922, 0.4994258
        %v1924 = vmul.f32 %v1904, %v1923
        %v1925 = vadd.f32 %v1924, 1.0
        %v1926 = vrcp.pop %v1925
        %v1927 = vmul.f32 %v1925, %v1926
        %v1928 = vsub.f32 1.0, %v1927
        %v1929 = vmul.f32 %v1926, %v1928
        %v1930 = vadd.f32 %v1926, %v1929
        %vm1931 = vweird.f32 %v1925
        %vm1932 = vweird.f32 %v1926
        %vm1933 = vmor %vm1931, %vm1932
        %v1934 = vsel %vm1933, %v1926, %v1930
        %v1935 = vand.u32 2147483647, %v1925
        %vm1936 = vcmp.eq.f32.partialorder %v1935, 8.507059e+37
        %v1937 = vand.u32 %v1925, 2147483648
        %v1938 = vor.u32 1.1754944e-38, %v1937
        %v1939 = vsel %vm1936, %v1938, %v1934
        %v1940 = vmul.f32 %v1915, %v1939
        %v1941 = vmin.f32 %v1940, 1.0
        %v1942 = vmax.f32 %v1941, -1.0
        %v1943 = vmul.f32 %v1074, %v1074
        %v1944 = vmin.f32 16.0, %v1943
        %v1945 = vmul.f32 %v1944, 2.1237322e-06
        %v1946 = vadd.f32 %v1945, 0.00028619796
        %v1947 = vmul.f32 %v1944, %v1946
        %v1948 = vadd.f32 %v1947, 0.0036580483
        %v1949 = vmul.f32 %v1944, %v1948
        %v1950 = vadd.f32 %v1949, 0.05243302
        %v1951 = vmul.f32 %v1944, %v1950
        %v1952 = vadd.f32 %v1951, 0.18741608
        %v1953 = vmul.f32 %v1944, %v1952
        %v1954 = vadd.f32 %v1953, 1.1283791
        %v1955 = vmul.f32 %v1074, %v1954
        %v1956 = vmul.f32 %v1944, 3.8918573e-05
        %v1957 = vadd.f32 %v1956, 0.001143296
        %v1958 = vmul.f32 %v1944, %v1957
        %v1959 = vadd.f32 %v1958, 0.014752088
        %v1960 = vmul.f32 %v1944, %v1959
        %v1961 = vadd.f32 %v1960, 0.112945676
        %v1962 = vmul.f32 %v1944, %v1961
        %v1963 = vadd.f32 %v1962, 0.4994258
        %v1964 = vmul.f32 %v1944, %v1963
        %v1965 = vadd.f32 %v1964, 1.0
        %v1966 = vrcp.pop %v1965
        %v1967 = vmul.f32 %v1965, %v1966
        %v1968 = vsub.f32 1.0, %v1967
        %v1969 = vmul.f32 %v1966, %v1968
        %v1970 = vadd.f32 %v1966, %v1969
        %vm1971 = vweird.f32 %v1965
        %vm1972 = vweird.f32 %v1966
        %vm1973 = vmor %vm1971, %vm1972
        %v1974 = vsel %vm1973, %v1966, %v1970
        %v1975 = vand.u32 2147483647, %v1965
        %vm1976 = vcmp.eq.f32.partialorder %v1975, 8.507059e+37
        %v1977 = vand.u32 %v1965, 2147483648
        %v1978 = vor.u32 1.1754944e-38, %v1977
        %v1979 = vsel %vm1976, %v1978, %v1974
        %v1980 = vmul.f32 %v1955, %v1979
        %v1981 = vmin.f32 %v1980, 1.0
        %v1982 = vmax.f32 %v1981, -1.0
        %v1983 = vmul.f32 %v1075, %v1075
        %v1984 = vmin.f32 16.0, %v1983
        %v1985 = vmul.f32 %v1984, 2.1237322e-06
        %v1986 = vadd.f32 %v1985, 0.00028619796
        %v1987 = vmul.f32 %v1984, %v1986
        %v1988 = vadd.f32 %v1987, 0.0036580483
        %v1989 = vmul.f32 %v1984, %v1988
        %v1990 = vadd.f32 %v1989, 0.05243302
        %v1991 = vmul.f32 %v1984, %v1990
        %v1992 = vadd.f32 %v1991, 0.18741608
        %v1993 = vmul.f32 %v1984, %v1992
        %v1994 = vadd.f32 %v1993, 1.1283791
        %v1995 = vmul.f32 %v1075, %v1994
        %v1996 = vmul.f32 %v1984, 3.8918573e-05
        %v1997 = vadd.f32 %v1996, 0.001143296
        %v1998 = vmul.f32 %v1984, %v1997
        %v1999 = vadd.f32 %v1998, 0.014752088
        %v2000 = vmul.f32 %v1984, %v1999
        %v2001 = vadd.f32 %v2000, 0.112945676
        %v2002 = vmul.f32 %v1984, %v2001
        %v2003 = vadd.f32 %v2002, 0.4994258
        %v2004 = vmul.f32 %v1984, %v2003
        %v2005 = vadd.f32 %v2004, 1.0
        %v2006 = vrcp.pop %v2005
        %v2007 = vmul.f32 %v2005, %v2006
        %v2008 = vsub.f32 1.0, %v2007
        %v2009 = vmul.f32 %v2006, %v2008
        %v2010 = vadd.f32 %v2006, %v2009
        %vm2011 = vweird.f32 %v2005
        %vm2012 = vweird.f32 %v2006
        %vm2013 = vmor %vm2011, %vm2012
        %v2014 = vsel %vm2013, %v2006, %v2010
        %v2015 = vand.u32 2147483647, %v2005
        %vm2016 = vcmp.eq.f32.partialorder %v2015, 8.507059e+37
        %v2017 = vand.u32 %v2005, 2147483648
        %v2018 = vor.u32 1.1754944e-38, %v2017
        %v2019 = vsel %vm2016, %v2018, %v2014
        %v2020 = vmul.f32 %v1995, %v2019
        %v2021 = vmin.f32 %v2020, 1.0
        %v2022 = vmax.f32 %v2021, -1.0
        %v2023 = vmul.f32 %v1076, %v1076
        %v2024 = vmin.f32 16.0, %v2023
        %v2025 = vmul.f32 %v2024, 2.1237322e-06
        %v2026 = vadd.f32 %v2025, 0.00028619796
        %v2027 = vmul.f32 %v2024, %v2026
        %v2028 = vadd.f32 %v2027, 0.0036580483
        %v2029 = vmul.f32 %v2024, %v2028
        %v2030 = vadd.f32 %v2029, 0.05243302
        %v2031 = vmul.f32 %v2024, %v2030
        %v2032 = vadd.f32 %v2031, 0.18741608
        %v2033 = vmul.f32 %v2024, %v2032
        %v2034 = vadd.f32 %v2033, 1.1283791
        %v2035 = vmul.f32 %v1076, %v2034
        %v2036 = vmul.f32 %v2024, 3.8918573e-05
        %v2037 = vadd.f32 %v2036, 0.001143296
        %v2038 = vmul.f32 %v2024, %v2037
        %v2039 = vadd.f32 %v2038, 0.014752088
        %v2040 = vmul.f32 %v2024, %v2039
        %v2041 = vadd.f32 %v2040, 0.112945676
        %v2042 = vmul.f32 %v2024, %v2041
        %v2043 = vadd.f32 %v2042, 0.4994258
        %v2044 = vmul.f32 %v2024, %v2043
        %v2045 = vadd.f32 %v2044, 1.0
        %v2046 = vrcp.pop %v2045
        %v2047 = vmul.f32 %v2045, %v2046
        %v2048 = vsub.f32 1.0, %v2047
        %v2049 = vmul.f32 %v2046, %v2048
        %v2050 = vadd.f32 %v2046, %v2049
        %vm2051 = vweird.f32 %v2045
        %vm2052 = vweird.f32 %v2046
        %vm2053 = vmor %vm2051, %vm2052
        %v2054 = vsel %vm2053, %v2046, %v2050
        %v2055 = vand.u32 2147483647, %v2045
        %vm2056 = vcmp.eq.f32.partialorder %v2055, 8.507059e+37
        %v2057 = vand.u32 %v2045, 2147483648
        %v2058 = vor.u32 1.1754944e-38, %v2057
        %v2059 = vsel %vm2056, %v2058, %v2054
        %v2060 = vmul.f32 %v2035, %v2059
        %v2061 = vmin.f32 %v2060, 1.0
        %v2062 = vmax.f32 %v2061, -1.0
        %v2063 = vmul.f32 %v1077, %v1077
        %v2064 = vmin.f32 16.0, %v2063
        %v2065 = vmul.f32 %v2064, 2.1237322e-06
        %v2066 = vadd.f32 %v2065, 0.00028619796
        %v2067 = vmul.f32 %v2064, %v2066
        %v2068 = vadd.f32 %v2067, 0.0036580483
        %v2069 = vmul.f32 %v2064, %v2068
        %v2070 = vadd.f32 %v2069, 0.05243302
        %v2071 = vmul.f32 %v2064, %v2070
        %v2072 = vadd.f32 %v2071, 0.18741608
        %v2073 = vmul.f32 %v2064, %v2072
        %v2074 = vadd.f32 %v2073, 1.1283791
        %v2075 = vmul.f32 %v1077, %v2074
        %v2076 = vmul.f32 %v2064, 3.8918573e-05
        %v2077 = vadd.f32 %v2076, 0.001143296
        %v2078 = vmul.f32 %v2064, %v2077
        %v2079 = vadd.f32 %v2078, 0.014752088
        %v2080 = vmul.f32 %v2064, %v2079
        %v2081 = vadd.f32 %v2080, 0.112945676
        %v2082 = vmul.f32 %v2064, %v2081
        %v2083 = vadd.f32 %v2082, 0.4994258
        %v2084 = vmul.f32 %v2064, %v2083
        %v2085 = vadd.f32 %v2084, 1.0
        %v2086 = vrcp.pop %v2085
        %v2087 = vmul.f32 %v2085, %v2086
        %v2088 = vsub.f32 1.0, %v2087
        %v2089 = vmul.f32 %v2086, %v2088
        %v2090 = vadd.f32 %v2086, %v2089
        %vm2091 = vweird.f32 %v2085
        %vm2092 = vweird.f32 %v2086
        %vm2093 = vmor %vm2091, %vm2092
        %v2094 = vsel %vm2093, %v2086, %v2090
        %v2095 = vand.u32 2147483647, %v2085
        %vm2096 = vcmp.eq.f32.partialorder %v2095, 8.507059e+37
        %v2097 = vand.u32 %v2085, 2147483648
        %v2098 = vor.u32 1.1754944e-38, %v2097
        %v2099 = vsel %vm2096, %v2098, %v2094
        %v2100 = vmul.f32 %v2075, %v2099
        %v2101 = vmin.f32 %v2100, 1.0
        %v2102 = vmax.f32 %v2101, -1.0
        %v2103 = vmul.f32 %v1078, %v1078
        %v2104 = vmin.f32 16.0, %v2103
        %v2105 = vmul.f32 %v2104, 2.1237322e-06
        %v2106 = vadd.f32 %v2105, 0.00028619796
        %v2107 = vmul.f32 %v2104, %v2106
        %v2108 = vadd.f32 %v2107, 0.0036580483
        %v2109 = vmul.f32 %v2104, %v2108
        %v2110 = vadd.f32 %v2109, 0.05243302
        %v2111 = vmul.f32 %v2104, %v2110
        %v2112 = vadd.f32 %v2111, 0.18741608
        %v2113 = vmul.f32 %v2104, %v2112
        %v2114 = vadd.f32 %v2113, 1.1283791
        %v2115 = vmul.f32 %v1078, %v2114
        %v2116 = vmul.f32 %v2104, 3.8918573e-05
        %v2117 = vadd.f32 %v2116, 0.001143296
        %v2118 = vmul.f32 %v2104, %v2117
        %v2119 = vadd.f32 %v2118, 0.014752088
        %v2120 = vmul.f32 %v2104, %v2119
        %v2121 = vadd.f32 %v2120, 0.112945676
        %v2122 = vmul.f32 %v2104, %v2121
        %v2123 = vadd.f32 %v2122, 0.4994258
        %v2124 = vmul.f32 %v2104, %v2123
        %v2125 = vadd.f32 %v2124, 1.0
        %v2126 = vrcp.pop %v2125
        %v2127 = vmul.f32 %v2125, %v2126
        %v2128 = vsub.f32 1.0, %v2127
        %v2129 = vmul.f32 %v2126, %v2128
        %v2130 = vadd.f32 %v2126, %v2129
        %vm2131 = vweird.f32 %v2125
        %vm2132 = vweird.f32 %v2126
        %vm2133 = vmor %vm2131, %vm2132
        %v2134 = vsel %vm2133, %v2126, %v2130
        %v2135 = vand.u32 2147483647, %v2125
        %vm2136 = vcmp.eq.f32.partialorder %v2135, 8.507059e+37
        %v2137 = vand.u32 %v2125, 2147483648
        %v2138 = vor.u32 1.1754944e-38, %v2137
        %v2139 = vsel %vm2136, %v2138, %v2134
        %v2140 = vmul.f32 %v2115, %v2139
        %v2141 = vmin.f32 %v2140, 1.0
        %v2142 = vmax.f32 %v2141, -1.0
        %v2143 = vmul.f32 %v1079, %v1079
        %v2144 = vmin.f32 16.0, %v2143
        %v2145 = vmul.f32 %v2144, 2.1237322e-06
        %v2146 = vadd.f32 %v2145, 0.00028619796
        %v2147 = vmul.f32 %v2144, %v2146
        %v2148 = vadd.f32 %v2147, 0.0036580483
        %v2149 = vmul.f32 %v2144, %v2148
        %v2150 = vadd.f32 %v2149, 0.05243302
        %v2151 = vmul.f32 %v2144, %v2150
        %v2152 = vadd.f32 %v2151, 0.18741608
        %v2153 = vmul.f32 %v2144, %v2152
        %v2154 = vadd.f32 %v2153, 1.1283791
        %v2155 = vmul.f32 %v1079, %v2154
        %v2156 = vmul.f32 %v2144, 3.8918573e-05
        %v2157 = vadd.f32 %v2156, 0.001143296
        %v2158 = vmul.f32 %v2144, %v2157
        %v2159 = vadd.f32 %v2158, 0.014752088
        %v2160 = vmul.f32 %v2144, %v2159
        %v2161 = vadd.f32 %v2160, 0.112945676
        %v2162 = vmul.f32 %v2144, %v2161
        %v2163 = vadd.f32 %v2162, 0.4994258
        %v2164 = vmul.f32 %v2144, %v2163
        %v2165 = vadd.f32 %v2164, 1.0
        %v2166 = vrcp.pop %v2165
        %v2167 = vmul.f32 %v2165, %v2166
        %v2168 = vsub.f32 1.0, %v2167
        %v2169 = vmul.f32 %v2166, %v2168
        %v2170 = vadd.f32 %v2166, %v2169
        %vm2171 = vweird.f32 %v2165
        %vm2172 = vweird.f32 %v2166
        %vm2173 = vmor %vm2171, %vm2172
        %v2174 = vsel %vm2173, %v2166, %v2170
        %v2175 = vand.u32 2147483647, %v2165
        %vm2176 = vcmp.eq.f32.partialorder %v2175, 8.507059e+37
        %v2177 = vand.u32 %v2165, 2147483648
        %v2178 = vor.u32 1.1754944e-38, %v2177
        %v2179 = vsel %vm2176, %v2178, %v2174
        %v2180 = vmul.f32 %v2155, %v2179
        %v2181 = vmin.f32 %v2180, 1.0
        %v2182 = vmax.f32 %v2181, -1.0
        %v2183 = vmul.f32 %v1080, %v1080
        %v2184 = vmin.f32 16.0, %v2183
        %v2185 = vmul.f32 %v2184, 2.1237322e-06
        %v2186 = vadd.f32 %v2185, 0.00028619796
        %v2187 = vmul.f32 %v2184, %v2186
        %v2188 = vadd.f32 %v2187, 0.0036580483
        %v2189 = vmul.f32 %v2184, %v2188
        %v2190 = vadd.f32 %v2189, 0.05243302
        %v2191 = vmul.f32 %v2184, %v2190
        %v2192 = vadd.f32 %v2191, 0.18741608
        %v2193 = vmul.f32 %v2184, %v2192
        %v2194 = vadd.f32 %v2193, 1.1283791
        %v2195 = vmul.f32 %v1080, %v2194
        %v2196 = vmul.f32 %v2184, 3.8918573e-05
        %v2197 = vadd.f32 %v2196, 0.001143296
        %v2198 = vmul.f32 %v2184, %v2197
        %v2199 = vadd.f32 %v2198, 0.014752088
        %v2200 = vmul.f32 %v2184, %v2199
        %v2201 = vadd.f32 %v2200, 0.112945676
        %v2202 = vmul.f32 %v2184, %v2201
        %v2203 = vadd.f32 %v2202, 0.4994258
        %v2204 = vmul.f32 %v2184, %v2203
        %v2205 = vadd.f32 %v2204, 1.0
        %v2206 = vrcp.pop %v2205
        %v2207 = vmul.f32 %v2205, %v2206
        %v2208 = vsub.f32 1.0, %v2207
        %v2209 = vmul.f32 %v2206, %v2208
        %v2210 = vadd.f32 %v2206, %v2209
        %vm2211 = vweird.f32 %v2205
        %vm2212 = vweird.f32 %v2206
        %vm2213 = vmor %vm2211, %vm2212
        %v2214 = vsel %vm2213, %v2206, %v2210
        %v2215 = vand.u32 2147483647, %v2205
        %vm2216 = vcmp.eq.f32.partialorder %v2215, 8.507059e+37
        %v2217 = vand.u32 %v2205, 2147483648
        %v2218 = vor.u32 1.1754944e-38, %v2217
        %v2219 = vsel %vm2216, %v2218, %v2214
        %v2220 = vmul.f32 %v2195, %v2219
        %v2221 = vmin.f32 %v2220, 1.0
        %v2222 = vmax.f32 %v2221, -1.0
        %v2223 = vmul.f32 %v1081, %v1081
        %v2224 = vmin.f32 16.0, %v2223
        %v2225 = vmul.f32 %v2224, 2.1237322e-06
        %v2226 = vadd.f32 %v2225, 0.00028619796
        %v2227 = vmul.f32 %v2224, %v2226
        %v2228 = vadd.f32 %v2227, 0.0036580483
        %v2229 = vmul.f32 %v2224, %v2228
        %v2230 = vadd.f32 %v2229, 0.05243302
        %v2231 = vmul.f32 %v2224, %v2230
        %v2232 = vadd.f32 %v2231, 0.18741608
        %v2233 = vmul.f32 %v2224, %v2232
        %v2234 = vadd.f32 %v2233, 1.1283791
        %v2235 = vmul.f32 %v1081, %v2234
        %v2236 = vmul.f32 %v2224, 3.8918573e-05
        %v2237 = vadd.f32 %v2236, 0.001143296
        %v2238 = vmul.f32 %v2224, %v2237
        %v2239 = vadd.f32 %v2238, 0.014752088
        %v2240 = vmul.f32 %v2224, %v2239
        %v2241 = vadd.f32 %v2240, 0.112945676
        %v2242 = vmul.f32 %v2224, %v2241
        %v2243 = vadd.f32 %v2242, 0.4994258
        %v2244 = vmul.f32 %v2224, %v2243
        %v2245 = vadd.f32 %v2244, 1.0
        %v2246 = vrcp.pop %v2245
        %v2247 = vmul.f32 %v2245, %v2246
        %v2248 = vsub.f32 1.0, %v2247
        %v2249 = vmul.f32 %v2246, %v2248
        %v2250 = vadd.f32 %v2246, %v2249
        %vm2251 = vweird.f32 %v2245
        %vm2252 = vweird.f32 %v2246
        %vm2253 = vmor %vm2251, %vm2252
        %v2254 = vsel %vm2253, %v2246, %v2250
        %v2255 = vand.u32 2147483647, %v2245
        %vm2256 = vcmp.eq.f32.partialorder %v2255, 8.507059e+37
        %v2257 = vand.u32 %v2245, 2147483648
        %v2258 = vor.u32 1.1754944e-38, %v2257
        %v2259 = vsel %vm2256, %v2258, %v2254
        %v2260 = vmul.f32 %v2235, %v2259
        %v2261 = vmin.f32 %v2260, 1.0
        %v2262 = vmax.f32 %v2261, -1.0
        %v2263 = vmul.f32 %v1082, %v1082
        %v2264 = vmin.f32 16.0, %v2263
        %v2265 = vmul.f32 %v2264, 2.1237322e-06
        %v2266 = vadd.f32 %v2265, 0.00028619796
        %v2267 = vmul.f32 %v2264, %v2266
        %v2268 = vadd.f32 %v2267, 0.0036580483
        %v2269 = vmul.f32 %v2264, %v2268
        %v2270 = vadd.f32 %v2269, 0.05243302
        %v2271 = vmul.f32 %v2264, %v2270
        %v2272 = vadd.f32 %v2271, 0.18741608
        %v2273 = vmul.f32 %v2264, %v2272
        %v2274 = vadd.f32 %v2273, 1.1283791
        %v2275 = vmul.f32 %v1082, %v2274
        %v2276 = vmul.f32 %v2264, 3.8918573e-05
        %v2277 = vadd.f32 %v2276, 0.001143296
        %v2278 = vmul.f32 %v2264, %v2277
        %v2279 = vadd.f32 %v2278, 0.014752088
        %v2280 = vmul.f32 %v2264, %v2279
        %v2281 = vadd.f32 %v2280, 0.112945676
        %v2282 = vmul.f32 %v2264, %v2281
        %v2283 = vadd.f32 %v2282, 0.4994258
        %v2284 = vmul.f32 %v2264, %v2283
        %v2285 = vadd.f32 %v2284, 1.0
        %v2286 = vrcp.pop %v2285
        %v2287 = vmul.f32 %v2285, %v2286
        %v2288 = vsub.f32 1.0, %v2287
        %v2289 = vmul.f32 %v2286, %v2288
        %v2290 = vadd.f32 %v2286, %v2289
        %vm2291 = vweird.f32 %v2285
        %vm2292 = vweird.f32 %v2286
        %vm2293 = vmor %vm2291, %vm2292
        %v2294 = vsel %vm2293, %v2286, %v2290
        %v2295 = vand.u32 2147483647, %v2285
        %vm2296 = vcmp.eq.f32.partialorder %v2295, 8.507059e+37
        %v2297 = vand.u32 %v2285, 2147483648
        %v2298 = vor.u32 1.1754944e-38, %v2297
        %v2299 = vsel %vm2296, %v2298, %v2294
        %v2300 = vmul.f32 %v2275, %v2299
        %v2301 = vmin.f32 %v2300, 1.0
        %v2302 = vmax.f32 %v2301, -1.0
        %v2303 = vmul.f32 %v1083, %v1083
        %v2304 = vmin.f32 16.0, %v2303
        %v2305 = vmul.f32 %v2304, 2.1237322e-06
        %v2306 = vadd.f32 %v2305, 0.00028619796
        %v2307 = vmul.f32 %v2304, %v2306
        %v2308 = vadd.f32 %v2307, 0.0036580483
        %v2309 = vmul.f32 %v2304, %v2308
        %v2310 = vadd.f32 %v2309, 0.05243302
        %v2311 = vmul.f32 %v2304, %v2310
        %v2312 = vadd.f32 %v2311, 0.18741608
        %v2313 = vmul.f32 %v2304, %v2312
        %v2314 = vadd.f32 %v2313, 1.1283791
        %v2315 = vmul.f32 %v1083, %v2314
        %v2316 = vmul.f32 %v2304, 3.8918573e-05
        %v2317 = vadd.f32 %v2316, 0.001143296
        %v2318 = vmul.f32 %v2304, %v2317
        %v2319 = vadd.f32 %v2318, 0.014752088
        %v2320 = vmul.f32 %v2304, %v2319
        %v2321 = vadd.f32 %v2320, 0.112945676
        %v2322 = vmul.f32 %v2304, %v2321
        %v2323 = vadd.f32 %v2322, 0.4994258
        %v2324 = vmul.f32 %v2304, %v2323
        %v2325 = vadd.f32 %v2324, 1.0
        %v2326 = vrcp.pop %v2325
        %v2327 = vmul.f32 %v2325, %v2326
        %v2328 = vsub.f32 1.0, %v2327
        %v2329 = vmul.f32 %v2326, %v2328
        %v2330 = vadd.f32 %v2326, %v2329
        %vm2331 = vweird.f32 %v2325
        %vm2332 = vweird.f32 %v2326
        %vm2333 = vmor %vm2331, %vm2332
        %v2334 = vsel %vm2333, %v2326, %v2330
        %v2335 = vand.u32 2147483647, %v2325
        %vm2336 = vcmp.eq.f32.partialorder %v2335, 8.507059e+37
        %v2337 = vand.u32 %v2325, 2147483648
        %v2338 = vor.u32 1.1754944e-38, %v2337
        %v2339 = vsel %vm2336, %v2338, %v2334
        %v2340 = vmul.f32 %v2315, %v2339
        %v2341 = vmin.f32 %v2340, 1.0
        %v2342 = vmax.f32 %v2341, -1.0
        %v2343 = vmul.f32 %v1084, %v1084
        %v2344 = vmin.f32 16.0, %v2343
        %v2345 = vmul.f32 %v2344, 2.1237322e-06
        %v2346 = vadd.f32 %v2345, 0.00028619796
        %v2347 = vmul.f32 %v2344, %v2346
        %v2348 = vadd.f32 %v2347, 0.0036580483
        %v2349 = vmul.f32 %v2344, %v2348
        %v2350 = vadd.f32 %v2349, 0.05243302
        %v2351 = vmul.f32 %v2344, %v2350
        %v2352 = vadd.f32 %v2351, 0.18741608
        %v2353 = vmul.f32 %v2344, %v2352
        %v2354 = vadd.f32 %v2353, 1.1283791
        %v2355 = vmul.f32 %v1084, %v2354
        %v2356 = vmul.f32 %v2344, 3.8918573e-05
        %v2357 = vadd.f32 %v2356, 0.001143296
        %v2358 = vmul.f32 %v2344, %v2357
        %v2359 = vadd.f32 %v2358, 0.014752088
        %v2360 = vmul.f32 %v2344, %v2359
        %v2361 = vadd.f32 %v2360, 0.112945676
        %v2362 = vmul.f32 %v2344, %v2361
        %v2363 = vadd.f32 %v2362, 0.4994258
        %v2364 = vmul.f32 %v2344, %v2363
        %v2365 = vadd.f32 %v2364, 1.0
        %v2366 = vrcp.pop %v2365
        %v2367 = vmul.f32 %v2365, %v2366
        %v2368 = vsub.f32 1.0, %v2367
        %v2369 = vmul.f32 %v2366, %v2368
        %v2370 = vadd.f32 %v2366, %v2369
        %vm2371 = vweird.f32 %v2365
        %vm2372 = vweird.f32 %v2366
        %vm2373 = vmor %vm2371, %vm2372
        %v2374 = vsel %vm2373, %v2366, %v2370
        %v2375 = vand.u32 2147483647, %v2365
        %vm2376 = vcmp.eq.f32.partialorder %v2375, 8.507059e+37
        %v2377 = vand.u32 %v2365, 2147483648
        %v2378 = vor.u32 1.1754944e-38, %v2377
        %v2379 = vsel %vm2376, %v2378, %v2374
        %v2380 = vmul.f32 %v2355, %v2379
        %v2381 = vmin.f32 %v2380, 1.0
        %v2382 = vmax.f32 %v2381, -1.0
        %v2383 = vmul.f32 %v1085, %v1085
        %v2384 = vmin.f32 16.0, %v2383
        %v2385 = vmul.f32 %v2384, 2.1237322e-06
        %v2386 = vadd.f32 %v2385, 0.00028619796
        %v2387 = vmul.f32 %v2384, %v2386
        %v2388 = vadd.f32 %v2387, 0.0036580483
        %v2389 = vmul.f32 %v2384, %v2388
        %v2390 = vadd.f32 %v2389, 0.05243302
        %v2391 = vmul.f32 %v2384, %v2390
        %v2392 = vadd.f32 %v2391, 0.18741608
        %v2393 = vmul.f32 %v2384, %v2392
        %v2394 = vadd.f32 %v2393, 1.1283791
        %v2395 = vmul.f32 %v1085, %v2394
        %v2396 = vmul.f32 %v2384, 3.8918573e-05
        %v2397 = vadd.f32 %v2396, 0.001143296
        %v2398 = vmul.f32 %v2384, %v2397
        %v2399 = vadd.f32 %v2398, 0.014752088
        %v2400 = vmul.f32 %v2384, %v2399
        %v2401 = vadd.f32 %v2400, 0.112945676
        %v2402 = vmul.f32 %v2384, %v2401
        %v2403 = vadd.f32 %v2402, 0.4994258
        %v2404 = vmul.f32 %v2384, %v2403
        %v2405 = vadd.f32 %v2404, 1.0
        %v2406 = vrcp.pop %v2405
        %v2407 = vmul.f32 %v2405, %v2406
        %v2408 = vsub.f32 1.0, %v2407
        %v2409 = vmul.f32 %v2406, %v2408
        %v2410 = vadd.f32 %v2406, %v2409
        %vm2411 = vweird.f32 %v2405
        %vm2412 = vweird.f32 %v2406
        %vm2413 = vmor %vm2411, %vm2412
        %v2414 = vsel %vm2413, %v2406, %v2410
        %v2415 = vand.u32 2147483647, %v2405
        %vm2416 = vcmp.eq.f32.partialorder %v2415, 8.507059e+37
        %v2417 = vand.u32 %v2405, 2147483648
        %v2418 = vor.u32 1.1754944e-38, %v2417
        %v2419 = vsel %vm2416, %v2418, %v2414
        %v2420 = vmul.f32 %v2395, %v2419
        %v2421 = vmin.f32 %v2420, 1.0
        %v2422 = vmax.f32 %v2421, -1.0
        %v2423 = vmul.f32 %v1086, %v1086
        %v2424 = vmin.f32 16.0, %v2423
        %v2425 = vmul.f32 %v2424, 2.1237322e-06
        %v2426 = vadd.f32 %v2425, 0.00028619796
        %v2427 = vmul.f32 %v2424, %v2426
        %v2428 = vadd.f32 %v2427, 0.0036580483
        %v2429 = vmul.f32 %v2424, %v2428
        %v2430 = vadd.f32 %v2429, 0.05243302
        %v2431 = vmul.f32 %v2424, %v2430
        %v2432 = vadd.f32 %v2431, 0.18741608
        %v2433 = vmul.f32 %v2424, %v2432
        %v2434 = vadd.f32 %v2433, 1.1283791
        %v2435 = vmul.f32 %v1086, %v2434
        %v2436 = vmul.f32 %v2424, 3.8918573e-05
        %v2437 = vadd.f32 %v2436, 0.001143296
        %v2438 = vmul.f32 %v2424, %v2437
        %v2439 = vadd.f32 %v2438, 0.014752088
        %v2440 = vmul.f32 %v2424, %v2439
        %v2441 = vadd.f32 %v2440, 0.112945676
        %v2442 = vmul.f32 %v2424, %v2441
        %v2443 = vadd.f32 %v2442, 0.4994258
        %v2444 = vmul.f32 %v2424, %v2443
        %v2445 = vadd.f32 %v2444, 1.0
        %v2446 = vrcp.pop %v2445
        %v2447 = vmul.f32 %v2445, %v2446
        %v2448 = vsub.f32 1.0, %v2447
        %v2449 = vmul.f32 %v2446, %v2448
        %v2450 = vadd.f32 %v2446, %v2449
        %vm2451 = vweird.f32 %v2445
        %vm2452 = vweird.f32 %v2446
        %vm2453 = vmor %vm2451, %vm2452
        %v2454 = vsel %vm2453, %v2446, %v2450
        %v2455 = vand.u32 2147483647, %v2445
        %vm2456 = vcmp.eq.f32.partialorder %v2455, 8.507059e+37
        %v2457 = vand.u32 %v2445, 2147483648
        %v2458 = vor.u32 1.1754944e-38, %v2457
        %v2459 = vsel %vm2456, %v2458, %v2454
        %v2460 = vmul.f32 %v2435, %v2459
        %v2461 = vmin.f32 %v2460, 1.0
        %v2462 = vmax.f32 %v2461, -1.0
        %v2463 = vmul.f32 %v1087, %v1087
        %v2464 = vmin.f32 16.0, %v2463
        %v2465 = vmul.f32 %v2464, 2.1237322e-06
        %v2466 = vadd.f32 %v2465, 0.00028619796
        %v2467 = vmul.f32 %v2464, %v2466
        %v2468 = vadd.f32 %v2467, 0.0036580483
        %v2469 = vmul.f32 %v2464, %v2468
        %v2470 = vadd.f32 %v2469, 0.05243302
        %v2471 = vmul.f32 %v2464, %v2470
        %v2472 = vadd.f32 %v2471, 0.18741608
        %v2473 = vmul.f32 %v2464, %v2472
        %v2474 = vadd.f32 %v2473, 1.1283791
        %v2475 = vmul.f32 %v1087, %v2474
        %v2476 = vmul.f32 %v2464, 3.8918573e-05
        %v2477 = vadd.f32 %v2476, 0.001143296
        %v2478 = vmul.f32 %v2464, %v2477
        %v2479 = vadd.f32 %v2478, 0.014752088
        %v2480 = vmul.f32 %v2464, %v2479
        %v2481 = vadd.f32 %v2480, 0.112945676
        %v2482 = vmul.f32 %v2464, %v2481
        %v2483 = vadd.f32 %v2482, 0.4994258
        %v2484 = vmul.f32 %v2464, %v2483
        %v2485 = vadd.f32 %v2484, 1.0
        %v2486 = vrcp.pop %v2485
        %v2487 = vmul.f32 %v2485, %v2486
        %v2488 = vsub.f32 1.0, %v2487
        %v2489 = vmul.f32 %v2486, %v2488
        %v2490 = vadd.f32 %v2486, %v2489
        %vm2491 = vweird.f32 %v2485
        %vm2492 = vweird.f32 %v2486
        %vm2493 = vmor %vm2491, %vm2492
        %v2494 = vsel %vm2493, %v2486, %v2490
        %v2495 = vand.u32 2147483647, %v2485
        %vm2496 = vcmp.eq.f32.partialorder %v2495, 8.507059e+37
        %v2497 = vand.u32 %v2485, 2147483648
        %v2498 = vor.u32 1.1754944e-38, %v2497
        %v2499 = vsel %vm2496, %v2498, %v2494
        %v2500 = vmul.f32 %v2475, %v2499
        %v2501 = vmin.f32 %v2500, 1.0
        %v2502 = vmax.f32 %v2501, -1.0
        %v2503 = vmul.f32 %v1088, %v1088
        %v2504 = vmin.f32 16.0, %v2503
        %v2505 = vmul.f32 %v2504, 2.1237322e-06
        %v2506 = vadd.f32 %v2505, 0.00028619796
        %v2507 = vmul.f32 %v2504, %v2506
        %v2508 = vadd.f32 %v2507, 0.0036580483
        %v2509 = vmul.f32 %v2504, %v2508
        %v2510 = vadd.f32 %v2509, 0.05243302
        %v2511 = vmul.f32 %v2504, %v2510
        %v2512 = vadd.f32 %v2511, 0.18741608
        %v2513 = vmul.f32 %v2504, %v2512
        %v2514 = vadd.f32 %v2513, 1.1283791
        %v2515 = vmul.f32 %v1088, %v2514
        %v2516 = vmul.f32 %v2504, 3.8918573e-05
        %v2517 = vadd.f32 %v2516, 0.001143296
        %v2518 = vmul.f32 %v2504, %v2517
        %v2519 = vadd.f32 %v2518, 0.014752088
        %v2520 = vmul.f32 %v2504, %v2519
        %v2521 = vadd.f32 %v2520, 0.112945676
        %v2522 = vmul.f32 %v2504, %v2521
        %v2523 = vadd.f32 %v2522, 0.4994258
        %v2524 = vmul.f32 %v2504, %v2523
        %v2525 = vadd.f32 %v2524, 1.0
        %v2526 = vrcp.pop %v2525
        %v2527 = vmul.f32 %v2525, %v2526
        %v2528 = vsub.f32 1.0, %v2527
        %v2529 = vmul.f32 %v2526, %v2528
        %v2530 = vadd.f32 %v2526, %v2529
        %vm2531 = vweird.f32 %v2525
        %vm2532 = vweird.f32 %v2526
        %vm2533 = vmor %vm2531, %vm2532
        %v2534 = vsel %vm2533, %v2526, %v2530
        %v2535 = vand.u32 2147483647, %v2525
        %vm2536 = vcmp.eq.f32.partialorder %v2535, 8.507059e+37
        %v2537 = vand.u32 %v2525, 2147483648
        %v2538 = vor.u32 1.1754944e-38, %v2537
        %v2539 = vsel %vm2536, %v2538, %v2534
        %v2540 = vmul.f32 %v2515, %v2539
        %v2541 = vmin.f32 %v2540, 1.0
        %v2542 = vmax.f32 %v2541, -1.0
        %v2543 = vmul.f32 %v1089, %v1089
        %v2544 = vmin.f32 16.0, %v2543
        %v2545 = vmul.f32 %v2544, 2.1237322e-06
        %v2546 = vadd.f32 %v2545, 0.00028619796
        %v2547 = vmul.f32 %v2544, %v2546
        %v2548 = vadd.f32 %v2547, 0.0036580483
        %v2549 = vmul.f32 %v2544, %v2548
        %v2550 = vadd.f32 %v2549, 0.05243302
        %v2551 = vmul.f32 %v2544, %v2550
        %v2552 = vadd.f32 %v2551, 0.18741608
        %v2553 = vmul.f32 %v2544, %v2552
        %v2554 = vadd.f32 %v2553, 1.1283791
        %v2555 = vmul.f32 %v1089, %v2554
        %v2556 = vmul.f32 %v2544, 3.8918573e-05
        %v2557 = vadd.f32 %v2556, 0.001143296
        %v2558 = vmul.f32 %v2544, %v2557
        %v2559 = vadd.f32 %v2558, 0.014752088
        %v2560 = vmul.f32 %v2544, %v2559
        %v2561 = vadd.f32 %v2560, 0.112945676
        %v2562 = vmul.f32 %v2544, %v2561
        %v2563 = vadd.f32 %v2562, 0.4994258
        %v2564 = vmul.f32 %v2544, %v2563
        %v2565 = vadd.f32 %v2564, 1.0
        %v2566 = vrcp.pop %v2565
        %v2567 = vmul.f32 %v2565, %v2566
        %v2568 = vsub.f32 1.0, %v2567
        %v2569 = vmul.f32 %v2566, %v2568
        %v2570 = vadd.f32 %v2566, %v2569
        %vm2571 = vweird.f32 %v2565
        %vm2572 = vweird.f32 %v2566
        %vm2573 = vmor %vm2571, %vm2572
        %v2574 = vsel %vm2573, %v2566, %v2570
        %v2575 = vand.u32 2147483647, %v2565
        %vm2576 = vcmp.eq.f32.partialorder %v2575, 8.507059e+37
        %v2577 = vand.u32 %v2565, 2147483648
        %v2578 = vor.u32 1.1754944e-38, %v2577
        %v2579 = vsel %vm2576, %v2578, %v2574
        %v2580 = vmul.f32 %v2555, %v2579
        %v2581 = vmin.f32 %v2580, 1.0
        %v2582 = vmax.f32 %v2581, -1.0
        %v2583 = vmul.f32 %v1090, %v1090
        %v2584 = vmin.f32 16.0, %v2583
        %v2585 = vmul.f32 %v2584, 2.1237322e-06
        %v2586 = vadd.f32 %v2585, 0.00028619796
        %v2587 = vmul.f32 %v2584, %v2586
        %v2588 = vadd.f32 %v2587, 0.0036580483
        %v2589 = vmul.f32 %v2584, %v2588
        %v2590 = vadd.f32 %v2589, 0.05243302
        %v2591 = vmul.f32 %v2584, %v2590
        %v2592 = vadd.f32 %v2591, 0.18741608
        %v2593 = vmul.f32 %v2584, %v2592
        %v2594 = vadd.f32 %v2593, 1.1283791
        %v2595 = vmul.f32 %v1090, %v2594
        %v2596 = vmul.f32 %v2584, 3.8918573e-05
        %v2597 = vadd.f32 %v2596, 0.001143296
        %v2598 = vmul.f32 %v2584, %v2597
        %v2599 = vadd.f32 %v2598, 0.014752088
        %v2600 = vmul.f32 %v2584, %v2599
        %v2601 = vadd.f32 %v2600, 0.112945676
        %v2602 = vmul.f32 %v2584, %v2601
        %v2603 = vadd.f32 %v2602, 0.4994258
        %v2604 = vmul.f32 %v2584, %v2603
        %v2605 = vadd.f32 %v2604, 1.0
        %v2606 = vrcp.pop %v2605
        %v2607 = vmul.f32 %v2605, %v2606
        %v2608 = vsub.f32 1.0, %v2607
        %v2609 = vmul.f32 %v2606, %v2608
        %v2610 = vadd.f32 %v2606, %v2609
        %vm2611 = vweird.f32 %v2605
        %vm2612 = vweird.f32 %v2606
        %vm2613 = vmor %vm2611, %vm2612
        %v2614 = vsel %vm2613, %v2606, %v2610
        %v2615 = vand.u32 2147483647, %v2605
        %vm2616 = vcmp.eq.f32.partialorder %v2615, 8.507059e+37
        %v2617 = vand.u32 %v2605, 2147483648
        %v2618 = vor.u32 1.1754944e-38, %v2617
        %v2619 = vsel %vm2616, %v2618, %v2614
        %v2620 = vmul.f32 %v2595, %v2619
        %v2621 = vmin.f32 %v2620, 1.0
        %v2622 = vmax.f32 %v2621, -1.0
        %v2623 = vmul.f32 %v1091, %v1091
        %v2624 = vmin.f32 16.0, %v2623
        %v2625 = vmul.f32 %v2624, 2.1237322e-06
        %v2626 = vadd.f32 %v2625, 0.00028619796
        %v2627 = vmul.f32 %v2624, %v2626
        %v2628 = vadd.f32 %v2627, 0.0036580483
        %v2629 = vmul.f32 %v2624, %v2628
        %v2630 = vadd.f32 %v2629, 0.05243302
        %v2631 = vmul.f32 %v2624, %v2630
        %v2632 = vadd.f32 %v2631, 0.18741608
        %v2633 = vmul.f32 %v2624, %v2632
        %v2634 = vadd.f32 %v2633, 1.1283791
        %v2635 = vmul.f32 %v1091, %v2634
        %v2636 = vmul.f32 %v2624, 3.8918573e-05
        %v2637 = vadd.f32 %v2636, 0.001143296
        %v2638 = vmul.f32 %v2624, %v2637
        %v2639 = vadd.f32 %v2638, 0.014752088
        %v2640 = vmul.f32 %v2624, %v2639
        %v2641 = vadd.f32 %v2640, 0.112945676
        %v2642 = vmul.f32 %v2624, %v2641
        %v2643 = vadd.f32 %v2642, 0.4994258
        %v2644 = vmul.f32 %v2624, %v2643
        %v2645 = vadd.f32 %v2644, 1.0
        %v2646 = vrcp.pop %v2645
        %v2647 = vmul.f32 %v2645, %v2646
        %v2648 = vsub.f32 1.0, %v2647
        %v2649 = vmul.f32 %v2646, %v2648
        %v2650 = vadd.f32 %v2646, %v2649
        %vm2651 = vweird.f32 %v2645
        %vm2652 = vweird.f32 %v2646
        %vm2653 = vmor %vm2651, %vm2652
        %v2654 = vsel %vm2653, %v2646, %v2650
        %v2655 = vand.u32 2147483647, %v2645
        %vm2656 = vcmp.eq.f32.partialorder %v2655, 8.507059e+37
        %v2657 = vand.u32 %v2645, 2147483648
        %v2658 = vor.u32 1.1754944e-38, %v2657
        %v2659 = vsel %vm2656, %v2658, %v2654
        %v2660 = vmul.f32 %v2635, %v2659
        %v2661 = vmin.f32 %v2660, 1.0
        %v2662 = vmax.f32 %v2661, -1.0
        %v2663 = vmul.f32 %v1092, %v1092
        %v2664 = vmin.f32 16.0, %v2663
        %v2665 = vmul.f32 %v2664, 2.1237322e-06
        %v2666 = vadd.f32 %v2665, 0.00028619796
        %v2667 = vmul.f32 %v2664, %v2666
        %v2668 = vadd.f32 %v2667, 0.0036580483
        %v2669 = vmul.f32 %v2664, %v2668
        %v2670 = vadd.f32 %v2669, 0.05243302
        %v2671 = vmul.f32 %v2664, %v2670
        %v2672 = vadd.f32 %v2671, 0.18741608
        %v2673 = vmul.f32 %v2664, %v2672
        %v2674 = vadd.f32 %v2673, 1.1283791
        %v2675 = vmul.f32 %v1092, %v2674
        %v2676 = vmul.f32 %v2664, 3.8918573e-05
        %v2677 = vadd.f32 %v2676, 0.001143296
        %v2678 = vmul.f32 %v2664, %v2677
        %v2679 = vadd.f32 %v2678, 0.014752088
        %v2680 = vmul.f32 %v2664, %v2679
        %v2681 = vadd.f32 %v2680, 0.112945676
        %v2682 = vmul.f32 %v2664, %v2681
        %v2683 = vadd.f32 %v2682, 0.4994258
        %v2684 = vmul.f32 %v2664, %v2683
        %v2685 = vadd.f32 %v2684, 1.0
        %v2686 = vrcp.pop %v2685
        %v2687 = vmul.f32 %v2685, %v2686
        %v2688 = vsub.f32 1.0, %v2687
        %v2689 = vmul.f32 %v2686, %v2688
        %v2690 = vadd.f32 %v2686, %v2689
        %vm2691 = vweird.f32 %v2685
        %vm2692 = vweird.f32 %v2686
        %vm2693 = vmor %vm2691, %vm2692
        %v2694 = vsel %vm2693, %v2686, %v2690
        %v2695 = vand.u32 2147483647, %v2685
        %vm2696 = vcmp.eq.f32.partialorder %v2695, 8.507059e+37
        %v2697 = vand.u32 %v2685, 2147483648
        %v2698 = vor.u32 1.1754944e-38, %v2697
        %v2699 = vsel %vm2696, %v2698, %v2694
        %v2700 = vmul.f32 %v2675, %v2699
        %v2701 = vmin.f32 %v2700, 1.0
        %v2702 = vmax.f32 %v2701, -1.0
        %v2703 = vmul.f32 %v1093, %v1093
        %v2704 = vmin.f32 16.0, %v2703
        %v2705 = vmul.f32 %v2704, 2.1237322e-06
        %v2706 = vadd.f32 %v2705, 0.00028619796
        %v2707 = vmul.f32 %v2704, %v2706
        %v2708 = vadd.f32 %v2707, 0.0036580483
        %v2709 = vmul.f32 %v2704, %v2708
        %v2710 = vadd.f32 %v2709, 0.05243302
        %v2711 = vmul.f32 %v2704, %v2710
        %v2712 = vadd.f32 %v2711, 0.18741608
        %v2713 = vmul.f32 %v2704, %v2712
        %v2714 = vadd.f32 %v2713, 1.1283791
        %v2715 = vmul.f32 %v1093, %v2714
        %v2716 = vmul.f32 %v2704, 3.8918573e-05
        %v2717 = vadd.f32 %v2716, 0.001143296
        %v2718 = vmul.f32 %v2704, %v2717
        %v2719 = vadd.f32 %v2718, 0.014752088
        %v2720 = vmul.f32 %v2704, %v2719
        %v2721 = vadd.f32 %v2720, 0.112945676
        %v2722 = vmul.f32 %v2704, %v2721
        %v2723 = vadd.f32 %v2722, 0.4994258
        %v2724 = vmul.f32 %v2704, %v2723
        %v2725 = vadd.f32 %v2724, 1.0
        %v2726 = vrcp.pop %v2725
        %v2727 = vmul.f32 %v2725, %v2726
        %v2728 = vsub.f32 1.0, %v2727
        %v2729 = vmul.f32 %v2726, %v2728
        %v2730 = vadd.f32 %v2726, %v2729
        %vm2731 = vweird.f32 %v2725
        %vm2732 = vweird.f32 %v2726
        %vm2733 = vmor %vm2731, %vm2732
        %v2734 = vsel %vm2733, %v2726, %v2730
        %v2735 = vand.u32 2147483647, %v2725
        %vm2736 = vcmp.eq.f32.partialorder %v2735, 8.507059e+37
        %v2737 = vand.u32 %v2725, 2147483648
        %v2738 = vor.u32 1.1754944e-38, %v2737
        %v2739 = vsel %vm2736, %v2738, %v2734
        %v2740 = vmul.f32 %v2715, %v2739
        %v2741 = vmin.f32 %v2740, 1.0
        %v2742 = vmax.f32 %v2741, -1.0
        %v2743 = vmul.f32 %v1094, %v1094
        %v2744 = vmin.f32 16.0, %v2743
        %v2745 = vmul.f32 %v2744, 2.1237322e-06
        %v2746 = vadd.f32 %v2745, 0.00028619796
        %v2747 = vmul.f32 %v2744, %v2746
        %v2748 = vadd.f32 %v2747, 0.0036580483
        %v2749 = vmul.f32 %v2744, %v2748
        %v2750 = vadd.f32 %v2749, 0.05243302
        %v2751 = vmul.f32 %v2744, %v2750
        %v2752 = vadd.f32 %v2751, 0.18741608
        %v2753 = vmul.f32 %v2744, %v2752
        %v2754 = vadd.f32 %v2753, 1.1283791
        %v2755 = vmul.f32 %v1094, %v2754
        %v2756 = vmul.f32 %v2744, 3.8918573e-05
        %v2757 = vadd.f32 %v2756, 0.001143296
        %v2758 = vmul.f32 %v2744, %v2757
        %v2759 = vadd.f32 %v2758, 0.014752088
        %v2760 = vmul.f32 %v2744, %v2759
        %v2761 = vadd.f32 %v2760, 0.112945676
        %v2762 = vmul.f32 %v2744, %v2761
        %v2763 = vadd.f32 %v2762, 0.4994258
        %v2764 = vmul.f32 %v2744, %v2763
        %v2765 = vadd.f32 %v2764, 1.0
        %v2766 = vrcp.pop %v2765
        %v2767 = vmul.f32 %v2765, %v2766
        %v2768 = vsub.f32 1.0, %v2767
        %v2769 = vmul.f32 %v2766, %v2768
        %v2770 = vadd.f32 %v2766, %v2769
        %vm2771 = vweird.f32 %v2765
        %vm2772 = vweird.f32 %v2766
        %vm2773 = vmor %vm2771, %vm2772
        %v2774 = vsel %vm2773, %v2766, %v2770
        %v2775 = vand.u32 2147483647, %v2765
        %vm2776 = vcmp.eq.f32.partialorder %v2775, 8.507059e+37
        %v2777 = vand.u32 %v2765, 2147483648
        %v2778 = vor.u32 1.1754944e-38, %v2777
        %v2779 = vsel %vm2776, %v2778, %v2774
        %v2780 = vmul.f32 %v2755, %v2779
        %v2781 = vmin.f32 %v2780, 1.0
        %v2782 = vmax.f32 %v2781, -1.0
        %v2783 = vmul.f32 %v1095, %v1095
        %v2784 = vmin.f32 16.0, %v2783
        %v2785 = vmul.f32 %v2784, 2.1237322e-06
        %v2786 = vadd.f32 %v2785, 0.00028619796
        %v2787 = vmul.f32 %v2784, %v2786
        %v2788 = vadd.f32 %v2787, 0.0036580483
        %v2789 = vmul.f32 %v2784, %v2788
        %v2790 = vadd.f32 %v2789, 0.05243302
        %v2791 = vmul.f32 %v2784, %v2790
        %v2792 = vadd.f32 %v2791, 0.18741608
        %v2793 = vmul.f32 %v2784, %v2792
        %v2794 = vadd.f32 %v2793, 1.1283791
        %v2795 = vmul.f32 %v1095, %v2794
        %v2796 = vmul.f32 %v2784, 3.8918573e-05
        %v2797 = vadd.f32 %v2796, 0.001143296
        %v2798 = vmul.f32 %v2784, %v2797
        %v2799 = vadd.f32 %v2798, 0.014752088
        %v2800 = vmul.f32 %v2784, %v2799
        %v2801 = vadd.f32 %v2800, 0.112945676
        %v2802 = vmul.f32 %v2784, %v2801
        %v2803 = vadd.f32 %v2802, 0.4994258
        %v2804 = vmul.f32 %v2784, %v2803
        %v2805 = vadd.f32 %v2804, 1.0
        %v2806 = vrcp.pop %v2805
        %v2807 = vmul.f32 %v2805, %v2806
        %v2808 = vsub.f32 1.0, %v2807
        %v2809 = vmul.f32 %v2806, %v2808
        %v2810 = vadd.f32 %v2806, %v2809
        %vm2811 = vweird.f32 %v2805
        %vm2812 = vweird.f32 %v2806
        %vm2813 = vmor %vm2811, %vm2812
        %v2814 = vsel %vm2813, %v2806, %v2810
        %v2815 = vand.u32 2147483647, %v2805
        %vm2816 = vcmp.eq.f32.partialorder %v2815, 8.507059e+37
        %v2817 = vand.u32 %v2805, 2147483648
        %v2818 = vor.u32 1.1754944e-38, %v2817
        %v2819 = vsel %vm2816, %v2818, %v2814
        %v2820 = vmul.f32 %v2795, %v2819
        %v2821 = vmin.f32 %v2820, 1.0
        %v2822 = vmax.f32 %v2821, -1.0
        %v2823 = vmul.f32 %v1096, %v1096
        %v2824 = vmin.f32 16.0, %v2823
        %v2825 = vmul.f32 %v2824, 2.1237322e-06
        %v2826 = vadd.f32 %v2825, 0.00028619796
        %v2827 = vmul.f32 %v2824, %v2826
        %v2828 = vadd.f32 %v2827, 0.0036580483
        %v2829 = vmul.f32 %v2824, %v2828
        %v2830 = vadd.f32 %v2829, 0.05243302
        %v2831 = vmul.f32 %v2824, %v2830
        %v2832 = vadd.f32 %v2831, 0.18741608
        %v2833 = vmul.f32 %v2824, %v2832
        %v2834 = vadd.f32 %v2833, 1.1283791
        %v2835 = vmul.f32 %v1096, %v2834
        %v2836 = vmul.f32 %v2824, 3.8918573e-05
        %v2837 = vadd.f32 %v2836, 0.001143296
        %v2838 = vmul.f32 %v2824, %v2837
        %v2839 = vadd.f32 %v2838, 0.014752088
        %v2840 = vmul.f32 %v2824, %v2839
        %v2841 = vadd.f32 %v2840, 0.112945676
        %v2842 = vmul.f32 %v2824, %v2841
        %v2843 = vadd.f32 %v2842, 0.4994258
        %v2844 = vmul.f32 %v2824, %v2843
        %v2845 = vadd.f32 %v2844, 1.0
        %v2846 = vrcp.pop %v2845
        %v2847 = vmul.f32 %v2845, %v2846
        %v2848 = vsub.f32 1.0, %v2847
        %v2849 = vmul.f32 %v2846, %v2848
        %v2850 = vadd.f32 %v2846, %v2849
        %vm2851 = vweird.f32 %v2845
        %vm2852 = vweird.f32 %v2846
        %vm2853 = vmor %vm2851, %vm2852
        %v2854 = vsel %vm2853, %v2846, %v2850
        %v2855 = vand.u32 2147483647, %v2845
        %vm2856 = vcmp.eq.f32.partialorder %v2855, 8.507059e+37
        %v2857 = vand.u32 %v2845, 2147483648
        %v2858 = vor.u32 1.1754944e-38, %v2857
        %v2859 = vsel %vm2856, %v2858, %v2854
        %v2860 = vmul.f32 %v2835, %v2859
        %v2861 = vmin.f32 %v2860, 1.0
        %v2862 = vmax.f32 %v2861, -1.0
        %v2863 = vmul.f32 %v1097, %v1097
        %v2864 = vmin.f32 16.0, %v2863
        %v2865 = vmul.f32 %v2864, 2.1237322e-06
        %v2866 = vadd.f32 %v2865, 0.00028619796
        %v2867 = vmul.f32 %v2864, %v2866
        %v2868 = vadd.f32 %v2867, 0.0036580483
        %v2869 = vmul.f32 %v2864, %v2868
        %v2870 = vadd.f32 %v2869, 0.05243302
        %v2871 = vmul.f32 %v2864, %v2870
        %v2872 = vadd.f32 %v2871, 0.18741608
        %v2873 = vmul.f32 %v2864, %v2872
        %v2874 = vadd.f32 %v2873, 1.1283791
        %v2875 = vmul.f32 %v1097, %v2874
        %v2876 = vmul.f32 %v2864, 3.8918573e-05
        %v2877 = vadd.f32 %v2876, 0.001143296
        %v2878 = vmul.f32 %v2864, %v2877
        %v2879 = vadd.f32 %v2878, 0.014752088
        %v2880 = vmul.f32 %v2864, %v2879
        %v2881 = vadd.f32 %v2880, 0.112945676
        %v2882 = vmul.f32 %v2864, %v2881
        %v2883 = vadd.f32 %v2882, 0.4994258
        %v2884 = vmul.f32 %v2864, %v2883
        %v2885 = vadd.f32 %v2884, 1.0
        %v2886 = vrcp.pop %v2885
        %v2887 = vmul.f32 %v2885, %v2886
        %v2888 = vsub.f32 1.0, %v2887
        %v2889 = vmul.f32 %v2886, %v2888
        %v2890 = vadd.f32 %v2886, %v2889
        %vm2891 = vweird.f32 %v2885
        %vm2892 = vweird.f32 %v2886
        %vm2893 = vmor %vm2891, %vm2892
        %v2894 = vsel %vm2893, %v2886, %v2890
        %v2895 = vand.u32 2147483647, %v2885
        %vm2896 = vcmp.eq.f32.partialorder %v2895, 8.507059e+37
        %v2897 = vand.u32 %v2885, 2147483648
        %v2898 = vor.u32 1.1754944e-38, %v2897
        %v2899 = vsel %vm2896, %v2898, %v2894
        %v2900 = vmul.f32 %v2875, %v2899
        %v2901 = vmin.f32 %v2900, 1.0
        %v2902 = vmax.f32 %v2901, -1.0
        %v2903 = vmul.f32 %v1098, %v1098
        %v2904 = vmin.f32 16.0, %v2903
        %v2905 = vmul.f32 %v2904, 2.1237322e-06
        %v2906 = vadd.f32 %v2905, 0.00028619796
        %v2907 = vmul.f32 %v2904, %v2906
        %v2908 = vadd.f32 %v2907, 0.0036580483
        %v2909 = vmul.f32 %v2904, %v2908
        %v2910 = vadd.f32 %v2909, 0.05243302
        %v2911 = vmul.f32 %v2904, %v2910
        %v2912 = vadd.f32 %v2911, 0.18741608
        %v2913 = vmul.f32 %v2904, %v2912
        %v2914 = vadd.f32 %v2913, 1.1283791
        %v2915 = vmul.f32 %v1098, %v2914
        %v2916 = vmul.f32 %v2904, 3.8918573e-05
        %v2917 = vadd.f32 %v2916, 0.001143296
        %v2918 = vmul.f32 %v2904, %v2917
        %v2919 = vadd.f32 %v2918, 0.014752088
        %v2920 = vmul.f32 %v2904, %v2919
        %v2921 = vadd.f32 %v2920, 0.112945676
        %v2922 = vmul.f32 %v2904, %v2921
        %v2923 = vadd.f32 %v2922, 0.4994258
        %v2924 = vmul.f32 %v2904, %v2923
        %v2925 = vadd.f32 %v2924, 1.0
        %v2926 = vrcp.pop %v2925
        %v2927 = vmul.f32 %v2925, %v2926
        %v2928 = vsub.f32 1.0, %v2927
        %v2929 = vmul.f32 %v2926, %v2928
        %v2930 = vadd.f32 %v2926, %v2929
        %vm2931 = vweird.f32 %v2925
        %vm2932 = vweird.f32 %v2926
        %vm2933 = vmor %vm2931, %vm2932
        %v2934 = vsel %vm2933, %v2926, %v2930
        %v2935 = vand.u32 2147483647, %v2925
        %vm2936 = vcmp.eq.f32.partialorder %v2935, 8.507059e+37
        %v2937 = vand.u32 %v2925, 2147483648
        %v2938 = vor.u32 1.1754944e-38, %v2937
        %v2939 = vsel %vm2936, %v2938, %v2934
        %v2940 = vmul.f32 %v2915, %v2939
        %v2941 = vmin.f32 %v2940, 1.0
        %v2942 = vmax.f32 %v2941, -1.0
        %v2943 = vmul.f32 %v1099, %v1099
        %v2944 = vmin.f32 16.0, %v2943
        %v2945 = vmul.f32 %v2944, 2.1237322e-06
        %v2946 = vadd.f32 %v2945, 0.00028619796
        %v2947 = vmul.f32 %v2944, %v2946
        %v2948 = vadd.f32 %v2947, 0.0036580483
        %v2949 = vmul.f32 %v2944, %v2948
        %v2950 = vadd.f32 %v2949, 0.05243302
        %v2951 = vmul.f32 %v2944, %v2950
        %v2952 = vadd.f32 %v2951, 0.18741608
        %v2953 = vmul.f32 %v2944, %v2952
        %v2954 = vadd.f32 %v2953, 1.1283791
        %v2955 = vmul.f32 %v1099, %v2954
        %v2956 = vmul.f32 %v2944, 3.8918573e-05
        %v2957 = vadd.f32 %v2956, 0.001143296
        %v2958 = vmul.f32 %v2944, %v2957
        %v2959 = vadd.f32 %v2958, 0.014752088
        %v2960 = vmul.f32 %v2944, %v2959
        %v2961 = vadd.f32 %v2960, 0.112945676
        %v2962 = vmul.f32 %v2944, %v2961
        %v2963 = vadd.f32 %v2962, 0.4994258
        %v2964 = vmul.f32 %v2944, %v2963
        %v2965 = vadd.f32 %v2964, 1.0
        %v2966 = vrcp.pop %v2965
        %v2967 = vmul.f32 %v2965, %v2966
        %v2968 = vsub.f32 1.0, %v2967
        %v2969 = vmul.f32 %v2966, %v2968
        %v2970 = vadd.f32 %v2966, %v2969
        %vm2971 = vweird.f32 %v2965
        %vm2972 = vweird.f32 %v2966
        %vm2973 = vmor %vm2971, %vm2972
        %v2974 = vsel %vm2973, %v2966, %v2970
        %v2975 = vand.u32 2147483647, %v2965
        %vm2976 = vcmp.eq.f32.partialorder %v2975, 8.507059e+37
        %v2977 = vand.u32 %v2965, 2147483648
        %v2978 = vor.u32 1.1754944e-38, %v2977
        %v2979 = vsel %vm2976, %v2978, %v2974
        %v2980 = vmul.f32 %v2955, %v2979
        %v2981 = vmin.f32 %v2980, 1.0
        %v2982 = vmax.f32 %v2981, -1.0
        %v2983 = vmul.f32 %v1100, %v1100
        %v2984 = vmin.f32 16.0, %v2983
        %v2985 = vmul.f32 %v2984, 2.1237322e-06
        %v2986 = vadd.f32 %v2985, 0.00028619796
        %v2987 = vmul.f32 %v2984, %v2986
        %v2988 = vadd.f32 %v2987, 0.0036580483
        %v2989 = vmul.f32 %v2984, %v2988
        %v2990 = vadd.f32 %v2989, 0.05243302
        %v2991 = vmul.f32 %v2984, %v2990
        %v2992 = vadd.f32 %v2991, 0.18741608
        %v2993 = vmul.f32 %v2984, %v2992
        %v2994 = vadd.f32 %v2993, 1.1283791
        %v2995 = vmul.f32 %v1100, %v2994
        %v2996 = vmul.f32 %v2984, 3.8918573e-05
        %v2997 = vadd.f32 %v2996, 0.001143296
        %v2998 = vmul.f32 %v2984, %v2997
        %v2999 = vadd.f32 %v2998, 0.014752088
        %v3000 = vmul.f32 %v2984, %v2999
        %v3001 = vadd.f32 %v3000, 0.112945676
        %v3002 = vmul.f32 %v2984, %v3001
        %v3003 = vadd.f32 %v3002, 0.4994258
        %v3004 = vmul.f32 %v2984, %v3003
        %v3005 = vadd.f32 %v3004, 1.0
        %v3006 = vrcp.pop %v3005
        %v3007 = vmul.f32 %v3005, %v3006
        %v3008 = vsub.f32 1.0, %v3007
        %v3009 = vmul.f32 %v3006, %v3008
        %v3010 = vadd.f32 %v3006, %v3009
        %vm3011 = vweird.f32 %v3005
        %vm3012 = vweird.f32 %v3006
        %vm3013 = vmor %vm3011, %vm3012
        %v3014 = vsel %vm3013, %v3006, %v3010
        %v3015 = vand.u32 2147483647, %v3005
        %vm3016 = vcmp.eq.f32.partialorder %v3015, 8.507059e+37
        %v3017 = vand.u32 %v3005, 2147483648
        %v3018 = vor.u32 1.1754944e-38, %v3017
        %v3019 = vsel %vm3016, %v3018, %v3014
        %v3020 = vmul.f32 %v2995, %v3019
        %v3021 = vmin.f32 %v3020, 1.0
        %v3022 = vmax.f32 %v3021, -1.0
        %v3023 = vmul.f32 %v1101, %v1101
        %v3024 = vmin.f32 16.0, %v3023
        %v3025 = vmul.f32 %v3024, 2.1237322e-06
        %v3026 = vadd.f32 %v3025, 0.00028619796
        %v3027 = vmul.f32 %v3024, %v3026
        %v3028 = vadd.f32 %v3027, 0.0036580483
        %v3029 = vmul.f32 %v3024, %v3028
        %v3030 = vadd.f32 %v3029, 0.05243302
        %v3031 = vmul.f32 %v3024, %v3030
        %v3032 = vadd.f32 %v3031, 0.18741608
        %v3033 = vmul.f32 %v3024, %v3032
        %v3034 = vadd.f32 %v3033, 1.1283791
        %v3035 = vmul.f32 %v1101, %v3034
        %v3036 = vmul.f32 %v3024, 3.8918573e-05
        %v3037 = vadd.f32 %v3036, 0.001143296
        %v3038 = vmul.f32 %v3024, %v3037
        %v3039 = vadd.f32 %v3038, 0.014752088
        %v3040 = vmul.f32 %v3024, %v3039
        %v3041 = vadd.f32 %v3040, 0.112945676
        %v3042 = vmul.f32 %v3024, %v3041
        %v3043 = vadd.f32 %v3042, 0.4994258
        %v3044 = vmul.f32 %v3024, %v3043
        %v3045 = vadd.f32 %v3044, 1.0
        %v3046 = vrcp.pop %v3045
        %v3047 = vmul.f32 %v3045, %v3046
        %v3048 = vsub.f32 1.0, %v3047
        %v3049 = vmul.f32 %v3046, %v3048
        %v3050 = vadd.f32 %v3046, %v3049
        %vm3051 = vweird.f32 %v3045
        %vm3052 = vweird.f32 %v3046
        %vm3053 = vmor %vm3051, %vm3052
        %v3054 = vsel %vm3053, %v3046, %v3050
        %v3055 = vand.u32 2147483647, %v3045
        %vm3056 = vcmp.eq.f32.partialorder %v3055, 8.507059e+37
        %v3057 = vand.u32 %v3045, 2147483648
        %v3058 = vor.u32 1.1754944e-38, %v3057
        %v3059 = vsel %vm3056, %v3058, %v3054
        %v3060 = vmul.f32 %v3035, %v3059
        %v3061 = vmin.f32 %v3060, 1.0
        %v3062 = vmax.f32 %v3061, -1.0
        %v3063 = vmul.f32 %v1102, %v1102
        %v3064 = vmin.f32 16.0, %v3063
        %v3065 = vmul.f32 %v3064, 2.1237322e-06
        %v3066 = vadd.f32 %v3065, 0.00028619796
        %v3067 = vmul.f32 %v3064, %v3066
        %v3068 = vadd.f32 %v3067, 0.0036580483
        %v3069 = vmul.f32 %v3064, %v3068
        %v3070 = vadd.f32 %v3069, 0.05243302
        %v3071 = vmul.f32 %v3064, %v3070
        %v3072 = vadd.f32 %v3071, 0.18741608
        %v3073 = vmul.f32 %v3064, %v3072
        %v3074 = vadd.f32 %v3073, 1.1283791
        %v3075 = vmul.f32 %v1102, %v3074
        %v3076 = vmul.f32 %v3064, 3.8918573e-05
        %v3077 = vadd.f32 %v3076, 0.001143296
        %v3078 = vmul.f32 %v3064, %v3077
        %v3079 = vadd.f32 %v3078, 0.014752088
        %v3080 = vmul.f32 %v3064, %v3079
        %v3081 = vadd.f32 %v3080, 0.112945676
        %v3082 = vmul.f32 %v3064, %v3081
        %v3083 = vadd.f32 %v3082, 0.4994258
        %v3084 = vmul.f32 %v3064, %v3083
        %v3085 = vadd.f32 %v3084, 1.0
        %v3086 = vrcp.pop %v3085
        %v3087 = vmul.f32 %v3085, %v3086
        %v3088 = vsub.f32 1.0, %v3087
        %v3089 = vmul.f32 %v3086, %v3088
        %v3090 = vadd.f32 %v3086, %v3089
        %vm3091 = vweird.f32 %v3085
        %vm3092 = vweird.f32 %v3086
        %vm3093 = vmor %vm3091, %vm3092
        %v3094 = vsel %vm3093, %v3086, %v3090
        %v3095 = vand.u32 2147483647, %v3085
        %vm3096 = vcmp.eq.f32.partialorder %v3095, 8.507059e+37
        %v3097 = vand.u32 %v3085, 2147483648
        %v3098 = vor.u32 1.1754944e-38, %v3097
        %v3099 = vsel %vm3096, %v3098, %v3094
        %v3100 = vmul.f32 %v3075, %v3099
        %v3101 = vmin.f32 %v3100, 1.0
        %v3102 = vmax.f32 %v3101, -1.0
        %v3103 = vmul.f32 %v1103, %v1103
        %v3104 = vmin.f32 16.0, %v3103
        %v3105 = vmul.f32 %v3104, 2.1237322e-06
        %v3106 = vadd.f32 %v3105, 0.00028619796
        %v3107 = vmul.f32 %v3104, %v3106
        %v3108 = vadd.f32 %v3107, 0.0036580483
        %v3109 = vmul.f32 %v3104, %v3108
        %v3110 = vadd.f32 %v3109, 0.05243302
        %v3111 = vmul.f32 %v3104, %v3110
        %v3112 = vadd.f32 %v3111, 0.18741608
        %v3113 = vmul.f32 %v3104, %v3112
        %v3114 = vadd.f32 %v3113, 1.1283791
        %v3115 = vmul.f32 %v1103, %v3114
        %v3116 = vmul.f32 %v3104, 3.8918573e-05
        %v3117 = vadd.f32 %v3116, 0.001143296
        %v3118 = vmul.f32 %v3104, %v3117
        %v3119 = vadd.f32 %v3118, 0.014752088
        %v3120 = vmul.f32 %v3104, %v3119
        %v3121 = vadd.f32 %v3120, 0.112945676
        %v3122 = vmul.f32 %v3104, %v3121
        %v3123 = vadd.f32 %v3122, 0.4994258
        %v3124 = vmul.f32 %v3104, %v3123
        %v3125 = vadd.f32 %v3124, 1.0
        %v3126 = vrcp.pop %v3125
        %v3127 = vmul.f32 %v3125, %v3126
        %v3128 = vsub.f32 1.0, %v3127
        %v3129 = vmul.f32 %v3126, %v3128
        %v3130 = vadd.f32 %v3126, %v3129
        %vm3131 = vweird.f32 %v3125
        %vm3132 = vweird.f32 %v3126
        %vm3133 = vmor %vm3131, %vm3132
        %v3134 = vsel %vm3133, %v3126, %v3130
        %v3135 = vand.u32 2147483647, %v3125
        %vm3136 = vcmp.eq.f32.partialorder %v3135, 8.507059e+37
        %v3137 = vand.u32 %v3125, 2147483648
        %v3138 = vor.u32 1.1754944e-38, %v3137
        %v3139 = vsel %vm3136, %v3138, %v3134
        %v3140 = vmul.f32 %v3115, %v3139
        %v3141 = vmin.f32 %v3140, 1.0
        %v3142 = vmax.f32 %v3141, -1.0
        %v3143 = vmul.f32 %v1104, %v1104
        %v3144 = vmin.f32 16.0, %v3143
        %v3145 = vmul.f32 %v3144, 2.1237322e-06
        %v3146 = vadd.f32 %v3145, 0.00028619796
        %v3147 = vmul.f32 %v3144, %v3146
        %v3148 = vadd.f32 %v3147, 0.0036580483
        %v3149 = vmul.f32 %v3144, %v3148
        %v3150 = vadd.f32 %v3149, 0.05243302
        %v3151 = vmul.f32 %v3144, %v3150
        %v3152 = vadd.f32 %v3151, 0.18741608
        %v3153 = vmul.f32 %v3144, %v3152
        %v3154 = vadd.f32 %v3153, 1.1283791
        %v3155 = vmul.f32 %v1104, %v3154
        %v3156 = vmul.f32 %v3144, 3.8918573e-05
        %v3157 = vadd.f32 %v3156, 0.001143296
        %v3158 = vmul.f32 %v3144, %v3157
        %v3159 = vadd.f32 %v3158, 0.014752088
        %v3160 = vmul.f32 %v3144, %v3159
        %v3161 = vadd.f32 %v3160, 0.112945676
        %v3162 = vmul.f32 %v3144, %v3161
        %v3163 = vadd.f32 %v3162, 0.4994258
        %v3164 = vmul.f32 %v3144, %v3163
        %v3165 = vadd.f32 %v3164, 1.0
        %v3166 = vrcp.pop %v3165
        %v3167 = vmul.f32 %v3165, %v3166
        %v3168 = vsub.f32 1.0, %v3167
        %v3169 = vmul.f32 %v3166, %v3168
        %v3170 = vadd.f32 %v3166, %v3169
        %vm3171 = vweird.f32 %v3165
        %vm3172 = vweird.f32 %v3166
        %vm3173 = vmor %vm3171, %vm3172
        %v3174 = vsel %vm3173, %v3166, %v3170
        %v3175 = vand.u32 2147483647, %v3165
        %vm3176 = vcmp.eq.f32.partialorder %v3175, 8.507059e+37
        %v3177 = vand.u32 %v3165, 2147483648
        %v3178 = vor.u32 1.1754944e-38, %v3177
        %v3179 = vsel %vm3176, %v3178, %v3174
        %v3180 = vmul.f32 %v3155, %v3179
        %v3181 = vmin.f32 %v3180, 1.0
        %v3182 = vmax.f32 %v3181, -1.0
        %v3183 = vmul.f32 %v1105, %v1105
        %v3184 = vmin.f32 16.0, %v3183
        %v3185 = vmul.f32 %v3184, 2.1237322e-06
        %v3186 = vadd.f32 %v3185, 0.00028619796
        %v3187 = vmul.f32 %v3184, %v3186
        %v3188 = vadd.f32 %v3187, 0.0036580483
        %v3189 = vmul.f32 %v3184, %v3188
        %v3190 = vadd.f32 %v3189, 0.05243302
        %v3191 = vmul.f32 %v3184, %v3190
        %v3192 = vadd.f32 %v3191, 0.18741608
        %v3193 = vmul.f32 %v3184, %v3192
        %v3194 = vadd.f32 %v3193, 1.1283791
        %v3195 = vmul.f32 %v1105, %v3194
        %v3196 = vmul.f32 %v3184, 3.8918573e-05
        %v3197 = vadd.f32 %v3196, 0.001143296
        %v3198 = vmul.f32 %v3184, %v3197
        %v3199 = vadd.f32 %v3198, 0.014752088
        %v3200 = vmul.f32 %v3184, %v3199
        %v3201 = vadd.f32 %v3200, 0.112945676
        %v3202 = vmul.f32 %v3184, %v3201
        %v3203 = vadd.f32 %v3202, 0.4994258
        %v3204 = vmul.f32 %v3184, %v3203
        %v3205 = vadd.f32 %v3204, 1.0
        %v3206 = vrcp.pop %v3205
        %v3207 = vmul.f32 %v3205, %v3206
        %v3208 = vsub.f32 1.0, %v3207
        %v3209 = vmul.f32 %v3206, %v3208
        %v3210 = vadd.f32 %v3206, %v3209
        %vm3211 = vweird.f32 %v3205
        %vm3212 = vweird.f32 %v3206
        %vm3213 = vmor %vm3211, %vm3212
        %v3214 = vsel %vm3213, %v3206, %v3210
        %v3215 = vand.u32 2147483647, %v3205
        %vm3216 = vcmp.eq.f32.partialorder %v3215, 8.507059e+37
        %v3217 = vand.u32 %v3205, 2147483648
        %v3218 = vor.u32 1.1754944e-38, %v3217
        %v3219 = vsel %vm3216, %v3218, %v3214
        %v3220 = vmul.f32 %v3195, %v3219
        %v3221 = vmin.f32 %v3220, 1.0
        %v3222 = vmax.f32 %v3221, -1.0
        %v3223 = vmul.f32 %v1106, %v1106
        %v3224 = vmin.f32 16.0, %v3223
        %v3225 = vmul.f32 %v3224, 2.1237322e-06
        %v3226 = vadd.f32 %v3225, 0.00028619796
        %v3227 = vmul.f32 %v3224, %v3226
        %v3228 = vadd.f32 %v3227, 0.0036580483
        %v3229 = vmul.f32 %v3224, %v3228
        %v3230 = vadd.f32 %v3229, 0.05243302
        %v3231 = vmul.f32 %v3224, %v3230
        %v3232 = vadd.f32 %v3231, 0.18741608
        %v3233 = vmul.f32 %v3224, %v3232
        %v3234 = vadd.f32 %v3233, 1.1283791
        %v3235 = vmul.f32 %v1106, %v3234
        %v3236 = vmul.f32 %v3224, 3.8918573e-05
        %v3237 = vadd.f32 %v3236, 0.001143296
        %v3238 = vmul.f32 %v3224, %v3237
        %v3239 = vadd.f32 %v3238, 0.014752088
        %v3240 = vmul.f32 %v3224, %v3239
        %v3241 = vadd.f32 %v3240, 0.112945676
        %v3242 = vmul.f32 %v3224, %v3241
        %v3243 = vadd.f32 %v3242, 0.4994258
        %v3244 = vmul.f32 %v3224, %v3243
        %v3245 = vadd.f32 %v3244, 1.0
        %v3246 = vrcp.pop %v3245
        %v3247 = vmul.f32 %v3245, %v3246
        %v3248 = vsub.f32 1.0, %v3247
        %v3249 = vmul.f32 %v3246, %v3248
        %v3250 = vadd.f32 %v3246, %v3249
        %vm3251 = vweird.f32 %v3245
        %vm3252 = vweird.f32 %v3246
        %vm3253 = vmor %vm3251, %vm3252
        %v3254 = vsel %vm3253, %v3246, %v3250
        %v3255 = vand.u32 2147483647, %v3245
        %vm3256 = vcmp.eq.f32.partialorder %v3255, 8.507059e+37
        %v3257 = vand.u32 %v3245, 2147483648
        %v3258 = vor.u32 1.1754944e-38, %v3257
        %v3259 = vsel %vm3256, %v3258, %v3254
        %v3260 = vmul.f32 %v3235, %v3259
        %v3261 = vmin.f32 %v3260, 1.0
        %v3262 = vmax.f32 %v3261, -1.0
        %v3263 = vmul.f32 %v1107, %v1107
        %v3264 = vmin.f32 16.0, %v3263
        %v3265 = vmul.f32 %v3264, 2.1237322e-06
        %v3266 = vadd.f32 %v3265, 0.00028619796
        %v3267 = vmul.f32 %v3264, %v3266
        %v3268 = vadd.f32 %v3267, 0.0036580483
        %v3269 = vmul.f32 %v3264, %v3268
        %v3270 = vadd.f32 %v3269, 0.05243302
        %v3271 = vmul.f32 %v3264, %v3270
        %v3272 = vadd.f32 %v3271, 0.18741608
        %v3273 = vmul.f32 %v3264, %v3272
        %v3274 = vadd.f32 %v3273, 1.1283791
        %v3275 = vmul.f32 %v1107, %v3274
        %v3276 = vmul.f32 %v3264, 3.8918573e-05
        %v3277 = vadd.f32 %v3276, 0.001143296
        %v3278 = vmul.f32 %v3264, %v3277
        %v3279 = vadd.f32 %v3278, 0.014752088
        %v3280 = vmul.f32 %v3264, %v3279
        %v3281 = vadd.f32 %v3280, 0.112945676
        %v3282 = vmul.f32 %v3264, %v3281
        %v3283 = vadd.f32 %v3282, 0.4994258
        %v3284 = vmul.f32 %v3264, %v3283
        %v3285 = vadd.f32 %v3284, 1.0
        %v3286 = vrcp.pop %v3285
        %v3287 = vmul.f32 %v3285, %v3286
        %v3288 = vsub.f32 1.0, %v3287
        %v3289 = vmul.f32 %v3286, %v3288
        %v3290 = vadd.f32 %v3286, %v3289
        %vm3291 = vweird.f32 %v3285
        %vm3292 = vweird.f32 %v3286
        %vm3293 = vmor %vm3291, %vm3292
        %v3294 = vsel %vm3293, %v3286, %v3290
        %v3295 = vand.u32 2147483647, %v3285
        %vm3296 = vcmp.eq.f32.partialorder %v3295, 8.507059e+37
        %v3297 = vand.u32 %v3285, 2147483648
        %v3298 = vor.u32 1.1754944e-38, %v3297
        %v3299 = vsel %vm3296, %v3298, %v3294
        %v3300 = vmul.f32 %v3275, %v3299
        %v3301 = vmin.f32 %v3300, 1.0
        %v3302 = vmax.f32 %v3301, -1.0
        %v3303 = vmul.f32 %v1108, %v1108
        %v3304 = vmin.f32 16.0, %v3303
        %v3305 = vmul.f32 %v3304, 2.1237322e-06
        %v3306 = vadd.f32 %v3305, 0.00028619796
        %v3307 = vmul.f32 %v3304, %v3306
        %v3308 = vadd.f32 %v3307, 0.0036580483
        %v3309 = vmul.f32 %v3304, %v3308
        %v3310 = vadd.f32 %v3309, 0.05243302
        %v3311 = vmul.f32 %v3304, %v3310
        %v3312 = vadd.f32 %v3311, 0.18741608
        %v3313 = vmul.f32 %v3304, %v3312
        %v3314 = vadd.f32 %v3313, 1.1283791
        %v3315 = vmul.f32 %v1108, %v3314
        %v3316 = vmul.f32 %v3304, 3.8918573e-05
        %v3317 = vadd.f32 %v3316, 0.001143296
        %v3318 = vmul.f32 %v3304, %v3317
        %v3319 = vadd.f32 %v3318, 0.014752088
        %v3320 = vmul.f32 %v3304, %v3319
        %v3321 = vadd.f32 %v3320, 0.112945676
        %v3322 = vmul.f32 %v3304, %v3321
        %v3323 = vadd.f32 %v3322, 0.4994258
        %v3324 = vmul.f32 %v3304, %v3323
        %v3325 = vadd.f32 %v3324, 1.0
        %v3326 = vrcp.pop %v3325
        %v3327 = vmul.f32 %v3325, %v3326
        %v3328 = vsub.f32 1.0, %v3327
        %v3329 = vmul.f32 %v3326, %v3328
        %v3330 = vadd.f32 %v3326, %v3329
        %vm3331 = vweird.f32 %v3325
        %vm3332 = vweird.f32 %v3326
        %vm3333 = vmor %vm3331, %vm3332
        %v3334 = vsel %vm3333, %v3326, %v3330
        %v3335 = vand.u32 2147483647, %v3325
        %vm3336 = vcmp.eq.f32.partialorder %v3335, 8.507059e+37
        %v3337 = vand.u32 %v3325, 2147483648
        %v3338 = vor.u32 1.1754944e-38, %v3337
        %v3339 = vsel %vm3336, %v3338, %v3334
        %v3340 = vmul.f32 %v3315, %v3339
        %v3341 = vmin.f32 %v3340, 1.0
        %v3342 = vmax.f32 %v3341, -1.0
        %v3343 = vmul.f32 %v1109, %v1109
        %v3344 = vmin.f32 16.0, %v3343
        %v3345 = vmul.f32 %v3344, 2.1237322e-06
        %v3346 = vadd.f32 %v3345, 0.00028619796
        %v3347 = vmul.f32 %v3344, %v3346
        %v3348 = vadd.f32 %v3347, 0.0036580483
        %v3349 = vmul.f32 %v3344, %v3348
        %v3350 = vadd.f32 %v3349, 0.05243302
        %v3351 = vmul.f32 %v3344, %v3350
        %v3352 = vadd.f32 %v3351, 0.18741608
        %v3353 = vmul.f32 %v3344, %v3352
        %v3354 = vadd.f32 %v3353, 1.1283791
        %v3355 = vmul.f32 %v1109, %v3354
        %v3356 = vmul.f32 %v3344, 3.8918573e-05
        %v3357 = vadd.f32 %v3356, 0.001143296
        %v3358 = vmul.f32 %v3344, %v3357
        %v3359 = vadd.f32 %v3358, 0.014752088
        %v3360 = vmul.f32 %v3344, %v3359
        %v3361 = vadd.f32 %v3360, 0.112945676
        %v3362 = vmul.f32 %v3344, %v3361
        %v3363 = vadd.f32 %v3362, 0.4994258
        %v3364 = vmul.f32 %v3344, %v3363
        %v3365 = vadd.f32 %v3364, 1.0
        %v3366 = vrcp.pop %v3365
        %v3367 = vmul.f32 %v3365, %v3366
        %v3368 = vsub.f32 1.0, %v3367
        %v3369 = vmul.f32 %v3366, %v3368
        %v3370 = vadd.f32 %v3366, %v3369
        %vm3371 = vweird.f32 %v3365
        %vm3372 = vweird.f32 %v3366
        %vm3373 = vmor %vm3371, %vm3372
        %v3374 = vsel %vm3373, %v3366, %v3370
        %v3375 = vand.u32 2147483647, %v3365
        %vm3376 = vcmp.eq.f32.partialorder %v3375, 8.507059e+37
        %v3377 = vand.u32 %v3365, 2147483648
        %v3378 = vor.u32 1.1754944e-38, %v3377
        %v3379 = vsel %vm3376, %v3378, %v3374
        %v3380 = vmul.f32 %v3355, %v3379
        %v3381 = vmin.f32 %v3380, 1.0
        %v3382 = vmax.f32 %v3381, -1.0
        %v3383 = vmul.f32 %v1110, %v1110
        %v3384 = vmin.f32 16.0, %v3383
        %v3385 = vmul.f32 %v3384, 2.1237322e-06
        %v3386 = vadd.f32 %v3385, 0.00028619796
        %v3387 = vmul.f32 %v3384, %v3386
        %v3388 = vadd.f32 %v3387, 0.0036580483
        %v3389 = vmul.f32 %v3384, %v3388
        %v3390 = vadd.f32 %v3389, 0.05243302
        %v3391 = vmul.f32 %v3384, %v3390
        %v3392 = vadd.f32 %v3391, 0.18741608
        %v3393 = vmul.f32 %v3384, %v3392
        %v3394 = vadd.f32 %v3393, 1.1283791
        %v3395 = vmul.f32 %v1110, %v3394
        %v3396 = vmul.f32 %v3384, 3.8918573e-05
        %v3397 = vadd.f32 %v3396, 0.001143296
        %v3398 = vmul.f32 %v3384, %v3397
        %v3399 = vadd.f32 %v3398, 0.014752088
        %v3400 = vmul.f32 %v3384, %v3399
        %v3401 = vadd.f32 %v3400, 0.112945676
        %v3402 = vmul.f32 %v3384, %v3401
        %v3403 = vadd.f32 %v3402, 0.4994258
        %v3404 = vmul.f32 %v3384, %v3403
        %v3405 = vadd.f32 %v3404, 1.0
        %v3406 = vrcp.pop %v3405
        %v3407 = vmul.f32 %v3405, %v3406
        %v3408 = vsub.f32 1.0, %v3407
        %v3409 = vmul.f32 %v3406, %v3408
        %v3410 = vadd.f32 %v3406, %v3409
        %vm3411 = vweird.f32 %v3405
        %vm3412 = vweird.f32 %v3406
        %vm3413 = vmor %vm3411, %vm3412
        %v3414 = vsel %vm3413, %v3406, %v3410
        %v3415 = vand.u32 2147483647, %v3405
        %vm3416 = vcmp.eq.f32.partialorder %v3415, 8.507059e+37
        %v3417 = vand.u32 %v3405, 2147483648
        %v3418 = vor.u32 1.1754944e-38, %v3417
        %v3419 = vsel %vm3416, %v3418, %v3414
        %v3420 = vmul.f32 %v3395, %v3419
        %v3421 = vmin.f32 %v3420, 1.0
        %v3422 = vmax.f32 %v3421, -1.0
        %v3423 = vmul.f32 %v1111, %v1111
        %v3424 = vmin.f32 16.0, %v3423
        %v3425 = vmul.f32 %v3424, 2.1237322e-06
        %v3426 = vadd.f32 %v3425, 0.00028619796
        %v3427 = vmul.f32 %v3424, %v3426
        %v3428 = vadd.f32 %v3427, 0.0036580483
        %v3429 = vmul.f32 %v3424, %v3428
        %v3430 = vadd.f32 %v3429, 0.05243302
        %v3431 = vmul.f32 %v3424, %v3430
        %v3432 = vadd.f32 %v3431, 0.18741608
        %v3433 = vmul.f32 %v3424, %v3432
        %v3434 = vadd.f32 %v3433, 1.1283791
        %v3435 = vmul.f32 %v1111, %v3434
        %v3436 = vmul.f32 %v3424, 3.8918573e-05
        %v3437 = vadd.f32 %v3436, 0.001143296
        %v3438 = vmul.f32 %v3424, %v3437
        %v3439 = vadd.f32 %v3438, 0.014752088
        %v3440 = vmul.f32 %v3424, %v3439
        %v3441 = vadd.f32 %v3440, 0.112945676
        %v3442 = vmul.f32 %v3424, %v3441
        %v3443 = vadd.f32 %v3442, 0.4994258
        %v3444 = vmul.f32 %v3424, %v3443
        %v3445 = vadd.f32 %v3444, 1.0
        %v3446 = vrcp.pop %v3445
        %v3447 = vmul.f32 %v3445, %v3446
        %v3448 = vsub.f32 1.0, %v3447
        %v3449 = vmul.f32 %v3446, %v3448
        %v3450 = vadd.f32 %v3446, %v3449
        %vm3451 = vweird.f32 %v3445
        %vm3452 = vweird.f32 %v3446
        %vm3453 = vmor %vm3451, %vm3452
        %v3454 = vsel %vm3453, %v3446, %v3450
        %v3455 = vand.u32 2147483647, %v3445
        %vm3456 = vcmp.eq.f32.partialorder %v3455, 8.507059e+37
        %v3457 = vand.u32 %v3445, 2147483648
        %v3458 = vor.u32 1.1754944e-38, %v3457
        %v3459 = vsel %vm3456, %v3458, %v3454
        %v3460 = vmul.f32 %v3435, %v3459
        %v3461 = vmin.f32 %v3460, 1.0
        %v3462 = vmax.f32 %v3461, -1.0
        %v3463 = vmul.f32 %v1112, %v1112
        %v3464 = vmin.f32 16.0, %v3463
        %v3465 = vmul.f32 %v3464, 2.1237322e-06
        %v3466 = vadd.f32 %v3465, 0.00028619796
        %v3467 = vmul.f32 %v3464, %v3466
        %v3468 = vadd.f32 %v3467, 0.0036580483
        %v3469 = vmul.f32 %v3464, %v3468
        %v3470 = vadd.f32 %v3469, 0.05243302
        %v3471 = vmul.f32 %v3464, %v3470
        %v3472 = vadd.f32 %v3471, 0.18741608
        %v3473 = vmul.f32 %v3464, %v3472
        %v3474 = vadd.f32 %v3473, 1.1283791
        %v3475 = vmul.f32 %v1112, %v3474
        %v3476 = vmul.f32 %v3464, 3.8918573e-05
        %v3477 = vadd.f32 %v3476, 0.001143296
        %v3478 = vmul.f32 %v3464, %v3477
        %v3479 = vadd.f32 %v3478, 0.014752088
        %v3480 = vmul.f32 %v3464, %v3479
        %v3481 = vadd.f32 %v3480, 0.112945676
        %v3482 = vmul.f32 %v3464, %v3481
        %v3483 = vadd.f32 %v3482, 0.4994258
        %v3484 = vmul.f32 %v3464, %v3483
        %v3485 = vadd.f32 %v3484, 1.0
        %v3486 = vrcp.pop %v3485
        %v3487 = vmul.f32 %v3485, %v3486
        %v3488 = vsub.f32 1.0, %v3487
        %v3489 = vmul.f32 %v3486, %v3488
        %v3490 = vadd.f32 %v3486, %v3489
        %vm3491 = vweird.f32 %v3485
        %vm3492 = vweird.f32 %v3486
        %vm3493 = vmor %vm3491, %vm3492
        %v3494 = vsel %vm3493, %v3486, %v3490
        %v3495 = vand.u32 2147483647, %v3485
        %vm3496 = vcmp.eq.f32.partialorder %v3495, 8.507059e+37
        %v3497 = vand.u32 %v3485, 2147483648
        %v3498 = vor.u32 1.1754944e-38, %v3497
        %v3499 = vsel %vm3496, %v3498, %v3494
        %v3500 = vmul.f32 %v3475, %v3499
        %v3501 = vmin.f32 %v3500, 1.0
        %v3502 = vmax.f32 %v3501, -1.0
        %v3503 = vmul.f32 %v1113, %v1113
        %v3504 = vmin.f32 16.0, %v3503
        %v3505 = vmul.f32 %v3504, 2.1237322e-06
        %v3506 = vadd.f32 %v3505, 0.00028619796
        %v3507 = vmul.f32 %v3504, %v3506
        %v3508 = vadd.f32 %v3507, 0.0036580483
        %v3509 = vmul.f32 %v3504, %v3508
        %v3510 = vadd.f32 %v3509, 0.05243302
        %v3511 = vmul.f32 %v3504, %v3510
        %v3512 = vadd.f32 %v3511, 0.18741608
        %v3513 = vmul.f32 %v3504, %v3512
        %v3514 = vadd.f32 %v3513, 1.1283791
        %v3515 = vmul.f32 %v1113, %v3514
        %v3516 = vmul.f32 %v3504, 3.8918573e-05
        %v3517 = vadd.f32 %v3516, 0.001143296
        %v3518 = vmul.f32 %v3504, %v3517
        %v3519 = vadd.f32 %v3518, 0.014752088
        %v3520 = vmul.f32 %v3504, %v3519
        %v3521 = vadd.f32 %v3520, 0.112945676
        %v3522 = vmul.f32 %v3504, %v3521
        %v3523 = vadd.f32 %v3522, 0.4994258
        %v3524 = vmul.f32 %v3504, %v3523
        %v3525 = vadd.f32 %v3524, 1.0
        %v3526 = vrcp.pop %v3525
        %v3527 = vmul.f32 %v3525, %v3526
        %v3528 = vsub.f32 1.0, %v3527
        %v3529 = vmul.f32 %v3526, %v3528
        %v3530 = vadd.f32 %v3526, %v3529
        %vm3531 = vweird.f32 %v3525
        %vm3532 = vweird.f32 %v3526
        %vm3533 = vmor %vm3531, %vm3532
        %v3534 = vsel %vm3533, %v3526, %v3530
        %v3535 = vand.u32 2147483647, %v3525
        %vm3536 = vcmp.eq.f32.partialorder %v3535, 8.507059e+37
        %v3537 = vand.u32 %v3525, 2147483648
        %v3538 = vor.u32 1.1754944e-38, %v3537
        %v3539 = vsel %vm3536, %v3538, %v3534
        %v3540 = vmul.f32 %v3515, %v3539
        %v3541 = vmin.f32 %v3540, 1.0
        %v3542 = vmax.f32 %v3541, -1.0
        %v3543 = vmul.f32 %v1114, %v1114
        %v3544 = vmin.f32 16.0, %v3543
        %v3545 = vmul.f32 %v3544, 2.1237322e-06
        %v3546 = vadd.f32 %v3545, 0.00028619796
        %v3547 = vmul.f32 %v3544, %v3546
        %v3548 = vadd.f32 %v3547, 0.0036580483
        %v3549 = vmul.f32 %v3544, %v3548
        %v3550 = vadd.f32 %v3549, 0.05243302
        %v3551 = vmul.f32 %v3544, %v3550
        %v3552 = vadd.f32 %v3551, 0.18741608
        %v3553 = vmul.f32 %v3544, %v3552
        %v3554 = vadd.f32 %v3553, 1.1283791
        %v3555 = vmul.f32 %v1114, %v3554
        %v3556 = vmul.f32 %v3544, 3.8918573e-05
        %v3557 = vadd.f32 %v3556, 0.001143296
        %v3558 = vmul.f32 %v3544, %v3557
        %v3559 = vadd.f32 %v3558, 0.014752088
        %v3560 = vmul.f32 %v3544, %v3559
        %v3561 = vadd.f32 %v3560, 0.112945676
        %v3562 = vmul.f32 %v3544, %v3561
        %v3563 = vadd.f32 %v3562, 0.4994258
        %v3564 = vmul.f32 %v3544, %v3563
        %v3565 = vadd.f32 %v3564, 1.0
        %v3566 = vrcp.pop %v3565
        %v3567 = vmul.f32 %v3565, %v3566
        %v3568 = vsub.f32 1.0, %v3567
        %v3569 = vmul.f32 %v3566, %v3568
        %v3570 = vadd.f32 %v3566, %v3569
        %vm3571 = vweird.f32 %v3565
        %vm3572 = vweird.f32 %v3566
        %vm3573 = vmor %vm3571, %vm3572
        %v3574 = vsel %vm3573, %v3566, %v3570
        %v3575 = vand.u32 2147483647, %v3565
        %vm3576 = vcmp.eq.f32.partialorder %v3575, 8.507059e+37
        %v3577 = vand.u32 %v3565, 2147483648
        %v3578 = vor.u32 1.1754944e-38, %v3577
        %v3579 = vsel %vm3576, %v3578, %v3574
        %v3580 = vmul.f32 %v3555, %v3579
        %v3581 = vmin.f32 %v3580, 1.0
        %v3582 = vmax.f32 %v3581, -1.0
        %v3583 = vmul.f32 %v1115, %v1115
        %v3584 = vmin.f32 16.0, %v3583
        %v3585 = vmul.f32 %v3584, 2.1237322e-06
        %v3586 = vadd.f32 %v3585, 0.00028619796
        %v3587 = vmul.f32 %v3584, %v3586
        %v3588 = vadd.f32 %v3587, 0.0036580483
        %v3589 = vmul.f32 %v3584, %v3588
        %v3590 = vadd.f32 %v3589, 0.05243302
        %v3591 = vmul.f32 %v3584, %v3590
        %v3592 = vadd.f32 %v3591, 0.18741608
        %v3593 = vmul.f32 %v3584, %v3592
        %v3594 = vadd.f32 %v3593, 1.1283791
        %v3595 = vmul.f32 %v1115, %v3594
        %v3596 = vmul.f32 %v3584, 3.8918573e-05
        %v3597 = vadd.f32 %v3596, 0.001143296
        %v3598 = vmul.f32 %v3584, %v3597
        %v3599 = vadd.f32 %v3598, 0.014752088
        %v3600 = vmul.f32 %v3584, %v3599
        %v3601 = vadd.f32 %v3600, 0.112945676
        %v3602 = vmul.f32 %v3584, %v3601
        %v3603 = vadd.f32 %v3602, 0.4994258
        %v3604 = vmul.f32 %v3584, %v3603
        %v3605 = vadd.f32 %v3604, 1.0
        %v3606 = vrcp.pop %v3605
        %v3607 = vmul.f32 %v3605, %v3606
        %v3608 = vsub.f32 1.0, %v3607
        %v3609 = vmul.f32 %v3606, %v3608
        %v3610 = vadd.f32 %v3606, %v3609
        %vm3611 = vweird.f32 %v3605
        %vm3612 = vweird.f32 %v3606
        %vm3613 = vmor %vm3611, %vm3612
        %v3614 = vsel %vm3613, %v3606, %v3610
        %v3615 = vand.u32 2147483647, %v3605
        %vm3616 = vcmp.eq.f32.partialorder %v3615, 8.507059e+37
        %v3617 = vand.u32 %v3605, 2147483648
        %v3618 = vor.u32 1.1754944e-38, %v3617
        %v3619 = vsel %vm3616, %v3618, %v3614
        %v3620 = vmul.f32 %v3595, %v3619
        %v3621 = vmin.f32 %v3620, 1.0
        %v3622 = vmax.f32 %v3621, -1.0
        %v3623 = vmul.f32 %v1116, %v1116
        %v3624 = vmin.f32 16.0, %v3623
        %v3625 = vmul.f32 %v3624, 2.1237322e-06
        %v3626 = vadd.f32 %v3625, 0.00028619796
        %v3627 = vmul.f32 %v3624, %v3626
        %v3628 = vadd.f32 %v3627, 0.0036580483
        %v3629 = vmul.f32 %v3624, %v3628
        %v3630 = vadd.f32 %v3629, 0.05243302
        %v3631 = vmul.f32 %v3624, %v3630
        %v3632 = vadd.f32 %v3631, 0.18741608
        %v3633 = vmul.f32 %v3624, %v3632
        %v3634 = vadd.f32 %v3633, 1.1283791
        %v3635 = vmul.f32 %v1116, %v3634
        %v3636 = vmul.f32 %v3624, 3.8918573e-05
        %v3637 = vadd.f32 %v3636, 0.001143296
        %v3638 = vmul.f32 %v3624, %v3637
        %v3639 = vadd.f32 %v3638, 0.014752088
        %v3640 = vmul.f32 %v3624, %v3639
        %v3641 = vadd.f32 %v3640, 0.112945676
        %v3642 = vmul.f32 %v3624, %v3641
        %v3643 = vadd.f32 %v3642, 0.4994258
        %v3644 = vmul.f32 %v3624, %v3643
        %v3645 = vadd.f32 %v3644, 1.0
        %v3646 = vrcp.pop %v3645
        %v3647 = vmul.f32 %v3645, %v3646
        %v3648 = vsub.f32 1.0, %v3647
        %v3649 = vmul.f32 %v3646, %v3648
        %v3650 = vadd.f32 %v3646, %v3649
        %vm3651 = vweird.f32 %v3645
        %vm3652 = vweird.f32 %v3646
        %vm3653 = vmor %vm3651, %vm3652
        %v3654 = vsel %vm3653, %v3646, %v3650
        %v3655 = vand.u32 2147483647, %v3645
        %vm3656 = vcmp.eq.f32.partialorder %v3655, 8.507059e+37
        %v3657 = vand.u32 %v3645, 2147483648
        %v3658 = vor.u32 1.1754944e-38, %v3657
        %v3659 = vsel %vm3656, %v3658, %v3654
        %v3660 = vmul.f32 %v3635, %v3659
        %v3661 = vmin.f32 %v3660, 1.0
        %v3662 = vmax.f32 %v3661, -1.0
        %v3663 = vmul.f32 %v1117, %v1117
        %v3664 = vmin.f32 16.0, %v3663
        %v3665 = vmul.f32 %v3664, 2.1237322e-06
        %v3666 = vadd.f32 %v3665, 0.00028619796
        %v3667 = vmul.f32 %v3664, %v3666
        %v3668 = vadd.f32 %v3667, 0.0036580483
        %v3669 = vmul.f32 %v3664, %v3668
        %v3670 = vadd.f32 %v3669, 0.05243302
        %v3671 = vmul.f32 %v3664, %v3670
        %v3672 = vadd.f32 %v3671, 0.18741608
        %v3673 = vmul.f32 %v3664, %v3672
        %v3674 = vadd.f32 %v3673, 1.1283791
        %v3675 = vmul.f32 %v1117, %v3674
        %v3676 = vmul.f32 %v3664, 3.8918573e-05
        %v3677 = vadd.f32 %v3676, 0.001143296
        %v3678 = vmul.f32 %v3664, %v3677
        %v3679 = vadd.f32 %v3678, 0.014752088
        %v3680 = vmul.f32 %v3664, %v3679
        %v3681 = vadd.f32 %v3680, 0.112945676
        %v3682 = vmul.f32 %v3664, %v3681
        %v3683 = vadd.f32 %v3682, 0.4994258
        %v3684 = vmul.f32 %v3664, %v3683
        %v3685 = vadd.f32 %v3684, 1.0
        %v3686 = vrcp.pop %v3685
        %v3687 = vmul.f32 %v3685, %v3686
        %v3688 = vsub.f32 1.0, %v3687
        %v3689 = vmul.f32 %v3686, %v3688
        %v3690 = vadd.f32 %v3686, %v3689
        %vm3691 = vweird.f32 %v3685
        %vm3692 = vweird.f32 %v3686
        %vm3693 = vmor %vm3691, %vm3692
        %v3694 = vsel %vm3693, %v3686, %v3690
        %v3695 = vand.u32 2147483647, %v3685
        %vm3696 = vcmp.eq.f32.partialorder %v3695, 8.507059e+37
        %v3697 = vand.u32 %v3685, 2147483648
        %v3698 = vor.u32 1.1754944e-38, %v3697
        %v3699 = vsel %vm3696, %v3698, %v3694
        %v3700 = vmul.f32 %v3675, %v3699
        %v3701 = vmin.f32 %v3700, 1.0
        %v3702 = vmax.f32 %v3701, -1.0
        %v3703 = vmul.f32 %v1118, %v1118
        %v3704 = vmin.f32 16.0, %v3703
        %v3705 = vmul.f32 %v3704, 2.1237322e-06
        %v3706 = vadd.f32 %v3705, 0.00028619796
        %v3707 = vmul.f32 %v3704, %v3706
        %v3708 = vadd.f32 %v3707, 0.0036580483
        %v3709 = vmul.f32 %v3704, %v3708
        %v3710 = vadd.f32 %v3709, 0.05243302
        %v3711 = vmul.f32 %v3704, %v3710
        %v3712 = vadd.f32 %v3711, 0.18741608
        %v3713 = vmul.f32 %v3704, %v3712
        %v3714 = vadd.f32 %v3713, 1.1283791
        %v3715 = vmul.f32 %v1118, %v3714
        %v3716 = vmul.f32 %v3704, 3.8918573e-05
        %v3717 = vadd.f32 %v3716, 0.001143296
        %v3718 = vmul.f32 %v3704, %v3717
        %v3719 = vadd.f32 %v3718, 0.014752088
        %v3720 = vmul.f32 %v3704, %v3719
        %v3721 = vadd.f32 %v3720, 0.112945676
        %v3722 = vmul.f32 %v3704, %v3721
        %v3723 = vadd.f32 %v3722, 0.4994258
        %v3724 = vmul.f32 %v3704, %v3723
        %v3725 = vadd.f32 %v3724, 1.0
        %v3726 = vrcp.pop %v3725
        %v3727 = vmul.f32 %v3725, %v3726
        %v3728 = vsub.f32 1.0, %v3727
        %v3729 = vmul.f32 %v3726, %v3728
        %v3730 = vadd.f32 %v3726, %v3729
        %vm3731 = vweird.f32 %v3725
        %vm3732 = vweird.f32 %v3726
        %vm3733 = vmor %vm3731, %vm3732
        %v3734 = vsel %vm3733, %v3726, %v3730
        %v3735 = vand.u32 2147483647, %v3725
        %vm3736 = vcmp.eq.f32.partialorder %v3735, 8.507059e+37
        %v3737 = vand.u32 %v3725, 2147483648
        %v3738 = vor.u32 1.1754944e-38, %v3737
        %v3739 = vsel %vm3736, %v3738, %v3734
        %v3740 = vmul.f32 %v3715, %v3739
        %v3741 = vmin.f32 %v3740, 1.0
        %v3742 = vmax.f32 %v3741, -1.0
        %v3743 = vmul.f32 %v1119, %v1119
        %v3744 = vmin.f32 16.0, %v3743
        %v3745 = vmul.f32 %v3744, 2.1237322e-06
        %v3746 = vadd.f32 %v3745, 0.00028619796
        %v3747 = vmul.f32 %v3744, %v3746
        %v3748 = vadd.f32 %v3747, 0.0036580483
        %v3749 = vmul.f32 %v3744, %v3748
        %v3750 = vadd.f32 %v3749, 0.05243302
        %v3751 = vmul.f32 %v3744, %v3750
        %v3752 = vadd.f32 %v3751, 0.18741608
        %v3753 = vmul.f32 %v3744, %v3752
        %v3754 = vadd.f32 %v3753, 1.1283791
        %v3755 = vmul.f32 %v1119, %v3754
        %v3756 = vmul.f32 %v3744, 3.8918573e-05
        %v3757 = vadd.f32 %v3756, 0.001143296
        %v3758 = vmul.f32 %v3744, %v3757
        %v3759 = vadd.f32 %v3758, 0.014752088
        %v3760 = vmul.f32 %v3744, %v3759
        %v3761 = vadd.f32 %v3760, 0.112945676
        %v3762 = vmul.f32 %v3744, %v3761
        %v3763 = vadd.f32 %v3762, 0.4994258
        %v3764 = vmul.f32 %v3744, %v3763
        %v3765 = vadd.f32 %v3764, 1.0
        %v3766 = vrcp.pop %v3765
        %v3767 = vmul.f32 %v3765, %v3766
        %v3768 = vsub.f32 1.0, %v3767
        %v3769 = vmul.f32 %v3766, %v3768
        %v3770 = vadd.f32 %v3766, %v3769
        %vm3771 = vweird.f32 %v3765
        %vm3772 = vweird.f32 %v3766
        %vm3773 = vmor %vm3771, %vm3772
        %v3774 = vsel %vm3773, %v3766, %v3770
        %v3775 = vand.u32 2147483647, %v3765
        %vm3776 = vcmp.eq.f32.partialorder %v3775, 8.507059e+37
        %v3777 = vand.u32 %v3765, 2147483648
        %v3778 = vor.u32 1.1754944e-38, %v3777
        %v3779 = vsel %vm3776, %v3778, %v3774
        %v3780 = vmul.f32 %v3755, %v3779
        %v3781 = vmin.f32 %v3780, 1.0
        %v3782 = vmax.f32 %v3781, -1.0
        %v3783 = vmul.f32 %v1120, %v1120
        %v3784 = vmin.f32 16.0, %v3783
        %v3785 = vmul.f32 %v3784, 2.1237322e-06
        %v3786 = vadd.f32 %v3785, 0.00028619796
        %v3787 = vmul.f32 %v3784, %v3786
        %v3788 = vadd.f32 %v3787, 0.0036580483
        %v3789 = vmul.f32 %v3784, %v3788
        %v3790 = vadd.f32 %v3789, 0.05243302
        %v3791 = vmul.f32 %v3784, %v3790
        %v3792 = vadd.f32 %v3791, 0.18741608
        %v3793 = vmul.f32 %v3784, %v3792
        %v3794 = vadd.f32 %v3793, 1.1283791
        %v3795 = vmul.f32 %v1120, %v3794
        %v3796 = vmul.f32 %v3784, 3.8918573e-05
        %v3797 = vadd.f32 %v3796, 0.001143296
        %v3798 = vmul.f32 %v3784, %v3797
        %v3799 = vadd.f32 %v3798, 0.014752088
        %v3800 = vmul.f32 %v3784, %v3799
        %v3801 = vadd.f32 %v3800, 0.112945676
        %v3802 = vmul.f32 %v3784, %v3801
        %v3803 = vadd.f32 %v3802, 0.4994258
        %v3804 = vmul.f32 %v3784, %v3803
        %v3805 = vadd.f32 %v3804, 1.0
        %v3806 = vrcp.pop %v3805
        %v3807 = vmul.f32 %v3805, %v3806
        %v3808 = vsub.f32 1.0, %v3807
        %v3809 = vmul.f32 %v3806, %v3808
        %v3810 = vadd.f32 %v3806, %v3809
        %vm3811 = vweird.f32 %v3805
        %vm3812 = vweird.f32 %v3806
        %vm3813 = vmor %vm3811, %vm3812
        %v3814 = vsel %vm3813, %v3806, %v3810
        %v3815 = vand.u32 2147483647, %v3805
        %vm3816 = vcmp.eq.f32.partialorder %v3815, 8.507059e+37
        %v3817 = vand.u32 %v3805, 2147483648
        %v3818 = vor.u32 1.1754944e-38, %v3817
        %v3819 = vsel %vm3816, %v3818, %v3814
        %v3820 = vmul.f32 %v3795, %v3819
        %v3821 = vmin.f32 %v3820, 1.0
        %v3822 = vmax.f32 %v3821, -1.0
        %v3823 = vmul.f32 %v1121, %v1121
        %v3824 = vmin.f32 16.0, %v3823
        %v3825 = vmul.f32 %v3824, 2.1237322e-06
        %v3826 = vadd.f32 %v3825, 0.00028619796
        %v3827 = vmul.f32 %v3824, %v3826
        %v3828 = vadd.f32 %v3827, 0.0036580483
        %v3829 = vmul.f32 %v3824, %v3828
        %v3830 = vadd.f32 %v3829, 0.05243302
        %v3831 = vmul.f32 %v3824, %v3830
        %v3832 = vadd.f32 %v3831, 0.18741608
        %v3833 = vmul.f32 %v3824, %v3832
        %v3834 = vadd.f32 %v3833, 1.1283791
        %v3835 = vmul.f32 %v1121, %v3834
        %v3836 = vmul.f32 %v3824, 3.8918573e-05
        %v3837 = vadd.f32 %v3836, 0.001143296
        %v3838 = vmul.f32 %v3824, %v3837
        %v3839 = vadd.f32 %v3838, 0.014752088
        %v3840 = vmul.f32 %v3824, %v3839
        %v3841 = vadd.f32 %v3840, 0.112945676
        %v3842 = vmul.f32 %v3824, %v3841
        %v3843 = vadd.f32 %v3842, 0.4994258
        %v3844 = vmul.f32 %v3824, %v3843
        %v3845 = vadd.f32 %v3844, 1.0
        %v3846 = vrcp.pop %v3845
        %v3847 = vmul.f32 %v3845, %v3846
        %v3848 = vsub.f32 1.0, %v3847
        %v3849 = vmul.f32 %v3846, %v3848
        %v3850 = vadd.f32 %v3846, %v3849
        %vm3851 = vweird.f32 %v3845
        %vm3852 = vweird.f32 %v3846
        %vm3853 = vmor %vm3851, %vm3852
        %v3854 = vsel %vm3853, %v3846, %v3850
        %v3855 = vand.u32 2147483647, %v3845
        %vm3856 = vcmp.eq.f32.partialorder %v3855, 8.507059e+37
        %v3857 = vand.u32 %v3845, 2147483648
        %v3858 = vor.u32 1.1754944e-38, %v3857
        %v3859 = vsel %vm3856, %v3858, %v3854
        %v3860 = vmul.f32 %v3835, %v3859
        %v3861 = vmin.f32 %v3860, 1.0
        %v3862 = vmax.f32 %v3861, -1.0
        %v3863 = vmul.f32 %v1122, %v1122
        %v3864 = vmin.f32 16.0, %v3863
        %v3865 = vmul.f32 %v3864, 2.1237322e-06
        %v3866 = vadd.f32 %v3865, 0.00028619796
        %v3867 = vmul.f32 %v3864, %v3866
        %v3868 = vadd.f32 %v3867, 0.0036580483
        %v3869 = vmul.f32 %v3864, %v3868
        %v3870 = vadd.f32 %v3869, 0.05243302
        %v3871 = vmul.f32 %v3864, %v3870
        %v3872 = vadd.f32 %v3871, 0.18741608
        %v3873 = vmul.f32 %v3864, %v3872
        %v3874 = vadd.f32 %v3873, 1.1283791
        %v3875 = vmul.f32 %v1122, %v3874
        %v3876 = vmul.f32 %v3864, 3.8918573e-05
        %v3877 = vadd.f32 %v3876, 0.001143296
        %v3878 = vmul.f32 %v3864, %v3877
        %v3879 = vadd.f32 %v3878, 0.014752088
        %v3880 = vmul.f32 %v3864, %v3879
        %v3881 = vadd.f32 %v3880, 0.112945676
        %v3882 = vmul.f32 %v3864, %v3881
        %v3883 = vadd.f32 %v3882, 0.4994258
        %v3884 = vmul.f32 %v3864, %v3883
        %v3885 = vadd.f32 %v3884, 1.0
        %v3886 = vrcp.pop %v3885
        %v3887 = vmul.f32 %v3885, %v3886
        %v3888 = vsub.f32 1.0, %v3887
        %v3889 = vmul.f32 %v3886, %v3888
        %v3890 = vadd.f32 %v3886, %v3889
        %vm3891 = vweird.f32 %v3885
        %vm3892 = vweird.f32 %v3886
        %vm3893 = vmor %vm3891, %vm3892
        %v3894 = vsel %vm3893, %v3886, %v3890
        %v3895 = vand.u32 2147483647, %v3885
        %vm3896 = vcmp.eq.f32.partialorder %v3895, 8.507059e+37
        %v3897 = vand.u32 %v3885, 2147483648
        %v3898 = vor.u32 1.1754944e-38, %v3897
        %v3899 = vsel %vm3896, %v3898, %v3894
        %v3900 = vmul.f32 %v3875, %v3899
        %v3901 = vmin.f32 %v3900, 1.0
        %v3902 = vmax.f32 %v3901, -1.0
        %v3903 = vmul.f32 %v1123, %v1123
        %v3904 = vmin.f32 16.0, %v3903
        %v3905 = vmul.f32 %v3904, 2.1237322e-06
        %v3906 = vadd.f32 %v3905, 0.00028619796
        %v3907 = vmul.f32 %v3904, %v3906
        %v3908 = vadd.f32 %v3907, 0.0036580483
        %v3909 = vmul.f32 %v3904, %v3908
        %v3910 = vadd.f32 %v3909, 0.05243302
        %v3911 = vmul.f32 %v3904, %v3910
        %v3912 = vadd.f32 %v3911, 0.18741608
        %v3913 = vmul.f32 %v3904, %v3912
        %v3914 = vadd.f32 %v3913, 1.1283791
        %v3915 = vmul.f32 %v1123, %v3914
        %v3916 = vmul.f32 %v3904, 3.8918573e-05
        %v3917 = vadd.f32 %v3916, 0.001143296
        %v3918 = vmul.f32 %v3904, %v3917
        %v3919 = vadd.f32 %v3918, 0.014752088
        %v3920 = vmul.f32 %v3904, %v3919
        %v3921 = vadd.f32 %v3920, 0.112945676
        %v3922 = vmul.f32 %v3904, %v3921
        %v3923 = vadd.f32 %v3922, 0.4994258
        %v3924 = vmul.f32 %v3904, %v3923
        %v3925 = vadd.f32 %v3924, 1.0
        %v3926 = vrcp.pop %v3925
        %v3927 = vmul.f32 %v3925, %v3926
        %v3928 = vsub.f32 1.0, %v3927
        %v3929 = vmul.f32 %v3926, %v3928
        %v3930 = vadd.f32 %v3926, %v3929
        %vm3931 = vweird.f32 %v3925
        %vm3932 = vweird.f32 %v3926
        %vm3933 = vmor %vm3931, %vm3932
        %v3934 = vsel %vm3933, %v3926, %v3930
        %v3935 = vand.u32 2147483647, %v3925
        %vm3936 = vcmp.eq.f32.partialorder %v3935, 8.507059e+37
        %v3937 = vand.u32 %v3925, 2147483648
        %v3938 = vor.u32 1.1754944e-38, %v3937
        %v3939 = vsel %vm3936, %v3938, %v3934
        %v3940 = vmul.f32 %v3915, %v3939
        %v3941 = vmin.f32 %v3940, 1.0
        %v3942 = vmax.f32 %v3941, -1.0
        %v3943 = vmul.f32 %v1124, %v1124
        %v3944 = vmin.f32 16.0, %v3943
        %v3945 = vmul.f32 %v3944, 2.1237322e-06
        %v3946 = vadd.f32 %v3945, 0.00028619796
        %v3947 = vmul.f32 %v3944, %v3946
        %v3948 = vadd.f32 %v3947, 0.0036580483
        %v3949 = vmul.f32 %v3944, %v3948
        %v3950 = vadd.f32 %v3949, 0.05243302
        %v3951 = vmul.f32 %v3944, %v3950
        %v3952 = vadd.f32 %v3951, 0.18741608
        %v3953 = vmul.f32 %v3944, %v3952
        %v3954 = vadd.f32 %v3953, 1.1283791
        %v3955 = vmul.f32 %v1124, %v3954
        %v3956 = vmul.f32 %v3944, 3.8918573e-05
        %v3957 = vadd.f32 %v3956, 0.001143296
        %v3958 = vmul.f32 %v3944, %v3957
        %v3959 = vadd.f32 %v3958, 0.014752088
        %v3960 = vmul.f32 %v3944, %v3959
        %v3961 = vadd.f32 %v3960, 0.112945676
        %v3962 = vmul.f32 %v3944, %v3961
        %v3963 = vadd.f32 %v3962, 0.4994258
        %v3964 = vmul.f32 %v3944, %v3963
        %v3965 = vadd.f32 %v3964, 1.0
        %v3966 = vrcp.pop %v3965
        %v3967 = vmul.f32 %v3965, %v3966
        %v3968 = vsub.f32 1.0, %v3967
        %v3969 = vmul.f32 %v3966, %v3968
        %v3970 = vadd.f32 %v3966, %v3969
        %vm3971 = vweird.f32 %v3965
        %vm3972 = vweird.f32 %v3966
        %vm3973 = vmor %vm3971, %vm3972
        %v3974 = vsel %vm3973, %v3966, %v3970
        %v3975 = vand.u32 2147483647, %v3965
        %vm3976 = vcmp.eq.f32.partialorder %v3975, 8.507059e+37
        %v3977 = vand.u32 %v3965, 2147483648
        %v3978 = vor.u32 1.1754944e-38, %v3977
        %v3979 = vsel %vm3976, %v3978, %v3974
        %v3980 = vmul.f32 %v3955, %v3979
        %v3981 = vmin.f32 %v3980, 1.0
        %v3982 = vmax.f32 %v3981, -1.0
        %v3983 = vmul.f32 %v1125, %v1125
        %v3984 = vmin.f32 16.0, %v3983
        %v3985 = vmul.f32 %v3984, 2.1237322e-06
        %v3986 = vadd.f32 %v3985, 0.00028619796
        %v3987 = vmul.f32 %v3984, %v3986
        %v3988 = vadd.f32 %v3987, 0.0036580483
        %v3989 = vmul.f32 %v3984, %v3988
        %v3990 = vadd.f32 %v3989, 0.05243302
        %v3991 = vmul.f32 %v3984, %v3990
        %v3992 = vadd.f32 %v3991, 0.18741608
        %v3993 = vmul.f32 %v3984, %v3992
        %v3994 = vadd.f32 %v3993, 1.1283791
        %v3995 = vmul.f32 %v1125, %v3994
        %v3996 = vmul.f32 %v3984, 3.8918573e-05
        %v3997 = vadd.f32 %v3996, 0.001143296
        %v3998 = vmul.f32 %v3984, %v3997
        %v3999 = vadd.f32 %v3998, 0.014752088
        %v4000 = vmul.f32 %v3984, %v3999
        %v4001 = vadd.f32 %v4000, 0.112945676
        %v4002 = vmul.f32 %v3984, %v4001
        %v4003 = vadd.f32 %v4002, 0.4994258
        %v4004 = vmul.f32 %v3984, %v4003
        %v4005 = vadd.f32 %v4004, 1.0
        %v4006 = vrcp.pop %v4005
        %v4007 = vmul.f32 %v4005, %v4006
        %v4008 = vsub.f32 1.0, %v4007
        %v4009 = vmul.f32 %v4006, %v4008
        %v4010 = vadd.f32 %v4006, %v4009
        %vm4011 = vweird.f32 %v4005
        %vm4012 = vweird.f32 %v4006
        %vm4013 = vmor %vm4011, %vm4012
        %v4014 = vsel %vm4013, %v4006, %v4010
        %v4015 = vand.u32 2147483647, %v4005
        %vm4016 = vcmp.eq.f32.partialorder %v4015, 8.507059e+37
        %v4017 = vand.u32 %v4005, 2147483648
        %v4018 = vor.u32 1.1754944e-38, %v4017
        %v4019 = vsel %vm4016, %v4018, %v4014
        %v4020 = vmul.f32 %v3995, %v4019
        %v4021 = vmin.f32 %v4020, 1.0
        %v4022 = vmax.f32 %v4021, -1.0
        %v4023 = vmul.f32 %v1126, %v1126
        %v4024 = vmin.f32 16.0, %v4023
        %v4025 = vmul.f32 %v4024, 2.1237322e-06
        %v4026 = vadd.f32 %v4025, 0.00028619796
        %v4027 = vmul.f32 %v4024, %v4026
        %v4028 = vadd.f32 %v4027, 0.0036580483
        %v4029 = vmul.f32 %v4024, %v4028
        %v4030 = vadd.f32 %v4029, 0.05243302
        %v4031 = vmul.f32 %v4024, %v4030
        %v4032 = vadd.f32 %v4031, 0.18741608
        %v4033 = vmul.f32 %v4024, %v4032
        %v4034 = vadd.f32 %v4033, 1.1283791
        %v4035 = vmul.f32 %v1126, %v4034
        %v4036 = vmul.f32 %v4024, 3.8918573e-05
        %v4037 = vadd.f32 %v4036, 0.001143296
        %v4038 = vmul.f32 %v4024, %v4037
        %v4039 = vadd.f32 %v4038, 0.014752088
        %v4040 = vmul.f32 %v4024, %v4039
        %v4041 = vadd.f32 %v4040, 0.112945676
        %v4042 = vmul.f32 %v4024, %v4041
        %v4043 = vadd.f32 %v4042, 0.4994258
        %v4044 = vmul.f32 %v4024, %v4043
        %v4045 = vadd.f32 %v4044, 1.0
        %v4046 = vrcp.pop %v4045
        %v4047 = vmul.f32 %v4045, %v4046
        %v4048 = vsub.f32 1.0, %v4047
        %v4049 = vmul.f32 %v4046, %v4048
        %v4050 = vadd.f32 %v4046, %v4049
        %vm4051 = vweird.f32 %v4045
        %vm4052 = vweird.f32 %v4046
        %vm4053 = vmor %vm4051, %vm4052
        %v4054 = vsel %vm4053, %v4046, %v4050
        %v4055 = vand.u32 2147483647, %v4045
        %vm4056 = vcmp.eq.f32.partialorder %v4055, 8.507059e+37
        %v4057 = vand.u32 %v4045, 2147483648
        %v4058 = vor.u32 1.1754944e-38, %v4057
        %v4059 = vsel %vm4056, %v4058, %v4054
        %v4060 = vmul.f32 %v4035, %v4059
        %v4061 = vmin.f32 %v4060, 1.0
        %v4062 = vmax.f32 %v4061, -1.0
        %v4063 = vmul.f32 %v1127, %v1127
        %v4064 = vmin.f32 16.0, %v4063
        %v4065 = vmul.f32 %v4064, 2.1237322e-06
        %v4066 = vadd.f32 %v4065, 0.00028619796
        %v4067 = vmul.f32 %v4064, %v4066
        %v4068 = vadd.f32 %v4067, 0.0036580483
        %v4069 = vmul.f32 %v4064, %v4068
        %v4070 = vadd.f32 %v4069, 0.05243302
        %v4071 = vmul.f32 %v4064, %v4070
        %v4072 = vadd.f32 %v4071, 0.18741608
        %v4073 = vmul.f32 %v4064, %v4072
        %v4074 = vadd.f32 %v4073, 1.1283791
        %v4075 = vmul.f32 %v1127, %v4074
        %v4076 = vmul.f32 %v4064, 3.8918573e-05
        %v4077 = vadd.f32 %v4076, 0.001143296
        %v4078 = vmul.f32 %v4064, %v4077
        %v4079 = vadd.f32 %v4078, 0.014752088
        %v4080 = vmul.f32 %v4064, %v4079
        %v4081 = vadd.f32 %v4080, 0.112945676
        %v4082 = vmul.f32 %v4064, %v4081
        %v4083 = vadd.f32 %v4082, 0.4994258
        %v4084 = vmul.f32 %v4064, %v4083
        %v4085 = vadd.f32 %v4084, 1.0
        %v4086 = vrcp.pop %v4085
        %v4087 = vmul.f32 %v4085, %v4086
        %v4088 = vsub.f32 1.0, %v4087
        %v4089 = vmul.f32 %v4086, %v4088
        %v4090 = vadd.f32 %v4086, %v4089
        %vm4091 = vweird.f32 %v4085
        %vm4092 = vweird.f32 %v4086
        %vm4093 = vmor %vm4091, %vm4092
        %v4094 = vsel %vm4093, %v4086, %v4090
        %v4095 = vand.u32 2147483647, %v4085
        %vm4096 = vcmp.eq.f32.partialorder %v4095, 8.507059e+37
        %v4097 = vand.u32 %v4085, 2147483648
        %v4098 = vor.u32 1.1754944e-38, %v4097
        %v4099 = vsel %vm4096, %v4098, %v4094
        %v4100 = vmul.f32 %v4075, %v4099
        %v4101 = vmin.f32 %v4100, 1.0
        %v4102 = vmax.f32 %v4101, -1.0
        %v4103 = vmul.f32 %v1128, %v1128
        %v4104 = vmin.f32 16.0, %v4103
        %v4105 = vmul.f32 %v4104, 2.1237322e-06
        %v4106 = vadd.f32 %v4105, 0.00028619796
        %v4107 = vmul.f32 %v4104, %v4106
        %v4108 = vadd.f32 %v4107, 0.0036580483
        %v4109 = vmul.f32 %v4104, %v4108
        %v4110 = vadd.f32 %v4109, 0.05243302
        %v4111 = vmul.f32 %v4104, %v4110
        %v4112 = vadd.f32 %v4111, 0.18741608
        %v4113 = vmul.f32 %v4104, %v4112
        %v4114 = vadd.f32 %v4113, 1.1283791
        %v4115 = vmul.f32 %v1128, %v4114
        %v4116 = vmul.f32 %v4104, 3.8918573e-05
        %v4117 = vadd.f32 %v4116, 0.001143296
        %v4118 = vmul.f32 %v4104, %v4117
        %v4119 = vadd.f32 %v4118, 0.014752088
        %v4120 = vmul.f32 %v4104, %v4119
        %v4121 = vadd.f32 %v4120, 0.112945676
        %v4122 = vmul.f32 %v4104, %v4121
        %v4123 = vadd.f32 %v4122, 0.4994258
        %v4124 = vmul.f32 %v4104, %v4123
        %v4125 = vadd.f32 %v4124, 1.0
        %v4126 = vrcp.pop %v4125
        %v4127 = vmul.f32 %v4125, %v4126
        %v4128 = vsub.f32 1.0, %v4127
        %v4129 = vmul.f32 %v4126, %v4128
        %v4130 = vadd.f32 %v4126, %v4129
        %vm4131 = vweird.f32 %v4125
        %vm4132 = vweird.f32 %v4126
        %vm4133 = vmor %vm4131, %vm4132
        %v4134 = vsel %vm4133, %v4126, %v4130
        %v4135 = vand.u32 2147483647, %v4125
        %vm4136 = vcmp.eq.f32.partialorder %v4135, 8.507059e+37
        %v4137 = vand.u32 %v4125, 2147483648
        %v4138 = vor.u32 1.1754944e-38, %v4137
        %v4139 = vsel %vm4136, %v4138, %v4134
        %v4140 = vmul.f32 %v4115, %v4139
        %v4141 = vmin.f32 %v4140, 1.0
        %v4142 = vmax.f32 %v4141, -1.0
        %v4143 = vmul.f32 %v1129, %v1129
        %v4144 = vmin.f32 16.0, %v4143
        %v4145 = vmul.f32 %v4144, 2.1237322e-06
        %v4146 = vadd.f32 %v4145, 0.00028619796
        %v4147 = vmul.f32 %v4144, %v4146
        %v4148 = vadd.f32 %v4147, 0.0036580483
        %v4149 = vmul.f32 %v4144, %v4148
        %v4150 = vadd.f32 %v4149, 0.05243302
        %v4151 = vmul.f32 %v4144, %v4150
        %v4152 = vadd.f32 %v4151, 0.18741608
        %v4153 = vmul.f32 %v4144, %v4152
        %v4154 = vadd.f32 %v4153, 1.1283791
        %v4155 = vmul.f32 %v1129, %v4154
        %v4156 = vmul.f32 %v4144, 3.8918573e-05
        %v4157 = vadd.f32 %v4156, 0.001143296
        %v4158 = vmul.f32 %v4144, %v4157
        %v4159 = vadd.f32 %v4158, 0.014752088
        %v4160 = vmul.f32 %v4144, %v4159
        %v4161 = vadd.f32 %v4160, 0.112945676
        %v4162 = vmul.f32 %v4144, %v4161
        %v4163 = vadd.f32 %v4162, 0.4994258
        %v4164 = vmul.f32 %v4144, %v4163
        %v4165 = vadd.f32 %v4164, 1.0
        %v4166 = vrcp.pop %v4165
        %v4167 = vmul.f32 %v4165, %v4166
        %v4168 = vsub.f32 1.0, %v4167
        %v4169 = vmul.f32 %v4166, %v4168
        %v4170 = vadd.f32 %v4166, %v4169
        %vm4171 = vweird.f32 %v4165
        %vm4172 = vweird.f32 %v4166
        %vm4173 = vmor %vm4171, %vm4172
        %v4174 = vsel %vm4173, %v4166, %v4170
        %v4175 = vand.u32 2147483647, %v4165
        %vm4176 = vcmp.eq.f32.partialorder %v4175, 8.507059e+37
        %v4177 = vand.u32 %v4165, 2147483648
        %v4178 = vor.u32 1.1754944e-38, %v4177
        %v4179 = vsel %vm4176, %v4178, %v4174
        %v4180 = vmul.f32 %v4155, %v4179
        %v4181 = vmin.f32 %v4180, 1.0
        %v4182 = vmax.f32 %v4181, -1.0
        %v4183 = vmul.f32 %v1130, %v1130
        %v4184 = vmin.f32 16.0, %v4183
        %v4185 = vmul.f32 %v4184, 2.1237322e-06
        %v4186 = vadd.f32 %v4185, 0.00028619796
        %v4187 = vmul.f32 %v4184, %v4186
        %v4188 = vadd.f32 %v4187, 0.0036580483
        %v4189 = vmul.f32 %v4184, %v4188
        %v4190 = vadd.f32 %v4189, 0.05243302
        %v4191 = vmul.f32 %v4184, %v4190
        %v4192 = vadd.f32 %v4191, 0.18741608
        %v4193 = vmul.f32 %v4184, %v4192
        %v4194 = vadd.f32 %v4193, 1.1283791
        %v4195 = vmul.f32 %v1130, %v4194
        %v4196 = vmul.f32 %v4184, 3.8918573e-05
        %v4197 = vadd.f32 %v4196, 0.001143296
        %v4198 = vmul.f32 %v4184, %v4197
        %v4199 = vadd.f32 %v4198, 0.014752088
        %v4200 = vmul.f32 %v4184, %v4199
        %v4201 = vadd.f32 %v4200, 0.112945676
        %v4202 = vmul.f32 %v4184, %v4201
        %v4203 = vadd.f32 %v4202, 0.4994258
        %v4204 = vmul.f32 %v4184, %v4203
        %v4205 = vadd.f32 %v4204, 1.0
        %v4206 = vrcp.pop %v4205
        %v4207 = vmul.f32 %v4205, %v4206
        %v4208 = vsub.f32 1.0, %v4207
        %v4209 = vmul.f32 %v4206, %v4208
        %v4210 = vadd.f32 %v4206, %v4209
        %vm4211 = vweird.f32 %v4205
        %vm4212 = vweird.f32 %v4206
        %vm4213 = vmor %vm4211, %vm4212
        %v4214 = vsel %vm4213, %v4206, %v4210
        %v4215 = vand.u32 2147483647, %v4205
        %vm4216 = vcmp.eq.f32.partialorder %v4215, 8.507059e+37
        %v4217 = vand.u32 %v4205, 2147483648
        %v4218 = vor.u32 1.1754944e-38, %v4217
        %v4219 = vsel %vm4216, %v4218, %v4214
        %v4220 = vmul.f32 %v4195, %v4219
        %v4221 = vmin.f32 %v4220, 1.0
        %v4222 = vmax.f32 %v4221, -1.0
        %v4223 = vmul.f32 %v1131, %v1131
        %v4224 = vmin.f32 16.0, %v4223
        %v4225 = vmul.f32 %v4224, 2.1237322e-06
        %v4226 = vadd.f32 %v4225, 0.00028619796
        %v4227 = vmul.f32 %v4224, %v4226
        %v4228 = vadd.f32 %v4227, 0.0036580483
        %v4229 = vmul.f32 %v4224, %v4228
        %v4230 = vadd.f32 %v4229, 0.05243302
        %v4231 = vmul.f32 %v4224, %v4230
        %v4232 = vadd.f32 %v4231, 0.18741608
        %v4233 = vmul.f32 %v4224, %v4232
        %v4234 = vadd.f32 %v4233, 1.1283791
        %v4235 = vmul.f32 %v1131, %v4234
        %v4236 = vmul.f32 %v4224, 3.8918573e-05
        %v4237 = vadd.f32 %v4236, 0.001143296
        %v4238 = vmul.f32 %v4224, %v4237
        %v4239 = vadd.f32 %v4238, 0.014752088
        %v4240 = vmul.f32 %v4224, %v4239
        %v4241 = vadd.f32 %v4240, 0.112945676
        %v4242 = vmul.f32 %v4224, %v4241
        %v4243 = vadd.f32 %v4242, 0.4994258
        %v4244 = vmul.f32 %v4224, %v4243
        %v4245 = vadd.f32 %v4244, 1.0
        %v4246 = vrcp.pop %v4245
        %v4247 = vmul.f32 %v4245, %v4246
        %v4248 = vsub.f32 1.0, %v4247
        %v4249 = vmul.f32 %v4246, %v4248
        %v4250 = vadd.f32 %v4246, %v4249
        %vm4251 = vweird.f32 %v4245
        %vm4252 = vweird.f32 %v4246
        %vm4253 = vmor %vm4251, %vm4252
        %v4254 = vsel %vm4253, %v4246, %v4250
        %v4255 = vand.u32 2147483647, %v4245
        %vm4256 = vcmp.eq.f32.partialorder %v4255, 8.507059e+37
        %v4257 = vand.u32 %v4245, 2147483648
        %v4258 = vor.u32 1.1754944e-38, %v4257
        %v4259 = vsel %vm4256, %v4258, %v4254
        %v4260 = vmul.f32 %v4235, %v4259
        %v4261 = vmin.f32 %v4260, 1.0
        %v4262 = vmax.f32 %v4261, -1.0
        %v4263 = vmul.f32 %v1132, %v1132
        %v4264 = vmin.f32 16.0, %v4263
        %v4265 = vmul.f32 %v4264, 2.1237322e-06
        %v4266 = vadd.f32 %v4265, 0.00028619796
        %v4267 = vmul.f32 %v4264, %v4266
        %v4268 = vadd.f32 %v4267, 0.0036580483
        %v4269 = vmul.f32 %v4264, %v4268
        %v4270 = vadd.f32 %v4269, 0.05243302
        %v4271 = vmul.f32 %v4264, %v4270
        %v4272 = vadd.f32 %v4271, 0.18741608
        %v4273 = vmul.f32 %v4264, %v4272
        %v4274 = vadd.f32 %v4273, 1.1283791
        %v4275 = vmul.f32 %v1132, %v4274
        %v4276 = vmul.f32 %v4264, 3.8918573e-05
        %v4277 = vadd.f32 %v4276, 0.001143296
        %v4278 = vmul.f32 %v4264, %v4277
        %v4279 = vadd.f32 %v4278, 0.014752088
        %v4280 = vmul.f32 %v4264, %v4279
        %v4281 = vadd.f32 %v4280, 0.112945676
        %v4282 = vmul.f32 %v4264, %v4281
        %v4283 = vadd.f32 %v4282, 0.4994258
        %v4284 = vmul.f32 %v4264, %v4283
        %v4285 = vadd.f32 %v4284, 1.0
        %v4286 = vrcp.pop %v4285
        %v4287 = vmul.f32 %v4285, %v4286
        %v4288 = vsub.f32 1.0, %v4287
        %v4289 = vmul.f32 %v4286, %v4288
        %v4290 = vadd.f32 %v4286, %v4289
        %vm4291 = vweird.f32 %v4285
        %vm4292 = vweird.f32 %v4286
        %vm4293 = vmor %vm4291, %vm4292
        %v4294 = vsel %vm4293, %v4286, %v4290
        %v4295 = vand.u32 2147483647, %v4285
        %vm4296 = vcmp.eq.f32.partialorder %v4295, 8.507059e+37
        %v4297 = vand.u32 %v4285, 2147483648
        %v4298 = vor.u32 1.1754944e-38, %v4297
        %v4299 = vsel %vm4296, %v4298, %v4294
        %v4300 = vmul.f32 %v4275, %v4299
        %v4301 = vmin.f32 %v4300, 1.0
        %v4302 = vmax.f32 %v4301, -1.0
        %v4303 = vmul.f32 %v1133, %v1133
        %v4304 = vmin.f32 16.0, %v4303
        %v4305 = vmul.f32 %v4304, 2.1237322e-06
        %v4306 = vadd.f32 %v4305, 0.00028619796
        %v4307 = vmul.f32 %v4304, %v4306
        %v4308 = vadd.f32 %v4307, 0.0036580483
        %v4309 = vmul.f32 %v4304, %v4308
        %v4310 = vadd.f32 %v4309, 0.05243302
        %v4311 = vmul.f32 %v4304, %v4310
        %v4312 = vadd.f32 %v4311, 0.18741608
        %v4313 = vmul.f32 %v4304, %v4312
        %v4314 = vadd.f32 %v4313, 1.1283791
        %v4315 = vmul.f32 %v1133, %v4314
        %v4316 = vmul.f32 %v4304, 3.8918573e-05
        %v4317 = vadd.f32 %v4316, 0.001143296
        %v4318 = vmul.f32 %v4304, %v4317
        %v4319 = vadd.f32 %v4318, 0.014752088
        %v4320 = vmul.f32 %v4304, %v4319
        %v4321 = vadd.f32 %v4320, 0.112945676
        %v4322 = vmul.f32 %v4304, %v4321
        %v4323 = vadd.f32 %v4322, 0.4994258
        %v4324 = vmul.f32 %v4304, %v4323
        %v4325 = vadd.f32 %v4324, 1.0
        %v4326 = vrcp.pop %v4325
        %v4327 = vmul.f32 %v4325, %v4326
        %v4328 = vsub.f32 1.0, %v4327
        %v4329 = vmul.f32 %v4326, %v4328
        %v4330 = vadd.f32 %v4326, %v4329
        %vm4331 = vweird.f32 %v4325
        %vm4332 = vweird.f32 %v4326
        %vm4333 = vmor %vm4331, %vm4332
        %v4334 = vsel %vm4333, %v4326, %v4330
        %v4335 = vand.u32 2147483647, %v4325
        %vm4336 = vcmp.eq.f32.partialorder %v4335, 8.507059e+37
        %v4337 = vand.u32 %v4325, 2147483648
        %v4338 = vor.u32 1.1754944e-38, %v4337
        %v4339 = vsel %vm4336, %v4338, %v4334
        %v4340 = vmul.f32 %v4315, %v4339
        %v4341 = vmin.f32 %v4340, 1.0
        %v4342 = vmax.f32 %v4341, -1.0
        %v4343 = vmul.f32 %v1134, %v1134
        %v4344 = vmin.f32 16.0, %v4343
        %v4345 = vmul.f32 %v4344, 2.1237322e-06
        %v4346 = vadd.f32 %v4345, 0.00028619796
        %v4347 = vmul.f32 %v4344, %v4346
        %v4348 = vadd.f32 %v4347, 0.0036580483
        %v4349 = vmul.f32 %v4344, %v4348
        %v4350 = vadd.f32 %v4349, 0.05243302
        %v4351 = vmul.f32 %v4344, %v4350
        %v4352 = vadd.f32 %v4351, 0.18741608
        %v4353 = vmul.f32 %v4344, %v4352
        %v4354 = vadd.f32 %v4353, 1.1283791
        %v4355 = vmul.f32 %v1134, %v4354
        %v4356 = vmul.f32 %v4344, 3.8918573e-05
        %v4357 = vadd.f32 %v4356, 0.001143296
        %v4358 = vmul.f32 %v4344, %v4357
        %v4359 = vadd.f32 %v4358, 0.014752088
        %v4360 = vmul.f32 %v4344, %v4359
        %v4361 = vadd.f32 %v4360, 0.112945676
        %v4362 = vmul.f32 %v4344, %v4361
        %v4363 = vadd.f32 %v4362, 0.4994258
        %v4364 = vmul.f32 %v4344, %v4363
        %v4365 = vadd.f32 %v4364, 1.0
        %v4366 = vrcp.pop %v4365
        %v4367 = vmul.f32 %v4365, %v4366
        %v4368 = vsub.f32 1.0, %v4367
        %v4369 = vmul.f32 %v4366, %v4368
        %v4370 = vadd.f32 %v4366, %v4369
        %vm4371 = vweird.f32 %v4365
        %vm4372 = vweird.f32 %v4366
        %vm4373 = vmor %vm4371, %vm4372
        %v4374 = vsel %vm4373, %v4366, %v4370
        %v4375 = vand.u32 2147483647, %v4365
        %vm4376 = vcmp.eq.f32.partialorder %v4375, 8.507059e+37
        %v4377 = vand.u32 %v4365, 2147483648
        %v4378 = vor.u32 1.1754944e-38, %v4377
        %v4379 = vsel %vm4376, %v4378, %v4374
        %v4380 = vmul.f32 %v4355, %v4379
        %v4381 = vmin.f32 %v4380, 1.0
        %v4382 = vmax.f32 %v4381, -1.0
        %v4383 = vmul.f32 %v1135, %v1135
        %v4384 = vmin.f32 16.0, %v4383
        %v4385 = vmul.f32 %v4384, 2.1237322e-06
        %v4386 = vadd.f32 %v4385, 0.00028619796
        %v4387 = vmul.f32 %v4384, %v4386
        %v4388 = vadd.f32 %v4387, 0.0036580483
        %v4389 = vmul.f32 %v4384, %v4388
        %v4390 = vadd.f32 %v4389, 0.05243302
        %v4391 = vmul.f32 %v4384, %v4390
        %v4392 = vadd.f32 %v4391, 0.18741608
        %v4393 = vmul.f32 %v4384, %v4392
        %v4394 = vadd.f32 %v4393, 1.1283791
        %v4395 = vmul.f32 %v1135, %v4394
        %v4396 = vmul.f32 %v4384, 3.8918573e-05
        %v4397 = vadd.f32 %v4396, 0.001143296
        %v4398 = vmul.f32 %v4384, %v4397
        %v4399 = vadd.f32 %v4398, 0.014752088
        %v4400 = vmul.f32 %v4384, %v4399
        %v4401 = vadd.f32 %v4400, 0.112945676
        %v4402 = vmul.f32 %v4384, %v4401
        %v4403 = vadd.f32 %v4402, 0.4994258
        %v4404 = vmul.f32 %v4384, %v4403
        %v4405 = vadd.f32 %v4404, 1.0
        %v4406 = vrcp.pop %v4405
        %v4407 = vmul.f32 %v4405, %v4406
        %v4408 = vsub.f32 1.0, %v4407
        %v4409 = vmul.f32 %v4406, %v4408
        %v4410 = vadd.f32 %v4406, %v4409
        %vm4411 = vweird.f32 %v4405
        %vm4412 = vweird.f32 %v4406
        %vm4413 = vmor %vm4411, %vm4412
        %v4414 = vsel %vm4413, %v4406, %v4410
        %v4415 = vand.u32 2147483647, %v4405
        %vm4416 = vcmp.eq.f32.partialorder %v4415, 8.507059e+37
        %v4417 = vand.u32 %v4405, 2147483648
        %v4418 = vor.u32 1.1754944e-38, %v4417
        %v4419 = vsel %vm4416, %v4418, %v4414
        %v4420 = vmul.f32 %v4395, %v4419
        %v4421 = vmin.f32 %v4420, 1.0
        %v4422 = vmax.f32 %v4421, -1.0
        %v4423 = vmul.f32 %v1136, %v1136
        %v4424 = vmin.f32 16.0, %v4423
        %v4425 = vmul.f32 %v4424, 2.1237322e-06
        %v4426 = vadd.f32 %v4425, 0.00028619796
        %v4427 = vmul.f32 %v4424, %v4426
        %v4428 = vadd.f32 %v4427, 0.0036580483
        %v4429 = vmul.f32 %v4424, %v4428
        %v4430 = vadd.f32 %v4429, 0.05243302
        %v4431 = vmul.f32 %v4424, %v4430
        %v4432 = vadd.f32 %v4431, 0.18741608
        %v4433 = vmul.f32 %v4424, %v4432
        %v4434 = vadd.f32 %v4433, 1.1283791
        %v4435 = vmul.f32 %v1136, %v4434
        %v4436 = vmul.f32 %v4424, 3.8918573e-05
        %v4437 = vadd.f32 %v4436, 0.001143296
        %v4438 = vmul.f32 %v4424, %v4437
        %v4439 = vadd.f32 %v4438, 0.014752088
        %v4440 = vmul.f32 %v4424, %v4439
        %v4441 = vadd.f32 %v4440, 0.112945676
        %v4442 = vmul.f32 %v4424, %v4441
        %v4443 = vadd.f32 %v4442, 0.4994258
        %v4444 = vmul.f32 %v4424, %v4443
        %v4445 = vadd.f32 %v4444, 1.0
        %v4446 = vrcp.pop %v4445
        %v4447 = vmul.f32 %v4445, %v4446
        %v4448 = vsub.f32 1.0, %v4447
        %v4449 = vmul.f32 %v4446, %v4448
        %v4450 = vadd.f32 %v4446, %v4449
        %vm4451 = vweird.f32 %v4445
        %vm4452 = vweird.f32 %v4446
        %vm4453 = vmor %vm4451, %vm4452
        %v4454 = vsel %vm4453, %v4446, %v4450
        %v4455 = vand.u32 2147483647, %v4445
        %vm4456 = vcmp.eq.f32.partialorder %v4455, 8.507059e+37
        %v4457 = vand.u32 %v4445, 2147483648
        %v4458 = vor.u32 1.1754944e-38, %v4457
        %v4459 = vsel %vm4456, %v4458, %v4454
        %v4460 = vmul.f32 %v4435, %v4459
        %v4461 = vmin.f32 %v4460, 1.0
        %v4462 = vmax.f32 %v4461, -1.0
        %v4463 = vmul.f32 %v1137, %v1137
        %v4464 = vmin.f32 16.0, %v4463
        %v4465 = vmul.f32 %v4464, 2.1237322e-06
        %v4466 = vadd.f32 %v4465, 0.00028619796
        %v4467 = vmul.f32 %v4464, %v4466
        %v4468 = vadd.f32 %v4467, 0.0036580483
        %v4469 = vmul.f32 %v4464, %v4468
        %v4470 = vadd.f32 %v4469, 0.05243302
        %v4471 = vmul.f32 %v4464, %v4470
        %v4472 = vadd.f32 %v4471, 0.18741608
        %v4473 = vmul.f32 %v4464, %v4472
        %v4474 = vadd.f32 %v4473, 1.1283791
        %v4475 = vmul.f32 %v1137, %v4474
        %v4476 = vmul.f32 %v4464, 3.8918573e-05
        %v4477 = vadd.f32 %v4476, 0.001143296
        %v4478 = vmul.f32 %v4464, %v4477
        %v4479 = vadd.f32 %v4478, 0.014752088
        %v4480 = vmul.f32 %v4464, %v4479
        %v4481 = vadd.f32 %v4480, 0.112945676
        %v4482 = vmul.f32 %v4464, %v4481
        %v4483 = vadd.f32 %v4482, 0.4994258
        %v4484 = vmul.f32 %v4464, %v4483
        %v4485 = vadd.f32 %v4484, 1.0
        %v4486 = vrcp.pop %v4485
        %v4487 = vmul.f32 %v4485, %v4486
        %v4488 = vsub.f32 1.0, %v4487
        %v4489 = vmul.f32 %v4486, %v4488
        %v4490 = vadd.f32 %v4486, %v4489
        %vm4491 = vweird.f32 %v4485
        %vm4492 = vweird.f32 %v4486
        %vm4493 = vmor %vm4491, %vm4492
        %v4494 = vsel %vm4493, %v4486, %v4490
        %v4495 = vand.u32 2147483647, %v4485
        %vm4496 = vcmp.eq.f32.partialorder %v4495, 8.507059e+37
        %v4497 = vand.u32 %v4485, 2147483648
        %v4498 = vor.u32 1.1754944e-38, %v4497
        %v4499 = vsel %vm4496, %v4498, %v4494
        %v4500 = vmul.f32 %v4475, %v4499
        %v4501 = vmin.f32 %v4500, 1.0
        %v4502 = vmax.f32 %v4501, -1.0
        %v4503 = vmul.f32 %v1138, %v1138
        %v4504 = vmin.f32 16.0, %v4503
        %v4505 = vmul.f32 %v4504, 2.1237322e-06
        %v4506 = vadd.f32 %v4505, 0.00028619796
        %v4507 = vmul.f32 %v4504, %v4506
        %v4508 = vadd.f32 %v4507, 0.0036580483
        %v4509 = vmul.f32 %v4504, %v4508
        %v4510 = vadd.f32 %v4509, 0.05243302
        %v4511 = vmul.f32 %v4504, %v4510
        %v4512 = vadd.f32 %v4511, 0.18741608
        %v4513 = vmul.f32 %v4504, %v4512
        %v4514 = vadd.f32 %v4513, 1.1283791
        %v4515 = vmul.f32 %v1138, %v4514
        %v4516 = vmul.f32 %v4504, 3.8918573e-05
        %v4517 = vadd.f32 %v4516, 0.001143296
        %v4518 = vmul.f32 %v4504, %v4517
        %v4519 = vadd.f32 %v4518, 0.014752088
        %v4520 = vmul.f32 %v4504, %v4519
        %v4521 = vadd.f32 %v4520, 0.112945676
        %v4522 = vmul.f32 %v4504, %v4521
        %v4523 = vadd.f32 %v4522, 0.4994258
        %v4524 = vmul.f32 %v4504, %v4523
        %v4525 = vadd.f32 %v4524, 1.0
        %v4526 = vrcp.pop %v4525
        %v4527 = vmul.f32 %v4525, %v4526
        %v4528 = vsub.f32 1.0, %v4527
        %v4529 = vmul.f32 %v4526, %v4528
        %v4530 = vadd.f32 %v4526, %v4529
        %vm4531 = vweird.f32 %v4525
        %vm4532 = vweird.f32 %v4526
        %vm4533 = vmor %vm4531, %vm4532
        %v4534 = vsel %vm4533, %v4526, %v4530
        %v4535 = vand.u32 2147483647, %v4525
        %vm4536 = vcmp.eq.f32.partialorder %v4535, 8.507059e+37
        %v4537 = vand.u32 %v4525, 2147483648
        %v4538 = vor.u32 1.1754944e-38, %v4537
        %v4539 = vsel %vm4536, %v4538, %v4534
        %v4540 = vmul.f32 %v4515, %v4539
        %v4541 = vmin.f32 %v4540, 1.0
        %v4542 = vmax.f32 %v4541, -1.0
        %v4543 = vmul.f32 %v1139, %v1139
        %v4544 = vmin.f32 16.0, %v4543
        %v4545 = vmul.f32 %v4544, 2.1237322e-06
        %v4546 = vadd.f32 %v4545, 0.00028619796
        %v4547 = vmul.f32 %v4544, %v4546
        %v4548 = vadd.f32 %v4547, 0.0036580483
        %v4549 = vmul.f32 %v4544, %v4548
        %v4550 = vadd.f32 %v4549, 0.05243302
        %v4551 = vmul.f32 %v4544, %v4550
        %v4552 = vadd.f32 %v4551, 0.18741608
        %v4553 = vmul.f32 %v4544, %v4552
        %v4554 = vadd.f32 %v4553, 1.1283791
        %v4555 = vmul.f32 %v1139, %v4554
        %v4556 = vmul.f32 %v4544, 3.8918573e-05
        %v4557 = vadd.f32 %v4556, 0.001143296
        %v4558 = vmul.f32 %v4544, %v4557
        %v4559 = vadd.f32 %v4558, 0.014752088
        %v4560 = vmul.f32 %v4544, %v4559
        %v4561 = vadd.f32 %v4560, 0.112945676
        %v4562 = vmul.f32 %v4544, %v4561
        %v4563 = vadd.f32 %v4562, 0.4994258
        %v4564 = vmul.f32 %v4544, %v4563
        %v4565 = vadd.f32 %v4564, 1.0
        %v4566 = vrcp.pop %v4565
        %v4567 = vmul.f32 %v4565, %v4566
        %v4568 = vsub.f32 1.0, %v4567
        %v4569 = vmul.f32 %v4566, %v4568
        %v4570 = vadd.f32 %v4566, %v4569
        %vm4571 = vweird.f32 %v4565
        %vm4572 = vweird.f32 %v4566
        %vm4573 = vmor %vm4571, %vm4572
        %v4574 = vsel %vm4573, %v4566, %v4570
        %v4575 = vand.u32 2147483647, %v4565
        %vm4576 = vcmp.eq.f32.partialorder %v4575, 8.507059e+37
        %v4577 = vand.u32 %v4565, 2147483648
        %v4578 = vor.u32 1.1754944e-38, %v4577
        %v4579 = vsel %vm4576, %v4578, %v4574
        %v4580 = vmul.f32 %v4555, %v4579
        %v4581 = vmin.f32 %v4580, 1.0
        %v4582 = vmax.f32 %v4581, -1.0
        %v4583 = vmul.f32 %v1140, %v1140
        %v4584 = vmin.f32 16.0, %v4583
        %v4585 = vmul.f32 %v4584, 2.1237322e-06
        %v4586 = vadd.f32 %v4585, 0.00028619796
        %v4587 = vmul.f32 %v4584, %v4586
        %v4588 = vadd.f32 %v4587, 0.0036580483
        %v4589 = vmul.f32 %v4584, %v4588
        %v4590 = vadd.f32 %v4589, 0.05243302
        %v4591 = vmul.f32 %v4584, %v4590
        %v4592 = vadd.f32 %v4591, 0.18741608
        %v4593 = vmul.f32 %v4584, %v4592
        %v4594 = vadd.f32 %v4593, 1.1283791
        %v4595 = vmul.f32 %v1140, %v4594
        %v4596 = vmul.f32 %v4584, 3.8918573e-05
        %v4597 = vadd.f32 %v4596, 0.001143296
        %v4598 = vmul.f32 %v4584, %v4597
        %v4599 = vadd.f32 %v4598, 0.014752088
        %v4600 = vmul.f32 %v4584, %v4599
        %v4601 = vadd.f32 %v4600, 0.112945676
        %v4602 = vmul.f32 %v4584, %v4601
        %v4603 = vadd.f32 %v4602, 0.4994258
        %v4604 = vmul.f32 %v4584, %v4603
        %v4605 = vadd.f32 %v4604, 1.0
        %v4606 = vrcp.pop %v4605
        %v4607 = vmul.f32 %v4605, %v4606
        %v4608 = vsub.f32 1.0, %v4607
        %v4609 = vmul.f32 %v4606, %v4608
        %v4610 = vadd.f32 %v4606, %v4609
        %vm4611 = vweird.f32 %v4605
        %vm4612 = vweird.f32 %v4606
        %vm4613 = vmor %vm4611, %vm4612
        %v4614 = vsel %vm4613, %v4606, %v4610
        %v4615 = vand.u32 2147483647, %v4605
        %vm4616 = vcmp.eq.f32.partialorder %v4615, 8.507059e+37
        %v4617 = vand.u32 %v4605, 2147483648
        %v4618 = vor.u32 1.1754944e-38, %v4617
        %v4619 = vsel %vm4616, %v4618, %v4614
        %v4620 = vmul.f32 %v4595, %v4619
        %v4621 = vmin.f32 %v4620, 1.0
        %v4622 = vmax.f32 %v4621, -1.0
        %v4623 = vmul.f32 %v1141, %v1141
        %v4624 = vmin.f32 16.0, %v4623
        %v4625 = vmul.f32 %v4624, 2.1237322e-06
        %v4626 = vadd.f32 %v4625, 0.00028619796
        %v4627 = vmul.f32 %v4624, %v4626
        %v4628 = vadd.f32 %v4627, 0.0036580483
        %v4629 = vmul.f32 %v4624, %v4628
        %v4630 = vadd.f32 %v4629, 0.05243302
        %v4631 = vmul.f32 %v4624, %v4630
        %v4632 = vadd.f32 %v4631, 0.18741608
        %v4633 = vmul.f32 %v4624, %v4632
        %v4634 = vadd.f32 %v4633, 1.1283791
        %v4635 = vmul.f32 %v1141, %v4634
        %v4636 = vmul.f32 %v4624, 3.8918573e-05
        %v4637 = vadd.f32 %v4636, 0.001143296
        %v4638 = vmul.f32 %v4624, %v4637
        %v4639 = vadd.f32 %v4638, 0.014752088
        %v4640 = vmul.f32 %v4624, %v4639
        %v4641 = vadd.f32 %v4640, 0.112945676
        %v4642 = vmul.f32 %v4624, %v4641
        %v4643 = vadd.f32 %v4642, 0.4994258
        %v4644 = vmul.f32 %v4624, %v4643
        %v4645 = vadd.f32 %v4644, 1.0
        %v4646 = vrcp.pop %v4645
        %v4647 = vmul.f32 %v4645, %v4646
        %v4648 = vsub.f32 1.0, %v4647
        %v4649 = vmul.f32 %v4646, %v4648
        %v4650 = vadd.f32 %v4646, %v4649
        %vm4651 = vweird.f32 %v4645
        %vm4652 = vweird.f32 %v4646
        %vm4653 = vmor %vm4651, %vm4652
        %v4654 = vsel %vm4653, %v4646, %v4650
        %v4655 = vand.u32 2147483647, %v4645
        %vm4656 = vcmp.eq.f32.partialorder %v4655, 8.507059e+37
        %v4657 = vand.u32 %v4645, 2147483648
        %v4658 = vor.u32 1.1754944e-38, %v4657
        %v4659 = vsel %vm4656, %v4658, %v4654
        %v4660 = vmul.f32 %v4635, %v4659
        %v4661 = vmin.f32 %v4660, 1.0
        %v4662 = vmax.f32 %v4661, -1.0
        %v4663 = vmul.f32 %v1142, %v1142
        %v4664 = vmin.f32 16.0, %v4663
        %v4665 = vmul.f32 %v4664, 2.1237322e-06
        %v4666 = vadd.f32 %v4665, 0.00028619796
        %v4667 = vmul.f32 %v4664, %v4666
        %v4668 = vadd.f32 %v4667, 0.0036580483
        %v4669 = vmul.f32 %v4664, %v4668
        %v4670 = vadd.f32 %v4669, 0.05243302
        %v4671 = vmul.f32 %v4664, %v4670
        %v4672 = vadd.f32 %v4671, 0.18741608
        %v4673 = vmul.f32 %v4664, %v4672
        %v4674 = vadd.f32 %v4673, 1.1283791
        %v4675 = vmul.f32 %v1142, %v4674
        %v4676 = vmul.f32 %v4664, 3.8918573e-05
        %v4677 = vadd.f32 %v4676, 0.001143296
        %v4678 = vmul.f32 %v4664, %v4677
        %v4679 = vadd.f32 %v4678, 0.014752088
        %v4680 = vmul.f32 %v4664, %v4679
        %v4681 = vadd.f32 %v4680, 0.112945676
        %v4682 = vmul.f32 %v4664, %v4681
        %v4683 = vadd.f32 %v4682, 0.4994258
        %v4684 = vmul.f32 %v4664, %v4683
        %v4685 = vadd.f32 %v4684, 1.0
        %v4686 = vrcp.pop %v4685
        %v4687 = vmul.f32 %v4685, %v4686
        %v4688 = vsub.f32 1.0, %v4687
        %v4689 = vmul.f32 %v4686, %v4688
        %v4690 = vadd.f32 %v4686, %v4689
        %vm4691 = vweird.f32 %v4685
        %vm4692 = vweird.f32 %v4686
        %vm4693 = vmor %vm4691, %vm4692
        %v4694 = vsel %vm4693, %v4686, %v4690
        %v4695 = vand.u32 2147483647, %v4685
        %vm4696 = vcmp.eq.f32.partialorder %v4695, 8.507059e+37
        %v4697 = vand.u32 %v4685, 2147483648
        %v4698 = vor.u32 1.1754944e-38, %v4697
        %v4699 = vsel %vm4696, %v4698, %v4694
        %v4700 = vmul.f32 %v4675, %v4699
        %v4701 = vmin.f32 %v4700, 1.0
        %v4702 = vmax.f32 %v4701, -1.0
        %v4703 = vmul.f32 %v1143, %v1143
        %v4704 = vmin.f32 16.0, %v4703
        %v4705 = vmul.f32 %v4704, 2.1237322e-06
        %v4706 = vadd.f32 %v4705, 0.00028619796
        %v4707 = vmul.f32 %v4704, %v4706
        %v4708 = vadd.f32 %v4707, 0.0036580483
        %v4709 = vmul.f32 %v4704, %v4708
        %v4710 = vadd.f32 %v4709, 0.05243302
        %v4711 = vmul.f32 %v4704, %v4710
        %v4712 = vadd.f32 %v4711, 0.18741608
        %v4713 = vmul.f32 %v4704, %v4712
        %v4714 = vadd.f32 %v4713, 1.1283791
        %v4715 = vmul.f32 %v1143, %v4714
        %v4716 = vmul.f32 %v4704, 3.8918573e-05
        %v4717 = vadd.f32 %v4716, 0.001143296
        %v4718 = vmul.f32 %v4704, %v4717
        %v4719 = vadd.f32 %v4718, 0.014752088
        %v4720 = vmul.f32 %v4704, %v4719
        %v4721 = vadd.f32 %v4720, 0.112945676
        %v4722 = vmul.f32 %v4704, %v4721
        %v4723 = vadd.f32 %v4722, 0.4994258
        %v4724 = vmul.f32 %v4704, %v4723
        %v4725 = vadd.f32 %v4724, 1.0
        %v4726 = vrcp.pop %v4725
        %v4727 = vmul.f32 %v4725, %v4726
        %v4728 = vsub.f32 1.0, %v4727
        %v4729 = vmul.f32 %v4726, %v4728
        %v4730 = vadd.f32 %v4726, %v4729
        %vm4731 = vweird.f32 %v4725
        %vm4732 = vweird.f32 %v4726
        %vm4733 = vmor %vm4731, %vm4732
        %v4734 = vsel %vm4733, %v4726, %v4730
        %v4735 = vand.u32 2147483647, %v4725
        %vm4736 = vcmp.eq.f32.partialorder %v4735, 8.507059e+37
        %v4737 = vand.u32 %v4725, 2147483648
        %v4738 = vor.u32 1.1754944e-38, %v4737
        %v4739 = vsel %vm4736, %v4738, %v4734
        %v4740 = vmul.f32 %v4715, %v4739
        %v4741 = vmin.f32 %v4740, 1.0
        %v4742 = vmax.f32 %v4741, -1.0
        %v4743 = vmul.f32 %v1144, %v1144
        %v4744 = vmin.f32 16.0, %v4743
        %v4745 = vmul.f32 %v4744, 2.1237322e-06
        %v4746 = vadd.f32 %v4745, 0.00028619796
        %v4747 = vmul.f32 %v4744, %v4746
        %v4748 = vadd.f32 %v4747, 0.0036580483
        %v4749 = vmul.f32 %v4744, %v4748
        %v4750 = vadd.f32 %v4749, 0.05243302
        %v4751 = vmul.f32 %v4744, %v4750
        %v4752 = vadd.f32 %v4751, 0.18741608
        %v4753 = vmul.f32 %v4744, %v4752
        %v4754 = vadd.f32 %v4753, 1.1283791
        %v4755 = vmul.f32 %v1144, %v4754
        %v4756 = vmul.f32 %v4744, 3.8918573e-05
        %v4757 = vadd.f32 %v4756, 0.001143296
        %v4758 = vmul.f32 %v4744, %v4757
        %v4759 = vadd.f32 %v4758, 0.014752088
        %v4760 = vmul.f32 %v4744, %v4759
        %v4761 = vadd.f32 %v4760, 0.112945676
        %v4762 = vmul.f32 %v4744, %v4761
        %v4763 = vadd.f32 %v4762, 0.4994258
        %v4764 = vmul.f32 %v4744, %v4763
        %v4765 = vadd.f32 %v4764, 1.0
        %v4766 = vrcp.pop %v4765
        %v4767 = vmul.f32 %v4765, %v4766
        %v4768 = vsub.f32 1.0, %v4767
        %v4769 = vmul.f32 %v4766, %v4768
        %v4770 = vadd.f32 %v4766, %v4769
        %vm4771 = vweird.f32 %v4765
        %vm4772 = vweird.f32 %v4766
        %vm4773 = vmor %vm4771, %vm4772
        %v4774 = vsel %vm4773, %v4766, %v4770
        %v4775 = vand.u32 2147483647, %v4765
        %vm4776 = vcmp.eq.f32.partialorder %v4775, 8.507059e+37
        %v4777 = vand.u32 %v4765, 2147483648
        %v4778 = vor.u32 1.1754944e-38, %v4777
        %v4779 = vsel %vm4776, %v4778, %v4774
        %v4780 = vmul.f32 %v4755, %v4779
        %v4781 = vmin.f32 %v4780, 1.0
        %v4782 = vmax.f32 %v4781, -1.0
        %v4783 = vmul.f32 %v1145, %v1145
        %v4784 = vmin.f32 16.0, %v4783
        %v4785 = vmul.f32 %v4784, 2.1237322e-06
        %v4786 = vadd.f32 %v4785, 0.00028619796
        %v4787 = vmul.f32 %v4784, %v4786
        %v4788 = vadd.f32 %v4787, 0.0036580483
        %v4789 = vmul.f32 %v4784, %v4788
        %v4790 = vadd.f32 %v4789, 0.05243302
        %v4791 = vmul.f32 %v4784, %v4790
        %v4792 = vadd.f32 %v4791, 0.18741608
        %v4793 = vmul.f32 %v4784, %v4792
        %v4794 = vadd.f32 %v4793, 1.1283791
        %v4795 = vmul.f32 %v1145, %v4794
        %v4796 = vmul.f32 %v4784, 3.8918573e-05
        %v4797 = vadd.f32 %v4796, 0.001143296
        %v4798 = vmul.f32 %v4784, %v4797
        %v4799 = vadd.f32 %v4798, 0.014752088
        %v4800 = vmul.f32 %v4784, %v4799
        %v4801 = vadd.f32 %v4800, 0.112945676
        %v4802 = vmul.f32 %v4784, %v4801
        %v4803 = vadd.f32 %v4802, 0.4994258
        %v4804 = vmul.f32 %v4784, %v4803
        %v4805 = vadd.f32 %v4804, 1.0
        %v4806 = vrcp.pop %v4805
        %v4807 = vmul.f32 %v4805, %v4806
        %v4808 = vsub.f32 1.0, %v4807
        %v4809 = vmul.f32 %v4806, %v4808
        %v4810 = vadd.f32 %v4806, %v4809
        %vm4811 = vweird.f32 %v4805
        %vm4812 = vweird.f32 %v4806
        %vm4813 = vmor %vm4811, %vm4812
        %v4814 = vsel %vm4813, %v4806, %v4810
        %v4815 = vand.u32 2147483647, %v4805
        %vm4816 = vcmp.eq.f32.partialorder %v4815, 8.507059e+37
        %v4817 = vand.u32 %v4805, 2147483648
        %v4818 = vor.u32 1.1754944e-38, %v4817
        %v4819 = vsel %vm4816, %v4818, %v4814
        %v4820 = vmul.f32 %v4795, %v4819
        %v4821 = vmin.f32 %v4820, 1.0
        %v4822 = vmax.f32 %v4821, -1.0
        %v4823 = vmul.f32 %v1146, %v1146
        %v4824 = vmin.f32 16.0, %v4823
        %v4825 = vmul.f32 %v4824, 2.1237322e-06
        %v4826 = vadd.f32 %v4825, 0.00028619796
        %v4827 = vmul.f32 %v4824, %v4826
        %v4828 = vadd.f32 %v4827, 0.0036580483
        %v4829 = vmul.f32 %v4824, %v4828
        %v4830 = vadd.f32 %v4829, 0.05243302
        %v4831 = vmul.f32 %v4824, %v4830
        %v4832 = vadd.f32 %v4831, 0.18741608
        %v4833 = vmul.f32 %v4824, %v4832
        %v4834 = vadd.f32 %v4833, 1.1283791
        %v4835 = vmul.f32 %v1146, %v4834
        %v4836 = vmul.f32 %v4824, 3.8918573e-05
        %v4837 = vadd.f32 %v4836, 0.001143296
        %v4838 = vmul.f32 %v4824, %v4837
        %v4839 = vadd.f32 %v4838, 0.014752088
        %v4840 = vmul.f32 %v4824, %v4839
        %v4841 = vadd.f32 %v4840, 0.112945676
        %v4842 = vmul.f32 %v4824, %v4841
        %v4843 = vadd.f32 %v4842, 0.4994258
        %v4844 = vmul.f32 %v4824, %v4843
        %v4845 = vadd.f32 %v4844, 1.0
        %v4846 = vrcp.pop %v4845
        %v4847 = vmul.f32 %v4845, %v4846
        %v4848 = vsub.f32 1.0, %v4847
        %v4849 = vmul.f32 %v4846, %v4848
        %v4850 = vadd.f32 %v4846, %v4849
        %vm4851 = vweird.f32 %v4845
        %vm4852 = vweird.f32 %v4846
        %vm4853 = vmor %vm4851, %vm4852
        %v4854 = vsel %vm4853, %v4846, %v4850
        %v4855 = vand.u32 2147483647, %v4845
        %vm4856 = vcmp.eq.f32.partialorder %v4855, 8.507059e+37
        %v4857 = vand.u32 %v4845, 2147483648
        %v4858 = vor.u32 1.1754944e-38, %v4857
        %v4859 = vsel %vm4856, %v4858, %v4854
        %v4860 = vmul.f32 %v4835, %v4859
        %v4861 = vmin.f32 %v4860, 1.0
        %v4862 = vmax.f32 %v4861, -1.0
        %v4863 = vmul.f32 %v1147, %v1147
        %v4864 = vmin.f32 16.0, %v4863
        %v4865 = vmul.f32 %v4864, 2.1237322e-06
        %v4866 = vadd.f32 %v4865, 0.00028619796
        %v4867 = vmul.f32 %v4864, %v4866
        %v4868 = vadd.f32 %v4867, 0.0036580483
        %v4869 = vmul.f32 %v4864, %v4868
        %v4870 = vadd.f32 %v4869, 0.05243302
        %v4871 = vmul.f32 %v4864, %v4870
        %v4872 = vadd.f32 %v4871, 0.18741608
        %v4873 = vmul.f32 %v4864, %v4872
        %v4874 = vadd.f32 %v4873, 1.1283791
        %v4875 = vmul.f32 %v1147, %v4874
        %v4876 = vmul.f32 %v4864, 3.8918573e-05
        %v4877 = vadd.f32 %v4876, 0.001143296
        %v4878 = vmul.f32 %v4864, %v4877
        %v4879 = vadd.f32 %v4878, 0.014752088
        %v4880 = vmul.f32 %v4864, %v4879
        %v4881 = vadd.f32 %v4880, 0.112945676
        %v4882 = vmul.f32 %v4864, %v4881
        %v4883 = vadd.f32 %v4882, 0.4994258
        %v4884 = vmul.f32 %v4864, %v4883
        %v4885 = vadd.f32 %v4884, 1.0
        %v4886 = vrcp.pop %v4885
        %v4887 = vmul.f32 %v4885, %v4886
        %v4888 = vsub.f32 1.0, %v4887
        %v4889 = vmul.f32 %v4886, %v4888
        %v4890 = vadd.f32 %v4886, %v4889
        %vm4891 = vweird.f32 %v4885
        %vm4892 = vweird.f32 %v4886
        %vm4893 = vmor %vm4891, %vm4892
        %v4894 = vsel %vm4893, %v4886, %v4890
        %v4895 = vand.u32 2147483647, %v4885
        %vm4896 = vcmp.eq.f32.partialorder %v4895, 8.507059e+37
        %v4897 = vand.u32 %v4885, 2147483648
        %v4898 = vor.u32 1.1754944e-38, %v4897
        %v4899 = vsel %vm4896, %v4898, %v4894
        %v4900 = vmul.f32 %v4875, %v4899
        %v4901 = vmin.f32 %v4900, 1.0
        %v4902 = vmax.f32 %v4901, -1.0
        %v4903 = vmul.f32 %v1148, %v1148
        %v4904 = vmin.f32 16.0, %v4903
        %v4905 = vmul.f32 %v4904, 2.1237322e-06
        %v4906 = vadd.f32 %v4905, 0.00028619796
        %v4907 = vmul.f32 %v4904, %v4906
        %v4908 = vadd.f32 %v4907, 0.0036580483
        %v4909 = vmul.f32 %v4904, %v4908
        %v4910 = vadd.f32 %v4909, 0.05243302
        %v4911 = vmul.f32 %v4904, %v4910
        %v4912 = vadd.f32 %v4911, 0.18741608
        %v4913 = vmul.f32 %v4904, %v4912
        %v4914 = vadd.f32 %v4913, 1.1283791
        %v4915 = vmul.f32 %v1148, %v4914
        %v4916 = vmul.f32 %v4904, 3.8918573e-05
        %v4917 = vadd.f32 %v4916, 0.001143296
        %v4918 = vmul.f32 %v4904, %v4917
        %v4919 = vadd.f32 %v4918, 0.014752088
        %v4920 = vmul.f32 %v4904, %v4919
        %v4921 = vadd.f32 %v4920, 0.112945676
        %v4922 = vmul.f32 %v4904, %v4921
        %v4923 = vadd.f32 %v4922, 0.4994258
        %v4924 = vmul.f32 %v4904, %v4923
        %v4925 = vadd.f32 %v4924, 1.0
        %v4926 = vrcp.pop %v4925
        %v4927 = vmul.f32 %v4925, %v4926
        %v4928 = vsub.f32 1.0, %v4927
        %v4929 = vmul.f32 %v4926, %v4928
        %v4930 = vadd.f32 %v4926, %v4929
        %vm4931 = vweird.f32 %v4925
        %vm4932 = vweird.f32 %v4926
        %vm4933 = vmor %vm4931, %vm4932
        %v4934 = vsel %vm4933, %v4926, %v4930
        %v4935 = vand.u32 2147483647, %v4925
        %vm4936 = vcmp.eq.f32.partialorder %v4935, 8.507059e+37
        %v4937 = vand.u32 %v4925, 2147483648
        %v4938 = vor.u32 1.1754944e-38, %v4937
        %v4939 = vsel %vm4936, %v4938, %v4934
        %v4940 = vmul.f32 %v4915, %v4939
        %v4941 = vmin.f32 %v4940, 1.0
        %v4942 = vmax.f32 %v4941, -1.0
        %v4943 = vmul.f32 %v1149, %v1149
        %v4944 = vmin.f32 16.0, %v4943
        %v4945 = vmul.f32 %v4944, 2.1237322e-06
        %v4946 = vadd.f32 %v4945, 0.00028619796
        %v4947 = vmul.f32 %v4944, %v4946
        %v4948 = vadd.f32 %v4947, 0.0036580483
        %v4949 = vmul.f32 %v4944, %v4948
        %v4950 = vadd.f32 %v4949, 0.05243302
        %v4951 = vmul.f32 %v4944, %v4950
        %v4952 = vadd.f32 %v4951, 0.18741608
        %v4953 = vmul.f32 %v4944, %v4952
        %v4954 = vadd.f32 %v4953, 1.1283791
        %v4955 = vmul.f32 %v1149, %v4954
        %v4956 = vmul.f32 %v4944, 3.8918573e-05
        %v4957 = vadd.f32 %v4956, 0.001143296
        %v4958 = vmul.f32 %v4944, %v4957
        %v4959 = vadd.f32 %v4958, 0.014752088
        %v4960 = vmul.f32 %v4944, %v4959
        %v4961 = vadd.f32 %v4960, 0.112945676
        %v4962 = vmul.f32 %v4944, %v4961
        %v4963 = vadd.f32 %v4962, 0.4994258
        %v4964 = vmul.f32 %v4944, %v4963
        %v4965 = vadd.f32 %v4964, 1.0
        %v4966 = vrcp.pop %v4965
        %v4967 = vmul.f32 %v4965, %v4966
        %v4968 = vsub.f32 1.0, %v4967
        %v4969 = vmul.f32 %v4966, %v4968
        %v4970 = vadd.f32 %v4966, %v4969
        %vm4971 = vweird.f32 %v4965
        %vm4972 = vweird.f32 %v4966
        %vm4973 = vmor %vm4971, %vm4972
        %v4974 = vsel %vm4973, %v4966, %v4970
        %v4975 = vand.u32 2147483647, %v4965
        %vm4976 = vcmp.eq.f32.partialorder %v4975, 8.507059e+37
        %v4977 = vand.u32 %v4965, 2147483648
        %v4978 = vor.u32 1.1754944e-38, %v4977
        %v4979 = vsel %vm4976, %v4978, %v4974
        %v4980 = vmul.f32 %v4955, %v4979
        %v4981 = vmin.f32 %v4980, 1.0
        %v4982 = vmax.f32 %v4981, -1.0
        %v4983 = vmul.f32 %v1150, %v1150
        %v4984 = vmin.f32 16.0, %v4983
        %v4985 = vmul.f32 %v4984, 2.1237322e-06
        %v4986 = vadd.f32 %v4985, 0.00028619796
        %v4987 = vmul.f32 %v4984, %v4986
        %v4988 = vadd.f32 %v4987, 0.0036580483
        %v4989 = vmul.f32 %v4984, %v4988
        %v4990 = vadd.f32 %v4989, 0.05243302
        %v4991 = vmul.f32 %v4984, %v4990
        %v4992 = vadd.f32 %v4991, 0.18741608
        %v4993 = vmul.f32 %v4984, %v4992
        %v4994 = vadd.f32 %v4993, 1.1283791
        %v4995 = vmul.f32 %v1150, %v4994
        %v4996 = vmul.f32 %v4984, 3.8918573e-05
        %v4997 = vadd.f32 %v4996, 0.001143296
        %v4998 = vmul.f32 %v4984, %v4997
        %v4999 = vadd.f32 %v4998, 0.014752088
        %v5000 = vmul.f32 %v4984, %v4999
        %v5001 = vadd.f32 %v5000, 0.112945676
        %v5002 = vmul.f32 %v4984, %v5001
        %v5003 = vadd.f32 %v5002, 0.4994258
        %v5004 = vmul.f32 %v4984, %v5003
        %v5005 = vadd.f32 %v5004, 1.0
        %v5006 = vrcp.pop %v5005
        %v5007 = vmul.f32 %v5005, %v5006
        %v5008 = vsub.f32 1.0, %v5007
        %v5009 = vmul.f32 %v5006, %v5008
        %v5010 = vadd.f32 %v5006, %v5009
        %vm5011 = vweird.f32 %v5005
        %vm5012 = vweird.f32 %v5006
        %vm5013 = vmor %vm5011, %vm5012
        %v5014 = vsel %vm5013, %v5006, %v5010
        %v5015 = vand.u32 2147483647, %v5005
        %vm5016 = vcmp.eq.f32.partialorder %v5015, 8.507059e+37
        %v5017 = vand.u32 %v5005, 2147483648
        %v5018 = vor.u32 1.1754944e-38, %v5017
        %v5019 = vsel %vm5016, %v5018, %v5014
        %v5020 = vmul.f32 %v4995, %v5019
        %v5021 = vmin.f32 %v5020, 1.0
        %v5022 = vmax.f32 %v5021, -1.0
        %v5023 = vmul.f32 %v1151, %v1151
        %v5024 = vmin.f32 16.0, %v5023
        %v5025 = vmul.f32 %v5024, 2.1237322e-06
        %v5026 = vadd.f32 %v5025, 0.00028619796
        %v5027 = vmul.f32 %v5024, %v5026
        %v5028 = vadd.f32 %v5027, 0.0036580483
        %v5029 = vmul.f32 %v5024, %v5028
        %v5030 = vadd.f32 %v5029, 0.05243302
        %v5031 = vmul.f32 %v5024, %v5030
        %v5032 = vadd.f32 %v5031, 0.18741608
        %v5033 = vmul.f32 %v5024, %v5032
        %v5034 = vadd.f32 %v5033, 1.1283791
        %v5035 = vmul.f32 %v1151, %v5034
        %v5036 = vmul.f32 %v5024, 3.8918573e-05
        %v5037 = vadd.f32 %v5036, 0.001143296
        %v5038 = vmul.f32 %v5024, %v5037
        %v5039 = vadd.f32 %v5038, 0.014752088
        %v5040 = vmul.f32 %v5024, %v5039
        %v5041 = vadd.f32 %v5040, 0.112945676
        %v5042 = vmul.f32 %v5024, %v5041
        %v5043 = vadd.f32 %v5042, 0.4994258
        %v5044 = vmul.f32 %v5024, %v5043
        %v5045 = vadd.f32 %v5044, 1.0
        %v5046 = vrcp.pop %v5045
        %v5047 = vmul.f32 %v5045, %v5046
        %v5048 = vsub.f32 1.0, %v5047
        %v5049 = vmul.f32 %v5046, %v5048
        %v5050 = vadd.f32 %v5046, %v5049
        %vm5051 = vweird.f32 %v5045
        %vm5052 = vweird.f32 %v5046
        %vm5053 = vmor %vm5051, %vm5052
        %v5054 = vsel %vm5053, %v5046, %v5050
        %v5055 = vand.u32 2147483647, %v5045
        %vm5056 = vcmp.eq.f32.partialorder %v5055, 8.507059e+37
        %v5057 = vand.u32 %v5045, 2147483648
        %v5058 = vor.u32 1.1754944e-38, %v5057
        %v5059 = vsel %vm5056, %v5058, %v5054
        %v5060 = vmul.f32 %v5035, %v5059
        %v5061 = vmin.f32 %v5060, 1.0
        %v5062 = vmax.f32 %v5061, -1.0
        %v5063 = vmul.f32 %v1152, %v1152
        %v5064 = vmin.f32 16.0, %v5063
        %v5065 = vmul.f32 %v5064, 2.1237322e-06
        %v5066 = vadd.f32 %v5065, 0.00028619796
        %v5067 = vmul.f32 %v5064, %v5066
        %v5068 = vadd.f32 %v5067, 0.0036580483
        %v5069 = vmul.f32 %v5064, %v5068
        %v5070 = vadd.f32 %v5069, 0.05243302
        %v5071 = vmul.f32 %v5064, %v5070
        %v5072 = vadd.f32 %v5071, 0.18741608
        %v5073 = vmul.f32 %v5064, %v5072
        %v5074 = vadd.f32 %v5073, 1.1283791
        %v5075 = vmul.f32 %v1152, %v5074
        %v5076 = vmul.f32 %v5064, 3.8918573e-05
        %v5077 = vadd.f32 %v5076, 0.001143296
        %v5078 = vmul.f32 %v5064, %v5077
        %v5079 = vadd.f32 %v5078, 0.014752088
        %v5080 = vmul.f32 %v5064, %v5079
        %v5081 = vadd.f32 %v5080, 0.112945676
        %v5082 = vmul.f32 %v5064, %v5081
        %v5083 = vadd.f32 %v5082, 0.4994258
        %v5084 = vmul.f32 %v5064, %v5083
        %v5085 = vadd.f32 %v5084, 1.0
        %v5086 = vrcp.pop %v5085
        %v5087 = vmul.f32 %v5085, %v5086
        %v5088 = vsub.f32 1.0, %v5087
        %v5089 = vmul.f32 %v5086, %v5088
        %v5090 = vadd.f32 %v5086, %v5089
        %vm5091 = vweird.f32 %v5085
        %vm5092 = vweird.f32 %v5086
        %vm5093 = vmor %vm5091, %vm5092
        %v5094 = vsel %vm5093, %v5086, %v5090
        %v5095 = vand.u32 2147483647, %v5085
        %vm5096 = vcmp.eq.f32.partialorder %v5095, 8.507059e+37
        %v5097 = vand.u32 %v5085, 2147483648
        %v5098 = vor.u32 1.1754944e-38, %v5097
        %v5099 = vsel %vm5096, %v5098, %v5094
        %v5100 = vmul.f32 %v5075, %v5099
        %v5101 = vmin.f32 %v5100, 1.0
        %v5102 = vmax.f32 %v5101, -1.0
        %v5103 = vmul.f32 %v1153, %v1153
        %v5104 = vmin.f32 16.0, %v5103
        %v5105 = vmul.f32 %v5104, 2.1237322e-06
        %v5106 = vadd.f32 %v5105, 0.00028619796
        %v5107 = vmul.f32 %v5104, %v5106
        %v5108 = vadd.f32 %v5107, 0.0036580483
        %v5109 = vmul.f32 %v5104, %v5108
        %v5110 = vadd.f32 %v5109, 0.05243302
        %v5111 = vmul.f32 %v5104, %v5110
        %v5112 = vadd.f32 %v5111, 0.18741608
        %v5113 = vmul.f32 %v5104, %v5112
        %v5114 = vadd.f32 %v5113, 1.1283791
        %v5115 = vmul.f32 %v1153, %v5114
        %v5116 = vmul.f32 %v5104, 3.8918573e-05
        %v5117 = vadd.f32 %v5116, 0.001143296
        %v5118 = vmul.f32 %v5104, %v5117
        %v5119 = vadd.f32 %v5118, 0.014752088
        %v5120 = vmul.f32 %v5104, %v5119
        %v5121 = vadd.f32 %v5120, 0.112945676
        %v5122 = vmul.f32 %v5104, %v5121
        %v5123 = vadd.f32 %v5122, 0.4994258
        %v5124 = vmul.f32 %v5104, %v5123
        %v5125 = vadd.f32 %v5124, 1.0
        %v5126 = vrcp.pop %v5125
        %v5127 = vmul.f32 %v5125, %v5126
        %v5128 = vsub.f32 1.0, %v5127
        %v5129 = vmul.f32 %v5126, %v5128
        %v5130 = vadd.f32 %v5126, %v5129
        %vm5131 = vweird.f32 %v5125
        %vm5132 = vweird.f32 %v5126
        %vm5133 = vmor %vm5131, %vm5132
        %v5134 = vsel %vm5133, %v5126, %v5130
        %v5135 = vand.u32 2147483647, %v5125
        %vm5136 = vcmp.eq.f32.partialorder %v5135, 8.507059e+37
        %v5137 = vand.u32 %v5125, 2147483648
        %v5138 = vor.u32 1.1754944e-38, %v5137
        %v5139 = vsel %vm5136, %v5138, %v5134
        %v5140 = vmul.f32 %v5115, %v5139
        %v5141 = vmin.f32 %v5140, 1.0
        %v5142 = vmax.f32 %v5141, -1.0
        %v5143 = vmul.f32 %v1154, %v1154
        %v5144 = vmin.f32 16.0, %v5143
        %v5145 = vmul.f32 %v5144, 2.1237322e-06
        %v5146 = vadd.f32 %v5145, 0.00028619796
        %v5147 = vmul.f32 %v5144, %v5146
        %v5148 = vadd.f32 %v5147, 0.0036580483
        %v5149 = vmul.f32 %v5144, %v5148
        %v5150 = vadd.f32 %v5149, 0.05243302
        %v5151 = vmul.f32 %v5144, %v5150
        %v5152 = vadd.f32 %v5151, 0.18741608
        %v5153 = vmul.f32 %v5144, %v5152
        %v5154 = vadd.f32 %v5153, 1.1283791
        %v5155 = vmul.f32 %v1154, %v5154
        %v5156 = vmul.f32 %v5144, 3.8918573e-05
        %v5157 = vadd.f32 %v5156, 0.001143296
        %v5158 = vmul.f32 %v5144, %v5157
        %v5159 = vadd.f32 %v5158, 0.014752088
        %v5160 = vmul.f32 %v5144, %v5159
        %v5161 = vadd.f32 %v5160, 0.112945676
        %v5162 = vmul.f32 %v5144, %v5161
        %v5163 = vadd.f32 %v5162, 0.4994258
        %v5164 = vmul.f32 %v5144, %v5163
        %v5165 = vadd.f32 %v5164, 1.0
        %v5166 = vrcp.pop %v5165
        %v5167 = vmul.f32 %v5165, %v5166
        %v5168 = vsub.f32 1.0, %v5167
        %v5169 = vmul.f32 %v5166, %v5168
        %v5170 = vadd.f32 %v5166, %v5169
        %vm5171 = vweird.f32 %v5165
        %vm5172 = vweird.f32 %v5166
        %vm5173 = vmor %vm5171, %vm5172
        %v5174 = vsel %vm5173, %v5166, %v5170
        %v5175 = vand.u32 2147483647, %v5165
        %vm5176 = vcmp.eq.f32.partialorder %v5175, 8.507059e+37
        %v5177 = vand.u32 %v5165, 2147483648
        %v5178 = vor.u32 1.1754944e-38, %v5177
        %v5179 = vsel %vm5176, %v5178, %v5174
        %v5180 = vmul.f32 %v5155, %v5179
        %v5181 = vmin.f32 %v5180, 1.0
        %v5182 = vmax.f32 %v5181, -1.0
        %v5183 = vmul.f32 %v1155, %v1155
        %v5184 = vmin.f32 16.0, %v5183
        %v5185 = vmul.f32 %v5184, 2.1237322e-06
        %v5186 = vadd.f32 %v5185, 0.00028619796
        %v5187 = vmul.f32 %v5184, %v5186
        %v5188 = vadd.f32 %v5187, 0.0036580483
        %v5189 = vmul.f32 %v5184, %v5188
        %v5190 = vadd.f32 %v5189, 0.05243302
        %v5191 = vmul.f32 %v5184, %v5190
        %v5192 = vadd.f32 %v5191, 0.18741608
        %v5193 = vmul.f32 %v5184, %v5192
        %v5194 = vadd.f32 %v5193, 1.1283791
        %v5195 = vmul.f32 %v1155, %v5194
        %v5196 = vmul.f32 %v5184, 3.8918573e-05
        %v5197 = vadd.f32 %v5196, 0.001143296
        %v5198 = vmul.f32 %v5184, %v5197
        %v5199 = vadd.f32 %v5198, 0.014752088
        %v5200 = vmul.f32 %v5184, %v5199
        %v5201 = vadd.f32 %v5200, 0.112945676
        %v5202 = vmul.f32 %v5184, %v5201
        %v5203 = vadd.f32 %v5202, 0.4994258
        %v5204 = vmul.f32 %v5184, %v5203
        %v5205 = vadd.f32 %v5204, 1.0
        %v5206 = vrcp.pop %v5205
        %v5207 = vmul.f32 %v5205, %v5206
        %v5208 = vsub.f32 1.0, %v5207
        %v5209 = vmul.f32 %v5206, %v5208
        %v5210 = vadd.f32 %v5206, %v5209
        %vm5211 = vweird.f32 %v5205
        %vm5212 = vweird.f32 %v5206
        %vm5213 = vmor %vm5211, %vm5212
        %v5214 = vsel %vm5213, %v5206, %v5210
        %v5215 = vand.u32 2147483647, %v5205
        %vm5216 = vcmp.eq.f32.partialorder %v5215, 8.507059e+37
        %v5217 = vand.u32 %v5205, 2147483648
        %v5218 = vor.u32 1.1754944e-38, %v5217
        %v5219 = vsel %vm5216, %v5218, %v5214
        %v5220 = vmul.f32 %v5195, %v5219
        %v5221 = vmin.f32 %v5220, 1.0
        %v5222 = vmax.f32 %v5221, -1.0
        %v5223 = vmul.f32 %v1156, %v1156
        %v5224 = vmin.f32 16.0, %v5223
        %v5225 = vmul.f32 %v5224, 2.1237322e-06
        %v5226 = vadd.f32 %v5225, 0.00028619796
        %v5227 = vmul.f32 %v5224, %v5226
        %v5228 = vadd.f32 %v5227, 0.0036580483
        %v5229 = vmul.f32 %v5224, %v5228
        %v5230 = vadd.f32 %v5229, 0.05243302
        %v5231 = vmul.f32 %v5224, %v5230
        %v5232 = vadd.f32 %v5231, 0.18741608
        %v5233 = vmul.f32 %v5224, %v5232
        %v5234 = vadd.f32 %v5233, 1.1283791
        %v5235 = vmul.f32 %v1156, %v5234
        %v5236 = vmul.f32 %v5224, 3.8918573e-05
        %v5237 = vadd.f32 %v5236, 0.001143296
        %v5238 = vmul.f32 %v5224, %v5237
        %v5239 = vadd.f32 %v5238, 0.014752088
        %v5240 = vmul.f32 %v5224, %v5239
        %v5241 = vadd.f32 %v5240, 0.112945676
        %v5242 = vmul.f32 %v5224, %v5241
        %v5243 = vadd.f32 %v5242, 0.4994258
        %v5244 = vmul.f32 %v5224, %v5243
        %v5245 = vadd.f32 %v5244, 1.0
        %v5246 = vrcp.pop %v5245
        %v5247 = vmul.f32 %v5245, %v5246
        %v5248 = vsub.f32 1.0, %v5247
        %v5249 = vmul.f32 %v5246, %v5248
        %v5250 = vadd.f32 %v5246, %v5249
        %vm5251 = vweird.f32 %v5245
        %vm5252 = vweird.f32 %v5246
        %vm5253 = vmor %vm5251, %vm5252
        %v5254 = vsel %vm5253, %v5246, %v5250
        %v5255 = vand.u32 2147483647, %v5245
        %vm5256 = vcmp.eq.f32.partialorder %v5255, 8.507059e+37
        %v5257 = vand.u32 %v5245, 2147483648
        %v5258 = vor.u32 1.1754944e-38, %v5257
        %v5259 = vsel %vm5256, %v5258, %v5254
        %v5260 = vmul.f32 %v5235, %v5259
        %v5261 = vmin.f32 %v5260, 1.0
        %v5262 = vmax.f32 %v5261, -1.0
        %v5263 = vmul.f32 %v1157, %v1157
        %v5264 = vmin.f32 16.0, %v5263
        %v5265 = vmul.f32 %v5264, 2.1237322e-06
        %v5266 = vadd.f32 %v5265, 0.00028619796
        %v5267 = vmul.f32 %v5264, %v5266
        %v5268 = vadd.f32 %v5267, 0.0036580483
        %v5269 = vmul.f32 %v5264, %v5268
        %v5270 = vadd.f32 %v5269, 0.05243302
        %v5271 = vmul.f32 %v5264, %v5270
        %v5272 = vadd.f32 %v5271, 0.18741608
        %v5273 = vmul.f32 %v5264, %v5272
        %v5274 = vadd.f32 %v5273, 1.1283791
        %v5275 = vmul.f32 %v1157, %v5274
        %v5276 = vmul.f32 %v5264, 3.8918573e-05
        %v5277 = vadd.f32 %v5276, 0.001143296
        %v5278 = vmul.f32 %v5264, %v5277
        %v5279 = vadd.f32 %v5278, 0.014752088
        %v5280 = vmul.f32 %v5264, %v5279
        %v5281 = vadd.f32 %v5280, 0.112945676
        %v5282 = vmul.f32 %v5264, %v5281
        %v5283 = vadd.f32 %v5282, 0.4994258
        %v5284 = vmul.f32 %v5264, %v5283
        %v5285 = vadd.f32 %v5284, 1.0
        %v5286 = vrcp.pop %v5285
        %v5287 = vmul.f32 %v5285, %v5286
        %v5288 = vsub.f32 1.0, %v5287
        %v5289 = vmul.f32 %v5286, %v5288
        %v5290 = vadd.f32 %v5286, %v5289
        %vm5291 = vweird.f32 %v5285
        %vm5292 = vweird.f32 %v5286
        %vm5293 = vmor %vm5291, %vm5292
        %v5294 = vsel %vm5293, %v5286, %v5290
        %v5295 = vand.u32 2147483647, %v5285
        %vm5296 = vcmp.eq.f32.partialorder %v5295, 8.507059e+37
        %v5297 = vand.u32 %v5285, 2147483648
        %v5298 = vor.u32 1.1754944e-38, %v5297
        %v5299 = vsel %vm5296, %v5298, %v5294
        %v5300 = vmul.f32 %v5275, %v5299
        %v5301 = vmin.f32 %v5300, 1.0
        %v5302 = vmax.f32 %v5301, -1.0
        %v5303 = vmul.f32 %v1158, %v1158
        %v5304 = vmin.f32 16.0, %v5303
        %v5305 = vmul.f32 %v5304, 2.1237322e-06
        %v5306 = vadd.f32 %v5305, 0.00028619796
        %v5307 = vmul.f32 %v5304, %v5306
        %v5308 = vadd.f32 %v5307, 0.0036580483
        %v5309 = vmul.f32 %v5304, %v5308
        %v5310 = vadd.f32 %v5309, 0.05243302
        %v5311 = vmul.f32 %v5304, %v5310
        %v5312 = vadd.f32 %v5311, 0.18741608
        %v5313 = vmul.f32 %v5304, %v5312
        %v5314 = vadd.f32 %v5313, 1.1283791
        %v5315 = vmul.f32 %v1158, %v5314
        %v5316 = vmul.f32 %v5304, 3.8918573e-05
        %v5317 = vadd.f32 %v5316, 0.001143296
        %v5318 = vmul.f32 %v5304, %v5317
        %v5319 = vadd.f32 %v5318, 0.014752088
        %v5320 = vmul.f32 %v5304, %v5319
        %v5321 = vadd.f32 %v5320, 0.112945676
        %v5322 = vmul.f32 %v5304, %v5321
        %v5323 = vadd.f32 %v5322, 0.4994258
        %v5324 = vmul.f32 %v5304, %v5323
        %v5325 = vadd.f32 %v5324, 1.0
        %v5326 = vrcp.pop %v5325
        %v5327 = vmul.f32 %v5325, %v5326
        %v5328 = vsub.f32 1.0, %v5327
        %v5329 = vmul.f32 %v5326, %v5328
        %v5330 = vadd.f32 %v5326, %v5329
        %vm5331 = vweird.f32 %v5325
        %vm5332 = vweird.f32 %v5326
        %vm5333 = vmor %vm5331, %vm5332
        %v5334 = vsel %vm5333, %v5326, %v5330
        %v5335 = vand.u32 2147483647, %v5325
        %vm5336 = vcmp.eq.f32.partialorder %v5335, 8.507059e+37
        %v5337 = vand.u32 %v5325, 2147483648
        %v5338 = vor.u32 1.1754944e-38, %v5337
        %v5339 = vsel %vm5336, %v5338, %v5334
        %v5340 = vmul.f32 %v5315, %v5339
        %v5341 = vmin.f32 %v5340, 1.0
        %v5342 = vmax.f32 %v5341, -1.0
        %v5343 = vmul.f32 %v1159, %v1159
        %v5344 = vmin.f32 16.0, %v5343
        %v5345 = vmul.f32 %v5344, 2.1237322e-06
        %v5346 = vadd.f32 %v5345, 0.00028619796
        %v5347 = vmul.f32 %v5344, %v5346
        %v5348 = vadd.f32 %v5347, 0.0036580483
        %v5349 = vmul.f32 %v5344, %v5348
        %v5350 = vadd.f32 %v5349, 0.05243302
        %v5351 = vmul.f32 %v5344, %v5350
        %v5352 = vadd.f32 %v5351, 0.18741608
        %v5353 = vmul.f32 %v5344, %v5352
        %v5354 = vadd.f32 %v5353, 1.1283791
        %v5355 = vmul.f32 %v1159, %v5354
        %v5356 = vmul.f32 %v5344, 3.8918573e-05
        %v5357 = vadd.f32 %v5356, 0.001143296
        %v5358 = vmul.f32 %v5344, %v5357
        %v5359 = vadd.f32 %v5358, 0.014752088
        %v5360 = vmul.f32 %v5344, %v5359
        %v5361 = vadd.f32 %v5360, 0.112945676
        %v5362 = vmul.f32 %v5344, %v5361
        %v5363 = vadd.f32 %v5362, 0.4994258
        %v5364 = vmul.f32 %v5344, %v5363
        %v5365 = vadd.f32 %v5364, 1.0
        %v5366 = vrcp.pop %v5365
        %v5367 = vmul.f32 %v5365, %v5366
        %v5368 = vsub.f32 1.0, %v5367
        %v5369 = vmul.f32 %v5366, %v5368
        %v5370 = vadd.f32 %v5366, %v5369
        %vm5371 = vweird.f32 %v5365
        %vm5372 = vweird.f32 %v5366
        %vm5373 = vmor %vm5371, %vm5372
        %v5374 = vsel %vm5373, %v5366, %v5370
        %v5375 = vand.u32 2147483647, %v5365
        %vm5376 = vcmp.eq.f32.partialorder %v5375, 8.507059e+37
        %v5377 = vand.u32 %v5365, 2147483648
        %v5378 = vor.u32 1.1754944e-38, %v5377
        %v5379 = vsel %vm5376, %v5378, %v5374
        %v5380 = vmul.f32 %v5355, %v5379
        %v5381 = vmin.f32 %v5380, 1.0
        %v5382 = vmax.f32 %v5381, -1.0
        %v5383 = vmul.f32 %v1160, %v1160
        %v5384 = vmin.f32 16.0, %v5383
        %v5385 = vmul.f32 %v5384, 2.1237322e-06
        %v5386 = vadd.f32 %v5385, 0.00028619796
        %v5387 = vmul.f32 %v5384, %v5386
        %v5388 = vadd.f32 %v5387, 0.0036580483
        %v5389 = vmul.f32 %v5384, %v5388
        %v5390 = vadd.f32 %v5389, 0.05243302
        %v5391 = vmul.f32 %v5384, %v5390
        %v5392 = vadd.f32 %v5391, 0.18741608
        %v5393 = vmul.f32 %v5384, %v5392
        %v5394 = vadd.f32 %v5393, 1.1283791
        %v5395 = vmul.f32 %v1160, %v5394
        %v5396 = vmul.f32 %v5384, 3.8918573e-05
        %v5397 = vadd.f32 %v5396, 0.001143296
        %v5398 = vmul.f32 %v5384, %v5397
        %v5399 = vadd.f32 %v5398, 0.014752088
        %v5400 = vmul.f32 %v5384, %v5399
        %v5401 = vadd.f32 %v5400, 0.112945676
        %v5402 = vmul.f32 %v5384, %v5401
        %v5403 = vadd.f32 %v5402, 0.4994258
        %v5404 = vmul.f32 %v5384, %v5403
        %v5405 = vadd.f32 %v5404, 1.0
        %v5406 = vrcp.pop %v5405
        %v5407 = vmul.f32 %v5405, %v5406
        %v5408 = vsub.f32 1.0, %v5407
        %v5409 = vmul.f32 %v5406, %v5408
        %v5410 = vadd.f32 %v5406, %v5409
        %vm5411 = vweird.f32 %v5405
        %vm5412 = vweird.f32 %v5406
        %vm5413 = vmor %vm5411, %vm5412
        %v5414 = vsel %vm5413, %v5406, %v5410
        %v5415 = vand.u32 2147483647, %v5405
        %vm5416 = vcmp.eq.f32.partialorder %v5415, 8.507059e+37
        %v5417 = vand.u32 %v5405, 2147483648
        %v5418 = vor.u32 1.1754944e-38, %v5417
        %v5419 = vsel %vm5416, %v5418, %v5414
        %v5420 = vmul.f32 %v5395, %v5419
        %v5421 = vmin.f32 %v5420, 1.0
        %v5422 = vmax.f32 %v5421, -1.0
        %v5423 = vmul.f32 %v1161, %v1161
        %v5424 = vmin.f32 16.0, %v5423
        %v5425 = vmul.f32 %v5424, 2.1237322e-06
        %v5426 = vadd.f32 %v5425, 0.00028619796
        %v5427 = vmul.f32 %v5424, %v5426
        %v5428 = vadd.f32 %v5427, 0.0036580483
        %v5429 = vmul.f32 %v5424, %v5428
        %v5430 = vadd.f32 %v5429, 0.05243302
        %v5431 = vmul.f32 %v5424, %v5430
        %v5432 = vadd.f32 %v5431, 0.18741608
        %v5433 = vmul.f32 %v5424, %v5432
        %v5434 = vadd.f32 %v5433, 1.1283791
        %v5435 = vmul.f32 %v1161, %v5434
        %v5436 = vmul.f32 %v5424, 3.8918573e-05
        %v5437 = vadd.f32 %v5436, 0.001143296
        %v5438 = vmul.f32 %v5424, %v5437
        %v5439 = vadd.f32 %v5438, 0.014752088
        %v5440 = vmul.f32 %v5424, %v5439
        %v5441 = vadd.f32 %v5440, 0.112945676
        %v5442 = vmul.f32 %v5424, %v5441
        %v5443 = vadd.f32 %v5442, 0.4994258
        %v5444 = vmul.f32 %v5424, %v5443
        %v5445 = vadd.f32 %v5444, 1.0
        %v5446 = vrcp.pop %v5445
        %v5447 = vmul.f32 %v5445, %v5446
        %v5448 = vsub.f32 1.0, %v5447
        %v5449 = vmul.f32 %v5446, %v5448
        %v5450 = vadd.f32 %v5446, %v5449
        %vm5451 = vweird.f32 %v5445
        %vm5452 = vweird.f32 %v5446
        %vm5453 = vmor %vm5451, %vm5452
        %v5454 = vsel %vm5453, %v5446, %v5450
        %v5455 = vand.u32 2147483647, %v5445
        %vm5456 = vcmp.eq.f32.partialorder %v5455, 8.507059e+37
        %v5457 = vand.u32 %v5445, 2147483648
        %v5458 = vor.u32 1.1754944e-38, %v5457
        %v5459 = vsel %vm5456, %v5458, %v5454
        %v5460 = vmul.f32 %v5435, %v5459
        %v5461 = vmin.f32 %v5460, 1.0
        %v5462 = vmax.f32 %v5461, -1.0
        %v5463 = vmul.f32 %v1162, %v1162
        %v5464 = vmin.f32 16.0, %v5463
        %v5465 = vmul.f32 %v5464, 2.1237322e-06
        %v5466 = vadd.f32 %v5465, 0.00028619796
        %v5467 = vmul.f32 %v5464, %v5466
        %v5468 = vadd.f32 %v5467, 0.0036580483
        %v5469 = vmul.f32 %v5464, %v5468
        %v5470 = vadd.f32 %v5469, 0.05243302
        %v5471 = vmul.f32 %v5464, %v5470
        %v5472 = vadd.f32 %v5471, 0.18741608
        %v5473 = vmul.f32 %v5464, %v5472
        %v5474 = vadd.f32 %v5473, 1.1283791
        %v5475 = vmul.f32 %v1162, %v5474
        %v5476 = vmul.f32 %v5464, 3.8918573e-05
        %v5477 = vadd.f32 %v5476, 0.001143296
        %v5478 = vmul.f32 %v5464, %v5477
        %v5479 = vadd.f32 %v5478, 0.014752088
        %v5480 = vmul.f32 %v5464, %v5479
        %v5481 = vadd.f32 %v5480, 0.112945676
        %v5482 = vmul.f32 %v5464, %v5481
        %v5483 = vadd.f32 %v5482, 0.4994258
        %v5484 = vmul.f32 %v5464, %v5483
        %v5485 = vadd.f32 %v5484, 1.0
        %v5486 = vrcp.pop %v5485
        %v5487 = vmul.f32 %v5485, %v5486
        %v5488 = vsub.f32 1.0, %v5487
        %v5489 = vmul.f32 %v5486, %v5488
        %v5490 = vadd.f32 %v5486, %v5489
        %vm5491 = vweird.f32 %v5485
        %vm5492 = vweird.f32 %v5486
        %vm5493 = vmor %vm5491, %vm5492
        %v5494 = vsel %vm5493, %v5486, %v5490
        %v5495 = vand.u32 2147483647, %v5485
        %vm5496 = vcmp.eq.f32.partialorder %v5495, 8.507059e+37
        %v5497 = vand.u32 %v5485, 2147483648
        %v5498 = vor.u32 1.1754944e-38, %v5497
        %v5499 = vsel %vm5496, %v5498, %v5494
        %v5500 = vmul.f32 %v5475, %v5499
        %v5501 = vmin.f32 %v5500, 1.0
        %v5502 = vmax.f32 %v5501, -1.0
        %v5503 = vmul.f32 %v1163, %v1163
        %v5504 = vmin.f32 16.0, %v5503
        %v5505 = vmul.f32 %v5504, 2.1237322e-06
        %v5506 = vadd.f32 %v5505, 0.00028619796
        %v5507 = vmul.f32 %v5504, %v5506
        %v5508 = vadd.f32 %v5507, 0.0036580483
        %v5509 = vmul.f32 %v5504, %v5508
        %v5510 = vadd.f32 %v5509, 0.05243302
        %v5511 = vmul.f32 %v5504, %v5510
        %v5512 = vadd.f32 %v5511, 0.18741608
        %v5513 = vmul.f32 %v5504, %v5512
        %v5514 = vadd.f32 %v5513, 1.1283791
        %v5515 = vmul.f32 %v1163, %v5514
        %v5516 = vmul.f32 %v5504, 3.8918573e-05
        %v5517 = vadd.f32 %v5516, 0.001143296
        %v5518 = vmul.f32 %v5504, %v5517
        %v5519 = vadd.f32 %v5518, 0.014752088
        %v5520 = vmul.f32 %v5504, %v5519
        %v5521 = vadd.f32 %v5520, 0.112945676
        %v5522 = vmul.f32 %v5504, %v5521
        %v5523 = vadd.f32 %v5522, 0.4994258
        %v5524 = vmul.f32 %v5504, %v5523
        %v5525 = vadd.f32 %v5524, 1.0
        %v5526 = vrcp.pop %v5525
        %v5527 = vmul.f32 %v5525, %v5526
        %v5528 = vsub.f32 1.0, %v5527
        %v5529 = vmul.f32 %v5526, %v5528
        %v5530 = vadd.f32 %v5526, %v5529
        %vm5531 = vweird.f32 %v5525
        %vm5532 = vweird.f32 %v5526
        %vm5533 = vmor %vm5531, %vm5532
        %v5534 = vsel %vm5533, %v5526, %v5530
        %v5535 = vand.u32 2147483647, %v5525
        %vm5536 = vcmp.eq.f32.partialorder %v5535, 8.507059e+37
        %v5537 = vand.u32 %v5525, 2147483648
        %v5538 = vor.u32 1.1754944e-38, %v5537
        %v5539 = vsel %vm5536, %v5538, %v5534
        %v5540 = vmul.f32 %v5515, %v5539
        %v5541 = vmin.f32 %v5540, 1.0
        %v5542 = vmax.f32 %v5541, -1.0
        %v5543 = vmul.f32 %v1164, %v1164
        %v5544 = vmin.f32 16.0, %v5543
        %v5545 = vmul.f32 %v5544, 2.1237322e-06
        %v5546 = vadd.f32 %v5545, 0.00028619796
        %v5547 = vmul.f32 %v5544, %v5546
        %v5548 = vadd.f32 %v5547, 0.0036580483
        %v5549 = vmul.f32 %v5544, %v5548
        %v5550 = vadd.f32 %v5549, 0.05243302
        %v5551 = vmul.f32 %v5544, %v5550
        %v5552 = vadd.f32 %v5551, 0.18741608
        %v5553 = vmul.f32 %v5544, %v5552
        %v5554 = vadd.f32 %v5553, 1.1283791
        %v5555 = vmul.f32 %v1164, %v5554
        %v5556 = vmul.f32 %v5544, 3.8918573e-05
        %v5557 = vadd.f32 %v5556, 0.001143296
        %v5558 = vmul.f32 %v5544, %v5557
        %v5559 = vadd.f32 %v5558, 0.014752088
        %v5560 = vmul.f32 %v5544, %v5559
        %v5561 = vadd.f32 %v5560, 0.112945676
        %v5562 = vmul.f32 %v5544, %v5561
        %v5563 = vadd.f32 %v5562, 0.4994258
        %v5564 = vmul.f32 %v5544, %v5563
        %v5565 = vadd.f32 %v5564, 1.0
        %v5566 = vrcp.pop %v5565
        %v5567 = vmul.f32 %v5565, %v5566
        %v5568 = vsub.f32 1.0, %v5567
        %v5569 = vmul.f32 %v5566, %v5568
        %v5570 = vadd.f32 %v5566, %v5569
        %vm5571 = vweird.f32 %v5565
        %vm5572 = vweird.f32 %v5566
        %vm5573 = vmor %vm5571, %vm5572
        %v5574 = vsel %vm5573, %v5566, %v5570
        %v5575 = vand.u32 2147483647, %v5565
        %vm5576 = vcmp.eq.f32.partialorder %v5575, 8.507059e+37
        %v5577 = vand.u32 %v5565, 2147483648
        %v5578 = vor.u32 1.1754944e-38, %v5577
        %v5579 = vsel %vm5576, %v5578, %v5574
        %v5580 = vmul.f32 %v5555, %v5579
        %v5581 = vmin.f32 %v5580, 1.0
        %v5582 = vmax.f32 %v5581, -1.0
        %v5583 = vmul.f32 %v1165, %v1165
        %v5584 = vmin.f32 16.0, %v5583
        %v5585 = vmul.f32 %v5584, 2.1237322e-06
        %v5586 = vadd.f32 %v5585, 0.00028619796
        %v5587 = vmul.f32 %v5584, %v5586
        %v5588 = vadd.f32 %v5587, 0.0036580483
        %v5589 = vmul.f32 %v5584, %v5588
        %v5590 = vadd.f32 %v5589, 0.05243302
        %v5591 = vmul.f32 %v5584, %v5590
        %v5592 = vadd.f32 %v5591, 0.18741608
        %v5593 = vmul.f32 %v5584, %v5592
        %v5594 = vadd.f32 %v5593, 1.1283791
        %v5595 = vmul.f32 %v1165, %v5594
        %v5596 = vmul.f32 %v5584, 3.8918573e-05
        %v5597 = vadd.f32 %v5596, 0.001143296
        %v5598 = vmul.f32 %v5584, %v5597
        %v5599 = vadd.f32 %v5598, 0.014752088
        %v5600 = vmul.f32 %v5584, %v5599
        %v5601 = vadd.f32 %v5600, 0.112945676
        %v5602 = vmul.f32 %v5584, %v5601
        %v5603 = vadd.f32 %v5602, 0.4994258
        %v5604 = vmul.f32 %v5584, %v5603
        %v5605 = vadd.f32 %v5604, 1.0
        %v5606 = vrcp.pop %v5605
        %v5607 = vmul.f32 %v5605, %v5606
        %v5608 = vsub.f32 1.0, %v5607
        %v5609 = vmul.f32 %v5606, %v5608
        %v5610 = vadd.f32 %v5606, %v5609
        %vm5611 = vweird.f32 %v5605
        %vm5612 = vweird.f32 %v5606
        %vm5613 = vmor %vm5611, %vm5612
        %v5614 = vsel %vm5613, %v5606, %v5610
        %v5615 = vand.u32 2147483647, %v5605
        %vm5616 = vcmp.eq.f32.partialorder %v5615, 8.507059e+37
        %v5617 = vand.u32 %v5605, 2147483648
        %v5618 = vor.u32 1.1754944e-38, %v5617
        %v5619 = vsel %vm5616, %v5618, %v5614
        %v5620 = vmul.f32 %v5595, %v5619
        %v5621 = vmin.f32 %v5620, 1.0
        %v5622 = vmax.f32 %v5621, -1.0
        %v5623 = vmul.f32 %v1166, %v1166
        %v5624 = vmin.f32 16.0, %v5623
        %v5625 = vmul.f32 %v5624, 2.1237322e-06
        %v5626 = vadd.f32 %v5625, 0.00028619796
        %v5627 = vmul.f32 %v5624, %v5626
        %v5628 = vadd.f32 %v5627, 0.0036580483
        %v5629 = vmul.f32 %v5624, %v5628
        %v5630 = vadd.f32 %v5629, 0.05243302
        %v5631 = vmul.f32 %v5624, %v5630
        %v5632 = vadd.f32 %v5631, 0.18741608
        %v5633 = vmul.f32 %v5624, %v5632
        %v5634 = vadd.f32 %v5633, 1.1283791
        %v5635 = vmul.f32 %v1166, %v5634
        %v5636 = vmul.f32 %v5624, 3.8918573e-05
        %v5637 = vadd.f32 %v5636, 0.001143296
        %v5638 = vmul.f32 %v5624, %v5637
        %v5639 = vadd.f32 %v5638, 0.014752088
        %v5640 = vmul.f32 %v5624, %v5639
        %v5641 = vadd.f32 %v5640, 0.112945676
        %v5642 = vmul.f32 %v5624, %v5641
        %v5643 = vadd.f32 %v5642, 0.4994258
        %v5644 = vmul.f32 %v5624, %v5643
        %v5645 = vadd.f32 %v5644, 1.0
        %v5646 = vrcp.pop %v5645
        %v5647 = vmul.f32 %v5645, %v5646
        %v5648 = vsub.f32 1.0, %v5647
        %v5649 = vmul.f32 %v5646, %v5648
        %v5650 = vadd.f32 %v5646, %v5649
        %vm5651 = vweird.f32 %v5645
        %vm5652 = vweird.f32 %v5646
        %vm5653 = vmor %vm5651, %vm5652
        %v5654 = vsel %vm5653, %v5646, %v5650
        %v5655 = vand.u32 2147483647, %v5645
        %vm5656 = vcmp.eq.f32.partialorder %v5655, 8.507059e+37
        %v5657 = vand.u32 %v5645, 2147483648
        %v5658 = vor.u32 1.1754944e-38, %v5657
        %v5659 = vsel %vm5656, %v5658, %v5654
        %v5660 = vmul.f32 %v5635, %v5659
        %v5661 = vmin.f32 %v5660, 1.0
        %v5662 = vmax.f32 %v5661, -1.0
        %v5663 = vmul.f32 %v1167, %v1167
        %v5664 = vmin.f32 16.0, %v5663
        %v5665 = vmul.f32 %v5664, 2.1237322e-06
        %v5666 = vadd.f32 %v5665, 0.00028619796
        %v5667 = vmul.f32 %v5664, %v5666
        %v5668 = vadd.f32 %v5667, 0.0036580483
        %v5669 = vmul.f32 %v5664, %v5668
        %v5670 = vadd.f32 %v5669, 0.05243302
        %v5671 = vmul.f32 %v5664, %v5670
        %v5672 = vadd.f32 %v5671, 0.18741608
        %v5673 = vmul.f32 %v5664, %v5672
        %v5674 = vadd.f32 %v5673, 1.1283791
        %v5675 = vmul.f32 %v1167, %v5674
        %v5676 = vmul.f32 %v5664, 3.8918573e-05
        %v5677 = vadd.f32 %v5676, 0.001143296
        %v5678 = vmul.f32 %v5664, %v5677
        %v5679 = vadd.f32 %v5678, 0.014752088
        %v5680 = vmul.f32 %v5664, %v5679
        %v5681 = vadd.f32 %v5680, 0.112945676
        %v5682 = vmul.f32 %v5664, %v5681
        %v5683 = vadd.f32 %v5682, 0.4994258
        %v5684 = vmul.f32 %v5664, %v5683
        %v5685 = vadd.f32 %v5684, 1.0
        %v5686 = vrcp.pop %v5685
        %v5687 = vmul.f32 %v5685, %v5686
        %v5688 = vsub.f32 1.0, %v5687
        %v5689 = vmul.f32 %v5686, %v5688
        %v5690 = vadd.f32 %v5686, %v5689
        %vm5691 = vweird.f32 %v5685
        %vm5692 = vweird.f32 %v5686
        %vm5693 = vmor %vm5691, %vm5692
        %v5694 = vsel %vm5693, %v5686, %v5690
        %v5695 = vand.u32 2147483647, %v5685
        %vm5696 = vcmp.eq.f32.partialorder %v5695, 8.507059e+37
        %v5697 = vand.u32 %v5685, 2147483648
        %v5698 = vor.u32 1.1754944e-38, %v5697
        %v5699 = vsel %vm5696, %v5698, %v5694
        %v5700 = vmul.f32 %v5675, %v5699
        %v5701 = vmin.f32 %v5700, 1.0
        %v5702 = vmax.f32 %v5701, -1.0
        %v5703 = vmul.f32 %v1168, %v1168
        %v5704 = vmin.f32 16.0, %v5703
        %v5705 = vmul.f32 %v5704, 2.1237322e-06
        %v5706 = vadd.f32 %v5705, 0.00028619796
        %v5707 = vmul.f32 %v5704, %v5706
        %v5708 = vadd.f32 %v5707, 0.0036580483
        %v5709 = vmul.f32 %v5704, %v5708
        %v5710 = vadd.f32 %v5709, 0.05243302
        %v5711 = vmul.f32 %v5704, %v5710
        %v5712 = vadd.f32 %v5711, 0.18741608
        %v5713 = vmul.f32 %v5704, %v5712
        %v5714 = vadd.f32 %v5713, 1.1283791
        %v5715 = vmul.f32 %v1168, %v5714
        %v5716 = vmul.f32 %v5704, 3.8918573e-05
        %v5717 = vadd.f32 %v5716, 0.001143296
        %v5718 = vmul.f32 %v5704, %v5717
        %v5719 = vadd.f32 %v5718, 0.014752088
        %v5720 = vmul.f32 %v5704, %v5719
        %v5721 = vadd.f32 %v5720, 0.112945676
        %v5722 = vmul.f32 %v5704, %v5721
        %v5723 = vadd.f32 %v5722, 0.4994258
        %v5724 = vmul.f32 %v5704, %v5723
        %v5725 = vadd.f32 %v5724, 1.0
        %v5726 = vrcp.pop %v5725
        %v5727 = vmul.f32 %v5725, %v5726
        %v5728 = vsub.f32 1.0, %v5727
        %v5729 = vmul.f32 %v5726, %v5728
        %v5730 = vadd.f32 %v5726, %v5729
        %vm5731 = vweird.f32 %v5725
        %vm5732 = vweird.f32 %v5726
        %vm5733 = vmor %vm5731, %vm5732
        %v5734 = vsel %vm5733, %v5726, %v5730
        %v5735 = vand.u32 2147483647, %v5725
        %vm5736 = vcmp.eq.f32.partialorder %v5735, 8.507059e+37
        %v5737 = vand.u32 %v5725, 2147483648
        %v5738 = vor.u32 1.1754944e-38, %v5737
        %v5739 = vsel %vm5736, %v5738, %v5734
        %v5740 = vmul.f32 %v5715, %v5739
        %v5741 = vmin.f32 %v5740, 1.0
        %v5742 = vmax.f32 %v5741, -1.0
        %v5743 = vmul.f32 %v1169, %v1169
        %v5744 = vmin.f32 16.0, %v5743
        %v5745 = vmul.f32 %v5744, 2.1237322e-06
        %v5746 = vadd.f32 %v5745, 0.00028619796
        %v5747 = vmul.f32 %v5744, %v5746
        %v5748 = vadd.f32 %v5747, 0.0036580483
        %v5749 = vmul.f32 %v5744, %v5748
        %v5750 = vadd.f32 %v5749, 0.05243302
        %v5751 = vmul.f32 %v5744, %v5750
        %v5752 = vadd.f32 %v5751, 0.18741608
        %v5753 = vmul.f32 %v5744, %v5752
        %v5754 = vadd.f32 %v5753, 1.1283791
        %v5755 = vmul.f32 %v1169, %v5754
        %v5756 = vmul.f32 %v5744, 3.8918573e-05
        %v5757 = vadd.f32 %v5756, 0.001143296
        %v5758 = vmul.f32 %v5744, %v5757
        %v5759 = vadd.f32 %v5758, 0.014752088
        %v5760 = vmul.f32 %v5744, %v5759
        %v5761 = vadd.f32 %v5760, 0.112945676
        %v5762 = vmul.f32 %v5744, %v5761
        %v5763 = vadd.f32 %v5762, 0.4994258
        %v5764 = vmul.f32 %v5744, %v5763
        %v5765 = vadd.f32 %v5764, 1.0
        %v5766 = vrcp.pop %v5765
        %v5767 = vmul.f32 %v5765, %v5766
        %v5768 = vsub.f32 1.0, %v5767
        %v5769 = vmul.f32 %v5766, %v5768
        %v5770 = vadd.f32 %v5766, %v5769
        %vm5771 = vweird.f32 %v5765
        %vm5772 = vweird.f32 %v5766
        %vm5773 = vmor %vm5771, %vm5772
        %v5774 = vsel %vm5773, %v5766, %v5770
        %v5775 = vand.u32 2147483647, %v5765
        %vm5776 = vcmp.eq.f32.partialorder %v5775, 8.507059e+37
        %v5777 = vand.u32 %v5765, 2147483648
        %v5778 = vor.u32 1.1754944e-38, %v5777
        %v5779 = vsel %vm5776, %v5778, %v5774
        %v5780 = vmul.f32 %v5755, %v5779
        %v5781 = vmin.f32 %v5780, 1.0
        %v5782 = vmax.f32 %v5781, -1.0
        %v5783 = vmul.f32 %v1170, %v1170
        %v5784 = vmin.f32 16.0, %v5783
        %v5785 = vmul.f32 %v5784, 2.1237322e-06
        %v5786 = vadd.f32 %v5785, 0.00028619796
        %v5787 = vmul.f32 %v5784, %v5786
        %v5788 = vadd.f32 %v5787, 0.0036580483
        %v5789 = vmul.f32 %v5784, %v5788
        %v5790 = vadd.f32 %v5789, 0.05243302
        %v5791 = vmul.f32 %v5784, %v5790
        %v5792 = vadd.f32 %v5791, 0.18741608
        %v5793 = vmul.f32 %v5784, %v5792
        %v5794 = vadd.f32 %v5793, 1.1283791
        %v5795 = vmul.f32 %v1170, %v5794
        %v5796 = vmul.f32 %v5784, 3.8918573e-05
        %v5797 = vadd.f32 %v5796, 0.001143296
        %v5798 = vmul.f32 %v5784, %v5797
        %v5799 = vadd.f32 %v5798, 0.014752088
        %v5800 = vmul.f32 %v5784, %v5799
        %v5801 = vadd.f32 %v5800, 0.112945676
        %v5802 = vmul.f32 %v5784, %v5801
        %v5803 = vadd.f32 %v5802, 0.4994258
        %v5804 = vmul.f32 %v5784, %v5803
        %v5805 = vadd.f32 %v5804, 1.0
        %v5806 = vrcp.pop %v5805
        %v5807 = vmul.f32 %v5805, %v5806
        %v5808 = vsub.f32 1.0, %v5807
        %v5809 = vmul.f32 %v5806, %v5808
        %v5810 = vadd.f32 %v5806, %v5809
        %vm5811 = vweird.f32 %v5805
        %vm5812 = vweird.f32 %v5806
        %vm5813 = vmor %vm5811, %vm5812
        %v5814 = vsel %vm5813, %v5806, %v5810
        %v5815 = vand.u32 2147483647, %v5805
        %vm5816 = vcmp.eq.f32.partialorder %v5815, 8.507059e+37
        %v5817 = vand.u32 %v5805, 2147483648
        %v5818 = vor.u32 1.1754944e-38, %v5817
        %v5819 = vsel %vm5816, %v5818, %v5814
        %v5820 = vmul.f32 %v5795, %v5819
        %v5821 = vmin.f32 %v5820, 1.0
        %v5822 = vmax.f32 %v5821, -1.0
        %v5823 = vmul.f32 %v1171, %v1171
        %v5824 = vmin.f32 16.0, %v5823
        %v5825 = vmul.f32 %v5824, 2.1237322e-06
        %v5826 = vadd.f32 %v5825, 0.00028619796
        %v5827 = vmul.f32 %v5824, %v5826
        %v5828 = vadd.f32 %v5827, 0.0036580483
        %v5829 = vmul.f32 %v5824, %v5828
        %v5830 = vadd.f32 %v5829, 0.05243302
        %v5831 = vmul.f32 %v5824, %v5830
        %v5832 = vadd.f32 %v5831, 0.18741608
        %v5833 = vmul.f32 %v5824, %v5832
        %v5834 = vadd.f32 %v5833, 1.1283791
        %v5835 = vmul.f32 %v1171, %v5834
        %v5836 = vmul.f32 %v5824, 3.8918573e-05
        %v5837 = vadd.f32 %v5836, 0.001143296
        %v5838 = vmul.f32 %v5824, %v5837
        %v5839 = vadd.f32 %v5838, 0.014752088
        %v5840 = vmul.f32 %v5824, %v5839
        %v5841 = vadd.f32 %v5840, 0.112945676
        %v5842 = vmul.f32 %v5824, %v5841
        %v5843 = vadd.f32 %v5842, 0.4994258
        %v5844 = vmul.f32 %v5824, %v5843
        %v5845 = vadd.f32 %v5844, 1.0
        %v5846 = vrcp.pop %v5845
        %v5847 = vmul.f32 %v5845, %v5846
        %v5848 = vsub.f32 1.0, %v5847
        %v5849 = vmul.f32 %v5846, %v5848
        %v5850 = vadd.f32 %v5846, %v5849
        %vm5851 = vweird.f32 %v5845
        %vm5852 = vweird.f32 %v5846
        %vm5853 = vmor %vm5851, %vm5852
        %v5854 = vsel %vm5853, %v5846, %v5850
        %v5855 = vand.u32 2147483647, %v5845
        %vm5856 = vcmp.eq.f32.partialorder %v5855, 8.507059e+37
        %v5857 = vand.u32 %v5845, 2147483648
        %v5858 = vor.u32 1.1754944e-38, %v5857
        %v5859 = vsel %vm5856, %v5858, %v5854
        %v5860 = vmul.f32 %v5835, %v5859
        %v5861 = vmin.f32 %v5860, 1.0
        %v5862 = vmax.f32 %v5861, -1.0
        %v5863 = vmul.f32 %v1172, %v1172
        %v5864 = vmin.f32 16.0, %v5863
        %v5865 = vmul.f32 %v5864, 2.1237322e-06
        %v5866 = vadd.f32 %v5865, 0.00028619796
        %v5867 = vmul.f32 %v5864, %v5866
        %v5868 = vadd.f32 %v5867, 0.0036580483
        %v5869 = vmul.f32 %v5864, %v5868
        %v5870 = vadd.f32 %v5869, 0.05243302
        %v5871 = vmul.f32 %v5864, %v5870
        %v5872 = vadd.f32 %v5871, 0.18741608
        %v5873 = vmul.f32 %v5864, %v5872
        %v5874 = vadd.f32 %v5873, 1.1283791
        %v5875 = vmul.f32 %v1172, %v5874
        %v5876 = vmul.f32 %v5864, 3.8918573e-05
        %v5877 = vadd.f32 %v5876, 0.001143296
        %v5878 = vmul.f32 %v5864, %v5877
        %v5879 = vadd.f32 %v5878, 0.014752088
        %v5880 = vmul.f32 %v5864, %v5879
        %v5881 = vadd.f32 %v5880, 0.112945676
        %v5882 = vmul.f32 %v5864, %v5881
        %v5883 = vadd.f32 %v5882, 0.4994258
        %v5884 = vmul.f32 %v5864, %v5883
        %v5885 = vadd.f32 %v5884, 1.0
        %v5886 = vrcp.pop %v5885
        %v5887 = vmul.f32 %v5885, %v5886
        %v5888 = vsub.f32 1.0, %v5887
        %v5889 = vmul.f32 %v5886, %v5888
        %v5890 = vadd.f32 %v5886, %v5889
        %vm5891 = vweird.f32 %v5885
        %vm5892 = vweird.f32 %v5886
        %vm5893 = vmor %vm5891, %vm5892
        %v5894 = vsel %vm5893, %v5886, %v5890
        %v5895 = vand.u32 2147483647, %v5885
        %vm5896 = vcmp.eq.f32.partialorder %v5895, 8.507059e+37
        %v5897 = vand.u32 %v5885, 2147483648
        %v5898 = vor.u32 1.1754944e-38, %v5897
        %v5899 = vsel %vm5896, %v5898, %v5894
        %v5900 = vmul.f32 %v5875, %v5899
        %v5901 = vmin.f32 %v5900, 1.0
        %v5902 = vmax.f32 %v5901, -1.0
        %v5903 = vmul.f32 %v1173, %v1173
        %v5904 = vmin.f32 16.0, %v5903
        %v5905 = vmul.f32 %v5904, 2.1237322e-06
        %v5906 = vadd.f32 %v5905, 0.00028619796
        %v5907 = vmul.f32 %v5904, %v5906
        %v5908 = vadd.f32 %v5907, 0.0036580483
        %v5909 = vmul.f32 %v5904, %v5908
        %v5910 = vadd.f32 %v5909, 0.05243302
        %v5911 = vmul.f32 %v5904, %v5910
        %v5912 = vadd.f32 %v5911, 0.18741608
        %v5913 = vmul.f32 %v5904, %v5912
        %v5914 = vadd.f32 %v5913, 1.1283791
        %v5915 = vmul.f32 %v1173, %v5914
        %v5916 = vmul.f32 %v5904, 3.8918573e-05
        %v5917 = vadd.f32 %v5916, 0.001143296
        %v5918 = vmul.f32 %v5904, %v5917
        %v5919 = vadd.f32 %v5918, 0.014752088
        %v5920 = vmul.f32 %v5904, %v5919
        %v5921 = vadd.f32 %v5920, 0.112945676
        %v5922 = vmul.f32 %v5904, %v5921
        %v5923 = vadd.f32 %v5922, 0.4994258
        %v5924 = vmul.f32 %v5904, %v5923
        %v5925 = vadd.f32 %v5924, 1.0
        %v5926 = vrcp.pop %v5925
        %v5927 = vmul.f32 %v5925, %v5926
        %v5928 = vsub.f32 1.0, %v5927
        %v5929 = vmul.f32 %v5926, %v5928
        %v5930 = vadd.f32 %v5926, %v5929
        %vm5931 = vweird.f32 %v5925
        %vm5932 = vweird.f32 %v5926
        %vm5933 = vmor %vm5931, %vm5932
        %v5934 = vsel %vm5933, %v5926, %v5930
        %v5935 = vand.u32 2147483647, %v5925
        %vm5936 = vcmp.eq.f32.partialorder %v5935, 8.507059e+37
        %v5937 = vand.u32 %v5925, 2147483648
        %v5938 = vor.u32 1.1754944e-38, %v5937
        %v5939 = vsel %vm5936, %v5938, %v5934
        %v5940 = vmul.f32 %v5915, %v5939
        %v5941 = vmin.f32 %v5940, 1.0
        %v5942 = vmax.f32 %v5941, -1.0
        %v5943 = vmul.f32 %v1174, %v1174
        %v5944 = vmin.f32 16.0, %v5943
        %v5945 = vmul.f32 %v5944, 2.1237322e-06
        %v5946 = vadd.f32 %v5945, 0.00028619796
        %v5947 = vmul.f32 %v5944, %v5946
        %v5948 = vadd.f32 %v5947, 0.0036580483
        %v5949 = vmul.f32 %v5944, %v5948
        %v5950 = vadd.f32 %v5949, 0.05243302
        %v5951 = vmul.f32 %v5944, %v5950
        %v5952 = vadd.f32 %v5951, 0.18741608
        %v5953 = vmul.f32 %v5944, %v5952
        %v5954 = vadd.f32 %v5953, 1.1283791
        %v5955 = vmul.f32 %v1174, %v5954
        %v5956 = vmul.f32 %v5944, 3.8918573e-05
        %v5957 = vadd.f32 %v5956, 0.001143296
        %v5958 = vmul.f32 %v5944, %v5957
        %v5959 = vadd.f32 %v5958, 0.014752088
        %v5960 = vmul.f32 %v5944, %v5959
        %v5961 = vadd.f32 %v5960, 0.112945676
        %v5962 = vmul.f32 %v5944, %v5961
        %v5963 = vadd.f32 %v5962, 0.4994258
        %v5964 = vmul.f32 %v5944, %v5963
        %v5965 = vadd.f32 %v5964, 1.0
        %v5966 = vrcp.pop %v5965
        %v5967 = vmul.f32 %v5965, %v5966
        %v5968 = vsub.f32 1.0, %v5967
        %v5969 = vmul.f32 %v5966, %v5968
        %v5970 = vadd.f32 %v5966, %v5969
        %vm5971 = vweird.f32 %v5965
        %vm5972 = vweird.f32 %v5966
        %vm5973 = vmor %vm5971, %vm5972
        %v5974 = vsel %vm5973, %v5966, %v5970
        %v5975 = vand.u32 2147483647, %v5965
        %vm5976 = vcmp.eq.f32.partialorder %v5975, 8.507059e+37
        %v5977 = vand.u32 %v5965, 2147483648
        %v5978 = vor.u32 1.1754944e-38, %v5977
        %v5979 = vsel %vm5976, %v5978, %v5974
        %v5980 = vmul.f32 %v5955, %v5979
        %v5981 = vmin.f32 %v5980, 1.0
        %v5982 = vmax.f32 %v5981, -1.0
        %v5983 = vmul.f32 %v1175, %v1175
        %v5984 = vmin.f32 16.0, %v5983
        %v5985 = vmul.f32 %v5984, 2.1237322e-06
        %v5986 = vadd.f32 %v5985, 0.00028619796
        %v5987 = vmul.f32 %v5984, %v5986
        %v5988 = vadd.f32 %v5987, 0.0036580483
        %v5989 = vmul.f32 %v5984, %v5988
        %v5990 = vadd.f32 %v5989, 0.05243302
        %v5991 = vmul.f32 %v5984, %v5990
        %v5992 = vadd.f32 %v5991, 0.18741608
        %v5993 = vmul.f32 %v5984, %v5992
        %v5994 = vadd.f32 %v5993, 1.1283791
        %v5995 = vmul.f32 %v1175, %v5994
        %v5996 = vmul.f32 %v5984, 3.8918573e-05
        %v5997 = vadd.f32 %v5996, 0.001143296
        %v5998 = vmul.f32 %v5984, %v5997
        %v5999 = vadd.f32 %v5998, 0.014752088
        %v6000 = vmul.f32 %v5984, %v5999
        %v6001 = vadd.f32 %v6000, 0.112945676
        %v6002 = vmul.f32 %v5984, %v6001
        %v6003 = vadd.f32 %v6002, 0.4994258
        %v6004 = vmul.f32 %v5984, %v6003
        %v6005 = vadd.f32 %v6004, 1.0
        %v6006 = vrcp.pop %v6005
        %v6007 = vmul.f32 %v6005, %v6006
        %v6008 = vsub.f32 1.0, %v6007
        %v6009 = vmul.f32 %v6006, %v6008
        %v6010 = vadd.f32 %v6006, %v6009
        %vm6011 = vweird.f32 %v6005
        %vm6012 = vweird.f32 %v6006
        %vm6013 = vmor %vm6011, %vm6012
        %v6014 = vsel %vm6013, %v6006, %v6010
        %v6015 = vand.u32 2147483647, %v6005
        %vm6016 = vcmp.eq.f32.partialorder %v6015, 8.507059e+37
        %v6017 = vand.u32 %v6005, 2147483648
        %v6018 = vor.u32 1.1754944e-38, %v6017
        %v6019 = vsel %vm6016, %v6018, %v6014
        %v6020 = vmul.f32 %v5995, %v6019
        %v6021 = vmin.f32 %v6020, 1.0
        %v6022 = vmax.f32 %v6021, -1.0
        %v6023 = vmul.f32 %v1176, %v1176
        %v6024 = vmin.f32 16.0, %v6023
        %v6025 = vmul.f32 %v6024, 2.1237322e-06
        %v6026 = vadd.f32 %v6025, 0.00028619796
        %v6027 = vmul.f32 %v6024, %v6026
        %v6028 = vadd.f32 %v6027, 0.0036580483
        %v6029 = vmul.f32 %v6024, %v6028
        %v6030 = vadd.f32 %v6029, 0.05243302
        %v6031 = vmul.f32 %v6024, %v6030
        %v6032 = vadd.f32 %v6031, 0.18741608
        %v6033 = vmul.f32 %v6024, %v6032
        %v6034 = vadd.f32 %v6033, 1.1283791
        %v6035 = vmul.f32 %v1176, %v6034
        %v6036 = vmul.f32 %v6024, 3.8918573e-05
        %v6037 = vadd.f32 %v6036, 0.001143296
        %v6038 = vmul.f32 %v6024, %v6037
        %v6039 = vadd.f32 %v6038, 0.014752088
        %v6040 = vmul.f32 %v6024, %v6039
        %v6041 = vadd.f32 %v6040, 0.112945676
        %v6042 = vmul.f32 %v6024, %v6041
        %v6043 = vadd.f32 %v6042, 0.4994258
        %v6044 = vmul.f32 %v6024, %v6043
        %v6045 = vadd.f32 %v6044, 1.0
        %v6046 = vrcp.pop %v6045
        %v6047 = vmul.f32 %v6045, %v6046
        %v6048 = vsub.f32 1.0, %v6047
        %v6049 = vmul.f32 %v6046, %v6048
        %v6050 = vadd.f32 %v6046, %v6049
        %vm6051 = vweird.f32 %v6045
        %vm6052 = vweird.f32 %v6046
        %vm6053 = vmor %vm6051, %vm6052
        %v6054 = vsel %vm6053, %v6046, %v6050
        %v6055 = vand.u32 2147483647, %v6045
        %vm6056 = vcmp.eq.f32.partialorder %v6055, 8.507059e+37
        %v6057 = vand.u32 %v6045, 2147483648
        %v6058 = vor.u32 1.1754944e-38, %v6057
        %v6059 = vsel %vm6056, %v6058, %v6054
        %v6060 = vmul.f32 %v6035, %v6059
        %v6061 = vmin.f32 %v6060, 1.0
        %v6062 = vmax.f32 %v6061, -1.0
        %v6063 = vmul.f32 %v1177, %v1177
        %v6064 = vmin.f32 16.0, %v6063
        %v6065 = vmul.f32 %v6064, 2.1237322e-06
        %v6066 = vadd.f32 %v6065, 0.00028619796
        %v6067 = vmul.f32 %v6064, %v6066
        %v6068 = vadd.f32 %v6067, 0.0036580483
        %v6069 = vmul.f32 %v6064, %v6068
        %v6070 = vadd.f32 %v6069, 0.05243302
        %v6071 = vmul.f32 %v6064, %v6070
        %v6072 = vadd.f32 %v6071, 0.18741608
        %v6073 = vmul.f32 %v6064, %v6072
        %v6074 = vadd.f32 %v6073, 1.1283791
        %v6075 = vmul.f32 %v1177, %v6074
        %v6076 = vmul.f32 %v6064, 3.8918573e-05
        %v6077 = vadd.f32 %v6076, 0.001143296
        %v6078 = vmul.f32 %v6064, %v6077
        %v6079 = vadd.f32 %v6078, 0.014752088
        %v6080 = vmul.f32 %v6064, %v6079
        %v6081 = vadd.f32 %v6080, 0.112945676
        %v6082 = vmul.f32 %v6064, %v6081
        %v6083 = vadd.f32 %v6082, 0.4994258
        %v6084 = vmul.f32 %v6064, %v6083
        %v6085 = vadd.f32 %v6084, 1.0
        %v6086 = vrcp.pop %v6085
        %v6087 = vmul.f32 %v6085, %v6086
        %v6088 = vsub.f32 1.0, %v6087
        %v6089 = vmul.f32 %v6086, %v6088
        %v6090 = vadd.f32 %v6086, %v6089
        %vm6091 = vweird.f32 %v6085
        %vm6092 = vweird.f32 %v6086
        %vm6093 = vmor %vm6091, %vm6092
        %v6094 = vsel %vm6093, %v6086, %v6090
        %v6095 = vand.u32 2147483647, %v6085
        %vm6096 = vcmp.eq.f32.partialorder %v6095, 8.507059e+37
        %v6097 = vand.u32 %v6085, 2147483648
        %v6098 = vor.u32 1.1754944e-38, %v6097
        %v6099 = vsel %vm6096, %v6098, %v6094
        %v6100 = vmul.f32 %v6075, %v6099
        %v6101 = vmin.f32 %v6100, 1.0
        %v6102 = vmax.f32 %v6101, -1.0
        %v6103 = vmul.f32 %v1178, %v1178
        %v6104 = vmin.f32 16.0, %v6103
        %v6105 = vmul.f32 %v6104, 2.1237322e-06
        %v6106 = vadd.f32 %v6105, 0.00028619796
        %v6107 = vmul.f32 %v6104, %v6106
        %v6108 = vadd.f32 %v6107, 0.0036580483
        %v6109 = vmul.f32 %v6104, %v6108
        %v6110 = vadd.f32 %v6109, 0.05243302
        %v6111 = vmul.f32 %v6104, %v6110
        %v6112 = vadd.f32 %v6111, 0.18741608
        %v6113 = vmul.f32 %v6104, %v6112
        %v6114 = vadd.f32 %v6113, 1.1283791
        %v6115 = vmul.f32 %v1178, %v6114
        %v6116 = vmul.f32 %v6104, 3.8918573e-05
        %v6117 = vadd.f32 %v6116, 0.001143296
        %v6118 = vmul.f32 %v6104, %v6117
        %v6119 = vadd.f32 %v6118, 0.014752088
        %v6120 = vmul.f32 %v6104, %v6119
        %v6121 = vadd.f32 %v6120, 0.112945676
        %v6122 = vmul.f32 %v6104, %v6121
        %v6123 = vadd.f32 %v6122, 0.4994258
        %v6124 = vmul.f32 %v6104, %v6123
        %v6125 = vadd.f32 %v6124, 1.0
        %v6126 = vrcp.pop %v6125
        %v6127 = vmul.f32 %v6125, %v6126
        %v6128 = vsub.f32 1.0, %v6127
        %v6129 = vmul.f32 %v6126, %v6128
        %v6130 = vadd.f32 %v6126, %v6129
        %vm6131 = vweird.f32 %v6125
        %vm6132 = vweird.f32 %v6126
        %vm6133 = vmor %vm6131, %vm6132
        %v6134 = vsel %vm6133, %v6126, %v6130
        %v6135 = vand.u32 2147483647, %v6125
        %vm6136 = vcmp.eq.f32.partialorder %v6135, 8.507059e+37
        %v6137 = vand.u32 %v6125, 2147483648
        %v6138 = vor.u32 1.1754944e-38, %v6137
        %v6139 = vsel %vm6136, %v6138, %v6134
        %v6140 = vmul.f32 %v6115, %v6139
        %v6141 = vmin.f32 %v6140, 1.0
        %v6142 = vmax.f32 %v6141, -1.0
        %v6143 = vmul.f32 %v1179, %v1179
        %v6144 = vmin.f32 16.0, %v6143
        %v6145 = vmul.f32 %v6144, 2.1237322e-06
        %v6146 = vadd.f32 %v6145, 0.00028619796
        %v6147 = vmul.f32 %v6144, %v6146
        %v6148 = vadd.f32 %v6147, 0.0036580483
        %v6149 = vmul.f32 %v6144, %v6148
        %v6150 = vadd.f32 %v6149, 0.05243302
        %v6151 = vmul.f32 %v6144, %v6150
        %v6152 = vadd.f32 %v6151, 0.18741608
        %v6153 = vmul.f32 %v6144, %v6152
        %v6154 = vadd.f32 %v6153, 1.1283791
        %v6155 = vmul.f32 %v1179, %v6154
        %v6156 = vmul.f32 %v6144, 3.8918573e-05
        %v6157 = vadd.f32 %v6156, 0.001143296
        %v6158 = vmul.f32 %v6144, %v6157
        %v6159 = vadd.f32 %v6158, 0.014752088
        %v6160 = vmul.f32 %v6144, %v6159
        %v6161 = vadd.f32 %v6160, 0.112945676
        %v6162 = vmul.f32 %v6144, %v6161
        %v6163 = vadd.f32 %v6162, 0.4994258
        %v6164 = vmul.f32 %v6144, %v6163
        %v6165 = vadd.f32 %v6164, 1.0
        %v6166 = vrcp.pop %v6165
        %v6167 = vmul.f32 %v6165, %v6166
        %v6168 = vsub.f32 1.0, %v6167
        %v6169 = vmul.f32 %v6166, %v6168
        %v6170 = vadd.f32 %v6166, %v6169
        %vm6171 = vweird.f32 %v6165
        %vm6172 = vweird.f32 %v6166
        %vm6173 = vmor %vm6171, %vm6172
        %v6174 = vsel %vm6173, %v6166, %v6170
        %v6175 = vand.u32 2147483647, %v6165
        %vm6176 = vcmp.eq.f32.partialorder %v6175, 8.507059e+37
        %v6177 = vand.u32 %v6165, 2147483648
        %v6178 = vor.u32 1.1754944e-38, %v6177
        %v6179 = vsel %vm6176, %v6178, %v6174
        %v6180 = vmul.f32 %v6155, %v6179
        %v6181 = vmin.f32 %v6180, 1.0
        %v6182 = vmax.f32 %v6181, -1.0
        %v6183 = vmul.f32 %v1180, %v1180
        %v6184 = vmin.f32 16.0, %v6183
        %v6185 = vmul.f32 %v6184, 2.1237322e-06
        %v6186 = vadd.f32 %v6185, 0.00028619796
        %v6187 = vmul.f32 %v6184, %v6186
        %v6188 = vadd.f32 %v6187, 0.0036580483
        %v6189 = vmul.f32 %v6184, %v6188
        %v6190 = vadd.f32 %v6189, 0.05243302
        %v6191 = vmul.f32 %v6184, %v6190
        %v6192 = vadd.f32 %v6191, 0.18741608
        %v6193 = vmul.f32 %v6184, %v6192
        %v6194 = vadd.f32 %v6193, 1.1283791
        %v6195 = vmul.f32 %v1180, %v6194
        %v6196 = vmul.f32 %v6184, 3.8918573e-05
        %v6197 = vadd.f32 %v6196, 0.001143296
        %v6198 = vmul.f32 %v6184, %v6197
        %v6199 = vadd.f32 %v6198, 0.014752088
        %v6200 = vmul.f32 %v6184, %v6199
        %v6201 = vadd.f32 %v6200, 0.112945676
        %v6202 = vmul.f32 %v6184, %v6201
        %v6203 = vadd.f32 %v6202, 0.4994258
        %v6204 = vmul.f32 %v6184, %v6203
        %v6205 = vadd.f32 %v6204, 1.0
        %v6206 = vrcp.pop %v6205
        %v6207 = vmul.f32 %v6205, %v6206
        %v6208 = vsub.f32 1.0, %v6207
        %v6209 = vmul.f32 %v6206, %v6208
        %v6210 = vadd.f32 %v6206, %v6209
        %vm6211 = vweird.f32 %v6205
        %vm6212 = vweird.f32 %v6206
        %vm6213 = vmor %vm6211, %vm6212
        %v6214 = vsel %vm6213, %v6206, %v6210
        %v6215 = vand.u32 2147483647, %v6205
        %vm6216 = vcmp.eq.f32.partialorder %v6215, 8.507059e+37
        %v6217 = vand.u32 %v6205, 2147483648
        %v6218 = vor.u32 1.1754944e-38, %v6217
        %v6219 = vsel %vm6216, %v6218, %v6214
        %v6220 = vmul.f32 %v6195, %v6219
        %v6221 = vmin.f32 %v6220, 1.0
        %v6222 = vmax.f32 %v6221, -1.0
        %v6223 = vmul.f32 %v1181, %v1181
        %v6224 = vmin.f32 16.0, %v6223
        %v6225 = vmul.f32 %v6224, 2.1237322e-06
        %v6226 = vadd.f32 %v6225, 0.00028619796
        %v6227 = vmul.f32 %v6224, %v6226
        %v6228 = vadd.f32 %v6227, 0.0036580483
        %v6229 = vmul.f32 %v6224, %v6228
        %v6230 = vadd.f32 %v6229, 0.05243302
        %v6231 = vmul.f32 %v6224, %v6230
        %v6232 = vadd.f32 %v6231, 0.18741608
        %v6233 = vmul.f32 %v6224, %v6232
        %v6234 = vadd.f32 %v6233, 1.1283791
        %v6235 = vmul.f32 %v1181, %v6234
        %v6236 = vmul.f32 %v6224, 3.8918573e-05
        %v6237 = vadd.f32 %v6236, 0.001143296
        %v6238 = vmul.f32 %v6224, %v6237
        %v6239 = vadd.f32 %v6238, 0.014752088
        %v6240 = vmul.f32 %v6224, %v6239
        %v6241 = vadd.f32 %v6240, 0.112945676
        %v6242 = vmul.f32 %v6224, %v6241
        %v6243 = vadd.f32 %v6242, 0.4994258
        %v6244 = vmul.f32 %v6224, %v6243
        %v6245 = vadd.f32 %v6244, 1.0
        %v6246 = vrcp.pop %v6245
        %v6247 = vmul.f32 %v6245, %v6246
        %v6248 = vsub.f32 1.0, %v6247
        %v6249 = vmul.f32 %v6246, %v6248
        %v6250 = vadd.f32 %v6246, %v6249
        %vm6251 = vweird.f32 %v6245
        %vm6252 = vweird.f32 %v6246
        %vm6253 = vmor %vm6251, %vm6252
        %v6254 = vsel %vm6253, %v6246, %v6250
        %v6255 = vand.u32 2147483647, %v6245
        %vm6256 = vcmp.eq.f32.partialorder %v6255, 8.507059e+37
        %v6257 = vand.u32 %v6245, 2147483648
        %v6258 = vor.u32 1.1754944e-38, %v6257
        %v6259 = vsel %vm6256, %v6258, %v6254
        %v6260 = vmul.f32 %v6235, %v6259
        %v6261 = vmin.f32 %v6260, 1.0
        %v6262 = vmax.f32 %v6261, -1.0
        %v6263 = vmul.f32 %v1182, %v1182
        %v6264 = vmin.f32 16.0, %v6263
        %v6265 = vmul.f32 %v6264, 2.1237322e-06
        %v6266 = vadd.f32 %v6265, 0.00028619796
        %v6267 = vmul.f32 %v6264, %v6266
        %v6268 = vadd.f32 %v6267, 0.0036580483
        %v6269 = vmul.f32 %v6264, %v6268
        %v6270 = vadd.f32 %v6269, 0.05243302
        %v6271 = vmul.f32 %v6264, %v6270
        %v6272 = vadd.f32 %v6271, 0.18741608
        %v6273 = vmul.f32 %v6264, %v6272
        %v6274 = vadd.f32 %v6273, 1.1283791
        %v6275 = vmul.f32 %v1182, %v6274
        %v6276 = vmul.f32 %v6264, 3.8918573e-05
        %v6277 = vadd.f32 %v6276, 0.001143296
        %v6278 = vmul.f32 %v6264, %v6277
        %v6279 = vadd.f32 %v6278, 0.014752088
        %v6280 = vmul.f32 %v6264, %v6279
        %v6281 = vadd.f32 %v6280, 0.112945676
        %v6282 = vmul.f32 %v6264, %v6281
        %v6283 = vadd.f32 %v6282, 0.4994258
        %v6284 = vmul.f32 %v6264, %v6283
        %v6285 = vadd.f32 %v6284, 1.0
        %v6286 = vrcp.pop %v6285
        %v6287 = vmul.f32 %v6285, %v6286
        %v6288 = vsub.f32 1.0, %v6287
        %v6289 = vmul.f32 %v6286, %v6288
        %v6290 = vadd.f32 %v6286, %v6289
        %vm6291 = vweird.f32 %v6285
        %vm6292 = vweird.f32 %v6286
        %vm6293 = vmor %vm6291, %vm6292
        %v6294 = vsel %vm6293, %v6286, %v6290
        %v6295 = vand.u32 2147483647, %v6285
        %vm6296 = vcmp.eq.f32.partialorder %v6295, 8.507059e+37
        %v6297 = vand.u32 %v6285, 2147483648
        %v6298 = vor.u32 1.1754944e-38, %v6297
        %v6299 = vsel %vm6296, %v6298, %v6294
        %v6300 = vmul.f32 %v6275, %v6299
        %v6301 = vmin.f32 %v6300, 1.0
        %v6302 = vmax.f32 %v6301, -1.0
        %v6303 = vadd.f32 %v1222, 1.0
        %v6304 = vadd.f32 %v1262, 1.0
        %v6305 = vadd.f32 %v1302, 1.0
        %v6306 = vadd.f32 %v1342, 1.0
        %v6307 = vadd.f32 %v1382, 1.0
        %v6308 = vadd.f32 %v1422, 1.0
        %v6309 = vadd.f32 %v1462, 1.0
        %v6310 = vadd.f32 %v1502, 1.0
        %v6311 = vadd.f32 %v1542, 1.0
        %v6312 = vadd.f32 %v1582, 1.0
        %v6313 = vadd.f32 %v1622, 1.0
        %v6314 = vadd.f32 %v1662, 1.0
        %v6315 = vadd.f32 %v1702, 1.0
        %v6316 = vadd.f32 %v1742, 1.0
        %v6317 = vadd.f32 %v1782, 1.0
        %v6318 = vadd.f32 %v1822, 1.0
        %v6319 = vadd.f32 %v1862, 1.0
        %v6320 = vadd.f32 %v1902, 1.0
        %v6321 = vadd.f32 %v1942, 1.0
        %v6322 = vadd.f32 %v1982, 1.0
        %v6323 = vadd.f32 %v2022, 1.0
        %v6324 = vadd.f32 %v2062, 1.0
        %v6325 = vadd.f32 %v2102, 1.0
        %v6326 = vadd.f32 %v2142, 1.0
        %v6327 = vadd.f32 %v2182, 1.0
        %v6328 = vadd.f32 %v2222, 1.0
        %v6329 = vadd.f32 %v2262, 1.0
        %v6330 = vadd.f32 %v2302, 1.0
        %v6331 = vadd.f32 %v2342, 1.0
        %v6332 = vadd.f32 %v2382, 1.0
        %v6333 = vadd.f32 %v2422, 1.0
        %v6334 = vadd.f32 %v2462, 1.0
        %v6335 = vadd.f32 %v2502, 1.0
        %v6336 = vadd.f32 %v2542, 1.0
        %v6337 = vadd.f32 %v2582, 1.0
        %v6338 = vadd.f32 %v2622, 1.0
        %v6339 = vadd.f32 %v2662, 1.0
        %v6340 = vadd.f32 %v2702, 1.0
        %v6341 = vadd.f32 %v2742, 1.0
        %v6342 = vadd.f32 %v2782, 1.0
        %v6343 = vadd.f32 %v2822, 1.0
        %v6344 = vadd.f32 %v2862, 1.0
        %v6345 = vadd.f32 %v2902, 1.0
        %v6346 = vadd.f32 %v2942, 1.0
        %v6347 = vadd.f32 %v2982, 1.0
        %v6348 = vadd.f32 %v3022, 1.0
        %v6349 = vadd.f32 %v3062, 1.0
        %v6350 = vadd.f32 %v3102, 1.0
        %v6351 = vadd.f32 %v3142, 1.0
        %v6352 = vadd.f32 %v3182, 1.0
        %v6353 = vadd.f32 %v3222, 1.0
        %v6354 = vadd.f32 %v3262, 1.0
        %v6355 = vadd.f32 %v3302, 1.0
        %v6356 = vadd.f32 %v3342, 1.0
        %v6357 = vadd.f32 %v3382, 1.0
        %v6358 = vadd.f32 %v3422, 1.0
        %v6359 = vadd.f32 %v3462, 1.0
        %v6360 = vadd.f32 %v3502, 1.0
        %v6361 = vadd.f32 %v3542, 1.0
        %v6362 = vadd.f32 %v3582, 1.0
        %v6363 = vadd.f32 %v3622, 1.0
        %v6364 = vadd.f32 %v3662, 1.0
        %v6365 = vadd.f32 %v3702, 1.0
        %v6366 = vadd.f32 %v3742, 1.0
        %v6367 = vadd.f32 %v3782, 1.0
        %v6368 = vadd.f32 %v3822, 1.0
        %v6369 = vadd.f32 %v3862, 1.0
        %v6370 = vadd.f32 %v3902, 1.0
        %v6371 = vadd.f32 %v3942, 1.0
        %v6372 = vadd.f32 %v3982, 1.0
        %v6373 = vadd.f32 %v4022, 1.0
        %v6374 = vadd.f32 %v4062, 1.0
        %v6375 = vadd.f32 %v4102, 1.0
        %v6376 = vadd.f32 %v4142, 1.0
        %v6377 = vadd.f32 %v4182, 1.0
        %v6378 = vadd.f32 %v4222, 1.0
        %v6379 = vadd.f32 %v4262, 1.0
        %v6380 = vadd.f32 %v4302, 1.0
        %v6381 = vadd.f32 %v4342, 1.0
        %v6382 = vadd.f32 %v4382, 1.0
        %v6383 = vadd.f32 %v4422, 1.0
        %v6384 = vadd.f32 %v4462, 1.0
        %v6385 = vadd.f32 %v4502, 1.0
        %v6386 = vadd.f32 %v4542, 1.0
        %v6387 = vadd.f32 %v4582, 1.0
        %v6388 = vadd.f32 %v4622, 1.0
        %v6389 = vadd.f32 %v4662, 1.0
        %v6390 = vadd.f32 %v4702, 1.0
        %v6391 = vadd.f32 %v4742, 1.0
        %v6392 = vadd.f32 %v4782, 1.0
        %v6393 = vadd.f32 %v4822, 1.0
        %v6394 = vadd.f32 %v4862, 1.0
        %v6395 = vadd.f32 %v4902, 1.0
        %v6396 = vadd.f32 %v4942, 1.0
        %v6397 = vadd.f32 %v4982, 1.0
        %v6398 = vadd.f32 %v5022, 1.0
        %v6399 = vadd.f32 %v5062, 1.0
        %v6400 = vadd.f32 %v5102, 1.0
        %v6401 = vadd.f32 %v5142, 1.0
        %v6402 = vadd.f32 %v5182, 1.0
        %v6403 = vadd.f32 %v5222, 1.0
        %v6404 = vadd.f32 %v5262, 1.0
        %v6405 = vadd.f32 %v5302, 1.0
        %v6406 = vadd.f32 %v5342, 1.0
        %v6407 = vadd.f32 %v5382, 1.0
        %v6408 = vadd.f32 %v5422, 1.0
        %v6409 = vadd.f32 %v5462, 1.0
        %v6410 = vadd.f32 %v5502, 1.0
        %v6411 = vadd.f32 %v5542, 1.0
        %v6412 = vadd.f32 %v5582, 1.0
        %v6413 = vadd.f32 %v5622, 1.0
        %v6414 = vadd.f32 %v5662, 1.0
        %v6415 = vadd.f32 %v5702, 1.0
        %v6416 = vadd.f32 %v5742, 1.0
        %v6417 = vadd.f32 %v5782, 1.0
        %v6418 = vadd.f32 %v5822, 1.0
        %v6419 = vadd.f32 %v5862, 1.0
        %v6420 = vadd.f32 %v5902, 1.0
        %v6421 = vadd.f32 %v5942, 1.0
        %v6422 = vadd.f32 %v5982, 1.0
        %v6423 = vadd.f32 %v6022, 1.0
        %v6424 = vadd.f32 %v6062, 1.0
        %v6425 = vadd.f32 %v6102, 1.0
        %v6426 = vadd.f32 %v6142, 1.0
        %v6427 = vadd.f32 %v6182, 1.0
        %v6428 = vadd.f32 %v6222, 1.0
        %v6429 = vadd.f32 %v6262, 1.0
        %v6430 = vadd.f32 %v6302, 1.0
        %v6431 = vmul.f32 %v927, %v6303
        %v6432 = vmul.f32 %v928, %v6304
        %v6433 = vmul.f32 %v929, %v6305
        %v6434 = vmul.f32 %v930, %v6306
        %v6435 = vmul.f32 %v931, %v6307
        %v6436 = vmul.f32 %v932, %v6308
        %v6437 = vmul.f32 %v933, %v6309
        %v6438 = vmul.f32 %v934, %v6310
        %v6439 = vmul.f32 %v935, %v6311
        %v6440 = vmul.f32 %v936, %v6312
        %v6441 = vmul.f32 %v937, %v6313
        %v6442 = vmul.f32 %v938, %v6314
        %v6443 = vmul.f32 %v939, %v6315
        %v6444 = vmul.f32 %v940, %v6316
        %v6445 = vmul.f32 %v941, %v6317
        %v6446 = vmul.f32 %v942, %v6318
        %v6447 = vmul.f32 %v943, %v6319
        %v6448 = vmul.f32 %v944, %v6320
        %v6449 = vmul.f32 %v945, %v6321
        %v6450 = vmul.f32 %v946, %v6322
        %v6451 = vmul.f32 %v947, %v6323
        %v6452 = vmul.f32 %v948, %v6324
        %v6453 = vmul.f32 %v949, %v6325
        %v6454 = vmul.f32 %v950, %v6326
        %v6455 = vmul.f32 %v951, %v6327
        %v6456 = vmul.f32 %v952, %v6328
        %v6457 = vmul.f32 %v953, %v6329
        %v6458 = vmul.f32 %v954, %v6330
        %v6459 = vmul.f32 %v955, %v6331
        %v6460 = vmul.f32 %v956, %v6332
        %v6461 = vmul.f32 %v957, %v6333
        %v6462 = vmul.f32 %v958, %v6334
        %v6463 = vmul.f32 %v959, %v6335
        %v6464 = vmul.f32 %v960, %v6336
        %v6465 = vmul.f32 %v961, %v6337
        %v6466 = vmul.f32 %v962, %v6338
        %v6467 = vmul.f32 %v963, %v6339
        %v6468 = vmul.f32 %v964, %v6340
        %v6469 = vmul.f32 %v965, %v6341
        %v6470 = vmul.f32 %v966, %v6342
        %v6471 = vmul.f32 %v967, %v6343
        %v6472 = vmul.f32 %v968, %v6344
        %v6473 = vmul.f32 %v969, %v6345
        %v6474 = vmul.f32 %v970, %v6346
        %v6475 = vmul.f32 %v971, %v6347
        %v6476 = vmul.f32 %v972, %v6348
        %v6477 = vmul.f32 %v973, %v6349
        %v6478 = vmul.f32 %v974, %v6350
        %v6479 = vmul.f32 %v975, %v6351
        %v6480 = vmul.f32 %v976, %v6352
        %v6481 = vmul.f32 %v977, %v6353
        %v6482 = vmul.f32 %v978, %v6354
        %v6483 = vmul.f32 %v979, %v6355
        %v6484 = vmul.f32 %v980, %v6356
        %v6485 = vmul.f32 %v981, %v6357
        %v6486 = vmul.f32 %v982, %v6358
        %v6487 = vmul.f32 %v983, %v6359
        %v6488 = vmul.f32 %v984, %v6360
        %v6489 = vmul.f32 %v985, %v6361
        %v6490 = vmul.f32 %v986, %v6362
        %v6491 = vmul.f32 %v987, %v6363
        %v6492 = vmul.f32 %v988, %v6364
        %v6493 = vmul.f32 %v989, %v6365
        %v6494 = vmul.f32 %v990, %v6366
        %v6495 = vmul.f32 %v991, %v6367
        %v6496 = vmul.f32 %v992, %v6368
        %v6497 = vmul.f32 %v993, %v6369
        %v6498 = vmul.f32 %v994, %v6370
        %v6499 = vmul.f32 %v995, %v6371
        %v6500 = vmul.f32 %v996, %v6372
        %v6501 = vmul.f32 %v997, %v6373
        %v6502 = vmul.f32 %v998, %v6374
        %v6503 = vmul.f32 %v999, %v6375
        %v6504 = vmul.f32 %v1000, %v6376
        %v6505 = vmul.f32 %v1001, %v6377
        %v6506 = vmul.f32 %v1002, %v6378
        %v6507 = vmul.f32 %v1003, %v6379
        %v6508 = vmul.f32 %v1004, %v6380
        %v6509 = vmul.f32 %v1005, %v6381
        %v6510 = vmul.f32 %v1006, %v6382
        %v6511 = vmul.f32 %v1007, %v6383
        %v6512 = vmul.f32 %v1008, %v6384
        %v6513 = vmul.f32 %v1009, %v6385
        %v6514 = vmul.f32 %v1010, %v6386
        %v6515 = vmul.f32 %v1011, %v6387
        %v6516 = vmul.f32 %v1012, %v6388
        %v6517 = vmul.f32 %v1013, %v6389
        %v6518 = vmul.f32 %v1014, %v6390
        %v6519 = vmul.f32 %v1015, %v6391
        %v6520 = vmul.f32 %v1016, %v6392
        %v6521 = vmul.f32 %v1017, %v6393
        %v6522 = vmul.f32 %v1018, %v6394
        %v6523 = vmul.f32 %v1019, %v6395
        %v6524 = vmul.f32 %v1020, %v6396
        %v6525 = vmul.f32 %v1021, %v6397
        %v6526 = vmul.f32 %v1022, %v6398
        %v6527 = vmul.f32 %v1023, %v6399
        %v6528 = vmul.f32 %v1024, %v6400
        %v6529 = vmul.f32 %v1025, %v6401
        %v6530 = vmul.f32 %v1026, %v6402
        %v6531 = vmul.f32 %v1027, %v6403
        %v6532 = vmul.f32 %v1028, %v6404
        %v6533 = vmul.f32 %v1029, %v6405
        %v6534 = vmul.f32 %v1030, %v6406
        %v6535 = vmul.f32 %v1031, %v6407
        %v6536 = vmul.f32 %v1032, %v6408
        %v6537 = vmul.f32 %v1033, %v6409
        %v6538 = vmul.f32 %v1034, %v6410
        %v6539 = vmul.f32 %v1035, %v6411
        %v6540 = vmul.f32 %v1036, %v6412
        %v6541 = vmul.f32 %v1037, %v6413
        %v6542 = vmul.f32 %v1038, %v6414
        %v6543 = vmul.f32 %v1039, %v6415
        %v6544 = vmul.f32 %v1040, %v6416
        %v6545 = vmul.f32 %v1041, %v6417
        %v6546 = vmul.f32 %v1042, %v6418
        %v6547 = vmul.f32 %v1043, %v6419
        %v6548 = vmul.f32 %v1044, %v6420
        %v6549 = vmul.f32 %v1045, %v6421
        %v6550 = vmul.f32 %v1046, %v6422
        %v6551 = vmul.f32 %v1047, %v6423
        %v6552 = vmul.f32 %v1048, %v6424
        %v6553 = vmul.f32 %v1049, %v6425
        %v6554 = vmul.f32 %v1050, %v6426
        %v6555 = vmul.f32 %v1051, %v6427
        %v6556 = vmul.f32 %v1052, %v6428
        %v6557 = vmul.f32 %v1053, %v6429
        %v6558 = vmul.f32 %v1054, %v6430
        %v6559 = vld [vmem:[#allocation2] sm:$0xff]
        %v6560 = vld [vmem:[#allocation2 + $0x8] sm:$0xff]
        %v6561 = vld [vmem:[#allocation2 + $0x10] sm:$0xff]
        %v6562 = vld [vmem:[#allocation2 + $0x18] sm:$0xff]
        %v6563 = vld [vmem:[#allocation2 + $0x20] sm:$0xff]
        %v6564 = vld [vmem:[#allocation2 + $0x28] sm:$0xff]
        %v6565 = vld [vmem:[#allocation2 + $0x30] sm:$0xff]
        %v6566 = vld [vmem:[#allocation2 + $0x38] sm:$0xff]
        %v6567 = vld [vmem:[#allocation2 + $0x40] sm:$0xff]
        %v6568 = vld [vmem:[#allocation2 + $0x48] sm:$0xff]
        %v6569 = vld [vmem:[#allocation2 + $0x50] sm:$0xff]
        %v6570 = vld [vmem:[#allocation2 + $0x58] sm:$0xff]
        %v6571 = vld [vmem:[#allocation2 + $0x60] sm:$0xff]
        %v6572 = vld [vmem:[#allocation2 + $0x68] sm:$0xff]
        %v6573 = vld [vmem:[#allocation2 + $0x70] sm:$0xff]
        %v6574 = vld [vmem:[#allocation2 + $0x78] sm:$0xff]
        %v6575 = vld [vmem:[#allocation2 + $0x80] sm:$0xff]
        %v6576 = vld [vmem:[#allocation2 + $0x88] sm:$0xff]
        %v6577 = vld [vmem:[#allocation2 + $0x90] sm:$0xff]
        %v6578 = vld [vmem:[#allocation2 + $0x98] sm:$0xff]
        %v6579 = vld [vmem:[#allocation2 + $0xa0] sm:$0xff]
        %v6580 = vld [vmem:[#allocation2 + $0xa8] sm:$0xff]
        %v6581 = vld [vmem:[#allocation2 + $0xb0] sm:$0xff]
        %v6582 = vld [vmem:[#allocation2 + $0xb8] sm:$0xff]
        %v6583 = vld [vmem:[#allocation2 + $0xc0] sm:$0xff]
        %v6584 = vld [vmem:[#allocation2 + $0xc8] sm:$0xff]
        %v6585 = vld [vmem:[#allocation2 + $0xd0] sm:$0xff]
        %v6586 = vld [vmem:[#allocation2 + $0xd8] sm:$0xff]
        %v6587 = vld [vmem:[#allocation2 + $0xe0] sm:$0xff]
        %v6588 = vld [vmem:[#allocation2 + $0xe8] sm:$0xff]
        %v6589 = vld [vmem:[#allocation2 + $0xf0] sm:$0xff]
        %v6590 = vld [vmem:[#allocation2 + $0xf8] sm:$0xff]
        %v6591 = vld [vmem:[#allocation9] sm:$0xff]
        %v6592 = vld [vmem:[#allocation9 + $0x8] sm:$0xff]
        %v6593 = vld [vmem:[#allocation9 + $0x10] sm:$0xff]
        %v6594 = vld [vmem:[#allocation9 + $0x18] sm:$0xff]
        %v6595 = vld [vmem:[#allocation9 + $0x20] sm:$0xff]
        %v6596 = vld [vmem:[#allocation9 + $0x28] sm:$0xff]
        %v6597 = vld [vmem:[#allocation9 + $0x30] sm:$0xff]
        %v6598 = vld [vmem:[#allocation9 + $0x38] sm:$0xff]
        %v6599 = vld [vmem:[#allocation9 + $0x40] sm:$0xff]
        %v6600 = vld [vmem:[#allocation9 + $0x48] sm:$0xff]
        %v6601 = vld [vmem:[#allocation9 + $0x50] sm:$0xff]
        %v6602 = vld [vmem:[#allocation9 + $0x58] sm:$0xff]
        %v6603 = vld [vmem:[#allocation9 + $0x60] sm:$0xff]
        %v6604 = vld [vmem:[#allocation9 + $0x68] sm:$0xff]
        %v6605 = vld [vmem:[#allocation9 + $0x70] sm:$0xff]
        %v6606 = vld [vmem:[#allocation9 + $0x78] sm:$0xff]
        %v6607 = vld [vmem:[#allocation9 + $0x80] sm:$0xff]
        %v6608 = vld [vmem:[#allocation9 + $0x88] sm:$0xff]
        %v6609 = vld [vmem:[#allocation9 + $0x90] sm:$0xff]
        %v6610 = vld [vmem:[#allocation9 + $0x98] sm:$0xff]
        %v6611 = vld [vmem:[#allocation9 + $0xa0] sm:$0xff]
        %v6612 = vld [vmem:[#allocation9 + $0xa8] sm:$0xff]
        %v6613 = vld [vmem:[#allocation9 + $0xb0] sm:$0xff]
        %v6614 = vld [vmem:[#allocation9 + $0xb8] sm:$0xff]
        %v6615 = vld [vmem:[#allocation9 + $0xc0] sm:$0xff]
        %v6616 = vld [vmem:[#allocation9 + $0xc8] sm:$0xff]
        %v6617 = vld [vmem:[#allocation9 + $0xd0] sm:$0xff]
        %v6618 = vld [vmem:[#allocation9 + $0xd8] sm:$0xff]
        %v6619 = vld [vmem:[#allocation9 + $0xe0] sm:$0xff]
        %v6620 = vld [vmem:[#allocation9 + $0xe8] sm:$0xff]
        %v6621 = vld [vmem:[#allocation9 + $0xf0] sm:$0xff]
        %v6622 = vld [vmem:[#allocation9 + $0xf8] sm:$0xff]
        %v6623 = vld [vmem:[#allocation9 + $0x100] sm:$0xff]
        %v6624 = vld [vmem:[#allocation9 + $0x108] sm:$0xff]
        %v6625 = vld [vmem:[#allocation9 + $0x110] sm:$0xff]
        %v6626 = vld [vmem:[#allocation9 + $0x118] sm:$0xff]
        %v6627 = vld [vmem:[#allocation9 + $0x120] sm:$0xff]
        %v6628 = vld [vmem:[#allocation9 + $0x128] sm:$0xff]
        %v6629 = vld [vmem:[#allocation9 + $0x130] sm:$0xff]
        %v6630 = vld [vmem:[#allocation9 + $0x138] sm:$0xff]
        %v6631 = vld [vmem:[#allocation9 + $0x140] sm:$0xff]
        %v6632 = vld [vmem:[#allocation9 + $0x148] sm:$0xff]
        %v6633 = vld [vmem:[#allocation9 + $0x150] sm:$0xff]
        %v6634 = vld [vmem:[#allocation9 + $0x158] sm:$0xff]
        %v6635 = vld [vmem:[#allocation9 + $0x160] sm:$0xff]
        %v6636 = vld [vmem:[#allocation9 + $0x168] sm:$0xff]
        %v6637 = vld [vmem:[#allocation9 + $0x170] sm:$0xff]
        %v6638 = vld [vmem:[#allocation9 + $0x178] sm:$0xff]
        %v6639 = vld [vmem:[#allocation9 + $0x180] sm:$0xff]
        %v6640 = vld [vmem:[#allocation9 + $0x188] sm:$0xff]
        %v6641 = vld [vmem:[#allocation9 + $0x190] sm:$0xff]
        %v6642 = vld [vmem:[#allocation9 + $0x198] sm:$0xff]
        %v6643 = vld [vmem:[#allocation9 + $0x1a0] sm:$0xff]
        %v6644 = vld [vmem:[#allocation9 + $0x1a8] sm:$0xff]
        %v6645 = vld [vmem:[#allocation9 + $0x1b0] sm:$0xff]
        %v6646 = vld [vmem:[#allocation9 + $0x1b8] sm:$0xff]
        %v6647 = vld [vmem:[#allocation9 + $0x1c0] sm:$0xff]
        %v6648 = vld [vmem:[#allocation9 + $0x1c8] sm:$0xff]
        %v6649 = vld [vmem:[#allocation9 + $0x1d0] sm:$0xff]
        %v6650 = vld [vmem:[#allocation9 + $0x1d8] sm:$0xff]
        %v6651 = vld [vmem:[#allocation9 + $0x1e0] sm:$0xff]
        %v6652 = vld [vmem:[#allocation9 + $0x1e8] sm:$0xff]
        %v6653 = vld [vmem:[#allocation9 + $0x1f0] sm:$0xff]
        %v6654 = vld [vmem:[#allocation9 + $0x1f8] sm:$0xff]
        %6655 = vmatpush.msra.mxu0 %v6606
        %6656 = vmatpush.msra.mxu0 %v6605
        %6657 = vmatpush.msra.mxu0 %v6604
        %6658 = vmatpush.msra.mxu0 %v6603
        %6659 = vmatpush.msra.mxu0 %v6602
        %6660 = vmatpush.msra.mxu0 %v6601
        %6661 = vmatpush.msra.mxu0 %v6600
        %6662 = vmatpush.msra.mxu0 %v6599
        %6663 = vmatpush.msra.mxu0 %v6598
        %6664 = vmatpush.msra.mxu0 %v6597
        %6665 = vmatpush.msra.mxu0 %v6596
        %6666 = vmatpush.msra.mxu0 %v6595
        %6667 = vmatpush.msra.mxu0 %v6594
        %6668 = vmatpush.msra.mxu0 %v6593
        %6669 = vmatpush.msra.mxu0 %v6592
        %6670 = vmatpush.msra.mxu0 %v6591
        %6671 = vmatmul.f32.gmra.mxu0 %v6431
        %v6672 = vpop.f32.mrf.mxu0
        %v6673 = vadd.f32 0.0, %v6672
        %6674 = vmatmul.f32.gmra.mxu0 %v6435
        %v6675 = vpop.f32.mrf.mxu0
        %v6676 = vadd.f32 0.0, %v6675
        %6677 = vmatmul.f32.gmra.mxu0 %v6439
        %v6678 = vpop.f32.mrf.mxu0
        %v6679 = vadd.f32 0.0, %v6678
        %6680 = vmatmul.f32.gmra.mxu0 %v6443
        %v6681 = vpop.f32.mrf.mxu0
        %v6682 = vadd.f32 0.0, %v6681
        %6683 = vmatmul.f32.gmra.mxu0 %v6447
        %v6684 = vpop.f32.mrf.mxu0
        %v6685 = vadd.f32 0.0, %v6684
        %6686 = vmatmul.f32.gmra.mxu0 %v6451
        %v6687 = vpop.f32.mrf.mxu0
        %v6688 = vadd.f32 0.0, %v6687
        %6689 = vmatmul.f32.gmra.mxu0 %v6455
        %v6690 = vpop.f32.mrf.mxu0
        %v6691 = vadd.f32 0.0, %v6690
        %6692 = vmatmul.f32.gmra.mxu0 %v6459
        %v6693 = vpop.f32.mrf.mxu0
        %v6694 = vadd.f32 0.0, %v6693
        %6695 = vmatmul.f32.gmra.mxu0 %v6463
        %v6696 = vpop.f32.mrf.mxu0
        %v6697 = vadd.f32 0.0, %v6696
        %6698 = vmatmul.f32.gmra.mxu0 %v6467
        %v6699 = vpop.f32.mrf.mxu0
        %v6700 = vadd.f32 0.0, %v6699
        %6701 = vmatmul.f32.gmra.mxu0 %v6471
        %v6702 = vpop.f32.mrf.mxu0
        %v6703 = vadd.f32 0.0, %v6702
        %6704 = vmatmul.f32.gmra.mxu0 %v6475
        %v6705 = vpop.f32.mrf.mxu0
        %v6706 = vadd.f32 0.0, %v6705
        %6707 = vmatmul.f32.gmra.mxu0 %v6479
        %v6708 = vpop.f32.mrf.mxu0
        %v6709 = vadd.f32 0.0, %v6708
        %6710 = vmatmul.f32.gmra.mxu0 %v6483
        %v6711 = vpop.f32.mrf.mxu0
        %v6712 = vadd.f32 0.0, %v6711
        %6713 = vmatmul.f32.gmra.mxu0 %v6487
        %v6714 = vpop.f32.mrf.mxu0
        %v6715 = vadd.f32 0.0, %v6714
        %6716 = vmatmul.f32.gmra.mxu0 %v6491
        %v6717 = vpop.f32.mrf.mxu0
        %v6718 = vadd.f32 0.0, %v6717
        %6719 = vmatmul.f32.gmra.mxu0 %v6495
        %v6720 = vpop.f32.mrf.mxu0
        %v6721 = vadd.f32 0.0, %v6720
        %6722 = vmatmul.f32.gmra.mxu0 %v6499
        %v6723 = vpop.f32.mrf.mxu0
        %v6724 = vadd.f32 0.0, %v6723
        %6725 = vmatmul.f32.gmra.mxu0 %v6503
        %v6726 = vpop.f32.mrf.mxu0
        %v6727 = vadd.f32 0.0, %v6726
        %6728 = vmatmul.f32.gmra.mxu0 %v6507
        %v6729 = vpop.f32.mrf.mxu0
        %v6730 = vadd.f32 0.0, %v6729
        %6731 = vmatmul.f32.gmra.mxu0 %v6511
        %v6732 = vpop.f32.mrf.mxu0
        %v6733 = vadd.f32 0.0, %v6732
        %6734 = vmatmul.f32.gmra.mxu0 %v6515
        %v6735 = vpop.f32.mrf.mxu0
        %v6736 = vadd.f32 0.0, %v6735
        %6737 = vmatmul.f32.gmra.mxu0 %v6519
        %v6738 = vpop.f32.mrf.mxu0
        %v6739 = vadd.f32 0.0, %v6738
        %6740 = vmatmul.f32.gmra.mxu0 %v6523
        %v6741 = vpop.f32.mrf.mxu0
        %v6742 = vadd.f32 0.0, %v6741
        %6743 = vmatmul.f32.gmra.mxu0 %v6527
        %v6744 = vpop.f32.mrf.mxu0
        %v6745 = vadd.f32 0.0, %v6744
        %6746 = vmatmul.f32.gmra.mxu0 %v6531
        %v6747 = vpop.f32.mrf.mxu0
        %v6748 = vadd.f32 0.0, %v6747
        %6749 = vmatmul.f32.gmra.mxu0 %v6535
        %v6750 = vpop.f32.mrf.mxu0
        %v6751 = vadd.f32 0.0, %v6750
        %6752 = vmatmul.f32.gmra.mxu0 %v6539
        %v6753 = vpop.f32.mrf.mxu0
        %v6754 = vadd.f32 0.0, %v6753
        %6755 = vmatmul.f32.gmra.mxu0 %v6543
        %v6756 = vpop.f32.mrf.mxu0
        %v6757 = vadd.f32 0.0, %v6756
        %6758 = vmatmul.f32.gmra.mxu0 %v6547
        %v6759 = vpop.f32.mrf.mxu0
        %v6760 = vadd.f32 0.0, %v6759
        %6761 = vmatmul.f32.gmra.mxu0 %v6551
        %v6762 = vpop.f32.mrf.mxu0
        %v6763 = vadd.f32 0.0, %v6762
        %6764 = vmatmul.f32.gmra.mxu0 %v6555
        %v6765 = vpop.f32.mrf.mxu0
        %v6766 = vadd.f32 0.0, %v6765
        %6767 = vdwg.mxu0
        %6768 = vmatpush.msra.mxu0 %v6622
        %6769 = vmatpush.msra.mxu0 %v6621
        %6770 = vmatpush.msra.mxu0 %v6620
        %6771 = vmatpush.msra.mxu0 %v6619
        %6772 = vmatpush.msra.mxu0 %v6618
        %6773 = vmatpush.msra.mxu0 %v6617
        %6774 = vmatpush.msra.mxu0 %v6616
        %6775 = vmatpush.msra.mxu0 %v6615
        %6776 = vmatpush.msra.mxu0 %v6614
        %6777 = vmatpush.msra.mxu0 %v6613
        %6778 = vmatpush.msra.mxu0 %v6612
        %6779 = vmatpush.msra.mxu0 %v6611
        %6780 = vmatpush.msra.mxu0 %v6610
        %6781 = vmatpush.msra.mxu0 %v6609
        %6782 = vmatpush.msra.mxu0 %v6608
        %6783 = vmatpush.msra.mxu0 %v6607
        %6784 = vmatmul.f32.gmra.mxu0 %v6432
        %v6785 = vpop.f32.mrf.mxu0
        %v6786 = vadd.f32 %v6673, %v6785
        %6787 = vmatmul.f32.gmra.mxu0 %v6436
        %v6788 = vpop.f32.mrf.mxu0
        %v6789 = vadd.f32 %v6676, %v6788
        %6790 = vmatmul.f32.gmra.mxu0 %v6440
        %v6791 = vpop.f32.mrf.mxu0
        %v6792 = vadd.f32 %v6679, %v6791
        %6793 = vmatmul.f32.gmra.mxu0 %v6444
        %v6794 = vpop.f32.mrf.mxu0
        %v6795 = vadd.f32 %v6682, %v6794
        %6796 = vmatmul.f32.gmra.mxu0 %v6448
        %v6797 = vpop.f32.mrf.mxu0
        %v6798 = vadd.f32 %v6685, %v6797
        %6799 = vmatmul.f32.gmra.mxu0 %v6452
        %v6800 = vpop.f32.mrf.mxu0
        %v6801 = vadd.f32 %v6688, %v6800
        %6802 = vmatmul.f32.gmra.mxu0 %v6456
        %v6803 = vpop.f32.mrf.mxu0
        %v6804 = vadd.f32 %v6691, %v6803
        %6805 = vmatmul.f32.gmra.mxu0 %v6460
        %v6806 = vpop.f32.mrf.mxu0
        %v6807 = vadd.f32 %v6694, %v6806
        %6808 = vmatmul.f32.gmra.mxu0 %v6464
        %v6809 = vpop.f32.mrf.mxu0
        %v6810 = vadd.f32 %v6697, %v6809
        %6811 = vmatmul.f32.gmra.mxu0 %v6468
        %v6812 = vpop.f32.mrf.mxu0
        %v6813 = vadd.f32 %v6700, %v6812
        %6814 = vmatmul.f32.gmra.mxu0 %v6472
        %v6815 = vpop.f32.mrf.mxu0
        %v6816 = vadd.f32 %v6703, %v6815
        %6817 = vmatmul.f32.gmra.mxu0 %v6476
        %v6818 = vpop.f32.mrf.mxu0
        %v6819 = vadd.f32 %v6706, %v6818
        %6820 = vmatmul.f32.gmra.mxu0 %v6480
        %v6821 = vpop.f32.mrf.mxu0
        %v6822 = vadd.f32 %v6709, %v6821
        %6823 = vmatmul.f32.gmra.mxu0 %v6484
        %v6824 = vpop.f32.mrf.mxu0
        %v6825 = vadd.f32 %v6712, %v6824
        %6826 = vmatmul.f32.gmra.mxu0 %v6488
        %v6827 = vpop.f32.mrf.mxu0
        %v6828 = vadd.f32 %v6715, %v6827
        %6829 = vmatmul.f32.gmra.mxu0 %v6492
        %v6830 = vpop.f32.mrf.mxu0
        %v6831 = vadd.f32 %v6718, %v6830
        %6832 = vmatmul.f32.gmra.mxu0 %v6496
        %v6833 = vpop.f32.mrf.mxu0
        %v6834 = vadd.f32 %v6721, %v6833
        %6835 = vmatmul.f32.gmra.mxu0 %v6500
        %v6836 = vpop.f32.mrf.mxu0
        %v6837 = vadd.f32 %v6724, %v6836
        %6838 = vmatmul.f32.gmra.mxu0 %v6504
        %v6839 = vpop.f32.mrf.mxu0
        %v6840 = vadd.f32 %v6727, %v6839
        %6841 = vmatmul.f32.gmra.mxu0 %v6508
        %v6842 = vpop.f32.mrf.mxu0
        %v6843 = vadd.f32 %v6730, %v6842
        %6844 = vmatmul.f32.gmra.mxu0 %v6512
        %v6845 = vpop.f32.mrf.mxu0
        %v6846 = vadd.f32 %v6733, %v6845
        %6847 = vmatmul.f32.gmra.mxu0 %v6516
        %v6848 = vpop.f32.mrf.mxu0
        %v6849 = vadd.f32 %v6736, %v6848
        %6850 = vmatmul.f32.gmra.mxu0 %v6520
        %v6851 = vpop.f32.mrf.mxu0
        %v6852 = vadd.f32 %v6739, %v6851
        %6853 = vmatmul.f32.gmra.mxu0 %v6524
        %v6854 = vpop.f32.mrf.mxu0
        %v6855 = vadd.f32 %v6742, %v6854
        %6856 = vmatmul.f32.gmra.mxu0 %v6528
        %v6857 = vpop.f32.mrf.mxu0
        %v6858 = vadd.f32 %v6745, %v6857
        %6859 = vmatmul.f32.gmra.mxu0 %v6532
        %v6860 = vpop.f32.mrf.mxu0
        %v6861 = vadd.f32 %v6748, %v6860
        %6862 = vmatmul.f32.gmra.mxu0 %v6536
        %v6863 = vpop.f32.mrf.mxu0
        %v6864 = vadd.f32 %v6751, %v6863
        %6865 = vmatmul.f32.gmra.mxu0 %v6540
        %v6866 = vpop.f32.mrf.mxu0
        %v6867 = vadd.f32 %v6754, %v6866
        %6868 = vmatmul.f32.gmra.mxu0 %v6544
        %v6869 = vpop.f32.mrf.mxu0
        %v6870 = vadd.f32 %v6757, %v6869
        %6871 = vmatmul.f32.gmra.mxu0 %v6548
        %v6872 = vpop.f32.mrf.mxu0
        %v6873 = vadd.f32 %v6760, %v6872
        %6874 = vmatmul.f32.gmra.mxu0 %v6552
        %v6875 = vpop.f32.mrf.mxu0
        %v6876 = vadd.f32 %v6763, %v6875
        %6877 = vmatmul.f32.gmra.mxu0 %v6556
        %v6878 = vpop.f32.mrf.mxu0
        %v6879 = vadd.f32 %v6766, %v6878
        %6880 = vdwg.mxu0
        %6881 = vmatpush.msra.mxu0 %v6638
        %6882 = vmatpush.msra.mxu0 %v6637
        %6883 = vmatpush.msra.mxu0 %v6636
        %6884 = vmatpush.msra.mxu0 %v6635
        %6885 = vmatpush.msra.mxu0 %v6634
        %6886 = vmatpush.msra.mxu0 %v6633
        %6887 = vmatpush.msra.mxu0 %v6632
        %6888 = vmatpush.msra.mxu0 %v6631
        %6889 = vmatpush.msra.mxu0 %v6630
        %6890 = vmatpush.msra.mxu0 %v6629
        %6891 = vmatpush.msra.mxu0 %v6628
        %6892 = vmatpush.msra.mxu0 %v6627
        %6893 = vmatpush.msra.mxu0 %v6626
        %6894 = vmatpush.msra.mxu0 %v6625
        %6895 = vmatpush.msra.mxu0 %v6624
        %6896 = vmatpush.msra.mxu0 %v6623
        %6897 = vmatmul.f32.gmra.mxu0 %v6433
        %v6898 = vpop.f32.mrf.mxu0
        %v6899 = vadd.f32 %v6786, %v6898
        %6900 = vmatmul.f32.gmra.mxu0 %v6437
        %v6901 = vpop.f32.mrf.mxu0
        %v6902 = vadd.f32 %v6789, %v6901
        %6903 = vmatmul.f32.gmra.mxu0 %v6441
        %v6904 = vpop.f32.mrf.mxu0
        %v6905 = vadd.f32 %v6792, %v6904
        %6906 = vmatmul.f32.gmra.mxu0 %v6445
        %v6907 = vpop.f32.mrf.mxu0
        %v6908 = vadd.f32 %v6795, %v6907
        %6909 = vmatmul.f32.gmra.mxu0 %v6449
        %v6910 = vpop.f32.mrf.mxu0
        %v6911 = vadd.f32 %v6798, %v6910
        %6912 = vmatmul.f32.gmra.mxu0 %v6453
        %v6913 = vpop.f32.mrf.mxu0
        %v6914 = vadd.f32 %v6801, %v6913
        %6915 = vmatmul.f32.gmra.mxu0 %v6457
        %v6916 = vpop.f32.mrf.mxu0
        %v6917 = vadd.f32 %v6804, %v6916
        %6918 = vmatmul.f32.gmra.mxu0 %v6461
        %v6919 = vpop.f32.mrf.mxu0
        %v6920 = vadd.f32 %v6807, %v6919
        %6921 = vmatmul.f32.gmra.mxu0 %v6465
        %v6922 = vpop.f32.mrf.mxu0
        %v6923 = vadd.f32 %v6810, %v6922
        %6924 = vmatmul.f32.gmra.mxu0 %v6469
        %v6925 = vpop.f32.mrf.mxu0
        %v6926 = vadd.f32 %v6813, %v6925
        %6927 = vmatmul.f32.gmra.mxu0 %v6473
        %v6928 = vpop.f32.mrf.mxu0
        %v6929 = vadd.f32 %v6816, %v6928
        %6930 = vmatmul.f32.gmra.mxu0 %v6477
        %v6931 = vpop.f32.mrf.mxu0
        %v6932 = vadd.f32 %v6819, %v6931
        %6933 = vmatmul.f32.gmra.mxu0 %v6481
        %v6934 = vpop.f32.mrf.mxu0
        %v6935 = vadd.f32 %v6822, %v6934
        %6936 = vmatmul.f32.gmra.mxu0 %v6485
        %v6937 = vpop.f32.mrf.mxu0
        %v6938 = vadd.f32 %v6825, %v6937
        %6939 = vmatmul.f32.gmra.mxu0 %v6489
        %v6940 = vpop.f32.mrf.mxu0
        %v6941 = vadd.f32 %v6828, %v6940
        %6942 = vmatmul.f32.gmra.mxu0 %v6493
        %v6943 = vpop.f32.mrf.mxu0
        %v6944 = vadd.f32 %v6831, %v6943
        %6945 = vmatmul.f32.gmra.mxu0 %v6497
        %v6946 = vpop.f32.mrf.mxu0
        %v6947 = vadd.f32 %v6834, %v6946
        %6948 = vmatmul.f32.gmra.mxu0 %v6501
        %v6949 = vpop.f32.mrf.mxu0
        %v6950 = vadd.f32 %v6837, %v6949
        %6951 = vmatmul.f32.gmra.mxu0 %v6505
        %v6952 = vpop.f32.mrf.mxu0
        %v6953 = vadd.f32 %v6840, %v6952
        %6954 = vmatmul.f32.gmra.mxu0 %v6509
        %v6955 = vpop.f32.mrf.mxu0
        %v6956 = vadd.f32 %v6843, %v6955
        %6957 = vmatmul.f32.gmra.mxu0 %v6513
        %v6958 = vpop.f32.mrf.mxu0
        %v6959 = vadd.f32 %v6846, %v6958
        %6960 = vmatmul.f32.gmra.mxu0 %v6517
        %v6961 = vpop.f32.mrf.mxu0
        %v6962 = vadd.f32 %v6849, %v6961
        %6963 = vmatmul.f32.gmra.mxu0 %v6521
        %v6964 = vpop.f32.mrf.mxu0
        %v6965 = vadd.f32 %v6852, %v6964
        %6966 = vmatmul.f32.gmra.mxu0 %v6525
        %v6967 = vpop.f32.mrf.mxu0
        %v6968 = vadd.f32 %v6855, %v6967
        %6969 = vmatmul.f32.gmra.mxu0 %v6529
        %v6970 = vpop.f32.mrf.mxu0
        %v6971 = vadd.f32 %v6858, %v6970
        %6972 = vmatmul.f32.gmra.mxu0 %v6533
        %v6973 = vpop.f32.mrf.mxu0
        %v6974 = vadd.f32 %v6861, %v6973
        %6975 = vmatmul.f32.gmra.mxu0 %v6537
        %v6976 = vpop.f32.mrf.mxu0
        %v6977 = vadd.f32 %v6864, %v6976
        %6978 = vmatmul.f32.gmra.mxu0 %v6541
        %v6979 = vpop.f32.mrf.mxu0
        %v6980 = vadd.f32 %v6867, %v6979
        %6981 = vmatmul.f32.gmra.mxu0 %v6545
        %v6982 = vpop.f32.mrf.mxu0
        %v6983 = vadd.f32 %v6870, %v6982
        %6984 = vmatmul.f32.gmra.mxu0 %v6549
        %v6985 = vpop.f32.mrf.mxu0
        %v6986 = vadd.f32 %v6873, %v6985
        %6987 = vmatmul.f32.gmra.mxu0 %v6553
        %v6988 = vpop.f32.mrf.mxu0
        %v6989 = vadd.f32 %v6876, %v6988
        %6990 = vmatmul.f32.gmra.mxu0 %v6557
        %v6991 = vpop.f32.mrf.mxu0
        %v6992 = vadd.f32 %v6879, %v6991
        %6993 = vdwg.mxu0
        %6994 = vmatpush.msra.mxu0 %v6654
        %6995 = vmatpush.msra.mxu0 %v6653
        %6996 = vmatpush.msra.mxu0 %v6652
        %6997 = vmatpush.msra.mxu0 %v6651
        %6998 = vmatpush.msra.mxu0 %v6650
        %6999 = vmatpush.msra.mxu0 %v6649
        %7000 = vmatpush.msra.mxu0 %v6648
        %7001 = vmatpush.msra.mxu0 %v6647
        %7002 = vmatpush.msra.mxu0 %v6646
        %7003 = vmatpush.msra.mxu0 %v6645
        %7004 = vmatpush.msra.mxu0 %v6644
        %7005 = vmatpush.msra.mxu0 %v6643
        %7006 = vmatpush.msra.mxu0 %v6642
        %7007 = vmatpush.msra.mxu0 %v6641
        %7008 = vmatpush.msra.mxu0 %v6640
        %7009 = vmatpush.msra.mxu0 %v6639
        %7010 = vmatmul.f32.gmra.mxu0 %v6434
        %v7011 = vpop.f32.mrf.mxu0
        %v7012 = vadd.f32 %v6899, %v7011
        %7013 = vmatmul.f32.gmra.mxu0 %v6438
        %v7014 = vpop.f32.mrf.mxu0
        %v7015 = vadd.f32 %v6902, %v7014
        %7016 = vmatmul.f32.gmra.mxu0 %v6442
        %v7017 = vpop.f32.mrf.mxu0
        %v7018 = vadd.f32 %v6905, %v7017
        %7019 = vmatmul.f32.gmra.mxu0 %v6446
        %v7020 = vpop.f32.mrf.mxu0
        %v7021 = vadd.f32 %v6908, %v7020
        %7022 = vmatmul.f32.gmra.mxu0 %v6450
        %v7023 = vpop.f32.mrf.mxu0
        %v7024 = vadd.f32 %v6911, %v7023
        %7025 = vmatmul.f32.gmra.mxu0 %v6454
        %v7026 = vpop.f32.mrf.mxu0
        %v7027 = vadd.f32 %v6914, %v7026
        %7028 = vmatmul.f32.gmra.mxu0 %v6458
        %v7029 = vpop.f32.mrf.mxu0
        %v7030 = vadd.f32 %v6917, %v7029
        %7031 = vmatmul.f32.gmra.mxu0 %v6462
        %v7032 = vpop.f32.mrf.mxu0
        %v7033 = vadd.f32 %v6920, %v7032
        %7034 = vmatmul.f32.gmra.mxu0 %v6466
        %v7035 = vpop.f32.mrf.mxu0
        %v7036 = vadd.f32 %v6923, %v7035
        %7037 = vmatmul.f32.gmra.mxu0 %v6470
        %v7038 = vpop.f32.mrf.mxu0
        %v7039 = vadd.f32 %v6926, %v7038
        %7040 = vmatmul.f32.gmra.mxu0 %v6474
        %v7041 = vpop.f32.mrf.mxu0
        %v7042 = vadd.f32 %v6929, %v7041
        %7043 = vmatmul.f32.gmra.mxu0 %v6478
        %v7044 = vpop.f32.mrf.mxu0
        %v7045 = vadd.f32 %v6932, %v7044
        %7046 = vmatmul.f32.gmra.mxu0 %v6482
        %v7047 = vpop.f32.mrf.mxu0
        %v7048 = vadd.f32 %v6935, %v7047
        %7049 = vmatmul.f32.gmra.mxu0 %v6486
        %v7050 = vpop.f32.mrf.mxu0
        %v7051 = vadd.f32 %v6938, %v7050
        %7052 = vmatmul.f32.gmra.mxu0 %v6490
        %v7053 = vpop.f32.mrf.mxu0
        %v7054 = vadd.f32 %v6941, %v7053
        %7055 = vmatmul.f32.gmra.mxu0 %v6494
        %v7056 = vpop.f32.mrf.mxu0
        %v7057 = vadd.f32 %v6944, %v7056
        %7058 = vmatmul.f32.gmra.mxu0 %v6498
        %v7059 = vpop.f32.mrf.mxu0
        %v7060 = vadd.f32 %v6947, %v7059
        %7061 = vmatmul.f32.gmra.mxu0 %v6502
        %v7062 = vpop.f32.mrf.mxu0
        %v7063 = vadd.f32 %v6950, %v7062
        %7064 = vmatmul.f32.gmra.mxu0 %v6506
        %v7065 = vpop.f32.mrf.mxu0
        %v7066 = vadd.f32 %v6953, %v7065
        %7067 = vmatmul.f32.gmra.mxu0 %v6510
        %v7068 = vpop.f32.mrf.mxu0
        %v7069 = vadd.f32 %v6956, %v7068
        %7070 = vmatmul.f32.gmra.mxu0 %v6514
        %v7071 = vpop.f32.mrf.mxu0
        %v7072 = vadd.f32 %v6959, %v7071
        %7073 = vmatmul.f32.gmra.mxu0 %v6518
        %v7074 = vpop.f32.mrf.mxu0
        %v7075 = vadd.f32 %v6962, %v7074
        %7076 = vmatmul.f32.gmra.mxu0 %v6522
        %v7077 = vpop.f32.mrf.mxu0
        %v7078 = vadd.f32 %v6965, %v7077
        %7079 = vmatmul.f32.gmra.mxu0 %v6526
        %v7080 = vpop.f32.mrf.mxu0
        %v7081 = vadd.f32 %v6968, %v7080
        %7082 = vmatmul.f32.gmra.mxu0 %v6530
        %v7083 = vpop.f32.mrf.mxu0
        %v7084 = vadd.f32 %v6971, %v7083
        %7085 = vmatmul.f32.gmra.mxu0 %v6534
        %v7086 = vpop.f32.mrf.mxu0
        %v7087 = vadd.f32 %v6974, %v7086
        %7088 = vmatmul.f32.gmra.mxu0 %v6538
        %v7089 = vpop.f32.mrf.mxu0
        %v7090 = vadd.f32 %v6977, %v7089
        %7091 = vmatmul.f32.gmra.mxu0 %v6542
        %v7092 = vpop.f32.mrf.mxu0
        %v7093 = vadd.f32 %v6980, %v7092
        %7094 = vmatmul.f32.gmra.mxu0 %v6546
        %v7095 = vpop.f32.mrf.mxu0
        %v7096 = vadd.f32 %v6983, %v7095
        %7097 = vmatmul.f32.gmra.mxu0 %v6550
        %v7098 = vpop.f32.mrf.mxu0
        %v7099 = vadd.f32 %v6986, %v7098
        %7100 = vmatmul.f32.gmra.mxu0 %v6554
        %v7101 = vpop.f32.mrf.mxu0
        %v7102 = vadd.f32 %v6989, %v7101
        %7103 = vmatmul.f32.gmra.mxu0 %v6558
        %v7104 = vpop.f32.mrf.mxu0
        %v7105 = vadd.f32 %v6992, %v7104
        %7106 = vdwg.mxu0
        %v7107 = vadd.f32 %v6559, %v7012
        %v7108 = vadd.f32 %v6560, %v7015
        %v7109 = vadd.f32 %v6561, %v7018
        %v7110 = vadd.f32 %v6562, %v7021
        %v7111 = vadd.f32 %v6563, %v7024
        %v7112 = vadd.f32 %v6564, %v7027
        %v7113 = vadd.f32 %v6565, %v7030
        %v7114 = vadd.f32 %v6566, %v7033
        %v7115 = vadd.f32 %v6567, %v7036
        %v7116 = vadd.f32 %v6568, %v7039
        %v7117 = vadd.f32 %v6569, %v7042
        %v7118 = vadd.f32 %v6570, %v7045
        %v7119 = vadd.f32 %v6571, %v7048
        %v7120 = vadd.f32 %v6572, %v7051
        %v7121 = vadd.f32 %v6573, %v7054
        %v7122 = vadd.f32 %v6574, %v7057
        %v7123 = vadd.f32 %v6575, %v7060
        %v7124 = vadd.f32 %v6576, %v7063
        %v7125 = vadd.f32 %v6577, %v7066
        %v7126 = vadd.f32 %v6578, %v7069
        %v7127 = vadd.f32 %v6579, %v7072
        %v7128 = vadd.f32 %v6580, %v7075
        %v7129 = vadd.f32 %v6581, %v7078
        %v7130 = vadd.f32 %v6582, %v7081
        %v7131 = vadd.f32 %v6583, %v7084
        %v7132 = vadd.f32 %v6584, %v7087
        %v7133 = vadd.f32 %v6585, %v7090
        %v7134 = vadd.f32 %v6586, %v7093
        %v7135 = vadd.f32 %v6587, %v7096
        %v7136 = vadd.f32 %v6588, %v7099
        %v7137 = vadd.f32 %v6589, %v7102
        %v7138 = vadd.f32 %v6590, %v7105
        %7139 = vst [vmem:[#allocation2] sm:$0xff] %v7107
        %7140 = vst [vmem:[#allocation2 + $0x8] sm:$0xff] %v7108
        %7141 = vst [vmem:[#allocation2 + $0x10] sm:$0xff] %v7109
        %7142 = vst [vmem:[#allocation2 + $0x18] sm:$0xff] %v7110
        %7143 = vst [vmem:[#allocation2 + $0x20] sm:$0xff] %v7111
        %7144 = vst [vmem:[#allocation2 + $0x28] sm:$0xff] %v7112
        %7145 = vst [vmem:[#allocation2 + $0x30] sm:$0xff] %v7113
        %7146 = vst [vmem:[#allocation2 + $0x38] sm:$0xff] %v7114
        %7147 = vst [vmem:[#allocation2 + $0x40] sm:$0xff] %v7115
        %7148 = vst [vmem:[#allocation2 + $0x48] sm:$0xff] %v7116
        %7149 = vst [vmem:[#allocation2 + $0x50] sm:$0xff] %v7117
        %7150 = vst [vmem:[#allocation2 + $0x58] sm:$0xff] %v7118
        %7151 = vst [vmem:[#allocation2 + $0x60] sm:$0xff] %v7119
        %7152 = vst [vmem:[#allocation2 + $0x68] sm:$0xff] %v7120
        %7153 = vst [vmem:[#allocation2 + $0x70] sm:$0xff] %v7121
        %7154 = vst [vmem:[#allocation2 + $0x78] sm:$0xff] %v7122
        %7155 = vst [vmem:[#allocation2 + $0x80] sm:$0xff] %v7123
        %7156 = vst [vmem:[#allocation2 + $0x88] sm:$0xff] %v7124
        %7157 = vst [vmem:[#allocation2 + $0x90] sm:$0xff] %v7125
        %7158 = vst [vmem:[#allocation2 + $0x98] sm:$0xff] %v7126
        %7159 = vst [vmem:[#allocation2 + $0xa0] sm:$0xff] %v7127
        %7160 = vst [vmem:[#allocation2 + $0xa8] sm:$0xff] %v7128
        %7161 = vst [vmem:[#allocation2 + $0xb0] sm:$0xff] %v7129
        %7162 = vst [vmem:[#allocation2 + $0xb8] sm:$0xff] %v7130
        %7163 = vst [vmem:[#allocation2 + $0xc0] sm:$0xff] %v7131
        %7164 = vst [vmem:[#allocation2 + $0xc8] sm:$0xff] %v7132
        %7165 = vst [vmem:[#allocation2 + $0xd0] sm:$0xff] %v7133
        %7166 = vst [vmem:[#allocation2 + $0xd8] sm:$0xff] %v7134
        %7167 = vst [vmem:[#allocation2 + $0xe0] sm:$0xff] %v7135
        %7168 = vst [vmem:[#allocation2 + $0xe8] sm:$0xff] %v7136
        %7169 = vst [vmem:[#allocation2 + $0xf0] sm:$0xff] %v7137
        %7170 = vst [vmem:[#allocation2 + $0xf8] sm:$0xff] %v7138
        // Predicated region
        $region61: #{tpu_custom_call.1} parent=39 // pred_check
          %p7171 = pneg %p333
        $region62: #{tpu_custom_call.1} parent=39 // pred_check_branch
          %7173 = sbr.rel (%p7171) target = $region64
        $region63: #{tpu_custom_call.1} parent=39 // pred_region
          %v7174 = vld [vmem:[#allocation2] sm:$0xff]
          %v7175 = vld [vmem:[#allocation2 + $0x8] sm:$0xff]
          %v7176 = vld [vmem:[#allocation2 + $0x10] sm:$0xff]
          %v7177 = vld [vmem:[#allocation2 + $0x18] sm:$0xff]
          %v7178 = vld [vmem:[#allocation2 + $0x20] sm:$0xff]
          %v7179 = vld [vmem:[#allocation2 + $0x28] sm:$0xff]
          %v7180 = vld [vmem:[#allocation2 + $0x30] sm:$0xff]
          %v7181 = vld [vmem:[#allocation2 + $0x38] sm:$0xff]
          %v7182 = vld [vmem:[#allocation2 + $0x40] sm:$0xff]
          %v7183 = vld [vmem:[#allocation2 + $0x48] sm:$0xff]
          %v7184 = vld [vmem:[#allocation2 + $0x50] sm:$0xff]
          %v7185 = vld [vmem:[#allocation2 + $0x58] sm:$0xff]
          %v7186 = vld [vmem:[#allocation2 + $0x60] sm:$0xff]
          %v7187 = vld [vmem:[#allocation2 + $0x68] sm:$0xff]
          %v7188 = vld [vmem:[#allocation2 + $0x70] sm:$0xff]
          %v7189 = vld [vmem:[#allocation2 + $0x78] sm:$0xff]
          %v7190 = vld [vmem:[#allocation2 + $0x80] sm:$0xff]
          %v7191 = vld [vmem:[#allocation2 + $0x88] sm:$0xff]
          %v7192 = vld [vmem:[#allocation2 + $0x90] sm:$0xff]
          %v7193 = vld [vmem:[#allocation2 + $0x98] sm:$0xff]
          %v7194 = vld [vmem:[#allocation2 + $0xa0] sm:$0xff]
          %v7195 = vld [vmem:[#allocation2 + $0xa8] sm:$0xff]
          %v7196 = vld [vmem:[#allocation2 + $0xb0] sm:$0xff]
          %v7197 = vld [vmem:[#allocation2 + $0xb8] sm:$0xff]
          %v7198 = vld [vmem:[#allocation2 + $0xc0] sm:$0xff]
          %v7199 = vld [vmem:[#allocation2 + $0xc8] sm:$0xff]
          %v7200 = vld [vmem:[#allocation2 + $0xd0] sm:$0xff]
          %v7201 = vld [vmem:[#allocation2 + $0xd8] sm:$0xff]
          %v7202 = vld [vmem:[#allocation2 + $0xe0] sm:$0xff]
          %v7203 = vld [vmem:[#allocation2 + $0xe8] sm:$0xff]
          %v7204 = vld [vmem:[#allocation2 + $0xf0] sm:$0xff]
          %v7205 = vld [vmem:[#allocation2 + $0xf8] sm:$0xff]
          %v7206 = vld [vmem:[%s4] sm:$0x1]
          %v7208 = vperm.slane %v7206, 0
          %v7210 = vadd.f32 %v7174, %v7208
          %v7211 = vadd.f32 %v7175, %v7208
          %v7212 = vadd.f32 %v7176, %v7208
          %v7213 = vadd.f32 %v7177, %v7208
          %v7214 = vadd.f32 %v7178, %v7208
          %v7215 = vadd.f32 %v7179, %v7208
          %v7216 = vadd.f32 %v7180, %v7208
          %v7217 = vadd.f32 %v7181, %v7208
          %v7218 = vadd.f32 %v7182, %v7208
          %v7219 = vadd.f32 %v7183, %v7208
          %v7220 = vadd.f32 %v7184, %v7208
          %v7221 = vadd.f32 %v7185, %v7208
          %v7222 = vadd.f32 %v7186, %v7208
          %v7223 = vadd.f32 %v7187, %v7208
          %v7224 = vadd.f32 %v7188, %v7208
          %v7225 = vadd.f32 %v7189, %v7208
          %v7226 = vadd.f32 %v7190, %v7208
          %v7227 = vadd.f32 %v7191, %v7208
          %v7228 = vadd.f32 %v7192, %v7208
          %v7229 = vadd.f32 %v7193, %v7208
          %v7230 = vadd.f32 %v7194, %v7208
          %v7231 = vadd.f32 %v7195, %v7208
          %v7232 = vadd.f32 %v7196, %v7208
          %v7233 = vadd.f32 %v7197, %v7208
          %v7234 = vadd.f32 %v7198, %v7208
          %v7235 = vadd.f32 %v7199, %v7208
          %v7236 = vadd.f32 %v7200, %v7208
          %v7237 = vadd.f32 %v7201, %v7208
          %v7238 = vadd.f32 %v7202, %v7208
          %v7239 = vadd.f32 %v7203, %v7208
          %v7240 = vadd.f32 %v7204, %v7208
          %v7241 = vadd.f32 %v7205, %v7208
          %7242 = vst [vmem:[%s327] sm:$0xff] %v7210
          %7243 = vst [vmem:[%s327 + $0x8] sm:$0xff] %v7211
          %7244 = vst [vmem:[%s327 + $0x10] sm:$0xff] %v7212
          %7245 = vst [vmem:[%s327 + $0x18] sm:$0xff] %v7213
          %7246 = vst [vmem:[%s327 + $0x20] sm:$0xff] %v7214
          %7247 = vst [vmem:[%s327 + $0x28] sm:$0xff] %v7215
          %7248 = vst [vmem:[%s327 + $0x30] sm:$0xff] %v7216
          %7249 = vst [vmem:[%s327 + $0x38] sm:$0xff] %v7217
          %7250 = vst [vmem:[%s327 + $0x40] sm:$0xff] %v7218
          %7251 = vst [vmem:[%s327 + $0x48] sm:$0xff] %v7219
          %7252 = vst [vmem:[%s327 + $0x50] sm:$0xff] %v7220
          %7253 = vst [vmem:[%s327 + $0x58] sm:$0xff] %v7221
          %7254 = vst [vmem:[%s327 + $0x60] sm:$0xff] %v7222
          %7255 = vst [vmem:[%s327 + $0x68] sm:$0xff] %v7223
          %7256 = vst [vmem:[%s327 + $0x70] sm:$0xff] %v7224
          %7257 = vst [vmem:[%s327 + $0x78] sm:$0xff] %v7225
          %7258 = vst [vmem:[%s327 + $0x80] sm:$0xff] %v7226
          %7259 = vst [vmem:[%s327 + $0x88] sm:$0xff] %v7227
          %7260 = vst [vmem:[%s327 + $0x90] sm:$0xff] %v7228
          %7261 = vst [vmem:[%s327 + $0x98] sm:$0xff] %v7229
          %7262 = vst [vmem:[%s327 + $0xa0] sm:$0xff] %v7230
          %7263 = vst [vmem:[%s327 + $0xa8] sm:$0xff] %v7231
          %7264 = vst [vmem:[%s327 + $0xb0] sm:$0xff] %v7232
          %7265 = vst [vmem:[%s327 + $0xb8] sm:$0xff] %v7233
          %7266 = vst [vmem:[%s327 + $0xc0] sm:$0xff] %v7234
          %7267 = vst [vmem:[%s327 + $0xc8] sm:$0xff] %v7235
          %7268 = vst [vmem:[%s327 + $0xd0] sm:$0xff] %v7236
          %7269 = vst [vmem:[%s327 + $0xd8] sm:$0xff] %v7237
          %7270 = vst [vmem:[%s327 + $0xe0] sm:$0xff] %v7238
          %7271 = vst [vmem:[%s327 + $0xe8] sm:$0xff] %v7239
          %7272 = vst [vmem:[%s327 + $0xf0] sm:$0xff] %v7240
          %7273 = vst [vmem:[%s327 + $0xf8] sm:$0xff] %v7241
        $region64: #{tpu_custom_call.1} parent=39 // pred_fallthru
          _
        %s7274 = sand.u32 %s169, 1
        %s7275 = scalar_lea.sflag [#allocation5], %s7274
        %s7276 = sand.u32 %s169, 1
        %s7277 = smul.addr %s7276, 256
        %s7278 = scalar_lea.vmem [#allocation11], %s7277
        // Predicated region
        $region65: #{tpu_custom_call.1} parent=39 // pred_check
          %p7279 = pneg %p179
        $region66: #{tpu_custom_call.1} parent=39 // pred_check_branch
          %7281 = sbr.rel (%p7279) target = $region68
        $region67: #{tpu_custom_call.1} parent=39 // pred_region
          %s7282 = smul.u32 32, %s28
          %7284 = vsyncadd %s7275, 0
          %s7285 = smul.addr %s7282, 8
          %s7286 = scalar_lea.hbm %s5, %s7285
          %s7287 = sshll.u32 %s7278, 4
          %s7288 = int_to_ptr.vmem [resolvable:$true] %s7287
          %s7289 = sshll.u32 %s7286, 4
          %s7290 = int_to_ptr.hbm [resolvable:$true] %s7289
          %7295 = dma.vmem_to_hbm [thread:$0]  %s7288, 4096, %s7290, %s7275, 128, 128, 8
        $region68: #{tpu_custom_call.1} parent=39 // pred_fallthru
          _
      $region40: #{tpu_custom_call.1} parent=5 // pred_fallthru
        _
      %p7296 = scmp.le.s32.totalorder 2, %s19
      // Predicated region
      $region69: #{tpu_custom_call.1} parent=5 // pred_check
        %p7297 = pneg %p7296
      $region70: #{tpu_custom_call.1} parent=5 // pred_check_branch
        %7299 = sbr.rel (%p7297) target = $region72
      $region71: #{tpu_custom_call.1} parent=5 // pred_region
        %s7300 = ssub.s32 %s19, 2
        // Predicated region
        $region73: #{tpu_custom_call.1} parent=71 // pred_check
          %p7301 = pneg %p185
        $region74: #{tpu_custom_call.1} parent=71 // pred_check_branch
          %7303 = sbr.rel (%p7301) target = $region76
        $region75: #{tpu_custom_call.1} parent=71 // pred_region
          %s7304 = sand.u32 %s170, 1
          %s7305 = scalar_lea.sflag [#allocation5], %s7304
          %s7306 = sand.u32 %s170, 1
          %s7307 = smul.addr %s7306, 256
          %s7308 = scalar_lea.vmem [#allocation11], %s7307
          %7310 = dma.done %s7305, 4096
        $region76: #{tpu_custom_call.1} parent=71 // pred_fallthru
          _
      $region72: #{tpu_custom_call.1} parent=5 // pred_fallthru
        _
    $region6: #{tpu_custom_call.1} parent=1 // loop_footer
      %s23 = sadd.s32 1, %s19
    $region7: #{tpu_custom_call.1} parent=1 // loop_footer_branch
      %18 = sbr.rel target = $region3
    $region8: #{tpu_custom_call.1} parent=1 // loop_exit
      _
    %7311 = vsyncpa [#allocation4], 1
    %s7312 = scalar_lea.sflag [#allocation4], 1
    %7313 = vsyncpa %s7312, 1
    %7314 = vsyncpa [#allocation7], 1
    %7315 = vsyncpa [#allocation10], 1
    %7316 = vsyncpa [#allocation5], 1
    %s7317 = scalar_lea.sflag [#allocation5], 1
    %7318 = vsyncpa %s7317, 1

</llo_original>
